<compile_context>
chip_gen: v7x
topology: tpu7x:2x2x1
jax: 0.10.0
libtpu: 0.0.40
codegen_flags: <defaults>
</compile_context>

<pallas_src>
from functools import partial

import jax
import jax.numpy as jnp
from jax.experimental import pallas as pl
from jax.experimental.pallas import tpu as pltpu

EPS = 1e-5
LANES = 128          # lane width for conv1 contraction / all channel lanes
C1, C2 = 46, 45      # real channel counts
C1P = 48             # conv2 contraction: cin padded only to 48 (tight K packing)
KH1 = KW1 = 9
KH2 = KW2 = 15
KK2 = KW2 * C1P      # per-tap-row contraction length (720)


# ---------------- fused Pallas kernel ----------------
# conv1(matmul)+BN1 -> packed bf16 y1 slab -> conv2 (15 unrolled matmuls) + BN2 + GELU

def _fused_kernel(p1_ref, w1_ref, aff1_ref, w2_ref, aff2_ref, o_ref, y1f_ref,
                  *, n, ho1, wo1, ho2, wo2):
    # ---- conv1 as one MXU matmul (bf16 operands, f32 accumulation) ----
    y1 = jnp.dot(p1_ref[...], w1_ref[...],
                 preferred_element_type=jnp.float32)          # (wo1*ho1*n, 128)

    # ---- BN1: training-mode batch stats, single sweep; conv bias omitted (cancels) ----
    mu1 = jnp.mean(y1, axis=0, keepdims=True)
    var1 = jnp.mean(y1 * y1, axis=0, keepdims=True) - mu1 * mu1
    y1 = (y1 - mu1) * jax.lax.rsqrt(var1 + EPS) * aff1_ref[0:1, :] + aff1_ref[1:2, :]

    # ---- pack y1 once (single bf16 cast) into a lane-flattened slab:
    #      rows (h, n), lanes (w, c[0:48]).  conv1 rows were ordered (w, h, n) so each
    #      w-column is a contiguous (ho1*n, 128) block -> wo1 cheap masked lane stores.
    y1b = y1.astype(jnp.bfloat16).reshape(wo1, ho1 * n, LANES)
    for w in range(wo1):                                      # static unroll
        y1f_ref[:, w * C1P:(w + 1) * C1P] = y1b[w, :, :C1P]

    # ---- conv2: KH2 statically-unrolled (m2, 720) x (720, 128) matmuls ----
    acc = None
    for ki in range(KH2):                                     # static unroll
        rows = y1f_ref[ki * n:(ki + ho2) * n, :]              # (ho2*n, wo1*48)
        lhs = jnp.concatenate(
            [rows[:, ow * C1P: ow * C1P + KK2] for ow in range(wo2)],
            axis=0)                                           # (m2, 720), rows (ow, oh, n)
        d = jnp.dot(lhs, w2_ref[ki], preferred_element_type=jnp.float32)  # (m2, 128)
        acc = d if acc is None else acc + d

    # ---- BN2 + tanh-GELU tail (all f32 on VPU/EUP) ----
    mu2 = jnp.mean(acc, axis=0, keepdims=True)
    var2 = jnp.mean(acc * acc, axis=0, keepdims=True) - mu2 * mu2
    v4 = (acc - mu2) * jax.lax.rsqrt(var2 + EPS) * aff2_ref[0:1, :] + aff2_ref[1:2, :]
    t = jnp.tanh((v4 + 0.044715 * (v4 * v4 * v4)) * 0.7978845608028654)
    o_ref[...] = 0.5 * v4 * (t + 1.0)


# ---------------- wrapper ----------------

def _model_forward(x, pp):
    n, cin, h, w = x.shape
    ho1, wo1 = h - KH1 + 1, w - KW1 + 1
    ho2, wo2 = ho1 - KH2 + 1, wo1 - KW2 + 1
    assert ho2 > 0 and wo2 > 0, "input too small for conv2 (k=15)"
    m1 = wo1 * ho1 * n
    m2 = wo2 * ho2 * n
    k1 = KH1 * KW1 * cin

    # conv1 im2col via one XLA primitive; for cin=1 feature order is (ki*9 + kj),
    # matching w1.reshape(81, 46).  Rows ordered (w, h, n) so the in-kernel y1 packing
    # is a plain leading-dim slice.
    patches = jax.lax.conv_general_dilated_patches(
        x, filter_shape=(KH1, KW1), window_strides=(1, 1), padding="VALID")  # (n,81,ho1,wo1)
    p1 = jnp.transpose(patches, (3, 2, 0, 1)).reshape(m1, k1)
    p1 = jnp.pad(p1, ((0, 0), (0, LANES - k1))).astype(jnp.bfloat16)

    kernel = partial(_fused_kernel, n=n, ho1=ho1, wo1=wo1, ho2=ho2, wo2=wo2)

    out = pl.pallas_call(
        kernel,
        out_shape=jax.ShapeDtypeStruct((m2, LANES), jnp.float32),
        grid=(1,),
        in_specs=[
            pl.BlockSpec((m1, LANES), lambda i: (0, 0)),            # conv1 patches
            pl.BlockSpec((LANES, LANES), lambda i: (0, 0)),         # w1 (81->128, 46->128)
            pl.BlockSpec((2, LANES), lambda i: (0, 0)),             # [gamma1, beta1]
            pl.BlockSpec((KH2, KK2, LANES), lambda i: (0, 0, 0)),   # w2, tight K pack
            pl.BlockSpec((2, LANES), lambda i: (0, 0)),             # [gamma2, beta2]
        ],
        out_specs=pl.BlockSpec((m2, LANES), lambda i: (0, 0)),
        scratch_shapes=[pltpu.VMEM((ho1 * n, wo1 * C1P), jnp.bfloat16)],  # y1 slab ~48 KiB
        compiler_params=pltpu.CompilerParams(
            dimension_semantics=("arbitrary",),
            vmem_limit_bytes=16 * 1024 * 1024),
    )(p1, pp["w1p"], pp["aff1"], pp["w2p"], pp["aff2"])

    # rows are ordered (ow, oh, n); slice off channel padding and go back to NCHW.
    out = out.reshape(wo2, ho2, n, LANES)[..., :C2]
    return jnp.transpose(out, (2, 3, 1, 0))                    # (n, C2, ho2, wo2)


model_forward = jax.jit(_model_forward)


# ---------------- parameters (deterministic init, PyTorch-style bounds) ----------------

def init_params(key):
    k1, k2, k3, k4 = jax.random.split(key, 4)
    bound1 = 1.0 / ((1 * KH1 * KW1) ** 0.5)
    bound2 = 1.0 / ((C1 * KH2 * KW2) ** 0.5)
    return dict(
        # weights stored as (kh, kw, cin, cout) so reshape matches im2col column layout
        w1=jax.random.uniform(k1, (KH1, KW1, 1, C1), jnp.float32, -bound1, bound1),
        b1=jax.random.uniform(k2, (C1,), jnp.float32, -bound1, bound1),
        g1=jnp.ones((C1,), jnp.float32),
        be1=jnp.zeros((C1,), jnp.float32),
        w2=jax.random.uniform(k3, (KH2, KW2, C1, C2), jnp.float32, -bound2, bound2),
        b2=jax.random.uniform(k4, (C2,), jnp.float32, -bound2, bound2),
        g2=jnp.ones((C2,), jnp.float32),
        be2=jnp.zeros((C2,), jnp.float32),
    )


def prepare_params(p):
    """One-time tight packing / padding / bf16 cast of the weights for the fused kernel.

    Conv biases are intentionally NOT packed: with training-mode batch-stat BatchNorm,
    (x + b) - mean(x + b) == x - mean(x), so they cancel exactly.
    """
    k1 = KH1 * KW1 * 1
    w1p = jnp.pad(p["w1"].reshape(k1, C1),
                  ((0, LANES - k1), (0, LANES - C1))).astype(jnp.bfloat16)
    # conv2 weight: cin padded 46->48 only (tight K), cout padded 45->128 lanes;
    # per-ki 2-D matrix with rows ordered (kj, c) to match the packed y1 slab lanes.
    w2 = jnp.pad(p["w2"], ((0, 0), (0, 0), (0, C1P - C1), (0, LANES - C2)))
    w2p = w2.reshape(KH2, KK2, LANES).astype(jnp.bfloat16)     # (15, 720, 128) ~2.6 MiB
    aff1 = jnp.pad(jnp.stack([p["g1"], p["be1"]]),
                   ((0, 0), (0, LANES - C1))).astype(jnp.float32)
    aff2 = jnp.pad(jnp.stack([p["g2"], p["be2"]]),
                   ((0, 0), (0, LANES - C2))).astype(jnp.float32)
    return dict(w1p=w1p, w2p=w2p, aff1=aff1, aff2=aff2)


# ---------------- pure-JAX f32 reference for the correctness check ----------------

def _im2col(x_nhwc, kh, kw):
    N, H, W, C = x_nhwc.shape
    Ho, Wo = H - kh + 1, W - kw + 1
    cols = []
    for i in range(kh):
        for j in range(kw):
            cols.append(x_nhwc[:, i:i + Ho, j:j + Wo, :])
    p = jnp.stack(cols, axis=3)                        # (N, Ho, Wo, kh*kw, C)
    return p.reshape(N * Ho * Wo, kh * kw * C), (N, Ho, Wo)


def _reference(x_nchw, params):
    def conv_bn(x_nhwc, wgt, b, g, be, kh, kw):
        p, (nn, ho, wo) = _im2col(x_nhwc, kh, kw)
        y = p @ wgt.reshape(kh * kw * x_nhwc.shape[-1], -1) + b
        mean = jnp.mean(y, axis=0, keepdims=True)
        var = jnp.mean((y - mean) ** 2, axis=0, keepdims=True)
        y = (y - mean) * jax.lax.rsqrt(var + EPS) * g + be
        return y.reshape(nn, ho, wo, -1)

    x = jnp.transpose(x_nchw, (0, 2, 3, 1))
    v2 = conv_bn(x, params["w1"], params["b1"], params["g1"], params["be1"], KH1, KW1)
    v4 = conv_bn(v2, params["w2"], params["b2"], params["g2"], params["be2"], KH2, KW2)
    out = 0.5 * v4 * (jnp.tanh((v4 + 0.044715 * v4 * v4 * v4) * 0.7978845608028654) + 1.0)
    return jnp.transpose(out, (0, 3, 1, 2))


if __name__ == "__main__":
    key = jax.random.PRNGKey(0)
    pkey, xkey = jax.random.split(key)
    params = init_params(pkey)
    padded = prepare_params(params)

    # small valid input: (N=2, C=1, H=24, W=24) -> conv1: (2,46,16,16) -> conv2: (2,45,2,2)
    x = jax.random.normal(xkey, (2, 1, 24, 24), dtype=jnp.float32)

    out = jax.block_until_ready(model_forward(x, padded))
    assert out.shape == (2, C2, 2, 2), out.shape

    ref = jax.block_until_ready(_reference(x, params))
    # bf16 MXU operands (f32 accumulation) vs an all-f32 reference over a K=10350
    # contraction -> allow a few e-2 absolute slack post-BatchNorm.
    assert jnp.allclose(out, ref, atol=5e-2, rtol=5e-2), float(jnp.max(jnp.abs(out - ref)))

    print("KERNEL_OK")
</pallas_src>

<mosaic_0001>
module attributes {stable_mosaic.version = 11 : i64} {
  func.func @_fused_kernel(%arg0: i32, %arg1: memref<512x128xbf16, #tpu.memory_space<vmem>>, %arg2: memref<128x128xbf16, #tpu.memory_space<vmem>>, %arg3: memref<2x128xf32, #tpu.memory_space<vmem>>, %arg4: memref<15x720x128xbf16, #tpu.memory_space<vmem>>, %arg5: memref<2x128xf32, #tpu.memory_space<vmem>>, %arg6: memref<8x128xf32, #tpu.memory_space<vmem>>, %arg7: memref<32x768xbf16, #tpu.memory_space<vmem>>) attributes {dimension_semantics = [#tpu.dimension_semantics<arbitrary>], iteration_bounds = array<i64: 1>, scalar_prefetch = 0 : i64, scratch_operands = 1 : i64, tpu.core_type = #tpu.core_type<tc>, window_params = [{pipeline_mode = #tpu.pipeline_mode<synchronous>, transform_indices = @transform_0, window_bounds = array<i64: 512, 128>}, {pipeline_mode = #tpu.pipeline_mode<synchronous>, transform_indices = @transform_1, window_bounds = array<i64: 128, 128>}, {pipeline_mode = #tpu.pipeline_mode<synchronous>, transform_indices = @transform_2, window_bounds = array<i64: 2, 128>}, {pipeline_mode = #tpu.pipeline_mode<synchronous>, transform_indices = @transform_3, window_bounds = array<i64: 15, 720, 128>}, {pipeline_mode = #tpu.pipeline_mode<synchronous>, transform_indices = @transform_4, window_bounds = array<i64: 2, 128>}, {pipeline_mode = #tpu.pipeline_mode<synchronous>, transform_indices = @transform_5, window_bounds = array<i64: 8, 128>}]} {
    %c0 = arith.constant 0 : index
    %c0_0 = arith.constant 0 : index
    %0 = vector.load %arg1[%c0, %c0_0] : memref<512x128xbf16, #tpu.memory_space<vmem>>, vector<512x128xbf16>
    %c0_1 = arith.constant 0 : index
    %c0_2 = arith.constant 0 : index
    %1 = vector.load %arg2[%c0_1, %c0_2] : memref<128x128xbf16, #tpu.memory_space<vmem>>, vector<128x128xbf16>
    %cst = arith.constant dense<0.000000e+00> : vector<512x128xf32>
    %2 = tpu.matmul %0, %1, %cst {dimension_numbers = #tpu.dot_dimension_numbers<[1], [0], [0], [1], [0, 0, 1, 1], [], []>} : vector<512x128xbf16>, vector<128x128xbf16>, vector<512x128xf32> -> vector<512x128xf32>
    %cst_3 = arith.constant dense<0.000000e+00> : vector<128xf32>
    %3 = vector.multi_reduction <add>, %2, %cst_3 [0] : vector<512x128xf32> to vector<128xf32>
    %4 = vector.shape_cast %3 : vector<128xf32> to vector<1x128xf32>
    %cst_4 = arith.constant 5.120000e+02 : f32
    %5 = vector.broadcast %cst_4 : f32 to vector<1x128xf32>
    %6 = arith.divf %4, %5 : vector<1x128xf32>
    %7 = arith.mulf %2, %2 : vector<512x128xf32>
    %cst_5 = arith.constant dense<0.000000e+00> : vector<128xf32>
    %8 = vector.multi_reduction <add>, %7, %cst_5 [0] : vector<512x128xf32> to vector<128xf32>
    %9 = vector.shape_cast %8 : vector<128xf32> to vector<1x128xf32>
    %cst_6 = arith.constant 5.120000e+02 : f32
    %10 = vector.broadcast %cst_6 : f32 to vector<1x128xf32>
    %11 = arith.divf %9, %10 : vector<1x128xf32>
    %12 = arith.mulf %6, %6 : vector<1x128xf32>
    %13 = arith.subf %11, %12 : vector<1x128xf32>
    %14 = vector.broadcast %6 : vector<1x128xf32> to vector<512x128xf32>
    %15 = arith.subf %2, %14 : vector<512x128xf32>
    %cst_7 = arith.constant 9.99999974E-6 : f32
    %16 = vector.broadcast %cst_7 : f32 to vector<1x128xf32>
    %17 = arith.addf %13, %16 : vector<1x128xf32>
    %18 = math.rsqrt %17 : vector<1x128xf32>
    %19 = vector.broadcast %18 : vector<1x128xf32> to vector<512x128xf32>
    %20 = arith.mulf %15, %19 : vector<512x128xf32>
    %c0_8 = arith.constant 0 : index
    %c0_9 = arith.constant 0 : index
    %21 = vector.load %arg3[%c0_8, %c0_9] : memref<2x128xf32, #tpu.memory_space<vmem>>, vector<1x128xf32>
    %22 = vector.broadcast %21 : vector<1x128xf32> to vector<512x128xf32>
    %23 = arith.mulf %20, %22 : vector<512x128xf32>
    %c1 = arith.constant 1 : index
    %c0_10 = arith.constant 0 : index
    %24 = vector.load %arg3[%c1, %c0_10] : memref<2x128xf32, #tpu.memory_space<vmem>>, vector<1x128xf32>
    %25 = vector.broadcast %24 : vector<1x128xf32> to vector<512x128xf32>
    %26 = arith.addf %23, %25 : vector<512x128xf32>
    %27 = arith.truncf %26 : vector<512x128xf32> to vector<512x128xbf16>
    %28 = vector.shape_cast %27 : vector<512x128xbf16> to vector<16x32x128xbf16>
    %29 = vector.extract_strided_slice %28 {offsets = [0, 0, 0], sizes = [1, 32, 48], strides = [1, 1, 1]} : vector<16x32x128xbf16> to vector<1x32x48xbf16>
    %30 = vector.shape_cast %29 : vector<1x32x48xbf16> to vector<32x48xbf16>
    %c0_11 = arith.constant 0 : index
    %c0_12 = arith.constant 0 : index
    %31 = vector.load %arg7[%c0_11, %c0_12] : memref<32x768xbf16, #tpu.memory_space<vmem>>, vector<32x48xbf16>
    tpu.vector_store %arg7[%c0_11, %c0_12], %30 {strides = array<i32>} : memref<32x768xbf16, #tpu.memory_space<vmem>>, vector<32x48xbf16>,
    %32 = vector.extract_strided_slice %28 {offsets = [1, 0, 0], sizes = [1, 32, 48], strides = [1, 1, 1]} : vector<16x32x128xbf16> to vector<1x32x48xbf16>
    %33 = vector.shape_cast %32 : vector<1x32x48xbf16> to vector<32x48xbf16>
    %c0_13 = arith.constant 0 : index
    %c48 = arith.constant 48 : index
    %34 = vector.load %arg7[%c0_13, %c48] : memref<32x768xbf16, #tpu.memory_space<vmem>>, vector<32x48xbf16>
    tpu.vector_store %arg7[%c0_13, %c48], %33 {strides = array<i32>} : memref<32x768xbf16, #tpu.memory_space<vmem>>, vector<32x48xbf16>,
    %35 = vector.extract_strided_slice %28 {offsets = [2, 0, 0], sizes = [1, 32, 48], strides = [1, 1, 1]} : vector<16x32x128xbf16> to vector<1x32x48xbf16>
    %36 = vector.shape_cast %35 : vector<1x32x48xbf16> to vector<32x48xbf16>
    %c0_14 = arith.constant 0 : index
    %c96 = arith.constant 96 : index
    %37 = vector.load %arg7[%c0_14, %c96] : memref<32x768xbf16, #tpu.memory_space<vmem>>, vector<32x48xbf16>
    tpu.vector_store %arg7[%c0_14, %c96], %36 {strides = array<i32>} : memref<32x768xbf16, #tpu.memory_space<vmem>>, vector<32x48xbf16>,
    %38 = vector.extract_strided_slice %28 {offsets = [3, 0, 0], sizes = [1, 32, 48], strides = [1, 1, 1]} : vector<16x32x128xbf16> to vector<1x32x48xbf16>
    %39 = vector.shape_cast %38 : vector<1x32x48xbf16> to vector<32x48xbf16>
    %c0_15 = arith.constant 0 : index
    %c144 = arith.constant 144 : index
    %40 = vector.load %arg7[%c0_15, %c144] : memref<32x768xbf16, #tpu.memory_space<vmem>>, vector<32x48xbf16>
    tpu.vector_store %arg7[%c0_15, %c144], %39 {strides = array<i32>} : memref<32x768xbf16, #tpu.memory_space<vmem>>, vector<32x48xbf16>,
    %41 = vector.extract_strided_slice %28 {offsets = [4, 0, 0], sizes = [1, 32, 48], strides = [1, 1, 1]} : vector<16x32x128xbf16> to vector<1x32x48xbf16>
    %42 = vector.shape_cast %41 : vector<1x32x48xbf16> to vector<32x48xbf16>
    %c0_16 = arith.constant 0 : index
    %c192 = arith.constant 192 : index
    %43 = vector.load %arg7[%c0_16, %c192] : memref<32x768xbf16, #tpu.memory_space<vmem>>, vector<32x48xbf16>
    tpu.vector_store %arg7[%c0_16, %c192], %42 {strides = array<i32>} : memref<32x768xbf16, #tpu.memory_space<vmem>>, vector<32x48xbf16>,
    %44 = vector.extract_strided_slice %28 {offsets = [5, 0, 0], sizes = [1, 32, 48], strides = [1, 1, 1]} : vector<16x32x128xbf16> to vector<1x32x48xbf16>
    %45 = vector.shape_cast %44 : vector<1x32x48xbf16> to vector<32x48xbf16>
    %c0_17 = arith.constant 0 : index
    %c240 = arith.constant 240 : index
    %46 = vector.load %arg7[%c0_17, %c240] : memref<32x768xbf16, #tpu.memory_space<vmem>>, vector<32x48xbf16>
    tpu.vector_store %arg7[%c0_17, %c240], %45 {strides = array<i32>} : memref<32x768xbf16, #tpu.memory_space<vmem>>, vector<32x48xbf16>,
    %47 = vector.extract_strided_slice %28 {offsets = [6, 0, 0], sizes = [1, 32, 48], strides = [1, 1, 1]} : vector<16x32x128xbf16> to vector<1x32x48xbf16>
    %48 = vector.shape_cast %47 : vector<1x32x48xbf16> to vector<32x48xbf16>
    %c0_18 = arith.constant 0 : index
    %c288 = arith.constant 288 : index
    %49 = vector.load %arg7[%c0_18, %c288] : memref<32x768xbf16, #tpu.memory_space<vmem>>, vector<32x48xbf16>
    tpu.vector_store %arg7[%c0_18, %c288], %48 {strides = array<i32>} : memref<32x768xbf16, #tpu.memory_space<vmem>>, vector<32x48xbf16>,
    %50 = vector.extract_strided_slice %28 {offsets = [7, 0, 0], sizes = [1, 32, 48], strides = [1, 1, 1]} : vector<16x32x128xbf16> to vector<1x32x48xbf16>
    %51 = vector.shape_cast %50 : vector<1x32x48xbf16> to vector<32x48xbf16>
    %c0_19 = arith.constant 0 : index
    %c336 = arith.constant 336 : index
    %52 = vector.load %arg7[%c0_19, %c336] : memref<32x768xbf16, #tpu.memory_space<vmem>>, vector<32x48xbf16>
    tpu.vector_store %arg7[%c0_19, %c336], %51 {strides = array<i32>} : memref<32x768xbf16, #tpu.memory_space<vmem>>, vector<32x48xbf16>,
    %53 = vector.extract_strided_slice %28 {offsets = [8, 0, 0], sizes = [1, 32, 48], strides = [1, 1, 1]} : vector<16x32x128xbf16> to vector<1x32x48xbf16>
    %54 = vector.shape_cast %53 : vector<1x32x48xbf16> to vector<32x48xbf16>
    %c0_20 = arith.constant 0 : index
    %c384 = arith.constant 384 : index
    %55 = vector.load %arg7[%c0_20, %c384] : memref<32x768xbf16, #tpu.memory_space<vmem>>, vector<32x48xbf16>
    tpu.vector_store %arg7[%c0_20, %c384], %54 {strides = array<i32>} : memref<32x768xbf16, #tpu.memory_space<vmem>>, vector<32x48xbf16>,
    %56 = vector.extract_strided_slice %28 {offsets = [9, 0, 0], sizes = [1, 32, 48], strides = [1, 1, 1]} : vector<16x32x128xbf16> to vector<1x32x48xbf16>
    %57 = vector.shape_cast %56 : vector<1x32x48xbf16> to vector<32x48xbf16>
    %c0_21 = arith.constant 0 : index
    %c432 = arith.constant 432 : index
    %58 = vector.load %arg7[%c0_21, %c432] : memref<32x768xbf16, #tpu.memory_space<vmem>>, vector<32x48xbf16>
    tpu.vector_store %arg7[%c0_21, %c432], %57 {strides = array<i32>} : memref<32x768xbf16, #tpu.memory_space<vmem>>, vector<32x48xbf16>,
    %59 = vector.extract_strided_slice %28 {offsets = [10, 0, 0], sizes = [1, 32, 48], strides = [1, 1, 1]} : vector<16x32x128xbf16> to vector<1x32x48xbf16>
    %60 = vector.shape_cast %59 : vector<1x32x48xbf16> to vector<32x48xbf16>
    %c0_22 = arith.constant 0 : index
    %c480 = arith.constant 480 : index
    %61 = vector.load %arg7[%c0_22, %c480] : memref<32x768xbf16, #tpu.memory_space<vmem>>, vector<32x48xbf16>
    tpu.vector_store %arg7[%c0_22, %c480], %60 {strides = array<i32>} : memref<32x768xbf16, #tpu.memory_space<vmem>>, vector<32x48xbf16>,
    %62 = vector.extract_strided_slice %28 {offsets = [11, 0, 0], sizes = [1, 32, 48], strides = [1, 1, 1]} : vector<16x32x128xbf16> to vector<1x32x48xbf16>
    %63 = vector.shape_cast %62 : vector<1x32x48xbf16> to vector<32x48xbf16>
    %c0_23 = arith.constant 0 : index
    %c528 = arith.constant 528 : index
    %64 = vector.load %arg7[%c0_23, %c528] : memref<32x768xbf16, #tpu.memory_space<vmem>>, vector<32x48xbf16>
    tpu.vector_store %arg7[%c0_23, %c528], %63 {strides = array<i32>} : memref<32x768xbf16, #tpu.memory_space<vmem>>, vector<32x48xbf16>,
    %65 = vector.extract_strided_slice %28 {offsets = [12, 0, 0], sizes = [1, 32, 48], strides = [1, 1, 1]} : vector<16x32x128xbf16> to vector<1x32x48xbf16>
    %66 = vector.shape_cast %65 : vector<1x32x48xbf16> to vector<32x48xbf16>
    %c0_24 = arith.constant 0 : index
    %c576 = arith.constant 576 : index
    %67 = vector.load %arg7[%c0_24, %c576] : memref<32x768xbf16, #tpu.memory_space<vmem>>, vector<32x48xbf16>
    tpu.vector_store %arg7[%c0_24, %c576], %66 {strides = array<i32>} : memref<32x768xbf16, #tpu.memory_space<vmem>>, vector<32x48xbf16>,
    %68 = vector.extract_strided_slice %28 {offsets = [13, 0, 0], sizes = [1, 32, 48], strides = [1, 1, 1]} : vector<16x32x128xbf16> to vector<1x32x48xbf16>
    %69 = vector.shape_cast %68 : vector<1x32x48xbf16> to vector<32x48xbf16>
    %c0_25 = arith.constant 0 : index
    %c624 = arith.constant 624 : index
    %70 = vector.load %arg7[%c0_25, %c624] : memref<32x768xbf16, #tpu.memory_space<vmem>>, vector<32x48xbf16>
    tpu.vector_store %arg7[%c0_25, %c624], %69 {strides = array<i32>} : memref<32x768xbf16, #tpu.memory_space<vmem>>, vector<32x48xbf16>,
    %71 = vector.extract_strided_slice %28 {offsets = [14, 0, 0], sizes = [1, 32, 48], strides = [1, 1, 1]} : vector<16x32x128xbf16> to vector<1x32x48xbf16>
    %72 = vector.shape_cast %71 : vector<1x32x48xbf16> to vector<32x48xbf16>
    %c0_26 = arith.constant 0 : index
    %c672 = arith.constant 672 : index
    %73 = vector.load %arg7[%c0_26, %c672] : memref<32x768xbf16, #tpu.memory_space<vmem>>, vector<32x48xbf16>
    tpu.vector_store %arg7[%c0_26, %c672], %72 {strides = array<i32>} : memref<32x768xbf16, #tpu.memory_space<vmem>>, vector<32x48xbf16>,
    %74 = vector.extract_strided_slice %28 {offsets = [15, 0, 0], sizes = [1, 32, 48], strides = [1, 1, 1]} : vector<16x32x128xbf16> to vector<1x32x48xbf16>
    %75 = vector.shape_cast %74 : vector<1x32x48xbf16> to vector<32x48xbf16>
    %c0_27 = arith.constant 0 : index
    %c720 = arith.constant 720 : index
    %76 = vector.load %arg7[%c0_27, %c720] : memref<32x768xbf16, #tpu.memory_space<vmem>>, vector<32x48xbf16>
    tpu.vector_store %arg7[%c0_27, %c720], %75 {strides = array<i32>} : memref<32x768xbf16, #tpu.memory_space<vmem>>, vector<32x48xbf16>,
    %c0_28 = arith.constant 0 : index
    %c0_29 = arith.constant 0 : index
    %77 = vector.load %arg7[%c0_28, %c0_29] : memref<32x768xbf16, #tpu.memory_space<vmem>>, vector<4x768xbf16>
    %78 = vector.extract_strided_slice %77 {offsets = [0, 0], sizes = [4, 720], strides = [1, 1]} : vector<4x768xbf16> to vector<4x720xbf16>
    %79 = vector.extract_strided_slice %77 {offsets = [0, 48], sizes = [4, 720], strides = [1, 1]} : vector<4x768xbf16> to vector<4x720xbf16>
    %80 = tpu.concatenate %78, %79 in 0 : vector<4x720xbf16>, vector<4x720xbf16> -> vector<8x720xbf16>
    %c0_30 = arith.constant 0 : index
    %c0_31 = arith.constant 0 : index
    %c0_32 = arith.constant 0 : index
    %81 = vector.load %arg4[%c0_30, %c0_31, %c0_32] : memref<15x720x128xbf16, #tpu.memory_space<vmem>>, vector<1x720x128xbf16>
    %82 = vector.shape_cast %81 : vector<1x720x128xbf16> to vector<720x128xbf16>
    %cst_33 = arith.constant dense<0.000000e+00> : vector<8x128xf32>
    %83 = tpu.matmul %80, %82, %cst_33 {dimension_numbers = #tpu.dot_dimension_numbers<[1], [0], [0], [1], [0, 0, 1, 1], [], []>} : vector<8x720xbf16>, vector<720x128xbf16>, vector<8x128xf32> -> vector<8x128xf32>
    %c2 = arith.constant 2 : index
    %c0_34 = arith.constant 0 : index
    %84 = vector.load %arg7[%c2, %c0_34] : memref<32x768xbf16, #tpu.memory_space<vmem>>, vector<4x768xbf16>
    %85 = vector.extract_strided_slice %84 {offsets = [0, 0], sizes = [4, 720], strides = [1, 1]} : vector<4x768xbf16> to vector<4x720xbf16>
    %86 = vector.extract_strided_slice %84 {offsets = [0, 48], sizes = [4, 720], strides = [1, 1]} : vector<4x768xbf16> to vector<4x720xbf16>
    %87 = tpu.concatenate %85, %86 in 0 : vector<4x720xbf16>, vector<4x720xbf16> -> vector<8x720xbf16>
    %c1_35 = arith.constant 1 : index
    %c0_36 = arith.constant 0 : index
    %c0_37 = arith.constant 0 : index
    %88 = vector.load %arg4[%c1_35, %c0_36, %c0_37] : memref<15x720x128xbf16, #tpu.memory_space<vmem>>, vector<1x720x128xbf16>
    %89 = vector.shape_cast %88 : vector<1x720x128xbf16> to vector<720x128xbf16>
    %cst_38 = arith.constant dense<0.000000e+00> : vector<8x128xf32>
    %90 = tpu.matmul %87, %89, %cst_38 {dimension_numbers = #tpu.dot_dimension_numbers<[1], [0], [0], [1], [0, 0, 1, 1], [], []>} : vector<8x720xbf16>, vector<720x128xbf16>, vector<8x128xf32> -> vector<8x128xf32>
    %91 = arith.addf %83, %90 : vector<8x128xf32>
    %c4 = arith.constant 4 : index
    %c0_39 = arith.constant 0 : index
    %92 = vector.load %arg7[%c4, %c0_39] : memref<32x768xbf16, #tpu.memory_space<vmem>>, vector<4x768xbf16>
    %93 = vector.extract_strided_slice %92 {offsets = [0, 0], sizes = [4, 720], strides = [1, 1]} : vector<4x768xbf16> to vector<4x720xbf16>
    %94 = vector.extract_strided_slice %92 {offsets = [0, 48], sizes = [4, 720], strides = [1, 1]} : vector<4x768xbf16> to vector<4x720xbf16>
    %95 = tpu.concatenate %93, %94 in 0 : vector<4x720xbf16>, vector<4x720xbf16> -> vector<8x720xbf16>
    %c2_40 = arith.constant 2 : index
    %c0_41 = arith.constant 0 : index
    %c0_42 = arith.constant 0 : index
    %96 = vector.load %arg4[%c2_40, %c0_41, %c0_42] : memref<15x720x128xbf16, #tpu.memory_space<vmem>>, vector<1x720x128xbf16>
    %97 = vector.shape_cast %96 : vector<1x720x128xbf16> to vector<720x128xbf16>
    %cst_43 = arith.constant dense<0.000000e+00> : vector<8x128xf32>
    %98 = tpu.matmul %95, %97, %cst_43 {dimension_numbers = #tpu.dot_dimension_numbers<[1], [0], [0], [1], [0, 0, 1, 1], [], []>} : vector<8x720xbf16>, vector<720x128xbf16>, vector<8x128xf32> -> vector<8x128xf32>
    %99 = arith.addf %91, %98 : vector<8x128xf32>
    %c6 = arith.constant 6 : index
    %c0_44 = arith.constant 0 : index
    %100 = vector.load %arg7[%c6, %c0_44] : memref<32x768xbf16, #tpu.memory_space<vmem>>, vector<4x768xbf16>
    %101 = vector.extract_strided_slice %100 {offsets = [0, 0], sizes = [4, 720], strides = [1, 1]} : vector<4x768xbf16> to vector<4x720xbf16>
    %102 = vector.extract_strided_slice %100 {offsets = [0, 48], sizes = [4, 720], strides = [1, 1]} : vector<4x768xbf16> to vector<4x720xbf16>
    %103 = tpu.concatenate %101, %102 in 0 : vector<4x720xbf16>, vector<4x720xbf16> -> vector<8x720xbf16>
    %c3 = arith.constant 3 : index
    %c0_45 = arith.constant 0 : index
    %c0_46 = arith.constant 0 : index
    %104 = vector.load %arg4[%c3, %c0_45, %c0_46] : memref<15x720x128xbf16, #tpu.memory_space<vmem>>, vector<1x720x128xbf16>
    %105 = vector.shape_cast %104 : vector<1x720x128xbf16> to vector<720x128xbf16>
    %cst_47 = arith.constant dense<0.000000e+00> : vector<8x128xf32>
    %106 = tpu.matmul %103, %105, %cst_47 {dimension_numbers = #tpu.dot_dimension_numbers<[1], [0], [0], [1], [0, 0, 1, 1], [], []>} : vector<8x720xbf16>, vector<720x128xbf16>, vector<8x128xf32> -> vector<8x128xf32>
    %107 = arith.addf %99, %106 : vector<8x128xf32>
    %c8 = arith.constant 8 : index
    %c0_48 = arith.constant 0 : index
    %108 = vector.load %arg7[%c8, %c0_48] : memref<32x768xbf16, #tpu.memory_space<vmem>>, vector<4x768xbf16>
    %109 = vector.extract_strided_slice %108 {offsets = [0, 0], sizes = [4, 720], strides = [1, 1]} : vector<4x768xbf16> to vector<4x720xbf16>
    %110 = vector.extract_strided_slice %108 {offsets = [0, 48], sizes = [4, 720], strides = [1, 1]} : vector<4x768xbf16> to vector<4x720xbf16>
    %111 = tpu.concatenate %109, %110 in 0 : vector<4x720xbf16>, vector<4x720xbf16> -> vector<8x720xbf16>
    %c4_49 = arith.constant 4 : index
    %c0_50 = arith.constant 0 : index
    %c0_51 = arith.constant 0 : index
    %112 = vector.load %arg4[%c4_49, %c0_50, %c0_51] : memref<15x720x128xbf16, #tpu.memory_space<vmem>>, vector<1x720x128xbf16>
    %113 = vector.shape_cast %112 : vector<1x720x128xbf16> to vector<720x128xbf16>
    %cst_52 = arith.constant dense<0.000000e+00> : vector<8x128xf32>
    %114 = tpu.matmul %111, %113, %cst_52 {dimension_numbers = #tpu.dot_dimension_numbers<[1], [0], [0], [1], [0, 0, 1, 1], [], []>} : vector<8x720xbf16>, vector<720x128xbf16>, vector<8x128xf32> -> vector<8x128xf32>
    %115 = arith.addf %107, %114 : vector<8x128xf32>
    %c10 = arith.constant 10 : index
    %c0_53 = arith.constant 0 : index
    %116 = vector.load %arg7[%c10, %c0_53] : memref<32x768xbf16, #tpu.memory_space<vmem>>, vector<4x768xbf16>
    %117 = vector.extract_strided_slice %116 {offsets = [0, 0], sizes = [4, 720], strides = [1, 1]} : vector<4x768xbf16> to vector<4x720xbf16>
    %118 = vector.extract_strided_slice %116 {offsets = [0, 48], sizes = [4, 720], strides = [1, 1]} : vector<4x768xbf16> to vector<4x720xbf16>
    %119 = tpu.concatenate %117, %118 in 0 : vector<4x720xbf16>, vector<4x720xbf16> -> vector<8x720xbf16>
    %c5 = arith.constant 5 : index
    %c0_54 = arith.constant 0 : index
    %c0_55 = arith.constant 0 : index
    %120 = vector.load %arg4[%c5, %c0_54, %c0_55] : memref<15x720x128xbf16, #tpu.memory_space<vmem>>, vector<1x720x128xbf16>
    %121 = vector.shape_cast %120 : vector<1x720x128xbf16> to vector<720x128xbf16>
    %cst_56 = arith.constant dense<0.000000e+00> : vector<8x128xf32>
    %122 = tpu.matmul %119, %121, %cst_56 {dimension_numbers = #tpu.dot_dimension_numbers<[1], [0], [0], [1], [0, 0, 1, 1], [], []>} : vector<8x720xbf16>, vector<720x128xbf16>, vector<8x128xf32> -> vector<8x128xf32>
    %123 = arith.addf %115, %122 : vector<8x128xf32>
    %c12 = arith.constant 12 : index
    %c0_57 = arith.constant 0 : index
    %124 = vector.load %arg7[%c12, %c0_57] : memref<32x768xbf16, #tpu.memory_space<vmem>>, vector<4x768xbf16>
    %125 = vector.extract_strided_slice %124 {offsets = [0, 0], sizes = [4, 720], strides = [1, 1]} : vector<4x768xbf16> to vector<4x720xbf16>
    %126 = vector.extract_strided_slice %124 {offsets = [0, 48], sizes = [4, 720], strides = [1, 1]} : vector<4x768xbf16> to vector<4x720xbf16>
    %127 = tpu.concatenate %125, %126 in 0 : vector<4x720xbf16>, vector<4x720xbf16> -> vector<8x720xbf16>
    %c6_58 = arith.constant 6 : index
    %c0_59 = arith.constant 0 : index
    %c0_60 = arith.constant 0 : index
    %128 = vector.load %arg4[%c6_58, %c0_59, %c0_60] : memref<15x720x128xbf16, #tpu.memory_space<vmem>>, vector<1x720x128xbf16>
    %129 = vector.shape_cast %128 : vector<1x720x128xbf16> to vector<720x128xbf16>
    %cst_61 = arith.constant dense<0.000000e+00> : vector<8x128xf32>
    %130 = tpu.matmul %127, %129, %cst_61 {dimension_numbers = #tpu.dot_dimension_numbers<[1], [0], [0], [1], [0, 0, 1, 1], [], []>} : vector<8x720xbf16>, vector<720x128xbf16>, vector<8x128xf32> -> vector<8x128xf32>
    %131 = arith.addf %123, %130 : vector<8x128xf32>
    %c14 = arith.constant 14 : index
    %c0_62 = arith.constant 0 : index
    %132 = vector.load %arg7[%c14, %c0_62] : memref<32x768xbf16, #tpu.memory_space<vmem>>, vector<4x768xbf16>
    %133 = vector.extract_strided_slice %132 {offsets = [0, 0], sizes = [4, 720], strides = [1, 1]} : vector<4x768xbf16> to vector<4x720xbf16>
    %134 = vector.extract_strided_slice %132 {offsets = [0, 48], sizes = [4, 720], strides = [1, 1]} : vector<4x768xbf16> to vector<4x720xbf16>
    %135 = tpu.concatenate %133, %134 in 0 : vector<4x720xbf16>, vector<4x720xbf16> -> vector<8x720xbf16>
    %c7 = arith.constant 7 : index
    %c0_63 = arith.constant 0 : index
    %c0_64 = arith.constant 0 : index
    %136 = vector.load %arg4[%c7, %c0_63, %c0_64] : memref<15x720x128xbf16, #tpu.memory_space<vmem>>, vector<1x720x128xbf16>
    %137 = vector.shape_cast %136 : vector<1x720x128xbf16> to vector<720x128xbf16>
    %cst_65 = arith.constant dense<0.000000e+00> : vector<8x128xf32>
    %138 = tpu.matmul %135, %137, %cst_65 {dimension_numbers = #tpu.dot_dimension_numbers<[1], [0], [0], [1], [0, 0, 1, 1], [], []>} : vector<8x720xbf16>, vector<720x128xbf16>, vector<8x128xf32> -> vector<8x128xf32>
    %139 = arith.addf %131, %138 : vector<8x128xf32>
    %c16 = arith.constant 16 : index
    %c0_66 = arith.constant 0 : index
    %140 = vector.load %arg7[%c16, %c0_66] : memref<32x768xbf16, #tpu.memory_space<vmem>>, vector<4x768xbf16>
    %141 = vector.extract_strided_slice %140 {offsets = [0, 0], sizes = [4, 720], strides = [1, 1]} : vector<4x768xbf16> to vector<4x720xbf16>
    %142 = vector.extract_strided_slice %140 {offsets = [0, 48], sizes = [4, 720], strides = [1, 1]} : vector<4x768xbf16> to vector<4x720xbf16>
    %143 = tpu.concatenate %141, %142 in 0 : vector<4x720xbf16>, vector<4x720xbf16> -> vector<8x720xbf16>
    %c8_67 = arith.constant 8 : index
    %c0_68 = arith.constant 0 : index
    %c0_69 = arith.constant 0 : index
    %144 = vector.load %arg4[%c8_67, %c0_68, %c0_69] : memref<15x720x128xbf16, #tpu.memory_space<vmem>>, vector<1x720x128xbf16>
    %145 = vector.shape_cast %144 : vector<1x720x128xbf16> to vector<720x128xbf16>
    %cst_70 = arith.constant dense<0.000000e+00> : vector<8x128xf32>
    %146 = tpu.matmul %143, %145, %cst_70 {dimension_numbers = #tpu.dot_dimension_numbers<[1], [0], [0], [1], [0, 0, 1, 1], [], []>} : vector<8x720xbf16>, vector<720x128xbf16>, vector<8x128xf32> -> vector<8x128xf32>
    %147 = arith.addf %139, %146 : vector<8x128xf32>
    %c18 = arith.constant 18 : index
    %c0_71 = arith.constant 0 : index
    %148 = vector.load %arg7[%c18, %c0_71] : memref<32x768xbf16, #tpu.memory_space<vmem>>, vector<4x768xbf16>
    %149 = vector.extract_strided_slice %148 {offsets = [0, 0], sizes = [4, 720], strides = [1, 1]} : vector<4x768xbf16> to vector<4x720xbf16>
    %150 = vector.extract_strided_slice %148 {offsets = [0, 48], sizes = [4, 720], strides = [1, 1]} : vector<4x768xbf16> to vector<4x720xbf16>
    %151 = tpu.concatenate %149, %150 in 0 : vector<4x720xbf16>, vector<4x720xbf16> -> vector<8x720xbf16>
    %c9 = arith.constant 9 : index
    %c0_72 = arith.constant 0 : index
    %c0_73 = arith.constant 0 : index
    %152 = vector.load %arg4[%c9, %c0_72, %c0_73] : memref<15x720x128xbf16, #tpu.memory_space<vmem>>, vector<1x720x128xbf16>
    %153 = vector.shape_cast %152 : vector<1x720x128xbf16> to vector<720x128xbf16>
    %cst_74 = arith.constant dense<0.000000e+00> : vector<8x128xf32>
    %154 = tpu.matmul %151, %153, %cst_74 {dimension_numbers = #tpu.dot_dimension_numbers<[1], [0], [0], [1], [0, 0, 1, 1], [], []>} : vector<8x720xbf16>, vector<720x128xbf16>, vector<8x128xf32> -> vector<8x128xf32>
    %155 = arith.addf %147, %154 : vector<8x128xf32>
    %c20 = arith.constant 20 : index
    %c0_75 = arith.constant 0 : index
    %156 = vector.load %arg7[%c20, %c0_75] : memref<32x768xbf16, #tpu.memory_space<vmem>>, vector<4x768xbf16>
    %157 = vector.extract_strided_slice %156 {offsets = [0, 0], sizes = [4, 720], strides = [1, 1]} : vector<4x768xbf16> to vector<4x720xbf16>
    %158 = vector.extract_strided_slice %156 {offsets = [0, 48], sizes = [4, 720], strides = [1, 1]} : vector<4x768xbf16> to vector<4x720xbf16>
    %159 = tpu.concatenate %157, %158 in 0 : vector<4x720xbf16>, vector<4x720xbf16> -> vector<8x720xbf16>
    %c10_76 = arith.constant 10 : index
    %c0_77 = arith.constant 0 : index
    %c0_78 = arith.constant 0 : index
    %160 = vector.load %arg4[%c10_76, %c0_77, %c0_78] : memref<15x720x128xbf16, #tpu.memory_space<vmem>>, vector<1x720x128xbf16>
    %161 = vector.shape_cast %160 : vector<1x720x128xbf16> to vector<720x128xbf16>
    %cst_79 = arith.constant dense<0.000000e+00> : vector<8x128xf32>
    %162 = tpu.matmul %159, %161, %cst_79 {dimension_numbers = #tpu.dot_dimension_numbers<[1], [0], [0], [1], [0, 0, 1, 1], [], []>} : vector<8x720xbf16>, vector<720x128xbf16>, vector<8x128xf32> -> vector<8x128xf32>
    %163 = arith.addf %155, %162 : vector<8x128xf32>
    %c22 = arith.constant 22 : index
    %c0_80 = arith.constant 0 : index
    %164 = vector.load %arg7[%c22, %c0_80] : memref<32x768xbf16, #tpu.memory_space<vmem>>, vector<4x768xbf16>
    %165 = vector.extract_strided_slice %164 {offsets = [0, 0], sizes = [4, 720], strides = [1, 1]} : vector<4x768xbf16> to vector<4x720xbf16>
    %166 = vector.extract_strided_slice %164 {offsets = [0, 48], sizes = [4, 720], strides = [1, 1]} : vector<4x768xbf16> to vector<4x720xbf16>
    %167 = tpu.concatenate %165, %166 in 0 : vector<4x720xbf16>, vector<4x720xbf16> -> vector<8x720xbf16>
    %c11 = arith.constant 11 : index
    %c0_81 = arith.constant 0 : index
    %c0_82 = arith.constant 0 : index
    %168 = vector.load %arg4[%c11, %c0_81, %c0_82] : memref<15x720x128xbf16, #tpu.memory_space<vmem>>, vector<1x720x128xbf16>
    %169 = vector.shape_cast %168 : vector<1x720x128xbf16> to vector<720x128xbf16>
    %cst_83 = arith.constant dense<0.000000e+00> : vector<8x128xf32>
    %170 = tpu.matmul %167, %169, %cst_83 {dimension_numbers = #tpu.dot_dimension_numbers<[1], [0], [0], [1], [0, 0, 1, 1], [], []>} : vector<8x720xbf16>, vector<720x128xbf16>, vector<8x128xf32> -> vector<8x128xf32>
    %171 = arith.addf %163, %170 : vector<8x128xf32>
    %c24 = arith.constant 24 : index
    %c0_84 = arith.constant 0 : index
    %172 = vector.load %arg7[%c24, %c0_84] : memref<32x768xbf16, #tpu.memory_space<vmem>>, vector<4x768xbf16>
    %173 = vector.extract_strided_slice %172 {offsets = [0, 0], sizes = [4, 720], strides = [1, 1]} : vector<4x768xbf16> to vector<4x720xbf16>
    %174 = vector.extract_strided_slice %172 {offsets = [0, 48], sizes = [4, 720], strides = [1, 1]} : vector<4x768xbf16> to vector<4x720xbf16>
    %175 = tpu.concatenate %173, %174 in 0 : vector<4x720xbf16>, vector<4x720xbf16> -> vector<8x720xbf16>
    %c12_85 = arith.constant 12 : index
    %c0_86 = arith.constant 0 : index
    %c0_87 = arith.constant 0 : index
    %176 = vector.load %arg4[%c12_85, %c0_86, %c0_87] : memref<15x720x128xbf16, #tpu.memory_space<vmem>>, vector<1x720x128xbf16>
    %177 = vector.shape_cast %176 : vector<1x720x128xbf16> to vector<720x128xbf16>
    %cst_88 = arith.constant dense<0.000000e+00> : vector<8x128xf32>
    %178 = tpu.matmul %175, %177, %cst_88 {dimension_numbers = #tpu.dot_dimension_numbers<[1], [0], [0], [1], [0, 0, 1, 1], [], []>} : vector<8x720xbf16>, vector<720x128xbf16>, vector<8x128xf32> -> vector<8x128xf32>
    %179 = arith.addf %171, %178 : vector<8x128xf32>
    %c26 = arith.constant 26 : index
    %c0_89 = arith.constant 0 : index
    %180 = vector.load %arg7[%c26, %c0_89] : memref<32x768xbf16, #tpu.memory_space<vmem>>, vector<4x768xbf16>
    %181 = vector.extract_strided_slice %180 {offsets = [0, 0], sizes = [4, 720], strides = [1, 1]} : vector<4x768xbf16> to vector<4x720xbf16>
    %182 = vector.extract_strided_slice %180 {offsets = [0, 48], sizes = [4, 720], strides = [1, 1]} : vector<4x768xbf16> to vector<4x720xbf16>
    %183 = tpu.concatenate %181, %182 in 0 : vector<4x720xbf16>, vector<4x720xbf16> -> vector<8x720xbf16>
    %c13 = arith.constant 13 : index
    %c0_90 = arith.constant 0 : index
    %c0_91 = arith.constant 0 : index
    %184 = vector.load %arg4[%c13, %c0_90, %c0_91] : memref<15x720x128xbf16, #tpu.memory_space<vmem>>, vector<1x720x128xbf16>
    %185 = vector.shape_cast %184 : vector<1x720x128xbf16> to vector<720x128xbf16>
    %cst_92 = arith.constant dense<0.000000e+00> : vector<8x128xf32>
    %186 = tpu.matmul %183, %185, %cst_92 {dimension_numbers = #tpu.dot_dimension_numbers<[1], [0], [0], [1], [0, 0, 1, 1], [], []>} : vector<8x720xbf16>, vector<720x128xbf16>, vector<8x128xf32> -> vector<8x128xf32>
    %187 = arith.addf %179, %186 : vector<8x128xf32>
    %c28 = arith.constant 28 : index
    %c0_93 = arith.constant 0 : index
    %188 = vector.load %arg7[%c28, %c0_93] : memref<32x768xbf16, #tpu.memory_space<vmem>>, vector<4x768xbf16>
    %189 = vector.extract_strided_slice %188 {offsets = [0, 0], sizes = [4, 720], strides = [1, 1]} : vector<4x768xbf16> to vector<4x720xbf16>
    %190 = vector.extract_strided_slice %188 {offsets = [0, 48], sizes = [4, 720], strides = [1, 1]} : vector<4x768xbf16> to vector<4x720xbf16>
    %191 = tpu.concatenate %189, %190 in 0 : vector<4x720xbf16>, vector<4x720xbf16> -> vector<8x720xbf16>
    %c14_94 = arith.constant 14 : index
    %c0_95 = arith.constant 0 : index
    %c0_96 = arith.constant 0 : index
    %192 = vector.load %arg4[%c14_94, %c0_95, %c0_96] : memref<15x720x128xbf16, #tpu.memory_space<vmem>>, vector<1x720x128xbf16>
    %193 = vector.shape_cast %192 : vector<1x720x128xbf16> to vector<720x128xbf16>
    %cst_97 = arith.constant dense<0.000000e+00> : vector<8x128xf32>
    %194 = tpu.matmul %191, %193, %cst_97 {dimension_numbers = #tpu.dot_dimension_numbers<[1], [0], [0], [1], [0, 0, 1, 1], [], []>} : vector<8x720xbf16>, vector<720x128xbf16>, vector<8x128xf32> -> vector<8x128xf32>
    %195 = arith.addf %187, %194 : vector<8x128xf32>
    %cst_98 = arith.constant dense<0.000000e+00> : vector<128xf32>
    %196 = vector.multi_reduction <add>, %195, %cst_98 [0] : vector<8x128xf32> to vector<128xf32>
    %197 = vector.shape_cast %196 : vector<128xf32> to vector<1x128xf32>
    %cst_99 = arith.constant 8.000000e+00 : f32
    %198 = vector.broadcast %cst_99 : f32 to vector<1x128xf32>
    %199 = arith.divf %197, %198 : vector<1x128xf32>
    %200 = arith.mulf %195, %195 : vector<8x128xf32>
    %cst_100 = arith.constant dense<0.000000e+00> : vector<128xf32>
    %201 = vector.multi_reduction <add>, %200, %cst_100 [0] : vector<8x128xf32> to vector<128xf32>
    %202 = vector.shape_cast %201 : vector<128xf32> to vector<1x128xf32>
    %cst_101 = arith.constant 8.000000e+00 : f32
    %203 = vector.broadcast %cst_101 : f32 to vector<1x128xf32>
    %204 = arith.divf %202, %203 : vector<1x128xf32>
    %205 = arith.mulf %199, %199 : vector<1x128xf32>
    %206 = arith.subf %204, %205 : vector<1x128xf32>
    %207 = vector.broadcast %199 : vector<1x128xf32> to vector<8x128xf32>
    %208 = arith.subf %195, %207 : vector<8x128xf32>
    %cst_102 = arith.constant 9.99999974E-6 : f32
    %209 = vector.broadcast %cst_102 : f32 to vector<1x128xf32>
    %210 = arith.addf %206, %209 : vector<1x128xf32>
    %211 = math.rsqrt %210 : vector<1x128xf32>
    %212 = vector.broadcast %211 : vector<1x128xf32> to vector<8x128xf32>
    %213 = arith.mulf %208, %212 : vector<8x128xf32>
    %c0_103 = arith.constant 0 : index
    %c0_104 = arith.constant 0 : index
    %214 = vector.load %arg5[%c0_103, %c0_104] : memref<2x128xf32, #tpu.memory_space<vmem>>, vector<1x128xf32>
    %215 = vector.broadcast %214 : vector<1x128xf32> to vector<8x128xf32>
    %216 = arith.mulf %213, %215 : vector<8x128xf32>
    %c1_105 = arith.constant 1 : index
    %c0_106 = arith.constant 0 : index
    %217 = vector.load %arg5[%c1_105, %c0_106] : memref<2x128xf32, #tpu.memory_space<vmem>>, vector<1x128xf32>
    %218 = vector.broadcast %217 : vector<1x128xf32> to vector<8x128xf32>
    %219 = arith.addf %216, %218 : vector<8x128xf32>
    %220 = arith.mulf %219, %219 : vector<8x128xf32>
    %221 = arith.mulf %220, %219 : vector<8x128xf32>
    %cst_107 = arith.constant 4.471500e-02 : f32
    %222 = vector.broadcast %cst_107 : f32 to vector<8x128xf32>
    %223 = arith.mulf %222, %221 : vector<8x128xf32>
    %224 = arith.addf %219, %223 : vector<8x128xf32>
    %cst_108 = arith.constant 0.797884583 : f32
    %225 = vector.broadcast %cst_108 : f32 to vector<8x128xf32>
    %226 = arith.mulf %224, %225 : vector<8x128xf32>
    %227 = math.tanh %226 : vector<8x128xf32>
    %cst_109 = arith.constant 5.000000e-01 : f32
    %228 = vector.broadcast %cst_109 : f32 to vector<8x128xf32>
    %229 = arith.mulf %228, %219 : vector<8x128xf32>
    %cst_110 = arith.constant 1.000000e+00 : f32
    %230 = vector.broadcast %cst_110 : f32 to vector<8x128xf32>
    %231 = arith.addf %227, %230 : vector<8x128xf32>
    %232 = arith.mulf %229, %231 : vector<8x128xf32>
    %c0_111 = arith.constant 0 : index
    %c0_112 = arith.constant 0 : index
    %233 = vector.load %arg6[%c0_111, %c0_112] : memref<8x128xf32, #tpu.memory_space<vmem>>, vector<8x128xf32>
    tpu.vector_store %arg6[%c0_111, %c0_112], %232 {strides = array<i32>} : memref<8x128xf32, #tpu.memory_space<vmem>>, vector<8x128xf32>,
    return
  }
  func.func @transform_0(%arg0: i32) -> (i32, i32) {
    %c0_i32 = arith.constant 0 : i32
    %c0_i32_0 = arith.constant 0 : i32
    %c0_i32_1 = arith.constant 0 : i32
    return %c0_i32, %c0_i32_0 : i32, i32
  }
  func.func @transform_1(%arg0: i32) -> (i32, i32) {
    %c0_i32 = arith.constant 0 : i32
    %c0_i32_0 = arith.constant 0 : i32
    %c0_i32_1 = arith.constant 0 : i32
    return %c0_i32, %c0_i32_0 : i32, i32
  }
  func.func @transform_2(%arg0: i32) -> (i32, i32) {
    %c0_i32 = arith.constant 0 : i32
    %c0_i32_0 = arith.constant 0 : i32
    %c0_i32_1 = arith.constant 0 : i32
    return %c0_i32, %c0_i32_0 : i32, i32
  }
  func.func @transform_3(%arg0: i32) -> (i32, i32, i32) {
    %c0_i32 = arith.constant 0 : i32
    %c0_i32_0 = arith.constant 0 : i32
    %c0_i32_1 = arith.constant 0 : i32
    %c0_i32_2 = arith.constant 0 : i32
    return %c0_i32, %c0_i32_0, %c0_i32_1 : i32, i32, i32
  }
  func.func @transform_4(%arg0: i32) -> (i32, i32) {
    %c0_i32 = arith.constant 0 : i32
    %c0_i32_0 = arith.constant 0 : i32
    %c0_i32_1 = arith.constant 0 : i32
    return %c0_i32, %c0_i32_0 : i32, i32
  }
  func.func @transform_5(%arg0: i32) -> (i32, i32) {
    %c0_i32 = arith.constant 0 : i32
    %c0_i32_0 = arith.constant 0 : i32
    %c0_i32_1 = arith.constant 0 : i32
    return %c0_i32, %c0_i32_0 : i32, i32
  }
}

</mosaic_0001>

<llo_original>
// kernel: _model_forward.1
$region0: #{_model_forward.1}
  #allocation0 [shape = 'u32[]', space=smem, size = 0x4, offset = 0x4, fixed_abs, tag = 'smem constant byte address 0x4 - core index']
  #allocation1 [shape = 'u32[144,128]{1,0:T(1,128)}', space=vmem, size = 0x12000, scoped, tag = 'internal scratch']
  #allocation2 [shape = 'bf16[32,768]{1,0:T(16,128)(2,1)}', space=vmem, size = 0xc000, scoped, tag = 'scratch operand']
  %s0 = inlined_call_operand.vmem [shape: bf16[512,128], index: 0, kind: input, shape index: {}]
  %s1 = inlined_call_operand.vmem [shape: bf16[128,128], index: 1, kind: input, shape index: {}]
  %s2 = inlined_call_operand.vmem [shape: f32[2,128], index: 2, kind: input, shape index: {}]
  %s3 = inlined_call_operand.vmem [shape: bf16[15,720,128], index: 3, kind: input, shape index: {}]
  %s4 = inlined_call_operand.vmem [shape: f32[2,128], index: 4, kind: input, shape index: {}]
  %s5 = inlined_call_operand.vmem [shape: f32[8,128], index: 5, kind: output, shape index: {}]
  %s6 = sld [smem:[#allocation0]]
  $region30: #{_model_forward.1} parent=0
    _
  %s8 = ssub.s32 1, %s6
  %s9 = scalar_select 0, %s8, %s6
  // Predicated region
  $region2: #{_model_forward.1} parent=0 // pred_check
    _
  $region3: #{_model_forward.1} parent=0 // pred_check_branch
    %11 = sbr.rel (0) target = $region5
  $region4: #{_model_forward.1} parent=0 // pred_region
    _
  $region5: #{_model_forward.1} parent=0 // pred_fallthru
    _
  // Predicated region
  $region6: #{_model_forward.1} parent=0 // pred_check
    _
  $region7: #{_model_forward.1} parent=0 // pred_check_branch
    %13 = sbr.rel (0) target = $region9
  $region8: #{_model_forward.1} parent=0 // pred_region
    _
  $region9: #{_model_forward.1} parent=0 // pred_fallthru
    _
  // Predicated region
  $region10: #{_model_forward.1} parent=0 // pred_check
    _
  $region11: #{_model_forward.1} parent=0 // pred_check_branch
    %15 = sbr.rel (0) target = $region13
  $region12: #{_model_forward.1} parent=0 // pred_region
    _
  $region13: #{_model_forward.1} parent=0 // pred_fallthru
    _
  // Predicated region
  $region14: #{_model_forward.1} parent=0 // pred_check
    _
  $region15: #{_model_forward.1} parent=0 // pred_check_branch
    %17 = sbr.rel (0) target = $region17
  $region16: #{_model_forward.1} parent=0 // pred_region
    _
  $region17: #{_model_forward.1} parent=0 // pred_fallthru
    _
  // Predicated region
  $region18: #{_model_forward.1} parent=0 // pred_check
    _
  $region19: #{_model_forward.1} parent=0 // pred_check_branch
    %19 = sbr.rel (0) target = $region21
  $region20: #{_model_forward.1} parent=0 // pred_region
    _
  $region21: #{_model_forward.1} parent=0 // pred_fallthru
    _
  %v21 = vld [vmem:[%s0] sm:$0xf]
  %v22 = vld [vmem:[%s0 + $0x4] sm:$0xf]
  %v23 = vld [vmem:[%s0 + $0x8] sm:$0xf]
  %v24 = vld [vmem:[%s0 + $0xc] sm:$0xf]
  %v25 = vld [vmem:[%s0 + $0x10] sm:$0xf]
  %v26 = vld [vmem:[%s0 + $0x14] sm:$0xf]
  %v27 = vld [vmem:[%s0 + $0x18] sm:$0xf]
  %v28 = vld [vmem:[%s0 + $0x1c] sm:$0xf]
  %v29 = vld [vmem:[%s0 + $0x20] sm:$0xf]
  %v30 = vld [vmem:[%s0 + $0x24] sm:$0xf]
  %v31 = vld [vmem:[%s0 + $0x28] sm:$0xf]
  %v32 = vld [vmem:[%s0 + $0x2c] sm:$0xf]
  %v33 = vld [vmem:[%s0 + $0x30] sm:$0xf]
  %v34 = vld [vmem:[%s0 + $0x34] sm:$0xf]
  %v35 = vld [vmem:[%s0 + $0x38] sm:$0xf]
  %v36 = vld [vmem:[%s0 + $0x3c] sm:$0xf]
  %v37 = vld [vmem:[%s0 + $0x40] sm:$0xf]
  %v38 = vld [vmem:[%s0 + $0x44] sm:$0xf]
  %v39 = vld [vmem:[%s0 + $0x48] sm:$0xf]
  %v40 = vld [vmem:[%s0 + $0x4c] sm:$0xf]
  %v41 = vld [vmem:[%s0 + $0x50] sm:$0xf]
  %v42 = vld [vmem:[%s0 + $0x54] sm:$0xf]
  %v43 = vld [vmem:[%s0 + $0x58] sm:$0xf]
  %v44 = vld [vmem:[%s0 + $0x5c] sm:$0xf]
  %v45 = vld [vmem:[%s0 + $0x60] sm:$0xf]
  %v46 = vld [vmem:[%s0 + $0x64] sm:$0xf]
  %v47 = vld [vmem:[%s0 + $0x68] sm:$0xf]
  %v48 = vld [vmem:[%s0 + $0x6c] sm:$0xf]
  %v49 = vld [vmem:[%s0 + $0x70] sm:$0xf]
  %v50 = vld [vmem:[%s0 + $0x74] sm:$0xf]
  %v51 = vld [vmem:[%s0 + $0x78] sm:$0xf]
  %v52 = vld [vmem:[%s0 + $0x7c] sm:$0xf]
  %v53 = vld [vmem:[%s0 + $0x80] sm:$0xf]
  %v54 = vld [vmem:[%s0 + $0x84] sm:$0xf]
  %v55 = vld [vmem:[%s0 + $0x88] sm:$0xf]
  %v56 = vld [vmem:[%s0 + $0x8c] sm:$0xf]
  %v57 = vld [vmem:[%s0 + $0x90] sm:$0xf]
  %v58 = vld [vmem:[%s0 + $0x94] sm:$0xf]
  %v59 = vld [vmem:[%s0 + $0x98] sm:$0xf]
  %v60 = vld [vmem:[%s0 + $0x9c] sm:$0xf]
  %v61 = vld [vmem:[%s0 + $0xa0] sm:$0xf]
  %v62 = vld [vmem:[%s0 + $0xa4] sm:$0xf]
  %v63 = vld [vmem:[%s0 + $0xa8] sm:$0xf]
  %v64 = vld [vmem:[%s0 + $0xac] sm:$0xf]
  %v65 = vld [vmem:[%s0 + $0xb0] sm:$0xf]
  %v66 = vld [vmem:[%s0 + $0xb4] sm:$0xf]
  %v67 = vld [vmem:[%s0 + $0xb8] sm:$0xf]
  %v68 = vld [vmem:[%s0 + $0xbc] sm:$0xf]
  %v69 = vld [vmem:[%s0 + $0xc0] sm:$0xf]
  %v70 = vld [vmem:[%s0 + $0xc4] sm:$0xf]
  %v71 = vld [vmem:[%s0 + $0xc8] sm:$0xf]
  %v72 = vld [vmem:[%s0 + $0xcc] sm:$0xf]
  %v73 = vld [vmem:[%s0 + $0xd0] sm:$0xf]
  %v74 = vld [vmem:[%s0 + $0xd4] sm:$0xf]
  %v75 = vld [vmem:[%s0 + $0xd8] sm:$0xf]
  %v76 = vld [vmem:[%s0 + $0xdc] sm:$0xf]
  %v77 = vld [vmem:[%s0 + $0xe0] sm:$0xf]
  %v78 = vld [vmem:[%s0 + $0xe4] sm:$0xf]
  %v79 = vld [vmem:[%s0 + $0xe8] sm:$0xf]
  %v80 = vld [vmem:[%s0 + $0xec] sm:$0xf]
  %v81 = vld [vmem:[%s0 + $0xf0] sm:$0xf]
  %v82 = vld [vmem:[%s0 + $0xf4] sm:$0xf]
  %v83 = vld [vmem:[%s0 + $0xf8] sm:$0xf]
  %v84 = vld [vmem:[%s0 + $0xfc] sm:$0xf]
  %v85 = vld [vmem:[%s1] sm:$0xf]
  %v86 = vld [vmem:[%s1 + $0x4] sm:$0xf]
  %v87 = vld [vmem:[%s1 + $0x8] sm:$0xf]
  %v88 = vld [vmem:[%s1 + $0xc] sm:$0xf]
  %v89 = vld [vmem:[%s1 + $0x10] sm:$0xf]
  %v90 = vld [vmem:[%s1 + $0x14] sm:$0xf]
  %v91 = vld [vmem:[%s1 + $0x18] sm:$0xf]
  %v92 = vld [vmem:[%s1 + $0x1c] sm:$0xf]
  %v93 = vld [vmem:[%s1 + $0x20] sm:$0xf]
  %v94 = vld [vmem:[%s1 + $0x24] sm:$0xf]
  %v95 = vld [vmem:[%s1 + $0x28] sm:$0xf]
  %v96 = vld [vmem:[%s1 + $0x2c] sm:$0xf]
  %v97 = vld [vmem:[%s1 + $0x30] sm:$0xf]
  %v98 = vld [vmem:[%s1 + $0x34] sm:$0xf]
  %v99 = vld [vmem:[%s1 + $0x38] sm:$0xf]
  %v100 = vld [vmem:[%s1 + $0x3c] sm:$0xf]
  %v165 = vunpack.c.l.b16 %v21
  %v166 = vunpack.c.l.b16 %v22
  %v167 = vunpack.c.l.b16 %v23
  %v168 = vunpack.c.l.b16 %v24
  %v169 = vunpack.c.l.b16 %v25
  %v170 = vunpack.c.l.b16 %v26
  %v171 = vunpack.c.l.b16 %v27
  %v172 = vunpack.c.l.b16 %v28
  %v173 = vunpack.c.l.b16 %v29
  %v174 = vunpack.c.l.b16 %v30
  %v175 = vunpack.c.l.b16 %v31
  %v176 = vunpack.c.l.b16 %v32
  %v177 = vunpack.c.l.b16 %v33
  %v178 = vunpack.c.l.b16 %v34
  %v179 = vunpack.c.l.b16 %v35
  %v180 = vunpack.c.l.b16 %v36
  %v181 = vunpack.c.l.b16 %v37
  %v182 = vunpack.c.l.b16 %v38
  %v183 = vunpack.c.l.b16 %v39
  %v184 = vunpack.c.l.b16 %v40
  %v185 = vunpack.c.l.b16 %v41
  %v186 = vunpack.c.l.b16 %v42
  %v187 = vunpack.c.l.b16 %v43
  %v188 = vunpack.c.l.b16 %v44
  %v189 = vunpack.c.l.b16 %v45
  %v190 = vunpack.c.l.b16 %v46
  %v191 = vunpack.c.l.b16 %v47
  %v192 = vunpack.c.l.b16 %v48
  %v193 = vunpack.c.l.b16 %v49
  %v194 = vunpack.c.l.b16 %v50
  %v195 = vunpack.c.l.b16 %v51
  %v196 = vunpack.c.l.b16 %v52
  %v197 = vunpack.c.l.b16 %v53
  %v198 = vunpack.c.l.b16 %v54
  %v199 = vunpack.c.l.b16 %v55
  %v200 = vunpack.c.l.b16 %v56
  %v201 = vunpack.c.l.b16 %v57
  %v202 = vunpack.c.l.b16 %v58
  %v203 = vunpack.c.l.b16 %v59
  %v204 = vunpack.c.l.b16 %v60
  %v205 = vunpack.c.l.b16 %v61
  %v206 = vunpack.c.l.b16 %v62
  %v207 = vunpack.c.l.b16 %v63
  %v208 = vunpack.c.l.b16 %v64
  %v209 = vunpack.c.l.b16 %v65
  %v210 = vunpack.c.l.b16 %v66
  %v211 = vunpack.c.l.b16 %v67
  %v212 = vunpack.c.l.b16 %v68
  %v213 = vunpack.c.l.b16 %v69
  %v214 = vunpack.c.l.b16 %v70
  %v215 = vunpack.c.l.b16 %v71
  %v216 = vunpack.c.l.b16 %v72
  %v217 = vunpack.c.l.b16 %v73
  %v218 = vunpack.c.l.b16 %v74
  %v219 = vunpack.c.l.b16 %v75
  %v220 = vunpack.c.l.b16 %v76
  %v221 = vunpack.c.l.b16 %v77
  %v222 = vunpack.c.l.b16 %v78
  %v223 = vunpack.c.l.b16 %v79
  %v224 = vunpack.c.l.b16 %v80
  %v225 = vunpack.c.l.b16 %v81
  %v226 = vunpack.c.l.b16 %v82
  %v227 = vunpack.c.l.b16 %v83
  %v228 = vunpack.c.l.b16 %v84
  %v229 = vpack.c.b16 %v166, %v165
  %v230 = vpack.c.b16 %v168, %v167
  %v231 = vpack.c.b16 %v170, %v169
  %v232 = vpack.c.b16 %v172, %v171
  %v233 = vpack.c.b16 %v174, %v173
  %v234 = vpack.c.b16 %v176, %v175
  %v235 = vpack.c.b16 %v178, %v177
  %v236 = vpack.c.b16 %v180, %v179
  %v237 = vpack.c.b16 %v182, %v181
  %v238 = vpack.c.b16 %v184, %v183
  %v239 = vpack.c.b16 %v186, %v185
  %v240 = vpack.c.b16 %v188, %v187
  %v241 = vpack.c.b16 %v190, %v189
  %v242 = vpack.c.b16 %v192, %v191
  %v243 = vpack.c.b16 %v194, %v193
  %v244 = vpack.c.b16 %v196, %v195
  %v245 = vpack.c.b16 %v198, %v197
  %v246 = vpack.c.b16 %v200, %v199
  %v247 = vpack.c.b16 %v202, %v201
  %v248 = vpack.c.b16 %v204, %v203
  %v249 = vpack.c.b16 %v206, %v205
  %v250 = vpack.c.b16 %v208, %v207
  %v251 = vpack.c.b16 %v210, %v209
  %v252 = vpack.c.b16 %v212, %v211
  %v253 = vpack.c.b16 %v214, %v213
  %v254 = vpack.c.b16 %v216, %v215
  %v255 = vpack.c.b16 %v218, %v217
  %v256 = vpack.c.b16 %v220, %v219
  %v257 = vpack.c.b16 %v222, %v221
  %v258 = vpack.c.b16 %v224, %v223
  %v259 = vpack.c.b16 %v226, %v225
  %v260 = vpack.c.b16 %v228, %v227
  %v309 = vunpack.c.l.b16 %v85
  %v310 = vunpack.c.l.b16 %v86
  %v311 = vunpack.c.l.b16 %v87
  %v312 = vunpack.c.l.b16 %v88
  %v313 = vunpack.c.l.b16 %v89
  %v314 = vunpack.c.l.b16 %v90
  %v315 = vunpack.c.l.b16 %v91
  %v316 = vunpack.c.l.b16 %v92
  %v317 = vunpack.c.l.b16 %v93
  %v318 = vunpack.c.l.b16 %v94
  %v319 = vunpack.c.l.b16 %v95
  %v320 = vunpack.c.l.b16 %v96
  %v321 = vunpack.c.l.b16 %v97
  %v322 = vunpack.c.l.b16 %v98
  %v323 = vunpack.c.l.b16 %v99
  %v324 = vunpack.c.l.b16 %v100
  %v325 = vpack.c.b16 %v310, %v309
  %v326 = vpack.c.b16 %v312, %v311
  %v327 = vpack.c.b16 %v314, %v313
  %v328 = vpack.c.b16 %v316, %v315
  %v329 = vpack.c.b16 %v318, %v317
  %v330 = vpack.c.b16 %v320, %v319
  %v331 = vpack.c.b16 %v322, %v321
  %v332 = vpack.c.b16 %v324, %v323
  %341 = vmatprep.subr.bf16.mxu0 0
  %342 = vmatpush1.bf16.msra.mxu0 %v325
  %343 = vmatprep.subr.bf16.mxu0 0
  %344 = vmatpush1.bf16.msra.mxu0 %v326
  %345 = vmatprep.subr.bf16.mxu0 0
  %346 = vmatpush1.bf16.msra.mxu0 %v327
  %347 = vmatprep.subr.bf16.mxu0 0
  %348 = vmatpush1.bf16.msra.mxu0 %v328
  %349 = vmatprep.subr.bf16.mxu0 0
  %350 = vmatpush1.bf16.msra.mxu0 %v329
  %351 = vmatprep.subr.bf16.mxu0 0
  %352 = vmatpush1.bf16.msra.mxu0 %v330
  %353 = vmatprep.subr.bf16.mxu0 0
  %354 = vmatpush1.bf16.msra.mxu0 %v331
  %355 = vmatprep.subr.bf16.mxu0 0
  %356 = vmatpush1.bf16.msra.mxu0 %v332
  %357 = vmatprep.subr.bf16.mxu0 0
  %358 = vmatpush1.bf16.msra.mxu0 0
  %359 = vmatprep.subr.bf16.mxu0 0
  %360 = vmatpush1.bf16.msra.mxu0 0
  %361 = vmatprep.subr.bf16.mxu0 0
  %362 = vmatpush1.bf16.msra.mxu0 0
  %363 = vmatprep.subr.bf16.mxu0 0
  %364 = vmatpush1.bf16.msra.mxu0 0
  %365 = vmatprep.subr.bf16.mxu0 0
  %366 = vmatpush1.bf16.msra.mxu0 0
  %367 = vmatprep.subr.bf16.mxu0 0
  %368 = vmatpush1.bf16.msra.mxu0 0
  %369 = vmatprep.subr.bf16.mxu0 0
  %370 = vmatpush1.bf16.msra.mxu0 0
  %371 = vmatprep.subr.bf16.mxu0 0
  %372 = vmatpush1.bf16.msra.mxu0 0
  %373 = vmatprep.mubr.bf16.mxu0 0
  %374 = vmatmul.mubr.bf16.gmra.mrb[0].mxu0 %v229
  %v375 = vpop.f32.mrb[0].mxu0
  %v376 = vadd.f32 0.0, %v375
  %v377 = vpop.f32.mrb[0].mxu0
  %v378 = vpop.f32.mrb[0].mxu0
  %v379 = vadd.f32 0.0, %v378
  %v380 = vpop.f32.mrb[0].mxu0
  %381 = vmatprep.mubr.bf16.mxu0 0
  %382 = vmatmul.mubr.bf16.gmra.mrb[0].mxu0 %v230
  %v383 = vpop.f32.mrb[0].mxu0
  %v384 = vadd.f32 0.0, %v383
  %v385 = vpop.f32.mrb[0].mxu0
  %v386 = vpop.f32.mrb[0].mxu0
  %v387 = vadd.f32 0.0, %v386
  %v388 = vpop.f32.mrb[0].mxu0
  %389 = vmatprep.mubr.bf16.mxu0 0
  %390 = vmatmul.mubr.bf16.gmra.mrb[0].mxu0 %v231
  %v391 = vpop.f32.mrb[0].mxu0
  %v392 = vadd.f32 0.0, %v391
  %v393 = vpop.f32.mrb[0].mxu0
  %v394 = vpop.f32.mrb[0].mxu0
  %v395 = vadd.f32 0.0, %v394
  %v396 = vpop.f32.mrb[0].mxu0
  %397 = vmatprep.mubr.bf16.mxu0 0
  %398 = vmatmul.mubr.bf16.gmra.mrb[0].mxu0 %v232
  %v399 = vpop.f32.mrb[0].mxu0
  %v400 = vadd.f32 0.0, %v399
  %v401 = vpop.f32.mrb[0].mxu0
  %v402 = vpop.f32.mrb[0].mxu0
  %v403 = vadd.f32 0.0, %v402
  %v404 = vpop.f32.mrb[0].mxu0
  %405 = vmatprep.mubr.bf16.mxu0 0
  %406 = vmatmul.mubr.bf16.gmra.mrb[0].mxu0 %v233
  %v407 = vpop.f32.mrb[0].mxu0
  %v408 = vadd.f32 0.0, %v407
  %v409 = vpop.f32.mrb[0].mxu0
  %v410 = vpop.f32.mrb[0].mxu0
  %v411 = vadd.f32 0.0, %v410
  %v412 = vpop.f32.mrb[0].mxu0
  %413 = vmatprep.mubr.bf16.mxu0 0
  %414 = vmatmul.mubr.bf16.gmra.mrb[0].mxu0 %v234
  %v415 = vpop.f32.mrb[0].mxu0
  %v416 = vadd.f32 0.0, %v415
  %v417 = vpop.f32.mrb[0].mxu0
  %v418 = vpop.f32.mrb[0].mxu0
  %v419 = vadd.f32 0.0, %v418
  %v420 = vpop.f32.mrb[0].mxu0
  %421 = vmatprep.mubr.bf16.mxu0 0
  %422 = vmatmul.mubr.bf16.gmra.mrb[0].mxu0 %v235
  %v423 = vpop.f32.mrb[0].mxu0
  %v424 = vadd.f32 0.0, %v423
  %v425 = vpop.f32.mrb[0].mxu0
  %v426 = vpop.f32.mrb[0].mxu0
  %v427 = vadd.f32 0.0, %v426
  %v428 = vpop.f32.mrb[0].mxu0
  %429 = vmatprep.mubr.bf16.mxu0 0
  %430 = vmatmul.mubr.bf16.gmra.mrb[0].mxu0 %v236
  %v431 = vpop.f32.mrb[0].mxu0
  %v432 = vadd.f32 0.0, %v431
  %v433 = vpop.f32.mrb[0].mxu0
  %v434 = vpop.f32.mrb[0].mxu0
  %v435 = vadd.f32 0.0, %v434
  %v436 = vpop.f32.mrb[0].mxu0
  %437 = vmatprep.mubr.bf16.mxu0 0
  %438 = vmatmul.mubr.bf16.gmra.mrb[0].mxu0 %v237
  %v439 = vpop.f32.mrb[0].mxu0
  %v440 = vadd.f32 0.0, %v439
  %v441 = vpop.f32.mrb[0].mxu0
  %v442 = vpop.f32.mrb[0].mxu0
  %v443 = vadd.f32 0.0, %v442
  %v444 = vpop.f32.mrb[0].mxu0
  %445 = vmatprep.mubr.bf16.mxu0 0
  %446 = vmatmul.mubr.bf16.gmra.mrb[0].mxu0 %v238
  %v447 = vpop.f32.mrb[0].mxu0
  %v448 = vadd.f32 0.0, %v447
  %v449 = vpop.f32.mrb[0].mxu0
  %v450 = vpop.f32.mrb[0].mxu0
  %v451 = vadd.f32 0.0, %v450
  %v452 = vpop.f32.mrb[0].mxu0
  %453 = vmatprep.mubr.bf16.mxu0 0
  %454 = vmatmul.mubr.bf16.gmra.mrb[0].mxu0 %v239
  %v455 = vpop.f32.mrb[0].mxu0
  %v456 = vadd.f32 0.0, %v455
  %v457 = vpop.f32.mrb[0].mxu0
  %v458 = vpop.f32.mrb[0].mxu0
  %v459 = vadd.f32 0.0, %v458
  %v460 = vpop.f32.mrb[0].mxu0
  %461 = vmatprep.mubr.bf16.mxu0 0
  %462 = vmatmul.mubr.bf16.gmra.mrb[0].mxu0 %v240
  %v463 = vpop.f32.mrb[0].mxu0
  %v464 = vadd.f32 0.0, %v463
  %v465 = vpop.f32.mrb[0].mxu0
  %v466 = vpop.f32.mrb[0].mxu0
  %v467 = vadd.f32 0.0, %v466
  %v468 = vpop.f32.mrb[0].mxu0
  %469 = vmatprep.mubr.bf16.mxu0 0
  %470 = vmatmul.mubr.bf16.gmra.mrb[0].mxu0 %v241
  %v471 = vpop.f32.mrb[0].mxu0
  %v472 = vadd.f32 0.0, %v471
  %v473 = vpop.f32.mrb[0].mxu0
  %v474 = vpop.f32.mrb[0].mxu0
  %v475 = vadd.f32 0.0, %v474
  %v476 = vpop.f32.mrb[0].mxu0
  %477 = vmatprep.mubr.bf16.mxu0 0
  %478 = vmatmul.mubr.bf16.gmra.mrb[0].mxu0 %v242
  %v479 = vpop.f32.mrb[0].mxu0
  %v480 = vadd.f32 0.0, %v479
  %v481 = vpop.f32.mrb[0].mxu0
  %v482 = vpop.f32.mrb[0].mxu0
  %v483 = vadd.f32 0.0, %v482
  %v484 = vpop.f32.mrb[0].mxu0
  %485 = vmatprep.mubr.bf16.mxu0 0
  %486 = vmatmul.mubr.bf16.gmra.mrb[0].mxu0 %v243
  %v487 = vpop.f32.mrb[0].mxu0
  %v488 = vadd.f32 0.0, %v487
  %v489 = vpop.f32.mrb[0].mxu0
  %v490 = vpop.f32.mrb[0].mxu0
  %v491 = vadd.f32 0.0, %v490
  %v492 = vpop.f32.mrb[0].mxu0
  %493 = vmatprep.mubr.bf16.mxu0 0
  %494 = vmatmul.mubr.bf16.gmra.mrb[0].mxu0 %v244
  %v495 = vpop.f32.mrb[0].mxu0
  %v496 = vadd.f32 0.0, %v495
  %v497 = vpop.f32.mrb[0].mxu0
  %v498 = vpop.f32.mrb[0].mxu0
  %v499 = vadd.f32 0.0, %v498
  %v500 = vpop.f32.mrb[0].mxu0
  %501 = vmatprep.mubr.bf16.mxu0 0
  %502 = vmatmul.mubr.bf16.gmra.mrb[0].mxu0 %v245
  %v503 = vpop.f32.mrb[0].mxu0
  %v504 = vadd.f32 0.0, %v503
  %v505 = vpop.f32.mrb[0].mxu0
  %v506 = vpop.f32.mrb[0].mxu0
  %v507 = vadd.f32 0.0, %v506
  %v508 = vpop.f32.mrb[0].mxu0
  %509 = vmatprep.mubr.bf16.mxu0 0
  %510 = vmatmul.mubr.bf16.gmra.mrb[0].mxu0 %v246
  %v511 = vpop.f32.mrb[0].mxu0
  %v512 = vadd.f32 0.0, %v511
  %v513 = vpop.f32.mrb[0].mxu0
  %v514 = vpop.f32.mrb[0].mxu0
  %v515 = vadd.f32 0.0, %v514
  %v516 = vpop.f32.mrb[0].mxu0
  %517 = vmatprep.mubr.bf16.mxu0 0
  %518 = vmatmul.mubr.bf16.gmra.mrb[0].mxu0 %v247
  %v519 = vpop.f32.mrb[0].mxu0
  %v520 = vadd.f32 0.0, %v519
  %v521 = vpop.f32.mrb[0].mxu0
  %v522 = vpop.f32.mrb[0].mxu0
  %v523 = vadd.f32 0.0, %v522
  %v524 = vpop.f32.mrb[0].mxu0
  %525 = vmatprep.mubr.bf16.mxu0 0
  %526 = vmatmul.mubr.bf16.gmra.mrb[0].mxu0 %v248
  %v527 = vpop.f32.mrb[0].mxu0
  %v528 = vadd.f32 0.0, %v527
  %v529 = vpop.f32.mrb[0].mxu0
  %v530 = vpop.f32.mrb[0].mxu0
  %v531 = vadd.f32 0.0, %v530
  %v532 = vpop.f32.mrb[0].mxu0
  %533 = vmatprep.mubr.bf16.mxu0 0
  %534 = vmatmul.mubr.bf16.gmra.mrb[0].mxu0 %v249
  %v535 = vpop.f32.mrb[0].mxu0
  %v536 = vadd.f32 0.0, %v535
  %v537 = vpop.f32.mrb[0].mxu0
  %v538 = vpop.f32.mrb[0].mxu0
  %v539 = vadd.f32 0.0, %v538
  %v540 = vpop.f32.mrb[0].mxu0
  %541 = vmatprep.mubr.bf16.mxu0 0
  %542 = vmatmul.mubr.bf16.gmra.mrb[0].mxu0 %v250
  %v543 = vpop.f32.mrb[0].mxu0
  %v544 = vadd.f32 0.0, %v543
  %v545 = vpop.f32.mrb[0].mxu0
  %v546 = vpop.f32.mrb[0].mxu0
  %v547 = vadd.f32 0.0, %v546
  %v548 = vpop.f32.mrb[0].mxu0
  %549 = vmatprep.mubr.bf16.mxu0 0
  %550 = vmatmul.mubr.bf16.gmra.mrb[0].mxu0 %v251
  %v551 = vpop.f32.mrb[0].mxu0
  %v552 = vadd.f32 0.0, %v551
  %v553 = vpop.f32.mrb[0].mxu0
  %v554 = vpop.f32.mrb[0].mxu0
  %v555 = vadd.f32 0.0, %v554
  %v556 = vpop.f32.mrb[0].mxu0
  %557 = vmatprep.mubr.bf16.mxu0 0
  %558 = vmatmul.mubr.bf16.gmra.mrb[0].mxu0 %v252
  %v559 = vpop.f32.mrb[0].mxu0
  %v560 = vadd.f32 0.0, %v559
  %v561 = vpop.f32.mrb[0].mxu0
  %v562 = vpop.f32.mrb[0].mxu0
  %v563 = vadd.f32 0.0, %v562
  %v564 = vpop.f32.mrb[0].mxu0
  %565 = vmatprep.mubr.bf16.mxu0 0
  %566 = vmatmul.mubr.bf16.gmra.mrb[0].mxu0 %v253
  %v567 = vpop.f32.mrb[0].mxu0
  %v568 = vadd.f32 0.0, %v567
  %v569 = vpop.f32.mrb[0].mxu0
  %v570 = vpop.f32.mrb[0].mxu0
  %v571 = vadd.f32 0.0, %v570
  %v572 = vpop.f32.mrb[0].mxu0
  %573 = vmatprep.mubr.bf16.mxu0 0
  %574 = vmatmul.mubr.bf16.gmra.mrb[0].mxu0 %v254
  %v575 = vpop.f32.mrb[0].mxu0
  %v576 = vadd.f32 0.0, %v575
  %v577 = vpop.f32.mrb[0].mxu0
  %v578 = vpop.f32.mrb[0].mxu0
  %v579 = vadd.f32 0.0, %v578
  %v580 = vpop.f32.mrb[0].mxu0
  %581 = vmatprep.mubr.bf16.mxu0 0
  %582 = vmatmul.mubr.bf16.gmra.mrb[0].mxu0 %v255
  %v583 = vpop.f32.mrb[0].mxu0
  %v584 = vadd.f32 0.0, %v583
  %v585 = vpop.f32.mrb[0].mxu0
  %v586 = vpop.f32.mrb[0].mxu0
  %v587 = vadd.f32 0.0, %v586
  %v588 = vpop.f32.mrb[0].mxu0
  %589 = vmatprep.mubr.bf16.mxu0 0
  %590 = vmatmul.mubr.bf16.gmra.mrb[0].mxu0 %v256
  %v591 = vpop.f32.mrb[0].mxu0
  %v592 = vadd.f32 0.0, %v591
  %v593 = vpop.f32.mrb[0].mxu0
  %v594 = vpop.f32.mrb[0].mxu0
  %v595 = vadd.f32 0.0, %v594
  %v596 = vpop.f32.mrb[0].mxu0
  %597 = vmatprep.mubr.bf16.mxu0 0
  %598 = vmatmul.mubr.bf16.gmra.mrb[0].mxu0 %v257
  %v599 = vpop.f32.mrb[0].mxu0
  %v600 = vadd.f32 0.0, %v599
  %v601 = vpop.f32.mrb[0].mxu0
  %v602 = vpop.f32.mrb[0].mxu0
  %v603 = vadd.f32 0.0, %v602
  %v604 = vpop.f32.mrb[0].mxu0
  %605 = vmatprep.mubr.bf16.mxu0 0
  %606 = vmatmul.mubr.bf16.gmra.mrb[0].mxu0 %v258
  %v607 = vpop.f32.mrb[0].mxu0
  %v608 = vadd.f32 0.0, %v607
  %v609 = vpop.f32.mrb[0].mxu0
  %v610 = vpop.f32.mrb[0].mxu0
  %v611 = vadd.f32 0.0, %v610
  %v612 = vpop.f32.mrb[0].mxu0
  %613 = vmatprep.mubr.bf16.mxu0 0
  %614 = vmatmul.mubr.bf16.gmra.mrb[0].mxu0 %v259
  %v615 = vpop.f32.mrb[0].mxu0
  %v616 = vadd.f32 0.0, %v615
  %v617 = vpop.f32.mrb[0].mxu0
  %v618 = vpop.f32.mrb[0].mxu0
  %v619 = vadd.f32 0.0, %v618
  %v620 = vpop.f32.mrb[0].mxu0
  %621 = vmatprep.mubr.bf16.mxu0 0
  %622 = vmatmul.mubr.bf16.gmra.mrb[0].mxu0 %v260
  %v623 = vpop.f32.mrb[0].mxu0
  %v624 = vadd.f32 0.0, %v623
  %v625 = vpop.f32.mrb[0].mxu0
  %v626 = vpop.f32.mrb[0].mxu0
  %v627 = vadd.f32 0.0, %v626
  %v628 = vpop.f32.mrb[0].mxu0
  %629 = vdwg.mxu0
  %v630 = vadd.f32 %v376, %v379
  %v631 = vadd.f32 %v630, %v384
  %v632 = vadd.f32 %v631, %v387
  %v633 = vadd.f32 %v632, %v392
  %v634 = vadd.f32 %v633, %v395
  %v635 = vadd.f32 %v634, %v400
  %v636 = vadd.f32 %v635, %v403
  %v637 = vadd.f32 %v636, %v408
  %v638 = vadd.f32 %v637, %v411
  %v639 = vadd.f32 %v638, %v416
  %v640 = vadd.f32 %v639, %v419
  %v641 = vadd.f32 %v640, %v424
  %v642 = vadd.f32 %v641, %v427
  %v643 = vadd.f32 %v642, %v432
  %v644 = vadd.f32 %v643, %v435
  %v645 = vadd.f32 %v644, %v440
  %v646 = vadd.f32 %v645, %v443
  %v647 = vadd.f32 %v646, %v448
  %v648 = vadd.f32 %v647, %v451
  %v649 = vadd.f32 %v648, %v456
  %v650 = vadd.f32 %v649, %v459
  %v651 = vadd.f32 %v650, %v464
  %v652 = vadd.f32 %v651, %v467
  %v653 = vadd.f32 %v652, %v472
  %v654 = vadd.f32 %v653, %v475
  %v655 = vadd.f32 %v654, %v480
  %v656 = vadd.f32 %v655, %v483
  %v657 = vadd.f32 %v656, %v488
  %v658 = vadd.f32 %v657, %v491
  %v659 = vadd.f32 %v658, %v496
  %v660 = vadd.f32 %v659, %v499
  %v661 = vadd.f32 %v660, %v504
  %v662 = vadd.f32 %v661, %v507
  %v663 = vadd.f32 %v662, %v512
  %v664 = vadd.f32 %v663, %v515
  %v665 = vadd.f32 %v664, %v520
  %v666 = vadd.f32 %v665, %v523
  %v667 = vadd.f32 %v666, %v528
  %v668 = vadd.f32 %v667, %v531
  %v669 = vadd.f32 %v668, %v536
  %v670 = vadd.f32 %v669, %v539
  %v671 = vadd.f32 %v670, %v544
  %v672 = vadd.f32 %v671, %v547
  %v673 = vadd.f32 %v672, %v552
  %v674 = vadd.f32 %v673, %v555
  %v675 = vadd.f32 %v674, %v560
  %v676 = vadd.f32 %v675, %v563
  %v677 = vadd.f32 %v676, %v568
  %v678 = vadd.f32 %v677, %v571
  %v679 = vadd.f32 %v678, %v576
  %v680 = vadd.f32 %v679, %v579
  %v681 = vadd.f32 %v680, %v584
  %v682 = vadd.f32 %v681, %v587
  %v683 = vadd.f32 %v682, %v592
  %v684 = vadd.f32 %v683, %v595
  %v685 = vadd.f32 %v684, %v600
  %v686 = vadd.f32 %v685, %v603
  %v687 = vadd.f32 %v686, %v608
  %v688 = vadd.f32 %v687, %v611
  %v689 = vadd.f32 %v688, %v616
  %v690 = vadd.f32 %v689, %v619
  %v691 = vadd.f32 %v690, %v624
  %v692 = vadd.f32 %v691, %v627
  %v693 = vrot.slane %v692, 4
  %v694 = vadd.f32 %v692, %v693
  %v695 = vrot.slane %v694, 2
  %v696 = vadd.f32 %v694, %v695
  %v697 = vrot.slane %v696, 1
  %v698 = vadd.f32 %v696, %v697
  %v699 = vrcp.pop 512.0
  %v700 = vmul.f32 %v698, %v699
  %v701 = vmul.f32 %v376, %v376
  %v702 = vmul.f32 %v379, %v379
  %v703 = vmul.f32 %v384, %v384
  %v704 = vmul.f32 %v387, %v387
  %v705 = vmul.f32 %v392, %v392
  %v706 = vmul.f32 %v395, %v395
  %v707 = vmul.f32 %v400, %v400
  %v708 = vmul.f32 %v403, %v403
  %v709 = vmul.f32 %v408, %v408
  %v710 = vmul.f32 %v411, %v411
  %v711 = vmul.f32 %v416, %v416
  %v712 = vmul.f32 %v419, %v419
  %v713 = vmul.f32 %v424, %v424
  %v714 = vmul.f32 %v427, %v427
  %v715 = vmul.f32 %v432, %v432
  %v716 = vmul.f32 %v435, %v435
  %v717 = vmul.f32 %v440, %v440
  %v718 = vmul.f32 %v443, %v443
  %v719 = vmul.f32 %v448, %v448
  %v720 = vmul.f32 %v451, %v451
  %v721 = vmul.f32 %v456, %v456
  %v722 = vmul.f32 %v459, %v459
  %v723 = vmul.f32 %v464, %v464
  %v724 = vmul.f32 %v467, %v467
  %v725 = vmul.f32 %v472, %v472
  %v726 = vmul.f32 %v475, %v475
  %v727 = vmul.f32 %v480, %v480
  %v728 = vmul.f32 %v483, %v483
  %v729 = vmul.f32 %v488, %v488
  %v730 = vmul.f32 %v491, %v491
  %v731 = vmul.f32 %v496, %v496
  %v732 = vmul.f32 %v499, %v499
  %v733 = vmul.f32 %v504, %v504
  %v734 = vmul.f32 %v507, %v507
  %v735 = vmul.f32 %v512, %v512
  %v736 = vmul.f32 %v515, %v515
  %v737 = vmul.f32 %v520, %v520
  %v738 = vmul.f32 %v523, %v523
  %v739 = vmul.f32 %v528, %v528
  %v740 = vmul.f32 %v531, %v531
  %v741 = vmul.f32 %v536, %v536
  %v742 = vmul.f32 %v539, %v539
  %v743 = vmul.f32 %v544, %v544
  %v744 = vmul.f32 %v547, %v547
  %v745 = vmul.f32 %v552, %v552
  %v746 = vmul.f32 %v555, %v555
  %v747 = vmul.f32 %v560, %v560
  %v748 = vmul.f32 %v563, %v563
  %v749 = vmul.f32 %v568, %v568
  %v750 = vmul.f32 %v571, %v571
  %v751 = vmul.f32 %v576, %v576
  %v752 = vmul.f32 %v579, %v579
  %v753 = vmul.f32 %v584, %v584
  %v754 = vmul.f32 %v587, %v587
  %v755 = vmul.f32 %v592, %v592
  %v756 = vmul.f32 %v595, %v595
  %v757 = vmul.f32 %v600, %v600
  %v758 = vmul.f32 %v603, %v603
  %v759 = vmul.f32 %v608, %v608
  %v760 = vmul.f32 %v611, %v611
  %v761 = vmul.f32 %v616, %v616
  %v762 = vmul.f32 %v619, %v619
  %v763 = vmul.f32 %v624, %v624
  %v764 = vmul.f32 %v627, %v627
  %v765 = vadd.f32 %v701, %v702
  %v766 = vadd.f32 %v765, %v703
  %v767 = vadd.f32 %v766, %v704
  %v768 = vadd.f32 %v767, %v705
  %v769 = vadd.f32 %v768, %v706
  %v770 = vadd.f32 %v769, %v707
  %v771 = vadd.f32 %v770, %v708
  %v772 = vadd.f32 %v771, %v709
  %v773 = vadd.f32 %v772, %v710
  %v774 = vadd.f32 %v773, %v711
  %v775 = vadd.f32 %v774, %v712
  %v776 = vadd.f32 %v775, %v713
  %v777 = vadd.f32 %v776, %v714
  %v778 = vadd.f32 %v777, %v715
  %v779 = vadd.f32 %v778, %v716
  %v780 = vadd.f32 %v779, %v717
  %v781 = vadd.f32 %v780, %v718
  %v782 = vadd.f32 %v781, %v719
  %v783 = vadd.f32 %v782, %v720
  %v784 = vadd.f32 %v783, %v721
  %v785 = vadd.f32 %v784, %v722
  %v786 = vadd.f32 %v785, %v723
  %v787 = vadd.f32 %v786, %v724
  %v788 = vadd.f32 %v787, %v725
  %v789 = vadd.f32 %v788, %v726
  %v790 = vadd.f32 %v789, %v727
  %v791 = vadd.f32 %v790, %v728
  %v792 = vadd.f32 %v791, %v729
  %v793 = vadd.f32 %v792, %v730
  %v794 = vadd.f32 %v793, %v731
  %v795 = vadd.f32 %v794, %v732
  %v796 = vadd.f32 %v795, %v733
  %v797 = vadd.f32 %v796, %v734
  %v798 = vadd.f32 %v797, %v735
  %v799 = vadd.f32 %v798, %v736
  %v800 = vadd.f32 %v799, %v737
  %v801 = vadd.f32 %v800, %v738
  %v802 = vadd.f32 %v801, %v739
  %v803 = vadd.f32 %v802, %v740
  %v804 = vadd.f32 %v803, %v741
  %v805 = vadd.f32 %v804, %v742
  %v806 = vadd.f32 %v805, %v743
  %v807 = vadd.f32 %v806, %v744
  %v808 = vadd.f32 %v807, %v745
  %v809 = vadd.f32 %v808, %v746
  %v810 = vadd.f32 %v809, %v747
  %v811 = vadd.f32 %v810, %v748
  %v812 = vadd.f32 %v811, %v749
  %v813 = vadd.f32 %v812, %v750
  %v814 = vadd.f32 %v813, %v751
  %v815 = vadd.f32 %v814, %v752
  %v816 = vadd.f32 %v815, %v753
  %v817 = vadd.f32 %v816, %v754
  %v818 = vadd.f32 %v817, %v755
  %v819 = vadd.f32 %v818, %v756
  %v820 = vadd.f32 %v819, %v757
  %v821 = vadd.f32 %v820, %v758
  %v822 = vadd.f32 %v821, %v759
  %v823 = vadd.f32 %v822, %v760
  %v824 = vadd.f32 %v823, %v761
  %v825 = vadd.f32 %v824, %v762
  %v826 = vadd.f32 %v825, %v763
  %v827 = vadd.f32 %v826, %v764
  %v828 = vrot.slane %v827, 4
  %v829 = vadd.f32 %v827, %v828
  %v830 = vrot.slane %v829, 2
  %v831 = vadd.f32 %v829, %v830
  %v832 = vrot.slane %v831, 1
  %v833 = vadd.f32 %v831, %v832
  %v834 = vmul.f32 %v833, %v699
  %v835 = vmul.f32 %v700, %v700
  %v836 = vsub.f32 %v834, %v835
  %v837 = vsub.f32 %v376, %v700
  %v838 = vsub.f32 %v379, %v700
  %v839 = vsub.f32 %v384, %v700
  %v840 = vsub.f32 %v387, %v700
  %v841 = vsub.f32 %v392, %v700
  %v842 = vsub.f32 %v395, %v700
  %v843 = vsub.f32 %v400, %v700
  %v844 = vsub.f32 %v403, %v700
  %v845 = vsub.f32 %v408, %v700
  %v846 = vsub.f32 %v411, %v700
  %v847 = vsub.f32 %v416, %v700
  %v848 = vsub.f32 %v419, %v700
  %v849 = vsub.f32 %v424, %v700
  %v850 = vsub.f32 %v427, %v700
  %v851 = vsub.f32 %v432, %v700
  %v852 = vsub.f32 %v435, %v700
  %v853 = vsub.f32 %v440, %v700
  %v854 = vsub.f32 %v443, %v700
  %v855 = vsub.f32 %v448, %v700
  %v856 = vsub.f32 %v451, %v700
  %v857 = vsub.f32 %v456, %v700
  %v858 = vsub.f32 %v459, %v700
  %v859 = vsub.f32 %v464, %v700
  %v860 = vsub.f32 %v467, %v700
  %v861 = vsub.f32 %v472, %v700
  %v862 = vsub.f32 %v475, %v700
  %v863 = vsub.f32 %v480, %v700
  %v864 = vsub.f32 %v483, %v700
  %v865 = vsub.f32 %v488, %v700
  %v866 = vsub.f32 %v491, %v700
  %v867 = vsub.f32 %v496, %v700
  %v868 = vsub.f32 %v499, %v700
  %v869 = vsub.f32 %v504, %v700
  %v870 = vsub.f32 %v507, %v700
  %v871 = vsub.f32 %v512, %v700
  %v872 = vsub.f32 %v515, %v700
  %v873 = vsub.f32 %v520, %v700
  %v874 = vsub.f32 %v523, %v700
  %v875 = vsub.f32 %v528, %v700
  %v876 = vsub.f32 %v531, %v700
  %v877 = vsub.f32 %v536, %v700
  %v878 = vsub.f32 %v539, %v700
  %v879 = vsub.f32 %v544, %v700
  %v880 = vsub.f32 %v547, %v700
  %v881 = vsub.f32 %v552, %v700
  %v882 = vsub.f32 %v555, %v700
  %v883 = vsub.f32 %v560, %v700
  %v884 = vsub.f32 %v563, %v700
  %v885 = vsub.f32 %v568, %v700
  %v886 = vsub.f32 %v571, %v700
  %v887 = vsub.f32 %v576, %v700
  %v888 = vsub.f32 %v579, %v700
  %v889 = vsub.f32 %v584, %v700
  %v890 = vsub.f32 %v587, %v700
  %v891 = vsub.f32 %v592, %v700
  %v892 = vsub.f32 %v595, %v700
  %v893 = vsub.f32 %v600, %v700
  %v894 = vsub.f32 %v603, %v700
  %v895 = vsub.f32 %v608, %v700
  %v896 = vsub.f32 %v611, %v700
  %v897 = vsub.f32 %v616, %v700
  %v898 = vsub.f32 %v619, %v700
  %v899 = vsub.f32 %v624, %v700
  %v900 = vsub.f32 %v627, %v700
  %v901 = vadd.f32 %v836, 1e-05
  %v902 = vrsqrt.pop %v901
  %v903 = vmul.f32 %v837, %v902
  %v904 = vmul.f32 %v838, %v902
  %v905 = vmul.f32 %v839, %v902
  %v906 = vmul.f32 %v840, %v902
  %v907 = vmul.f32 %v841, %v902
  %v908 = vmul.f32 %v842, %v902
  %v909 = vmul.f32 %v843, %v902
  %v910 = vmul.f32 %v844, %v902
  %v911 = vmul.f32 %v845, %v902
  %v912 = vmul.f32 %v846, %v902
  %v913 = vmul.f32 %v847, %v902
  %v914 = vmul.f32 %v848, %v902
  %v915 = vmul.f32 %v849, %v902
  %v916 = vmul.f32 %v850, %v902
  %v917 = vmul.f32 %v851, %v902
  %v918 = vmul.f32 %v852, %v902
  %v919 = vmul.f32 %v853, %v902
  %v920 = vmul.f32 %v854, %v902
  %v921 = vmul.f32 %v855, %v902
  %v922 = vmul.f32 %v856, %v902
  %v923 = vmul.f32 %v857, %v902
  %v924 = vmul.f32 %v858, %v902
  %v925 = vmul.f32 %v859, %v902
  %v926 = vmul.f32 %v860, %v902
  %v927 = vmul.f32 %v861, %v902
  %v928 = vmul.f32 %v862, %v902
  %v929 = vmul.f32 %v863, %v902
  %v930 = vmul.f32 %v864, %v902
  %v931 = vmul.f32 %v865, %v902
  %v932 = vmul.f32 %v866, %v902
  %v933 = vmul.f32 %v867, %v902
  %v934 = vmul.f32 %v868, %v902
  %v935 = vmul.f32 %v869, %v902
  %v936 = vmul.f32 %v870, %v902
  %v937 = vmul.f32 %v871, %v902
  %v938 = vmul.f32 %v872, %v902
  %v939 = vmul.f32 %v873, %v902
  %v940 = vmul.f32 %v874, %v902
  %v941 = vmul.f32 %v875, %v902
  %v942 = vmul.f32 %v876, %v902
  %v943 = vmul.f32 %v877, %v902
  %v944 = vmul.f32 %v878, %v902
  %v945 = vmul.f32 %v879, %v902
  %v946 = vmul.f32 %v880, %v902
  %v947 = vmul.f32 %v881, %v902
  %v948 = vmul.f32 %v882, %v902
  %v949 = vmul.f32 %v883, %v902
  %v950 = vmul.f32 %v884, %v902
  %v951 = vmul.f32 %v885, %v902
  %v952 = vmul.f32 %v886, %v902
  %v953 = vmul.f32 %v887, %v902
  %v954 = vmul.f32 %v888, %v902
  %v955 = vmul.f32 %v889, %v902
  %v956 = vmul.f32 %v890, %v902
  %v957 = vmul.f32 %v891, %v902
  %v958 = vmul.f32 %v892, %v902
  %v959 = vmul.f32 %v893, %v902
  %v960 = vmul.f32 %v894, %v902
  %v961 = vmul.f32 %v895, %v902
  %v962 = vmul.f32 %v896, %v902
  %v963 = vmul.f32 %v897, %v902
  %v964 = vmul.f32 %v898, %v902
  %v965 = vmul.f32 %v899, %v902
  %v966 = vmul.f32 %v900, %v902
  %v967 = vld [vmem:[%s2] sm:$0x1]
  %v968 = vlaneseq
  %v969 = vshrl.u32 %v968, 7
  %v970 = vsub.s32 0, %v969
  %v971 = vrot.slane %v967, %v970
  %v972 = vmul.f32 %v903, %v971
  %v973 = vmul.f32 %v904, %v971
  %v974 = vmul.f32 %v905, %v971
  %v975 = vmul.f32 %v906, %v971
  %v976 = vmul.f32 %v907, %v971
  %v977 = vmul.f32 %v908, %v971
  %v978 = vmul.f32 %v909, %v971
  %v979 = vmul.f32 %v910, %v971
  %v980 = vmul.f32 %v911, %v971
  %v981 = vmul.f32 %v912, %v971
  %v982 = vmul.f32 %v913, %v971
  %v983 = vmul.f32 %v914, %v971
  %v984 = vmul.f32 %v915, %v971
  %v985 = vmul.f32 %v916, %v971
  %v986 = vmul.f32 %v917, %v971
  %v987 = vmul.f32 %v918, %v971
  %v988 = vmul.f32 %v919, %v971
  %v989 = vmul.f32 %v920, %v971
  %v990 = vmul.f32 %v921, %v971
  %v991 = vmul.f32 %v922, %v971
  %v992 = vmul.f32 %v923, %v971
  %v993 = vmul.f32 %v924, %v971
  %v994 = vmul.f32 %v925, %v971
  %v995 = vmul.f32 %v926, %v971
  %v996 = vmul.f32 %v927, %v971
  %v997 = vmul.f32 %v928, %v971
  %v998 = vmul.f32 %v929, %v971
  %v999 = vmul.f32 %v930, %v971
  %v1000 = vmul.f32 %v931, %v971
  %v1001 = vmul.f32 %v932, %v971
  %v1002 = vmul.f32 %v933, %v971
  %v1003 = vmul.f32 %v934, %v971
  %v1004 = vmul.f32 %v935, %v971
  %v1005 = vmul.f32 %v936, %v971
  %v1006 = vmul.f32 %v937, %v971
  %v1007 = vmul.f32 %v938, %v971
  %v1008 = vmul.f32 %v939, %v971
  %v1009 = vmul.f32 %v940, %v971
  %v1010 = vmul.f32 %v941, %v971
  %v1011 = vmul.f32 %v942, %v971
  %v1012 = vmul.f32 %v943, %v971
  %v1013 = vmul.f32 %v944, %v971
  %v1014 = vmul.f32 %v945, %v971
  %v1015 = vmul.f32 %v946, %v971
  %v1016 = vmul.f32 %v947, %v971
  %v1017 = vmul.f32 %v948, %v971
  %v1018 = vmul.f32 %v949, %v971
  %v1019 = vmul.f32 %v950, %v971
  %v1020 = vmul.f32 %v951, %v971
  %v1021 = vmul.f32 %v952, %v971
  %v1022 = vmul.f32 %v953, %v971
  %v1023 = vmul.f32 %v954, %v971
  %v1024 = vmul.f32 %v955, %v971
  %v1025 = vmul.f32 %v956, %v971
  %v1026 = vmul.f32 %v957, %v971
  %v1027 = vmul.f32 %v958, %v971
  %v1028 = vmul.f32 %v959, %v971
  %v1029 = vmul.f32 %v960, %v971
  %v1030 = vmul.f32 %v961, %v971
  %v1031 = vmul.f32 %v962, %v971
  %v1032 = vmul.f32 %v963, %v971
  %v1033 = vmul.f32 %v964, %v971
  %v1034 = vmul.f32 %v965, %v971
  %v1035 = vmul.f32 %v966, %v971
  %v1036 = vld [vmem:[%s2 + $0x1] sm:$0x1]
  %v1037 = vlaneseq
  %v1038 = vshrl.u32 %v1037, 7
  %v1039 = vsub.s32 0, %v1038
  %v1040 = vrot.slane %v1036, %v1039
  %v1041 = vadd.f32 %v972, %v1040
  %v1042 = vadd.f32 %v973, %v1040
  %v1043 = vadd.f32 %v974, %v1040
  %v1044 = vadd.f32 %v975, %v1040
  %v1045 = vadd.f32 %v976, %v1040
  %v1046 = vadd.f32 %v977, %v1040
  %v1047 = vadd.f32 %v978, %v1040
  %v1048 = vadd.f32 %v979, %v1040
  %v1049 = vadd.f32 %v980, %v1040
  %v1050 = vadd.f32 %v981, %v1040
  %v1051 = vadd.f32 %v982, %v1040
  %v1052 = vadd.f32 %v983, %v1040
  %v1053 = vadd.f32 %v984, %v1040
  %v1054 = vadd.f32 %v985, %v1040
  %v1055 = vadd.f32 %v986, %v1040
  %v1056 = vadd.f32 %v987, %v1040
  %v1057 = vadd.f32 %v988, %v1040
  %v1058 = vadd.f32 %v989, %v1040
  %v1059 = vadd.f32 %v990, %v1040
  %v1060 = vadd.f32 %v991, %v1040
  %v1061 = vadd.f32 %v992, %v1040
  %v1062 = vadd.f32 %v993, %v1040
  %v1063 = vadd.f32 %v994, %v1040
  %v1064 = vadd.f32 %v995, %v1040
  %v1065 = vadd.f32 %v996, %v1040
  %v1066 = vadd.f32 %v997, %v1040
  %v1067 = vadd.f32 %v998, %v1040
  %v1068 = vadd.f32 %v999, %v1040
  %v1069 = vadd.f32 %v1000, %v1040
  %v1070 = vadd.f32 %v1001, %v1040
  %v1071 = vadd.f32 %v1002, %v1040
  %v1072 = vadd.f32 %v1003, %v1040
  %v1073 = vadd.f32 %v1004, %v1040
  %v1074 = vadd.f32 %v1005, %v1040
  %v1075 = vadd.f32 %v1006, %v1040
  %v1076 = vadd.f32 %v1007, %v1040
  %v1077 = vadd.f32 %v1008, %v1040
  %v1078 = vadd.f32 %v1009, %v1040
  %v1079 = vadd.f32 %v1010, %v1040
  %v1080 = vadd.f32 %v1011, %v1040
  %v1081 = vadd.f32 %v1012, %v1040
  %v1082 = vadd.f32 %v1013, %v1040
  %v1083 = vadd.f32 %v1014, %v1040
  %v1084 = vadd.f32 %v1015, %v1040
  %v1085 = vadd.f32 %v1016, %v1040
  %v1086 = vadd.f32 %v1017, %v1040
  %v1087 = vadd.f32 %v1018, %v1040
  %v1088 = vadd.f32 %v1019, %v1040
  %v1089 = vadd.f32 %v1020, %v1040
  %v1090 = vadd.f32 %v1021, %v1040
  %v1091 = vadd.f32 %v1022, %v1040
  %v1092 = vadd.f32 %v1023, %v1040
  %v1093 = vadd.f32 %v1024, %v1040
  %v1094 = vadd.f32 %v1025, %v1040
  %v1095 = vadd.f32 %v1026, %v1040
  %v1096 = vadd.f32 %v1027, %v1040
  %v1097 = vadd.f32 %v1028, %v1040
  %v1098 = vadd.f32 %v1029, %v1040
  %v1099 = vadd.f32 %v1030, %v1040
  %v1100 = vadd.f32 %v1031, %v1040
  %v1101 = vadd.f32 %v1032, %v1040
  %v1102 = vadd.f32 %v1033, %v1040
  %v1103 = vadd.f32 %v1034, %v1040
  %v1104 = vadd.f32 %v1035, %v1040
  %v1105 = vpack.c.bf16 %v1042, %v1041
  %v1106 = vpack.c.bf16 %v1044, %v1043
  %v1107 = vpack.c.bf16 %v1046, %v1045
  %v1108 = vpack.c.bf16 %v1048, %v1047
  %v1109 = vpack.c.bf16 %v1050, %v1049
  %v1110 = vpack.c.bf16 %v1052, %v1051
  %v1111 = vpack.c.bf16 %v1054, %v1053
  %v1112 = vpack.c.bf16 %v1056, %v1055
  %v1113 = vpack.c.bf16 %v1058, %v1057
  %v1114 = vpack.c.bf16 %v1060, %v1059
  %v1115 = vpack.c.bf16 %v1062, %v1061
  %v1116 = vpack.c.bf16 %v1064, %v1063
  %v1117 = vpack.c.bf16 %v1066, %v1065
  %v1118 = vpack.c.bf16 %v1068, %v1067
  %v1119 = vpack.c.bf16 %v1070, %v1069
  %v1120 = vpack.c.bf16 %v1072, %v1071
  %v1121 = vpack.c.bf16 %v1074, %v1073
  %v1122 = vpack.c.bf16 %v1076, %v1075
  %v1123 = vpack.c.bf16 %v1078, %v1077
  %v1124 = vpack.c.bf16 %v1080, %v1079
  %v1125 = vpack.c.bf16 %v1082, %v1081
  %v1126 = vpack.c.bf16 %v1084, %v1083
  %v1127 = vpack.c.bf16 %v1086, %v1085
  %v1128 = vpack.c.bf16 %v1088, %v1087
  %v1129 = vpack.c.bf16 %v1090, %v1089
  %v1130 = vpack.c.bf16 %v1092, %v1091
  %v1131 = vpack.c.bf16 %v1094, %v1093
  %v1132 = vpack.c.bf16 %v1096, %v1095
  %v1133 = vpack.c.bf16 %v1098, %v1097
  %v1134 = vpack.c.bf16 %v1100, %v1099
  %v1135 = vpack.c.bf16 %v1102, %v1101
  %v1136 = vpack.c.bf16 %v1104, %v1103
  %vm1137 = vcmask 392192
  %1138 = vst.msk [vmem:[#allocation2] sm:$0xff] %vm1137, %v1105
  %1139 = vst.msk [vmem:[#allocation2 + $0x30] sm:$0xff] %vm1137, %v1106
  %1142 = vrot.lane.b32.xlu0 %v1107, 48
  %v1143 = vpop.permute.xlu0 %1142
  %1144 = vrot.lane.b32.xlu0 %v1108, 48
  %v1145 = vpop.permute.xlu0 %1144
  %vm1148 = vcmask 785792
  %1149 = vst.msk [vmem:[#allocation2] sm:$0xff] %vm1148, %v1143
  %1150 = vst.msk [vmem:[#allocation2 + $0x30] sm:$0xff] %vm1148, %v1145
  %1153 = vrot.lane.b32.xlu0 %v1109, 96
  %v1154 = vpop.permute.xlu0 %1153
  %1155 = vrot.lane.b32.xlu0 %v1110, 96
  %v1156 = vpop.permute.xlu0 %1155
  %vm1159 = vcmask 1048320
  %1160 = vst.msk [vmem:[#allocation2] sm:$0xff] %vm1159, %v1154
  %vm1161 = vcmask 130048
  %1162 = vst.msk [vmem:[#allocation2 + $0x8] sm:$0xff] %vm1161, %v1154
  %1163 = vst.msk [vmem:[#allocation2 + $0x30] sm:$0xff] %vm1159, %v1156
  %1164 = vst.msk [vmem:[#allocation2 + $0x38] sm:$0xff] %vm1161, %v1156
  %1167 = vrot.lane.b32.xlu0 %v1111, 16
  %v1168 = vpop.permute.xlu0 %1167
  %1169 = vrot.lane.b32.xlu0 %v1112, 16
  %v1170 = vpop.permute.xlu0 %1169
  %vm1173 = vcmask 523392
  %1174 = vst.msk [vmem:[#allocation2 + $0x8] sm:$0xff] %vm1173, %v1168
  %1175 = vst.msk [vmem:[#allocation2 + $0x38] sm:$0xff] %vm1173, %v1170
  %1178 = vrot.lane.b32.xlu0 %v1113, 64
  %v1179 = vpop.permute.xlu0 %1178
  %1180 = vrot.lane.b32.xlu0 %v1114, 64
  %v1181 = vpop.permute.xlu0 %1180
  %vm1184 = vcmask 916992
  %1185 = vst.msk [vmem:[#allocation2 + $0x8] sm:$0xff] %vm1184, %v1179
  %1186 = vst.msk [vmem:[#allocation2 + $0x38] sm:$0xff] %vm1184, %v1181
  %1189 = vrot.lane.b32.xlu0 %v1115, 112
  %v1190 = vpop.permute.xlu0 %1189
  %1191 = vrot.lane.b32.xlu0 %v1116, 112
  %v1192 = vpop.permute.xlu0 %1191
  %vm1195 = vcmask 1048448
  %1196 = vst.msk [vmem:[#allocation2 + $0x8] sm:$0xff] %vm1195, %v1190
  %vm1197 = vcmask 261120
  %1198 = vst.msk [vmem:[#allocation2 + $0x10] sm:$0xff] %vm1197, %v1190
  %1199 = vst.msk [vmem:[#allocation2 + $0x38] sm:$0xff] %vm1195, %v1192
  %1200 = vst.msk [vmem:[#allocation2 + $0x40] sm:$0xff] %vm1197, %v1192
  %1203 = vrot.lane.b32.xlu0 %v1117, 32
  %v1204 = vpop.permute.xlu0 %1203
  %1205 = vrot.lane.b32.xlu0 %v1118, 32
  %v1206 = vpop.permute.xlu0 %1205
  %vm1209 = vcmask 654592
  %1210 = vst.msk [vmem:[#allocation2 + $0x10] sm:$0xff] %vm1209, %v1204
  %1211 = vst.msk [vmem:[#allocation2 + $0x40] sm:$0xff] %vm1209, %v1206
  %1214 = vrot.lane.b32.xlu0 %v1119, 80
  %v1215 = vpop.permute.xlu0 %1214
  %1216 = vrot.lane.b32.xlu0 %v1120, 80
  %v1217 = vpop.permute.xlu0 %1216
  %vm1220 = vcmask 1048192
  %1221 = vst.msk [vmem:[#allocation2 + $0x10] sm:$0xff] %vm1220, %v1215
  %1222 = vst.msk [vmem:[#allocation2 + $0x40] sm:$0xff] %vm1220, %v1217
  %1223 = vst.msk [vmem:[#allocation2 + $0x18] sm:$0xff] %vm1137, %v1121
  %1224 = vst.msk [vmem:[#allocation2 + $0x48] sm:$0xff] %vm1137, %v1122
  %1227 = vrot.lane.b32.xlu0 %v1123, 48
  %v1228 = vpop.permute.xlu0 %1227
  %1229 = vrot.lane.b32.xlu0 %v1124, 48
  %v1230 = vpop.permute.xlu0 %1229
  %1233 = vst.msk [vmem:[#allocation2 + $0x18] sm:$0xff] %vm1148, %v1228
  %1234 = vst.msk [vmem:[#allocation2 + $0x48] sm:$0xff] %vm1148, %v1230
  %1237 = vrot.lane.b32.xlu0 %v1125, 96
  %v1238 = vpop.permute.xlu0 %1237
  %1239 = vrot.lane.b32.xlu0 %v1126, 96
  %v1240 = vpop.permute.xlu0 %1239
  %1243 = vst.msk [vmem:[#allocation2 + $0x18] sm:$0xff] %vm1159, %v1238
  %1244 = vst.msk [vmem:[#allocation2 + $0x20] sm:$0xff] %vm1161, %v1238
  %1245 = vst.msk [vmem:[#allocation2 + $0x48] sm:$0xff] %vm1159, %v1240
  %1246 = vst.msk [vmem:[#allocation2 + $0x50] sm:$0xff] %vm1161, %v1240
  %1249 = vrot.lane.b32.xlu0 %v1127, 16
  %v1250 = vpop.permute.xlu0 %1249
  %1251 = vrot.lane.b32.xlu0 %v1128, 16
  %v1252 = vpop.permute.xlu0 %1251
  %1255 = vst.msk [vmem:[#allocation2 + $0x20] sm:$0xff] %vm1173, %v1250
  %1256 = vst.msk [vmem:[#allocation2 + $0x50] sm:$0xff] %vm1173, %v1252
  %1259 = vrot.lane.b32.xlu0 %v1129, 64
  %v1260 = vpop.permute.xlu0 %1259
  %1261 = vrot.lane.b32.xlu0 %v1130, 64
  %v1262 = vpop.permute.xlu0 %1261
  %1265 = vst.msk [vmem:[#allocation2 + $0x20] sm:$0xff] %vm1184, %v1260
  %1266 = vst.msk [vmem:[#allocation2 + $0x50] sm:$0xff] %vm1184, %v1262
  %1269 = vrot.lane.b32.xlu0 %v1131, 112
  %v1270 = vpop.permute.xlu0 %1269
  %1271 = vrot.lane.b32.xlu0 %v1132, 112
  %v1272 = vpop.permute.xlu0 %1271
  %1275 = vst.msk [vmem:[#allocation2 + $0x20] sm:$0xff] %vm1195, %v1270
  %1276 = vst.msk [vmem:[#allocation2 + $0x28] sm:$0xff] %vm1197, %v1270
  %1277 = vst.msk [vmem:[#allocation2 + $0x50] sm:$0xff] %vm1195, %v1272
  %1278 = vst.msk [vmem:[#allocation2 + $0x58] sm:$0xff] %vm1197, %v1272
  %1281 = vrot.lane.b32.xlu0 %v1133, 32
  %v1282 = vpop.permute.xlu0 %1281
  %1283 = vrot.lane.b32.xlu0 %v1134, 32
  %v1284 = vpop.permute.xlu0 %1283
  %1287 = vst.msk [vmem:[#allocation2 + $0x28] sm:$0xff] %vm1209, %v1282
  %1288 = vst.msk [vmem:[#allocation2 + $0x58] sm:$0xff] %vm1209, %v1284
  %1291 = vrot.lane.b32.xlu0 %v1135, 80
  %v1292 = vpop.permute.xlu0 %1291
  %1293 = vrot.lane.b32.xlu0 %v1136, 80
  %v1294 = vpop.permute.xlu0 %1293
  %1297 = vst.msk [vmem:[#allocation2 + $0x28] sm:$0xff] %vm1220, %v1292
  %1298 = vst.msk [vmem:[#allocation2 + $0x58] sm:$0xff] %vm1220, %v1294
  %v1299 = vld [vmem:[#allocation2] sm:$0x3]
  %v1300 = vld [vmem:[#allocation2 + $0x8] sm:$0x3]
  %v1301 = vld [vmem:[#allocation2 + $0x10] sm:$0x3]
  %v1302 = vld [vmem:[#allocation2 + $0x18] sm:$0x3]
  %v1303 = vld [vmem:[#allocation2 + $0x20] sm:$0x3]
  %v1304 = vld [vmem:[#allocation2 + $0x28] sm:$0x3]
  %v1311 = vrot.slane %v1299, 6
  %v1312 = vrot.slane %v1300, 6
  %v1313 = vrot.slane %v1301, 6
  %v1314 = vrot.slane %v1302, 6
  %v1315 = vrot.slane %v1303, 6
  %v1316 = vrot.slane %v1304, 6
  %1317 = vrot.lane.b32.xlu0 %v1311, 80
  %v1318 = vpop.permute.xlu0 %1317
  %1319 = vrot.lane.b32.xlu0 %v1312, 80
  %v1320 = vpop.permute.xlu0 %1319
  %1321 = vrot.lane.b32.xlu0 %v1313, 80
  %v1322 = vpop.permute.xlu0 %1321
  %1323 = vrot.lane.b32.xlu0 %v1314, 80
  %v1324 = vpop.permute.xlu0 %1323
  %1325 = vrot.lane.b32.xlu0 %v1315, 80
  %v1326 = vpop.permute.xlu0 %1325
  %1327 = vrot.lane.b32.xlu0 %v1316, 80
  %v1328 = vpop.permute.xlu0 %1327
  %vm1329 = vcmask 654336
  %v1330 = vsel %vm1329, %v1318, %v1320
  %v1331 = vsel %vm1329, %v1320, %v1322
  %v1332 = vsel %vm1329, %v1322, %v1324
  %v1333 = vsel %vm1329, %v1324, %v1326
  %v1334 = vsel %vm1329, %v1326, %v1328
  %vm1335 = vcmask 1041408
  %v1338 = vsel %vm1335, %v1299, %v1330
  %v1342 = vsel %vm1335, %v1300, %v1331
  %v1346 = vsel %vm1335, %v1301, %v1332
  %v1350 = vsel %vm1335, %v1302, %v1333
  %v1354 = vsel %vm1335, %v1303, %v1334
  %v1358 = vsel %vm1335, %v1304, %v1328
  %v1359 = vld [vmem:[%s3] sm:$0xf]
  %v1360 = vld [vmem:[%s3 + $0x4] sm:$0xf]
  %v1361 = vld [vmem:[%s3 + $0x8] sm:$0xf]
  %v1362 = vld [vmem:[%s3 + $0xc] sm:$0xf]
  %v1363 = vld [vmem:[%s3 + $0x10] sm:$0xf]
  %v1364 = vld [vmem:[%s3 + $0x14] sm:$0xf]
  %v1365 = vld [vmem:[%s3 + $0x18] sm:$0xf]
  %v1366 = vld [vmem:[%s3 + $0x1c] sm:$0xf]
  %v1367 = vld [vmem:[%s3 + $0x20] sm:$0xf]
  %v1368 = vld [vmem:[%s3 + $0x24] sm:$0xf]
  %v1369 = vld [vmem:[%s3 + $0x28] sm:$0xf]
  %v1370 = vld [vmem:[%s3 + $0x2c] sm:$0xf]
  %v1371 = vld [vmem:[%s3 + $0x30] sm:$0xf]
  %v1372 = vld [vmem:[%s3 + $0x34] sm:$0xf]
  %v1373 = vld [vmem:[%s3 + $0x38] sm:$0xf]
  %v1374 = vld [vmem:[%s3 + $0x3c] sm:$0xf]
  %v1375 = vld [vmem:[%s3 + $0x40] sm:$0xf]
  %v1376 = vld [vmem:[%s3 + $0x44] sm:$0xf]
  %v1377 = vld [vmem:[%s3 + $0x48] sm:$0xf]
  %v1378 = vld [vmem:[%s3 + $0x4c] sm:$0xf]
  %v1379 = vld [vmem:[%s3 + $0x50] sm:$0xf]
  %v1380 = vld [vmem:[%s3 + $0x54] sm:$0xf]
  %v1381 = vld [vmem:[%s3 + $0x58] sm:$0xf]
  %v1382 = vld [vmem:[%s3 + $0x5c] sm:$0xf]
  %v1383 = vld [vmem:[%s3 + $0x60] sm:$0xf]
  %v1384 = vld [vmem:[%s3 + $0x64] sm:$0xf]
  %v1385 = vld [vmem:[%s3 + $0x68] sm:$0xf]
  %v1386 = vld [vmem:[%s3 + $0x6c] sm:$0xf]
  %v1387 = vld [vmem:[%s3 + $0x70] sm:$0xf]
  %v1388 = vld [vmem:[%s3 + $0x74] sm:$0xf]
  %v1389 = vld [vmem:[%s3 + $0x78] sm:$0xf]
  %v1390 = vld [vmem:[%s3 + $0x7c] sm:$0xf]
  %v1391 = vld [vmem:[%s3 + $0x80] sm:$0xf]
  %v1392 = vld [vmem:[%s3 + $0x84] sm:$0xf]
  %v1393 = vld [vmem:[%s3 + $0x88] sm:$0xf]
  %v1394 = vld [vmem:[%s3 + $0x8c] sm:$0xf]
  %v1395 = vld [vmem:[%s3 + $0x90] sm:$0xf]
  %v1396 = vld [vmem:[%s3 + $0x94] sm:$0xf]
  %v1397 = vld [vmem:[%s3 + $0x98] sm:$0xf]
  %v1398 = vld [vmem:[%s3 + $0x9c] sm:$0xf]
  %v1399 = vld [vmem:[%s3 + $0xa0] sm:$0xf]
  %v1400 = vld [vmem:[%s3 + $0xa4] sm:$0xf]
  %v1401 = vld [vmem:[%s3 + $0xa8] sm:$0xf]
  %v1402 = vld [vmem:[%s3 + $0xac] sm:$0xf]
  %v1403 = vld [vmem:[%s3 + $0xb0] sm:$0xf]
  %v1404 = vld [vmem:[%s3 + $0xb4] sm:$0xf]
  %v1405 = vld [vmem:[%s3 + $0xb8] sm:$0xf]
  %v1406 = vld [vmem:[%s3 + $0xbc] sm:$0xf]
  %v1407 = vld [vmem:[%s3 + $0xc0] sm:$0xf]
  %v1408 = vld [vmem:[%s3 + $0xc4] sm:$0xf]
  %v1409 = vld [vmem:[%s3 + $0xc8] sm:$0xf]
  %v1410 = vld [vmem:[%s3 + $0xcc] sm:$0xf]
  %v1411 = vld [vmem:[%s3 + $0xd0] sm:$0xf]
  %v1412 = vld [vmem:[%s3 + $0xd4] sm:$0xf]
  %v1413 = vld [vmem:[%s3 + $0xd8] sm:$0xf]
  %v1414 = vld [vmem:[%s3 + $0xdc] sm:$0xf]
  %v1415 = vld [vmem:[%s3 + $0xe0] sm:$0xf]
  %v1416 = vld [vmem:[%s3 + $0xe4] sm:$0xf]
  %v1417 = vld [vmem:[%s3 + $0xe8] sm:$0xf]
  %v1418 = vld [vmem:[%s3 + $0xec] sm:$0xf]
  %v1419 = vld [vmem:[%s3 + $0xf0] sm:$0xf]
  %v1420 = vld [vmem:[%s3 + $0xf4] sm:$0xf]
  %v1421 = vld [vmem:[%s3 + $0xf8] sm:$0xf]
  %v1422 = vld [vmem:[%s3 + $0xfc] sm:$0xf]
  %v1423 = vld [vmem:[%s3 + $0x100] sm:$0xf]
  %v1424 = vld [vmem:[%s3 + $0x104] sm:$0xf]
  %v1425 = vld [vmem:[%s3 + $0x108] sm:$0xf]
  %v1426 = vld [vmem:[%s3 + $0x10c] sm:$0xf]
  %v1427 = vld [vmem:[%s3 + $0x110] sm:$0xf]
  %v1428 = vld [vmem:[%s3 + $0x114] sm:$0xf]
  %v1429 = vld [vmem:[%s3 + $0x118] sm:$0xf]
  %v1430 = vld [vmem:[%s3 + $0x11c] sm:$0xf]
  %v1431 = vld [vmem:[%s3 + $0x120] sm:$0xf]
  %v1432 = vld [vmem:[%s3 + $0x124] sm:$0xf]
  %v1433 = vld [vmem:[%s3 + $0x128] sm:$0xf]
  %v1434 = vld [vmem:[%s3 + $0x12c] sm:$0xf]
  %v1435 = vld [vmem:[%s3 + $0x130] sm:$0xf]
  %v1436 = vld [vmem:[%s3 + $0x134] sm:$0xf]
  %v1437 = vld [vmem:[%s3 + $0x138] sm:$0xf]
  %v1438 = vld [vmem:[%s3 + $0x13c] sm:$0xf]
  %v1439 = vld [vmem:[%s3 + $0x140] sm:$0xf]
  %v1440 = vld [vmem:[%s3 + $0x144] sm:$0xf]
  %v1441 = vld [vmem:[%s3 + $0x148] sm:$0xf]
  %v1442 = vld [vmem:[%s3 + $0x14c] sm:$0xf]
  %v1443 = vld [vmem:[%s3 + $0x150] sm:$0xf]
  %v1444 = vld [vmem:[%s3 + $0x154] sm:$0xf]
  %v1445 = vld [vmem:[%s3 + $0x158] sm:$0xf]
  %v1446 = vld [vmem:[%s3 + $0x15c] sm:$0xf]
  %v1447 = vld [vmem:[%s3 + $0x160] sm:$0xf]
  %v1448 = vld [vmem:[%s3 + $0x164] sm:$0xf]
  %v1449 = vld [vmem:[#allocation2] sm:$0x6]
  %v1450 = vld [vmem:[#allocation2 + $0x8] sm:$0x6]
  %v1451 = vld [vmem:[#allocation2 + $0x10] sm:$0x6]
  %v1452 = vld [vmem:[#allocation2 + $0x18] sm:$0x6]
  %v1453 = vld [vmem:[#allocation2 + $0x20] sm:$0x6]
  %v1454 = vld [vmem:[#allocation2 + $0x28] sm:$0x6]
  %v1461 = vrot.slane %v1449, 1
  %v1462 = vrot.slane %v1450, 1
  %v1463 = vrot.slane %v1451, 1
  %v1464 = vrot.slane %v1452, 1
  %v1465 = vrot.slane %v1453, 1
  %v1466 = vrot.slane %v1454, 1
  %v1467 = vrot.slane %v1449, 7
  %v1468 = vrot.slane %v1450, 7
  %v1469 = vrot.slane %v1451, 7
  %v1470 = vrot.slane %v1452, 7
  %v1471 = vrot.slane %v1453, 7
  %v1472 = vrot.slane %v1454, 7
  %1473 = vrot.lane.b32.xlu0 %v1467, 80
  %v1474 = vpop.permute.xlu0 %1473
  %1475 = vrot.lane.b32.xlu0 %v1468, 80
  %v1476 = vpop.permute.xlu0 %1475
  %1477 = vrot.lane.b32.xlu0 %v1469, 80
  %v1478 = vpop.permute.xlu0 %1477
  %1479 = vrot.lane.b32.xlu0 %v1470, 80
  %v1480 = vpop.permute.xlu0 %1479
  %1481 = vrot.lane.b32.xlu0 %v1471, 80
  %v1482 = vpop.permute.xlu0 %1481
  %1483 = vrot.lane.b32.xlu0 %v1472, 80
  %v1484 = vpop.permute.xlu0 %1483
  %v1485 = vsel %vm1329, %v1474, %v1476
  %v1486 = vsel %vm1329, %v1476, %v1478
  %v1487 = vsel %vm1329, %v1478, %v1480
  %v1488 = vsel %vm1329, %v1480, %v1482
  %v1489 = vsel %vm1329, %v1482, %v1484
  %v1492 = vsel %vm1335, %v1461, %v1485
  %v1496 = vsel %vm1335, %v1462, %v1486
  %v1500 = vsel %vm1335, %v1463, %v1487
  %v1504 = vsel %vm1335, %v1464, %v1488
  %v1508 = vsel %vm1335, %v1465, %v1489
  %v1512 = vsel %vm1335, %v1466, %v1484
  %s1513 = scalar_lea.vmem %s3, 360
  %v1514 = vld [vmem:[%s1513] sm:$0xf]
  %v1515 = vld [vmem:[%s1513 + $0x4] sm:$0xf]
  %v1516 = vld [vmem:[%s1513 + $0x8] sm:$0xf]
  %v1517 = vld [vmem:[%s1513 + $0xc] sm:$0xf]
  %v1518 = vld [vmem:[%s1513 + $0x10] sm:$0xf]
  %v1519 = vld [vmem:[%s1513 + $0x14] sm:$0xf]
  %v1520 = vld [vmem:[%s1513 + $0x18] sm:$0xf]
  %v1521 = vld [vmem:[%s1513 + $0x1c] sm:$0xf]
  %v1522 = vld [vmem:[%s1513 + $0x20] sm:$0xf]
  %v1523 = vld [vmem:[%s1513 + $0x24] sm:$0xf]
  %v1524 = vld [vmem:[%s1513 + $0x28] sm:$0xf]
  %v1525 = vld [vmem:[%s1513 + $0x2c] sm:$0xf]
  %v1526 = vld [vmem:[%s1513 + $0x30] sm:$0xf]
  %v1527 = vld [vmem:[%s1513 + $0x34] sm:$0xf]
  %v1528 = vld [vmem:[%s1513 + $0x38] sm:$0xf]
  %v1529 = vld [vmem:[%s1513 + $0x3c] sm:$0xf]
  %v1530 = vld [vmem:[%s1513 + $0x40] sm:$0xf]
  %v1531 = vld [vmem:[%s1513 + $0x44] sm:$0xf]
  %v1532 = vld [vmem:[%s1513 + $0x48] sm:$0xf]
  %v1533 = vld [vmem:[%s1513 + $0x4c] sm:$0xf]
  %v1534 = vld [vmem:[%s1513 + $0x50] sm:$0xf]
  %v1535 = vld [vmem:[%s1513 + $0x54] sm:$0xf]
  %v1536 = vld [vmem:[%s1513 + $0x58] sm:$0xf]
  %v1537 = vld [vmem:[%s1513 + $0x5c] sm:$0xf]
  %v1538 = vld [vmem:[%s1513 + $0x60] sm:$0xf]
  %v1539 = vld [vmem:[%s1513 + $0x64] sm:$0xf]
  %v1540 = vld [vmem:[%s1513 + $0x68] sm:$0xf]
  %v1541 = vld [vmem:[%s1513 + $0x6c] sm:$0xf]
  %v1542 = vld [vmem:[%s1513 + $0x70] sm:$0xf]
  %v1543 = vld [vmem:[%s1513 + $0x74] sm:$0xf]
  %v1544 = vld [vmem:[%s1513 + $0x78] sm:$0xf]
  %v1545 = vld [vmem:[%s1513 + $0x7c] sm:$0xf]
  %v1546 = vld [vmem:[%s1513 + $0x80] sm:$0xf]
  %v1547 = vld [vmem:[%s1513 + $0x84] sm:$0xf]
  %v1548 = vld [vmem:[%s1513 + $0x88] sm:$0xf]
  %v1549 = vld [vmem:[%s1513 + $0x8c] sm:$0xf]
  %v1550 = vld [vmem:[%s1513 + $0x90] sm:$0xf]
  %v1551 = vld [vmem:[%s1513 + $0x94] sm:$0xf]
  %v1552 = vld [vmem:[%s1513 + $0x98] sm:$0xf]
  %v1553 = vld [vmem:[%s1513 + $0x9c] sm:$0xf]
  %v1554 = vld [vmem:[%s1513 + $0xa0] sm:$0xf]
  %v1555 = vld [vmem:[%s1513 + $0xa4] sm:$0xf]
  %v1556 = vld [vmem:[%s1513 + $0xa8] sm:$0xf]
  %v1557 = vld [vmem:[%s1513 + $0xac] sm:$0xf]
  %v1558 = vld [vmem:[%s1513 + $0xb0] sm:$0xf]
  %v1559 = vld [vmem:[%s1513 + $0xb4] sm:$0xf]
  %v1560 = vld [vmem:[%s1513 + $0xb8] sm:$0xf]
  %v1561 = vld [vmem:[%s1513 + $0xbc] sm:$0xf]
  %v1562 = vld [vmem:[%s1513 + $0xc0] sm:$0xf]
  %v1563 = vld [vmem:[%s1513 + $0xc4] sm:$0xf]
  %v1564 = vld [vmem:[%s1513 + $0xc8] sm:$0xf]
  %v1565 = vld [vmem:[%s1513 + $0xcc] sm:$0xf]
  %v1566 = vld [vmem:[%s1513 + $0xd0] sm:$0xf]
  %v1567 = vld [vmem:[%s1513 + $0xd4] sm:$0xf]
  %v1568 = vld [vmem:[%s1513 + $0xd8] sm:$0xf]
  %v1569 = vld [vmem:[%s1513 + $0xdc] sm:$0xf]
  %v1570 = vld [vmem:[%s1513 + $0xe0] sm:$0xf]
  %v1571 = vld [vmem:[%s1513 + $0xe4] sm:$0xf]
  %v1572 = vld [vmem:[%s1513 + $0xe8] sm:$0xf]
  %v1573 = vld [vmem:[%s1513 + $0xec] sm:$0xf]
  %v1574 = vld [vmem:[%s1513 + $0xf0] sm:$0xf]
  %v1575 = vld [vmem:[%s1513 + $0xf4] sm:$0xf]
  %v1576 = vld [vmem:[%s1513 + $0xf8] sm:$0xf]
  %v1577 = vld [vmem:[%s1513 + $0xfc] sm:$0xf]
  %v1578 = vld [vmem:[%s1513 + $0x100] sm:$0xf]
  %v1579 = vld [vmem:[%s1513 + $0x104] sm:$0xf]
  %v1580 = vld [vmem:[%s1513 + $0x108] sm:$0xf]
  %v1581 = vld [vmem:[%s1513 + $0x10c] sm:$0xf]
  %v1582 = vld [vmem:[%s1513 + $0x110] sm:$0xf]
  %v1583 = vld [vmem:[%s1513 + $0x114] sm:$0xf]
  %v1584 = vld [vmem:[%s1513 + $0x118] sm:$0xf]
  %v1585 = vld [vmem:[%s1513 + $0x11c] sm:$0xf]
  %v1586 = vld [vmem:[%s1513 + $0x120] sm:$0xf]
  %v1587 = vld [vmem:[%s1513 + $0x124] sm:$0xf]
  %v1588 = vld [vmem:[%s1513 + $0x128] sm:$0xf]
  %v1589 = vld [vmem:[%s1513 + $0x12c] sm:$0xf]
  %v1590 = vld [vmem:[%s1513 + $0x130] sm:$0xf]
  %v1591 = vld [vmem:[%s1513 + $0x134] sm:$0xf]
  %v1592 = vld [vmem:[%s1513 + $0x138] sm:$0xf]
  %v1593 = vld [vmem:[%s1513 + $0x13c] sm:$0xf]
  %v1594 = vld [vmem:[%s1513 + $0x140] sm:$0xf]
  %v1595 = vld [vmem:[%s1513 + $0x144] sm:$0xf]
  %v1596 = vld [vmem:[%s1513 + $0x148] sm:$0xf]
  %v1597 = vld [vmem:[%s1513 + $0x14c] sm:$0xf]
  %v1598 = vld [vmem:[%s1513 + $0x150] sm:$0xf]
  %v1599 = vld [vmem:[%s1513 + $0x154] sm:$0xf]
  %v1600 = vld [vmem:[%s1513 + $0x158] sm:$0xf]
  %v1601 = vld [vmem:[%s1513 + $0x15c] sm:$0xf]
  %v1602 = vld [vmem:[%s1513 + $0x160] sm:$0xf]
  %v1603 = vld [vmem:[%s1513 + $0x164] sm:$0xf]
  %v1694 = vunpack.c.l.b16 %v1514
  %v1695 = vunpack.c.l.b16 %v1515
  %v1696 = vunpack.c.l.b16 %v1516
  %v1697 = vunpack.c.l.b16 %v1517
  %v1698 = vunpack.c.l.b16 %v1518
  %v1699 = vunpack.c.l.b16 %v1519
  %v1700 = vunpack.c.l.b16 %v1520
  %v1701 = vunpack.c.l.b16 %v1521
  %v1702 = vunpack.c.l.b16 %v1522
  %v1703 = vunpack.c.l.b16 %v1523
  %v1704 = vunpack.c.l.b16 %v1524
  %v1705 = vunpack.c.l.b16 %v1525
  %v1706 = vunpack.c.l.b16 %v1526
  %v1707 = vunpack.c.l.b16 %v1527
  %v1708 = vunpack.c.l.b16 %v1528
  %v1709 = vunpack.c.l.b16 %v1529
  %v1710 = vunpack.c.l.b16 %v1530
  %v1711 = vunpack.c.l.b16 %v1531
  %v1712 = vunpack.c.l.b16 %v1532
  %v1713 = vunpack.c.l.b16 %v1533
  %v1714 = vunpack.c.l.b16 %v1534
  %v1715 = vunpack.c.l.b16 %v1535
  %v1716 = vunpack.c.l.b16 %v1536
  %v1717 = vunpack.c.l.b16 %v1537
  %v1718 = vunpack.c.l.b16 %v1538
  %v1719 = vunpack.c.l.b16 %v1539
  %v1720 = vunpack.c.l.b16 %v1540
  %v1721 = vunpack.c.l.b16 %v1541
  %v1722 = vunpack.c.l.b16 %v1542
  %v1723 = vunpack.c.l.b16 %v1543
  %v1724 = vunpack.c.l.b16 %v1544
  %v1725 = vunpack.c.l.b16 %v1545
  %v1726 = vunpack.c.l.b16 %v1546
  %v1727 = vunpack.c.l.b16 %v1547
  %v1728 = vunpack.c.l.b16 %v1548
  %v1729 = vunpack.c.l.b16 %v1549
  %v1730 = vunpack.c.l.b16 %v1550
  %v1731 = vunpack.c.l.b16 %v1551
  %v1732 = vunpack.c.l.b16 %v1552
  %v1733 = vunpack.c.l.b16 %v1553
  %v1734 = vunpack.c.l.b16 %v1554
  %v1735 = vunpack.c.l.b16 %v1555
  %v1736 = vunpack.c.l.b16 %v1556
  %v1737 = vunpack.c.l.b16 %v1557
  %v1738 = vunpack.c.l.b16 %v1558
  %v1739 = vunpack.c.l.b16 %v1559
  %v1740 = vunpack.c.l.b16 %v1560
  %v1741 = vunpack.c.l.b16 %v1561
  %v1742 = vunpack.c.l.b16 %v1562
  %v1743 = vunpack.c.l.b16 %v1563
  %v1744 = vunpack.c.l.b16 %v1564
  %v1745 = vunpack.c.l.b16 %v1565
  %v1746 = vunpack.c.l.b16 %v1566
  %v1747 = vunpack.c.l.b16 %v1567
  %v1748 = vunpack.c.l.b16 %v1568
  %v1749 = vunpack.c.l.b16 %v1569
  %v1750 = vunpack.c.l.b16 %v1570
  %v1751 = vunpack.c.l.b16 %v1571
  %v1752 = vunpack.c.l.b16 %v1572
  %v1753 = vunpack.c.l.b16 %v1573
  %v1754 = vunpack.c.l.b16 %v1574
  %v1755 = vunpack.c.l.b16 %v1575
  %v1756 = vunpack.c.l.b16 %v1576
  %v1757 = vunpack.c.l.b16 %v1577
  %v1758 = vunpack.c.l.b16 %v1578
  %v1759 = vunpack.c.l.b16 %v1579
  %v1760 = vunpack.c.l.b16 %v1580
  %v1761 = vunpack.c.l.b16 %v1581
  %v1762 = vunpack.c.l.b16 %v1582
  %v1763 = vunpack.c.l.b16 %v1583
  %v1764 = vunpack.c.l.b16 %v1584
  %v1765 = vunpack.c.l.b16 %v1585
  %v1766 = vunpack.c.l.b16 %v1586
  %v1767 = vunpack.c.l.b16 %v1587
  %v1768 = vunpack.c.l.b16 %v1588
  %v1769 = vunpack.c.l.b16 %v1589
  %v1770 = vunpack.c.l.b16 %v1590
  %v1771 = vunpack.c.l.b16 %v1591
  %v1772 = vunpack.c.l.b16 %v1592
  %v1773 = vunpack.c.l.b16 %v1593
  %v1774 = vunpack.c.l.b16 %v1594
  %v1775 = vunpack.c.l.b16 %v1595
  %v1776 = vunpack.c.l.b16 %v1596
  %v1777 = vunpack.c.l.b16 %v1597
  %v1778 = vunpack.c.l.b16 %v1598
  %v1779 = vunpack.c.l.b16 %v1599
  %v1780 = vunpack.c.l.b16 %v1600
  %v1781 = vunpack.c.l.b16 %v1601
  %v1782 = vunpack.c.l.b16 %v1602
  %v1783 = vunpack.c.l.b16 %v1603
  %v1784 = vpack.c.b16 %v1695, %v1694
  %v1785 = vpack.c.b16 %v1697, %v1696
  %v1786 = vpack.c.b16 %v1699, %v1698
  %v1787 = vpack.c.b16 %v1701, %v1700
  %v1788 = vpack.c.b16 %v1703, %v1702
  %v1789 = vpack.c.b16 %v1705, %v1704
  %v1790 = vpack.c.b16 %v1707, %v1706
  %v1791 = vpack.c.b16 %v1709, %v1708
  %v1792 = vpack.c.b16 %v1711, %v1710
  %v1793 = vpack.c.b16 %v1713, %v1712
  %v1794 = vpack.c.b16 %v1715, %v1714
  %v1795 = vpack.c.b16 %v1717, %v1716
  %v1796 = vpack.c.b16 %v1719, %v1718
  %v1797 = vpack.c.b16 %v1721, %v1720
  %v1798 = vpack.c.b16 %v1723, %v1722
  %v1799 = vpack.c.b16 %v1725, %v1724
  %v1800 = vpack.c.b16 %v1727, %v1726
  %v1801 = vpack.c.b16 %v1729, %v1728
  %v1802 = vpack.c.b16 %v1731, %v1730
  %v1803 = vpack.c.b16 %v1733, %v1732
  %v1804 = vpack.c.b16 %v1735, %v1734
  %v1805 = vpack.c.b16 %v1737, %v1736
  %v1806 = vpack.c.b16 %v1739, %v1738
  %v1807 = vpack.c.b16 %v1741, %v1740
  %v1808 = vpack.c.b16 %v1743, %v1742
  %v1809 = vpack.c.b16 %v1745, %v1744
  %v1810 = vpack.c.b16 %v1747, %v1746
  %v1811 = vpack.c.b16 %v1749, %v1748
  %v1812 = vpack.c.b16 %v1751, %v1750
  %v1813 = vpack.c.b16 %v1753, %v1752
  %v1814 = vpack.c.b16 %v1755, %v1754
  %v1815 = vpack.c.b16 %v1757, %v1756
  %v1816 = vpack.c.b16 %v1759, %v1758
  %v1817 = vpack.c.b16 %v1761, %v1760
  %v1818 = vpack.c.b16 %v1763, %v1762
  %v1819 = vpack.c.b16 %v1765, %v1764
  %v1820 = vpack.c.b16 %v1767, %v1766
  %v1821 = vpack.c.b16 %v1769, %v1768
  %v1822 = vpack.c.b16 %v1771, %v1770
  %v1823 = vpack.c.b16 %v1773, %v1772
  %v1824 = vpack.c.b16 %v1775, %v1774
  %v1825 = vpack.c.b16 %v1777, %v1776
  %v1826 = vpack.c.b16 %v1779, %v1778
  %v1827 = vpack.c.b16 %v1781, %v1780
  %v1828 = vpack.c.b16 %v1783, %v1782
  %vm1874 = vcmask 654336
  %v1875 = vsel %vm1874, %v1512, 0
  %1877 = vmatprep.subr.bf16.mxu0 0
  %1878 = vmatpush1.bf16.msra.mxu0 %v1784
  %1879 = vmatprep.subr.bf16.mxu0 0
  %1880 = vmatpush1.bf16.msra.mxu0 %v1785
  %1881 = vmatprep.subr.bf16.mxu0 0
  %1882 = vmatpush1.bf16.msra.mxu0 %v1786
  %1883 = vmatprep.subr.bf16.mxu0 0
  %1884 = vmatpush1.bf16.msra.mxu0 %v1787
  %1885 = vmatprep.subr.bf16.mxu0 0
  %1886 = vmatpush1.bf16.msra.mxu0 %v1788
  %1887 = vmatprep.subr.bf16.mxu0 0
  %1888 = vmatpush1.bf16.msra.mxu0 %v1789
  %1889 = vmatprep.subr.bf16.mxu0 0
  %1890 = vmatpush1.bf16.msra.mxu0 %v1790
  %1891 = vmatprep.subr.bf16.mxu0 0
  %1892 = vmatpush1.bf16.msra.mxu0 %v1791
  %1893 = vmatprep.subr.bf16.mxu0 0
  %1894 = vmatpush1.bf16.msra.mxu0 %v1792
  %1895 = vmatprep.subr.bf16.mxu0 0
  %1896 = vmatpush1.bf16.msra.mxu0 %v1793
  %1897 = vmatprep.subr.bf16.mxu0 0
  %1898 = vmatpush1.bf16.msra.mxu0 %v1794
  %1899 = vmatprep.subr.bf16.mxu0 0
  %1900 = vmatpush1.bf16.msra.mxu0 %v1795
  %1901 = vmatprep.subr.bf16.mxu0 0
  %1902 = vmatpush1.bf16.msra.mxu0 %v1796
  %1903 = vmatprep.subr.bf16.mxu0 0
  %1904 = vmatpush1.bf16.msra.mxu0 %v1797
  %1905 = vmatprep.subr.bf16.mxu0 0
  %1906 = vmatpush1.bf16.msra.mxu0 %v1798
  %1907 = vmatprep.subr.bf16.mxu0 0
  %1908 = vmatpush1.bf16.msra.mxu0 %v1799
  %1909 = vmatprep.mubr.bf16.mxu0 %v1496
  %1910 = vmatmul.mubr.bf16.gmra.mrb[0].mxu0 %v1492
  %v1911 = vpop.f32.mrb[0].mxu0
  %v1912 = vadd.f32 0.0, %v1911
  %v1913 = vpop.f32.mrb[0].mxu0
  %v1914 = vpop.f32.mrb[0].mxu0
  %v1915 = vpop.f32.mrb[0].mxu0
  %1916 = vdwg.mxu0
  %1917 = vmatprep.subr.bf16.mxu0 0
  %1918 = vmatpush1.bf16.msra.mxu0 %v1800
  %1919 = vmatprep.subr.bf16.mxu0 0
  %1920 = vmatpush1.bf16.msra.mxu0 %v1801
  %1921 = vmatprep.subr.bf16.mxu0 0
  %1922 = vmatpush1.bf16.msra.mxu0 %v1802
  %1923 = vmatprep.subr.bf16.mxu0 0
  %1924 = vmatpush1.bf16.msra.mxu0 %v1803
  %1925 = vmatprep.subr.bf16.mxu0 0
  %1926 = vmatpush1.bf16.msra.mxu0 %v1804
  %1927 = vmatprep.subr.bf16.mxu0 0
  %1928 = vmatpush1.bf16.msra.mxu0 %v1805
  %1929 = vmatprep.subr.bf16.mxu0 0
  %1930 = vmatpush1.bf16.msra.mxu0 %v1806
  %1931 = vmatprep.subr.bf16.mxu0 0
  %1932 = vmatpush1.bf16.msra.mxu0 %v1807
  %1933 = vmatprep.subr.bf16.mxu0 0
  %1934 = vmatpush1.bf16.msra.mxu0 %v1808
  %1935 = vmatprep.subr.bf16.mxu0 0
  %1936 = vmatpush1.bf16.msra.mxu0 %v1809
  %1937 = vmatprep.subr.bf16.mxu0 0
  %1938 = vmatpush1.bf16.msra.mxu0 %v1810
  %1939 = vmatprep.subr.bf16.mxu0 0
  %1940 = vmatpush1.bf16.msra.mxu0 %v1811
  %1941 = vmatprep.subr.bf16.mxu0 0
  %1942 = vmatpush1.bf16.msra.mxu0 %v1812
  %1943 = vmatprep.subr.bf16.mxu0 0
  %1944 = vmatpush1.bf16.msra.mxu0 %v1813
  %1945 = vmatprep.subr.bf16.mxu0 0
  %1946 = vmatpush1.bf16.msra.mxu0 %v1814
  %1947 = vmatprep.subr.bf16.mxu0 0
  %1948 = vmatpush1.bf16.msra.mxu0 %v1815
  %1949 = vmatprep.mubr.bf16.mxu0 %v1504
  %1950 = vmatmul.mubr.bf16.gmra.mrb[0].mxu0 %v1500
  %v1951 = vpop.f32.mrb[0].mxu0
  %v1952 = vadd.f32 %v1912, %v1951
  %v1953 = vpop.f32.mrb[0].mxu0
  %v1954 = vpop.f32.mrb[0].mxu0
  %v1955 = vpop.f32.mrb[0].mxu0
  %1956 = vdwg.mxu0
  %1957 = vmatprep.subr.bf16.mxu0 0
  %1958 = vmatpush1.bf16.msra.mxu0 %v1816
  %1959 = vmatprep.subr.bf16.mxu0 0
  %1960 = vmatpush1.bf16.msra.mxu0 %v1817
  %1961 = vmatprep.subr.bf16.mxu0 0
  %1962 = vmatpush1.bf16.msra.mxu0 %v1818
  %1963 = vmatprep.subr.bf16.mxu0 0
  %1964 = vmatpush1.bf16.msra.mxu0 %v1819
  %1965 = vmatprep.subr.bf16.mxu0 0
  %1966 = vmatpush1.bf16.msra.mxu0 %v1820
  %1967 = vmatprep.subr.bf16.mxu0 0
  %1968 = vmatpush1.bf16.msra.mxu0 %v1821
  %1969 = vmatprep.subr.bf16.mxu0 0
  %1970 = vmatpush1.bf16.msra.mxu0 %v1822
  %1971 = vmatprep.subr.bf16.mxu0 0
  %1972 = vmatpush1.bf16.msra.mxu0 %v1823
  %1973 = vmatprep.subr.bf16.mxu0 0
  %1974 = vmatpush1.bf16.msra.mxu0 %v1824
  %1975 = vmatprep.subr.bf16.mxu0 0
  %1976 = vmatpush1.bf16.msra.mxu0 %v1825
  %1977 = vmatprep.subr.bf16.mxu0 0
  %1978 = vmatpush1.bf16.msra.mxu0 %v1826
  %1979 = vmatprep.subr.bf16.mxu0 0
  %1980 = vmatpush1.bf16.msra.mxu0 %v1827
  %1981 = vmatprep.subr.bf16.mxu0 0
  %1982 = vmatpush1.bf16.msra.mxu0 %v1828
  %1983 = vmatprep.subr.bf16.mxu0 0
  %1984 = vmatpush1.bf16.msra.mxu0 0
  %1985 = vmatprep.subr.bf16.mxu0 0
  %1986 = vmatpush1.bf16.msra.mxu0 0
  %1987 = vmatprep.subr.bf16.mxu0 0
  %1988 = vmatpush1.bf16.msra.mxu0 0
  %1989 = vmatprep.mubr.bf16.mxu0 %v1875
  %1990 = vmatmul.mubr.bf16.gmra.mrb[0].mxu0 %v1508
  %v1991 = vpop.f32.mrb[0].mxu0
  %v1992 = vadd.f32 %v1952, %v1991
  %v1993 = vpop.f32.mrb[0].mxu0
  %v1994 = vpop.f32.mrb[0].mxu0
  %v1995 = vpop.f32.mrb[0].mxu0
  %1996 = vdwg.mxu0
  %v2087 = vunpack.c.l.b16 %v1359
  %v2088 = vunpack.c.l.b16 %v1360
  %v2089 = vunpack.c.l.b16 %v1361
  %v2090 = vunpack.c.l.b16 %v1362
  %v2091 = vunpack.c.l.b16 %v1363
  %v2092 = vunpack.c.l.b16 %v1364
  %v2093 = vunpack.c.l.b16 %v1365
  %v2094 = vunpack.c.l.b16 %v1366
  %v2095 = vunpack.c.l.b16 %v1367
  %v2096 = vunpack.c.l.b16 %v1368
  %v2097 = vunpack.c.l.b16 %v1369
  %v2098 = vunpack.c.l.b16 %v1370
  %v2099 = vunpack.c.l.b16 %v1371
  %v2100 = vunpack.c.l.b16 %v1372
  %v2101 = vunpack.c.l.b16 %v1373
  %v2102 = vunpack.c.l.b16 %v1374
  %v2103 = vunpack.c.l.b16 %v1375
  %v2104 = vunpack.c.l.b16 %v1376
  %v2105 = vunpack.c.l.b16 %v1377
  %v2106 = vunpack.c.l.b16 %v1378
  %v2107 = vunpack.c.l.b16 %v1379
  %v2108 = vunpack.c.l.b16 %v1380
  %v2109 = vunpack.c.l.b16 %v1381
  %v2110 = vunpack.c.l.b16 %v1382
  %v2111 = vunpack.c.l.b16 %v1383
  %v2112 = vunpack.c.l.b16 %v1384
  %v2113 = vunpack.c.l.b16 %v1385
  %v2114 = vunpack.c.l.b16 %v1386
  %v2115 = vunpack.c.l.b16 %v1387
  %v2116 = vunpack.c.l.b16 %v1388
  %v2117 = vunpack.c.l.b16 %v1389
  %v2118 = vunpack.c.l.b16 %v1390
  %v2119 = vunpack.c.l.b16 %v1391
  %v2120 = vunpack.c.l.b16 %v1392
  %v2121 = vunpack.c.l.b16 %v1393
  %v2122 = vunpack.c.l.b16 %v1394
  %v2123 = vunpack.c.l.b16 %v1395
  %v2124 = vunpack.c.l.b16 %v1396
  %v2125 = vunpack.c.l.b16 %v1397
  %v2126 = vunpack.c.l.b16 %v1398
  %v2127 = vunpack.c.l.b16 %v1399
  %v2128 = vunpack.c.l.b16 %v1400
  %v2129 = vunpack.c.l.b16 %v1401
  %v2130 = vunpack.c.l.b16 %v1402
  %v2131 = vunpack.c.l.b16 %v1403
  %v2132 = vunpack.c.l.b16 %v1404
  %v2133 = vunpack.c.l.b16 %v1405
  %v2134 = vunpack.c.l.b16 %v1406
  %v2135 = vunpack.c.l.b16 %v1407
  %v2136 = vunpack.c.l.b16 %v1408
  %v2137 = vunpack.c.l.b16 %v1409
  %v2138 = vunpack.c.l.b16 %v1410
  %v2139 = vunpack.c.l.b16 %v1411
  %v2140 = vunpack.c.l.b16 %v1412
  %v2141 = vunpack.c.l.b16 %v1413
  %v2142 = vunpack.c.l.b16 %v1414
  %v2143 = vunpack.c.l.b16 %v1415
  %v2144 = vunpack.c.l.b16 %v1416
  %v2145 = vunpack.c.l.b16 %v1417
  %v2146 = vunpack.c.l.b16 %v1418
  %v2147 = vunpack.c.l.b16 %v1419
  %v2148 = vunpack.c.l.b16 %v1420
  %v2149 = vunpack.c.l.b16 %v1421
  %v2150 = vunpack.c.l.b16 %v1422
  %v2151 = vunpack.c.l.b16 %v1423
  %v2152 = vunpack.c.l.b16 %v1424
  %v2153 = vunpack.c.l.b16 %v1425
  %v2154 = vunpack.c.l.b16 %v1426
  %v2155 = vunpack.c.l.b16 %v1427
  %v2156 = vunpack.c.l.b16 %v1428
  %v2157 = vunpack.c.l.b16 %v1429
  %v2158 = vunpack.c.l.b16 %v1430
  %v2159 = vunpack.c.l.b16 %v1431
  %v2160 = vunpack.c.l.b16 %v1432
  %v2161 = vunpack.c.l.b16 %v1433
  %v2162 = vunpack.c.l.b16 %v1434
  %v2163 = vunpack.c.l.b16 %v1435
  %v2164 = vunpack.c.l.b16 %v1436
  %v2165 = vunpack.c.l.b16 %v1437
  %v2166 = vunpack.c.l.b16 %v1438
  %v2167 = vunpack.c.l.b16 %v1439
  %v2168 = vunpack.c.l.b16 %v1440
  %v2169 = vunpack.c.l.b16 %v1441
  %v2170 = vunpack.c.l.b16 %v1442
  %v2171 = vunpack.c.l.b16 %v1443
  %v2172 = vunpack.c.l.b16 %v1444
  %v2173 = vunpack.c.l.b16 %v1445
  %v2174 = vunpack.c.l.b16 %v1446
  %v2175 = vunpack.c.l.b16 %v1447
  %v2176 = vunpack.c.l.b16 %v1448
  %v2177 = vpack.c.b16 %v2088, %v2087
  %v2178 = vpack.c.b16 %v2090, %v2089
  %v2179 = vpack.c.b16 %v2092, %v2091
  %v2180 = vpack.c.b16 %v2094, %v2093
  %v2181 = vpack.c.b16 %v2096, %v2095
  %v2182 = vpack.c.b16 %v2098, %v2097
  %v2183 = vpack.c.b16 %v2100, %v2099
  %v2184 = vpack.c.b16 %v2102, %v2101
  %v2185 = vpack.c.b16 %v2104, %v2103
  %v2186 = vpack.c.b16 %v2106, %v2105
  %v2187 = vpack.c.b16 %v2108, %v2107
  %v2188 = vpack.c.b16 %v2110, %v2109
  %v2189 = vpack.c.b16 %v2112, %v2111
  %v2190 = vpack.c.b16 %v2114, %v2113
  %v2191 = vpack.c.b16 %v2116, %v2115
  %v2192 = vpack.c.b16 %v2118, %v2117
  %v2193 = vpack.c.b16 %v2120, %v2119
  %v2194 = vpack.c.b16 %v2122, %v2121
  %v2195 = vpack.c.b16 %v2124, %v2123
  %v2196 = vpack.c.b16 %v2126, %v2125
  %v2197 = vpack.c.b16 %v2128, %v2127
  %v2198 = vpack.c.b16 %v2130, %v2129
  %v2199 = vpack.c.b16 %v2132, %v2131
  %v2200 = vpack.c.b16 %v2134, %v2133
  %v2201 = vpack.c.b16 %v2136, %v2135
  %v2202 = vpack.c.b16 %v2138, %v2137
  %v2203 = vpack.c.b16 %v2140, %v2139
  %v2204 = vpack.c.b16 %v2142, %v2141
  %v2205 = vpack.c.b16 %v2144, %v2143
  %v2206 = vpack.c.b16 %v2146, %v2145
  %v2207 = vpack.c.b16 %v2148, %v2147
  %v2208 = vpack.c.b16 %v2150, %v2149
  %v2209 = vpack.c.b16 %v2152, %v2151
  %v2210 = vpack.c.b16 %v2154, %v2153
  %v2211 = vpack.c.b16 %v2156, %v2155
  %v2212 = vpack.c.b16 %v2158, %v2157
  %v2213 = vpack.c.b16 %v2160, %v2159
  %v2214 = vpack.c.b16 %v2162, %v2161
  %v2215 = vpack.c.b16 %v2164, %v2163
  %v2216 = vpack.c.b16 %v2166, %v2165
  %v2217 = vpack.c.b16 %v2168, %v2167
  %v2218 = vpack.c.b16 %v2170, %v2169
  %v2219 = vpack.c.b16 %v2172, %v2171
  %v2220 = vpack.c.b16 %v2174, %v2173
  %v2221 = vpack.c.b16 %v2176, %v2175
  %v2267 = vsel %vm1874, %v1358, 0
  %2269 = vmatprep.subr.bf16.mxu0 0
  %2270 = vmatpush1.bf16.msra.mxu0 %v2177
  %2271 = vmatprep.subr.bf16.mxu0 0
  %2272 = vmatpush1.bf16.msra.mxu0 %v2178
  %2273 = vmatprep.subr.bf16.mxu0 0
  %2274 = vmatpush1.bf16.msra.mxu0 %v2179
  %2275 = vmatprep.subr.bf16.mxu0 0
  %2276 = vmatpush1.bf16.msra.mxu0 %v2180
  %2277 = vmatprep.subr.bf16.mxu0 0
  %2278 = vmatpush1.bf16.msra.mxu0 %v2181
  %2279 = vmatprep.subr.bf16.mxu0 0
  %2280 = vmatpush1.bf16.msra.mxu0 %v2182
  %2281 = vmatprep.subr.bf16.mxu0 0
  %2282 = vmatpush1.bf16.msra.mxu0 %v2183
  %2283 = vmatprep.subr.bf16.mxu0 0
  %2284 = vmatpush1.bf16.msra.mxu0 %v2184
  %2285 = vmatprep.subr.bf16.mxu0 0
  %2286 = vmatpush1.bf16.msra.mxu0 %v2185
  %2287 = vmatprep.subr.bf16.mxu0 0
  %2288 = vmatpush1.bf16.msra.mxu0 %v2186
  %2289 = vmatprep.subr.bf16.mxu0 0
  %2290 = vmatpush1.bf16.msra.mxu0 %v2187
  %2291 = vmatprep.subr.bf16.mxu0 0
  %2292 = vmatpush1.bf16.msra.mxu0 %v2188
  %2293 = vmatprep.subr.bf16.mxu0 0
  %2294 = vmatpush1.bf16.msra.mxu0 %v2189
  %2295 = vmatprep.subr.bf16.mxu0 0
  %2296 = vmatpush1.bf16.msra.mxu0 %v2190
  %2297 = vmatprep.subr.bf16.mxu0 0
  %2298 = vmatpush1.bf16.msra.mxu0 %v2191
  %2299 = vmatprep.subr.bf16.mxu0 0
  %2300 = vmatpush1.bf16.msra.mxu0 %v2192
  %2301 = vmatprep.mubr.bf16.mxu0 %v1342
  %2302 = vmatmul.mubr.bf16.gmra.mrb[0].mxu0 %v1338
  %v2303 = vpop.f32.mrb[0].mxu0
  %v2304 = vadd.f32 %v1992, %v2303
  %v2305 = vpop.f32.mrb[0].mxu0
  %v2306 = vpop.f32.mrb[0].mxu0
  %v2307 = vpop.f32.mrb[0].mxu0
  %2308 = vdwg.mxu0
  %2309 = vmatprep.subr.bf16.mxu0 0
  %2310 = vmatpush1.bf16.msra.mxu0 %v2193
  %2311 = vmatprep.subr.bf16.mxu0 0
  %2312 = vmatpush1.bf16.msra.mxu0 %v2194
  %2313 = vmatprep.subr.bf16.mxu0 0
  %2314 = vmatpush1.bf16.msra.mxu0 %v2195
  %2315 = vmatprep.subr.bf16.mxu0 0
  %2316 = vmatpush1.bf16.msra.mxu0 %v2196
  %2317 = vmatprep.subr.bf16.mxu0 0
  %2318 = vmatpush1.bf16.msra.mxu0 %v2197
  %2319 = vmatprep.subr.bf16.mxu0 0
  %2320 = vmatpush1.bf16.msra.mxu0 %v2198
  %2321 = vmatprep.subr.bf16.mxu0 0
  %2322 = vmatpush1.bf16.msra.mxu0 %v2199
  %2323 = vmatprep.subr.bf16.mxu0 0
  %2324 = vmatpush1.bf16.msra.mxu0 %v2200
  %2325 = vmatprep.subr.bf16.mxu0 0
  %2326 = vmatpush1.bf16.msra.mxu0 %v2201
  %2327 = vmatprep.subr.bf16.mxu0 0
  %2328 = vmatpush1.bf16.msra.mxu0 %v2202
  %2329 = vmatprep.subr.bf16.mxu0 0
  %2330 = vmatpush1.bf16.msra.mxu0 %v2203
  %2331 = vmatprep.subr.bf16.mxu0 0
  %2332 = vmatpush1.bf16.msra.mxu0 %v2204
  %2333 = vmatprep.subr.bf16.mxu0 0
  %2334 = vmatpush1.bf16.msra.mxu0 %v2205
  %2335 = vmatprep.subr.bf16.mxu0 0
  %2336 = vmatpush1.bf16.msra.mxu0 %v2206
  %2337 = vmatprep.subr.bf16.mxu0 0
  %2338 = vmatpush1.bf16.msra.mxu0 %v2207
  %2339 = vmatprep.subr.bf16.mxu0 0
  %2340 = vmatpush1.bf16.msra.mxu0 %v2208
  %2341 = vmatprep.mubr.bf16.mxu0 %v1350
  %2342 = vmatmul.mubr.bf16.gmra.mrb[0].mxu0 %v1346
  %v2343 = vpop.f32.mrb[0].mxu0
  %v2344 = vadd.f32 %v2304, %v2343
  %v2345 = vpop.f32.mrb[0].mxu0
  %v2346 = vpop.f32.mrb[0].mxu0
  %v2347 = vpop.f32.mrb[0].mxu0
  %2348 = vdwg.mxu0
  %2349 = vmatprep.subr.bf16.mxu0 0
  %2350 = vmatpush1.bf16.msra.mxu0 %v2209
  %2351 = vmatprep.subr.bf16.mxu0 0
  %2352 = vmatpush1.bf16.msra.mxu0 %v2210
  %2353 = vmatprep.subr.bf16.mxu0 0
  %2354 = vmatpush1.bf16.msra.mxu0 %v2211
  %2355 = vmatprep.subr.bf16.mxu0 0
  %2356 = vmatpush1.bf16.msra.mxu0 %v2212
  %2357 = vmatprep.subr.bf16.mxu0 0
  %2358 = vmatpush1.bf16.msra.mxu0 %v2213
  %2359 = vmatprep.subr.bf16.mxu0 0
  %2360 = vmatpush1.bf16.msra.mxu0 %v2214
  %2361 = vmatprep.subr.bf16.mxu0 0
  %2362 = vmatpush1.bf16.msra.mxu0 %v2215
  %2363 = vmatprep.subr.bf16.mxu0 0
  %2364 = vmatpush1.bf16.msra.mxu0 %v2216
  %2365 = vmatprep.subr.bf16.mxu0 0
  %2366 = vmatpush1.bf16.msra.mxu0 %v2217
  %2367 = vmatprep.subr.bf16.mxu0 0
  %2368 = vmatpush1.bf16.msra.mxu0 %v2218
  %2369 = vmatprep.subr.bf16.mxu0 0
  %2370 = vmatpush1.bf16.msra.mxu0 %v2219
  %2371 = vmatprep.subr.bf16.mxu0 0
  %2372 = vmatpush1.bf16.msra.mxu0 %v2220
  %2373 = vmatprep.subr.bf16.mxu0 0
  %2374 = vmatpush1.bf16.msra.mxu0 %v2221
  %2375 = vmatprep.subr.bf16.mxu0 0
  %2376 = vmatpush1.bf16.msra.mxu0 0
  %2377 = vmatprep.subr.bf16.mxu0 0
  %2378 = vmatpush1.bf16.msra.mxu0 0
  %2379 = vmatprep.subr.bf16.mxu0 0
  %2380 = vmatpush1.bf16.msra.mxu0 0
  %2381 = vmatprep.mubr.bf16.mxu0 %v2267
  %2382 = vmatmul.mubr.bf16.gmra.mrb[0].mxu0 %v1354
  %v2383 = vpop.f32.mrb[0].mxu0
  %v2384 = vadd.f32 %v2344, %v2383
  %v2385 = vpop.f32.mrb[0].mxu0
  %v2386 = vpop.f32.mrb[0].mxu0
  %v2387 = vpop.f32.mrb[0].mxu0
  %2388 = vdwg.mxu0
  %v2389 = vld [vmem:[#allocation2] sm:$0xc]
  %v2390 = vld [vmem:[#allocation2 + $0x8] sm:$0xc]
  %v2391 = vld [vmem:[#allocation2 + $0x10] sm:$0xc]
  %v2392 = vld [vmem:[#allocation2 + $0x18] sm:$0xc]
  %v2393 = vld [vmem:[#allocation2 + $0x20] sm:$0xc]
  %v2394 = vld [vmem:[#allocation2 + $0x28] sm:$0xc]
  %v2401 = vrot.slane %v2389, 2
  %v2402 = vrot.slane %v2390, 2
  %v2403 = vrot.slane %v2391, 2
  %v2404 = vrot.slane %v2392, 2
  %v2405 = vrot.slane %v2393, 2
  %v2406 = vrot.slane %v2394, 2
  %2407 = vrot.lane.b32.xlu0 %v2389, 80
  %v2408 = vpop.permute.xlu0 %2407
  %2409 = vrot.lane.b32.xlu0 %v2390, 80
  %v2410 = vpop.permute.xlu0 %2409
  %2411 = vrot.lane.b32.xlu0 %v2391, 80
  %v2412 = vpop.permute.xlu0 %2411
  %2413 = vrot.lane.b32.xlu0 %v2392, 80
  %v2414 = vpop.permute.xlu0 %2413
  %2415 = vrot.lane.b32.xlu0 %v2393, 80
  %v2416 = vpop.permute.xlu0 %2415
  %2417 = vrot.lane.b32.xlu0 %v2394, 80
  %v2418 = vpop.permute.xlu0 %2417
  %v2419 = vsel %vm1329, %v2408, %v2410
  %v2420 = vsel %vm1329, %v2410, %v2412
  %v2421 = vsel %vm1329, %v2412, %v2414
  %v2422 = vsel %vm1329, %v2414, %v2416
  %v2423 = vsel %vm1329, %v2416, %v2418
  %v2426 = vsel %vm1335, %v2401, %v2419
  %v2430 = vsel %vm1335, %v2402, %v2420
  %v2434 = vsel %vm1335, %v2403, %v2421
  %v2438 = vsel %vm1335, %v2404, %v2422
  %v2442 = vsel %vm1335, %v2405, %v2423
  %v2446 = vsel %vm1335, %v2406, %v2418
  %s2447 = scalar_lea.vmem %s3, 720
  %v2448 = vld [vmem:[%s2447] sm:$0xf]
  %v2449 = vld [vmem:[%s2447 + $0x4] sm:$0xf]
  %v2450 = vld [vmem:[%s2447 + $0x8] sm:$0xf]
  %v2451 = vld [vmem:[%s2447 + $0xc] sm:$0xf]
  %v2452 = vld [vmem:[%s2447 + $0x10] sm:$0xf]
  %v2453 = vld [vmem:[%s2447 + $0x14] sm:$0xf]
  %v2454 = vld [vmem:[%s2447 + $0x18] sm:$0xf]
  %v2455 = vld [vmem:[%s2447 + $0x1c] sm:$0xf]
  %v2456 = vld [vmem:[%s2447 + $0x20] sm:$0xf]
  %v2457 = vld [vmem:[%s2447 + $0x24] sm:$0xf]
  %v2458 = vld [vmem:[%s2447 + $0x28] sm:$0xf]
  %v2459 = vld [vmem:[%s2447 + $0x2c] sm:$0xf]
  %v2460 = vld [vmem:[%s2447 + $0x30] sm:$0xf]
  %v2461 = vld [vmem:[%s2447 + $0x34] sm:$0xf]
  %v2462 = vld [vmem:[%s2447 + $0x38] sm:$0xf]
  %v2463 = vld [vmem:[%s2447 + $0x3c] sm:$0xf]
  %v2464 = vld [vmem:[%s2447 + $0x40] sm:$0xf]
  %v2465 = vld [vmem:[%s2447 + $0x44] sm:$0xf]
  %v2466 = vld [vmem:[%s2447 + $0x48] sm:$0xf]
  %v2467 = vld [vmem:[%s2447 + $0x4c] sm:$0xf]
  %v2468 = vld [vmem:[%s2447 + $0x50] sm:$0xf]
  %v2469 = vld [vmem:[%s2447 + $0x54] sm:$0xf]
  %v2470 = vld [vmem:[%s2447 + $0x58] sm:$0xf]
  %v2471 = vld [vmem:[%s2447 + $0x5c] sm:$0xf]
  %v2472 = vld [vmem:[%s2447 + $0x60] sm:$0xf]
  %v2473 = vld [vmem:[%s2447 + $0x64] sm:$0xf]
  %v2474 = vld [vmem:[%s2447 + $0x68] sm:$0xf]
  %v2475 = vld [vmem:[%s2447 + $0x6c] sm:$0xf]
  %v2476 = vld [vmem:[%s2447 + $0x70] sm:$0xf]
  %v2477 = vld [vmem:[%s2447 + $0x74] sm:$0xf]
  %v2478 = vld [vmem:[%s2447 + $0x78] sm:$0xf]
  %v2479 = vld [vmem:[%s2447 + $0x7c] sm:$0xf]
  %v2480 = vld [vmem:[%s2447 + $0x80] sm:$0xf]
  %v2481 = vld [vmem:[%s2447 + $0x84] sm:$0xf]
  %v2482 = vld [vmem:[%s2447 + $0x88] sm:$0xf]
  %v2483 = vld [vmem:[%s2447 + $0x8c] sm:$0xf]
  %v2484 = vld [vmem:[%s2447 + $0x90] sm:$0xf]
  %v2485 = vld [vmem:[%s2447 + $0x94] sm:$0xf]
  %v2486 = vld [vmem:[%s2447 + $0x98] sm:$0xf]
  %v2487 = vld [vmem:[%s2447 + $0x9c] sm:$0xf]
  %v2488 = vld [vmem:[%s2447 + $0xa0] sm:$0xf]
  %v2489 = vld [vmem:[%s2447 + $0xa4] sm:$0xf]
  %v2490 = vld [vmem:[%s2447 + $0xa8] sm:$0xf]
  %v2491 = vld [vmem:[%s2447 + $0xac] sm:$0xf]
  %v2492 = vld [vmem:[%s2447 + $0xb0] sm:$0xf]
  %v2493 = vld [vmem:[%s2447 + $0xb4] sm:$0xf]
  %v2494 = vld [vmem:[%s2447 + $0xb8] sm:$0xf]
  %v2495 = vld [vmem:[%s2447 + $0xbc] sm:$0xf]
  %v2496 = vld [vmem:[%s2447 + $0xc0] sm:$0xf]
  %v2497 = vld [vmem:[%s2447 + $0xc4] sm:$0xf]
  %v2498 = vld [vmem:[%s2447 + $0xc8] sm:$0xf]
  %v2499 = vld [vmem:[%s2447 + $0xcc] sm:$0xf]
  %v2500 = vld [vmem:[%s2447 + $0xd0] sm:$0xf]
  %v2501 = vld [vmem:[%s2447 + $0xd4] sm:$0xf]
  %v2502 = vld [vmem:[%s2447 + $0xd8] sm:$0xf]
  %v2503 = vld [vmem:[%s2447 + $0xdc] sm:$0xf]
  %v2504 = vld [vmem:[%s2447 + $0xe0] sm:$0xf]
  %v2505 = vld [vmem:[%s2447 + $0xe4] sm:$0xf]
  %v2506 = vld [vmem:[%s2447 + $0xe8] sm:$0xf]
  %v2507 = vld [vmem:[%s2447 + $0xec] sm:$0xf]
  %v2508 = vld [vmem:[%s2447 + $0xf0] sm:$0xf]
  %v2509 = vld [vmem:[%s2447 + $0xf4] sm:$0xf]
  %v2510 = vld [vmem:[%s2447 + $0xf8] sm:$0xf]
  %v2511 = vld [vmem:[%s2447 + $0xfc] sm:$0xf]
  %v2512 = vld [vmem:[%s2447 + $0x100] sm:$0xf]
  %v2513 = vld [vmem:[%s2447 + $0x104] sm:$0xf]
  %v2514 = vld [vmem:[%s2447 + $0x108] sm:$0xf]
  %v2515 = vld [vmem:[%s2447 + $0x10c] sm:$0xf]
  %v2516 = vld [vmem:[%s2447 + $0x110] sm:$0xf]
  %v2517 = vld [vmem:[%s2447 + $0x114] sm:$0xf]
  %v2518 = vld [vmem:[%s2447 + $0x118] sm:$0xf]
  %v2519 = vld [vmem:[%s2447 + $0x11c] sm:$0xf]
  %v2520 = vld [vmem:[%s2447 + $0x120] sm:$0xf]
  %v2521 = vld [vmem:[%s2447 + $0x124] sm:$0xf]
  %v2522 = vld [vmem:[%s2447 + $0x128] sm:$0xf]
  %v2523 = vld [vmem:[%s2447 + $0x12c] sm:$0xf]
  %v2524 = vld [vmem:[%s2447 + $0x130] sm:$0xf]
  %v2525 = vld [vmem:[%s2447 + $0x134] sm:$0xf]
  %v2526 = vld [vmem:[%s2447 + $0x138] sm:$0xf]
  %v2527 = vld [vmem:[%s2447 + $0x13c] sm:$0xf]
  %v2528 = vld [vmem:[%s2447 + $0x140] sm:$0xf]
  %v2529 = vld [vmem:[%s2447 + $0x144] sm:$0xf]
  %v2530 = vld [vmem:[%s2447 + $0x148] sm:$0xf]
  %v2531 = vld [vmem:[%s2447 + $0x14c] sm:$0xf]
  %v2532 = vld [vmem:[%s2447 + $0x150] sm:$0xf]
  %v2533 = vld [vmem:[%s2447 + $0x154] sm:$0xf]
  %v2534 = vld [vmem:[%s2447 + $0x158] sm:$0xf]
  %v2535 = vld [vmem:[%s2447 + $0x15c] sm:$0xf]
  %v2536 = vld [vmem:[%s2447 + $0x160] sm:$0xf]
  %v2537 = vld [vmem:[%s2447 + $0x164] sm:$0xf]
  %v2628 = vunpack.c.l.b16 %v2448
  %v2629 = vunpack.c.l.b16 %v2449
  %v2630 = vunpack.c.l.b16 %v2450
  %v2631 = vunpack.c.l.b16 %v2451
  %v2632 = vunpack.c.l.b16 %v2452
  %v2633 = vunpack.c.l.b16 %v2453
  %v2634 = vunpack.c.l.b16 %v2454
  %v2635 = vunpack.c.l.b16 %v2455
  %v2636 = vunpack.c.l.b16 %v2456
  %v2637 = vunpack.c.l.b16 %v2457
  %v2638 = vunpack.c.l.b16 %v2458
  %v2639 = vunpack.c.l.b16 %v2459
  %v2640 = vunpack.c.l.b16 %v2460
  %v2641 = vunpack.c.l.b16 %v2461
  %v2642 = vunpack.c.l.b16 %v2462
  %v2643 = vunpack.c.l.b16 %v2463
  %v2644 = vunpack.c.l.b16 %v2464
  %v2645 = vunpack.c.l.b16 %v2465
  %v2646 = vunpack.c.l.b16 %v2466
  %v2647 = vunpack.c.l.b16 %v2467
  %v2648 = vunpack.c.l.b16 %v2468
  %v2649 = vunpack.c.l.b16 %v2469
  %v2650 = vunpack.c.l.b16 %v2470
  %v2651 = vunpack.c.l.b16 %v2471
  %v2652 = vunpack.c.l.b16 %v2472
  %v2653 = vunpack.c.l.b16 %v2473
  %v2654 = vunpack.c.l.b16 %v2474
  %v2655 = vunpack.c.l.b16 %v2475
  %v2656 = vunpack.c.l.b16 %v2476
  %v2657 = vunpack.c.l.b16 %v2477
  %v2658 = vunpack.c.l.b16 %v2478
  %v2659 = vunpack.c.l.b16 %v2479
  %v2660 = vunpack.c.l.b16 %v2480
  %v2661 = vunpack.c.l.b16 %v2481
  %v2662 = vunpack.c.l.b16 %v2482
  %v2663 = vunpack.c.l.b16 %v2483
  %v2664 = vunpack.c.l.b16 %v2484
  %v2665 = vunpack.c.l.b16 %v2485
  %v2666 = vunpack.c.l.b16 %v2486
  %v2667 = vunpack.c.l.b16 %v2487
  %v2668 = vunpack.c.l.b16 %v2488
  %v2669 = vunpack.c.l.b16 %v2489
  %v2670 = vunpack.c.l.b16 %v2490
  %v2671 = vunpack.c.l.b16 %v2491
  %v2672 = vunpack.c.l.b16 %v2492
  %v2673 = vunpack.c.l.b16 %v2493
  %v2674 = vunpack.c.l.b16 %v2494
  %v2675 = vunpack.c.l.b16 %v2495
  %v2676 = vunpack.c.l.b16 %v2496
  %v2677 = vunpack.c.l.b16 %v2497
  %v2678 = vunpack.c.l.b16 %v2498
  %v2679 = vunpack.c.l.b16 %v2499
  %v2680 = vunpack.c.l.b16 %v2500
  %v2681 = vunpack.c.l.b16 %v2501
  %v2682 = vunpack.c.l.b16 %v2502
  %v2683 = vunpack.c.l.b16 %v2503
  %v2684 = vunpack.c.l.b16 %v2504
  %v2685 = vunpack.c.l.b16 %v2505
  %v2686 = vunpack.c.l.b16 %v2506
  %v2687 = vunpack.c.l.b16 %v2507
  %v2688 = vunpack.c.l.b16 %v2508
  %v2689 = vunpack.c.l.b16 %v2509
  %v2690 = vunpack.c.l.b16 %v2510
  %v2691 = vunpack.c.l.b16 %v2511
  %v2692 = vunpack.c.l.b16 %v2512
  %v2693 = vunpack.c.l.b16 %v2513
  %v2694 = vunpack.c.l.b16 %v2514
  %v2695 = vunpack.c.l.b16 %v2515
  %v2696 = vunpack.c.l.b16 %v2516
  %v2697 = vunpack.c.l.b16 %v2517
  %v2698 = vunpack.c.l.b16 %v2518
  %v2699 = vunpack.c.l.b16 %v2519
  %v2700 = vunpack.c.l.b16 %v2520
  %v2701 = vunpack.c.l.b16 %v2521
  %v2702 = vunpack.c.l.b16 %v2522
  %v2703 = vunpack.c.l.b16 %v2523
  %v2704 = vunpack.c.l.b16 %v2524
  %v2705 = vunpack.c.l.b16 %v2525
  %v2706 = vunpack.c.l.b16 %v2526
  %v2707 = vunpack.c.l.b16 %v2527
  %v2708 = vunpack.c.l.b16 %v2528
  %v2709 = vunpack.c.l.b16 %v2529
  %v2710 = vunpack.c.l.b16 %v2530
  %v2711 = vunpack.c.l.b16 %v2531
  %v2712 = vunpack.c.l.b16 %v2532
  %v2713 = vunpack.c.l.b16 %v2533
  %v2714 = vunpack.c.l.b16 %v2534
  %v2715 = vunpack.c.l.b16 %v2535
  %v2716 = vunpack.c.l.b16 %v2536
  %v2717 = vunpack.c.l.b16 %v2537
  %v2718 = vpack.c.b16 %v2629, %v2628
  %v2719 = vpack.c.b16 %v2631, %v2630
  %v2720 = vpack.c.b16 %v2633, %v2632
  %v2721 = vpack.c.b16 %v2635, %v2634
  %v2722 = vpack.c.b16 %v2637, %v2636
  %v2723 = vpack.c.b16 %v2639, %v2638
  %v2724 = vpack.c.b16 %v2641, %v2640
  %v2725 = vpack.c.b16 %v2643, %v2642
  %v2726 = vpack.c.b16 %v2645, %v2644
  %v2727 = vpack.c.b16 %v2647, %v2646
  %v2728 = vpack.c.b16 %v2649, %v2648
  %v2729 = vpack.c.b16 %v2651, %v2650
  %v2730 = vpack.c.b16 %v2653, %v2652
  %v2731 = vpack.c.b16 %v2655, %v2654
  %v2732 = vpack.c.b16 %v2657, %v2656
  %v2733 = vpack.c.b16 %v2659, %v2658
  %v2734 = vpack.c.b16 %v2661, %v2660
  %v2735 = vpack.c.b16 %v2663, %v2662
  %v2736 = vpack.c.b16 %v2665, %v2664
  %v2737 = vpack.c.b16 %v2667, %v2666
  %v2738 = vpack.c.b16 %v2669, %v2668
  %v2739 = vpack.c.b16 %v2671, %v2670
  %v2740 = vpack.c.b16 %v2673, %v2672
  %v2741 = vpack.c.b16 %v2675, %v2674
  %v2742 = vpack.c.b16 %v2677, %v2676
  %v2743 = vpack.c.b16 %v2679, %v2678
  %v2744 = vpack.c.b16 %v2681, %v2680
  %v2745 = vpack.c.b16 %v2683, %v2682
  %v2746 = vpack.c.b16 %v2685, %v2684
  %v2747 = vpack.c.b16 %v2687, %v2686
  %v2748 = vpack.c.b16 %v2689, %v2688
  %v2749 = vpack.c.b16 %v2691, %v2690
  %v2750 = vpack.c.b16 %v2693, %v2692
  %v2751 = vpack.c.b16 %v2695, %v2694
  %v2752 = vpack.c.b16 %v2697, %v2696
  %v2753 = vpack.c.b16 %v2699, %v2698
  %v2754 = vpack.c.b16 %v2701, %v2700
  %v2755 = vpack.c.b16 %v2703, %v2702
  %v2756 = vpack.c.b16 %v2705, %v2704
  %v2757 = vpack.c.b16 %v2707, %v2706
  %v2758 = vpack.c.b16 %v2709, %v2708
  %v2759 = vpack.c.b16 %v2711, %v2710
  %v2760 = vpack.c.b16 %v2713, %v2712
  %v2761 = vpack.c.b16 %v2715, %v2714
  %v2762 = vpack.c.b16 %v2717, %v2716
  %v2808 = vsel %vm1874, %v2446, 0
  %2810 = vmatprep.subr.bf16.mxu0 0
  %2811 = vmatpush1.bf16.msra.mxu0 %v2718
  %2812 = vmatprep.subr.bf16.mxu0 0
  %2813 = vmatpush1.bf16.msra.mxu0 %v2719
  %2814 = vmatprep.subr.bf16.mxu0 0
  %2815 = vmatpush1.bf16.msra.mxu0 %v2720
  %2816 = vmatprep.subr.bf16.mxu0 0
  %2817 = vmatpush1.bf16.msra.mxu0 %v2721
  %2818 = vmatprep.subr.bf16.mxu0 0
  %2819 = vmatpush1.bf16.msra.mxu0 %v2722
  %2820 = vmatprep.subr.bf16.mxu0 0
  %2821 = vmatpush1.bf16.msra.mxu0 %v2723
  %2822 = vmatprep.subr.bf16.mxu0 0
  %2823 = vmatpush1.bf16.msra.mxu0 %v2724
  %2824 = vmatprep.subr.bf16.mxu0 0
  %2825 = vmatpush1.bf16.msra.mxu0 %v2725
  %2826 = vmatprep.subr.bf16.mxu0 0
  %2827 = vmatpush1.bf16.msra.mxu0 %v2726
  %2828 = vmatprep.subr.bf16.mxu0 0
  %2829 = vmatpush1.bf16.msra.mxu0 %v2727
  %2830 = vmatprep.subr.bf16.mxu0 0
  %2831 = vmatpush1.bf16.msra.mxu0 %v2728
  %2832 = vmatprep.subr.bf16.mxu0 0
  %2833 = vmatpush1.bf16.msra.mxu0 %v2729
  %2834 = vmatprep.subr.bf16.mxu0 0
  %2835 = vmatpush1.bf16.msra.mxu0 %v2730
  %2836 = vmatprep.subr.bf16.mxu0 0
  %2837 = vmatpush1.bf16.msra.mxu0 %v2731
  %2838 = vmatprep.subr.bf16.mxu0 0
  %2839 = vmatpush1.bf16.msra.mxu0 %v2732
  %2840 = vmatprep.subr.bf16.mxu0 0
  %2841 = vmatpush1.bf16.msra.mxu0 %v2733
  %2842 = vmatprep.mubr.bf16.mxu0 %v2430
  %2843 = vmatmul.mubr.bf16.gmra.mrb[0].mxu0 %v2426
  %v2844 = vpop.f32.mrb[0].mxu0
  %v2845 = vadd.f32 0.0, %v2844
  %v2846 = vpop.f32.mrb[0].mxu0
  %v2847 = vpop.f32.mrb[0].mxu0
  %v2848 = vpop.f32.mrb[0].mxu0
  %2849 = vdwg.mxu0
  %2850 = vmatprep.subr.bf16.mxu0 0
  %2851 = vmatpush1.bf16.msra.mxu0 %v2734
  %2852 = vmatprep.subr.bf16.mxu0 0
  %2853 = vmatpush1.bf16.msra.mxu0 %v2735
  %2854 = vmatprep.subr.bf16.mxu0 0
  %2855 = vmatpush1.bf16.msra.mxu0 %v2736
  %2856 = vmatprep.subr.bf16.mxu0 0
  %2857 = vmatpush1.bf16.msra.mxu0 %v2737
  %2858 = vmatprep.subr.bf16.mxu0 0
  %2859 = vmatpush1.bf16.msra.mxu0 %v2738
  %2860 = vmatprep.subr.bf16.mxu0 0
  %2861 = vmatpush1.bf16.msra.mxu0 %v2739
  %2862 = vmatprep.subr.bf16.mxu0 0
  %2863 = vmatpush1.bf16.msra.mxu0 %v2740
  %2864 = vmatprep.subr.bf16.mxu0 0
  %2865 = vmatpush1.bf16.msra.mxu0 %v2741
  %2866 = vmatprep.subr.bf16.mxu0 0
  %2867 = vmatpush1.bf16.msra.mxu0 %v2742
  %2868 = vmatprep.subr.bf16.mxu0 0
  %2869 = vmatpush1.bf16.msra.mxu0 %v2743
  %2870 = vmatprep.subr.bf16.mxu0 0
  %2871 = vmatpush1.bf16.msra.mxu0 %v2744
  %2872 = vmatprep.subr.bf16.mxu0 0
  %2873 = vmatpush1.bf16.msra.mxu0 %v2745
  %2874 = vmatprep.subr.bf16.mxu0 0
  %2875 = vmatpush1.bf16.msra.mxu0 %v2746
  %2876 = vmatprep.subr.bf16.mxu0 0
  %2877 = vmatpush1.bf16.msra.mxu0 %v2747
  %2878 = vmatprep.subr.bf16.mxu0 0
  %2879 = vmatpush1.bf16.msra.mxu0 %v2748
  %2880 = vmatprep.subr.bf16.mxu0 0
  %2881 = vmatpush1.bf16.msra.mxu0 %v2749
  %2882 = vmatprep.mubr.bf16.mxu0 %v2438
  %2883 = vmatmul.mubr.bf16.gmra.mrb[0].mxu0 %v2434
  %v2884 = vpop.f32.mrb[0].mxu0
  %v2885 = vadd.f32 %v2845, %v2884
  %v2886 = vpop.f32.mrb[0].mxu0
  %v2887 = vpop.f32.mrb[0].mxu0
  %v2888 = vpop.f32.mrb[0].mxu0
  %2889 = vdwg.mxu0
  %2890 = vmatprep.subr.bf16.mxu0 0
  %2891 = vmatpush1.bf16.msra.mxu0 %v2750
  %2892 = vmatprep.subr.bf16.mxu0 0
  %2893 = vmatpush1.bf16.msra.mxu0 %v2751
  %2894 = vmatprep.subr.bf16.mxu0 0
  %2895 = vmatpush1.bf16.msra.mxu0 %v2752
  %2896 = vmatprep.subr.bf16.mxu0 0
  %2897 = vmatpush1.bf16.msra.mxu0 %v2753
  %2898 = vmatprep.subr.bf16.mxu0 0
  %2899 = vmatpush1.bf16.msra.mxu0 %v2754
  %2900 = vmatprep.subr.bf16.mxu0 0
  %2901 = vmatpush1.bf16.msra.mxu0 %v2755
  %2902 = vmatprep.subr.bf16.mxu0 0
  %2903 = vmatpush1.bf16.msra.mxu0 %v2756
  %2904 = vmatprep.subr.bf16.mxu0 0
  %2905 = vmatpush1.bf16.msra.mxu0 %v2757
  %2906 = vmatprep.subr.bf16.mxu0 0
  %2907 = vmatpush1.bf16.msra.mxu0 %v2758
  %2908 = vmatprep.subr.bf16.mxu0 0
  %2909 = vmatpush1.bf16.msra.mxu0 %v2759
  %2910 = vmatprep.subr.bf16.mxu0 0
  %2911 = vmatpush1.bf16.msra.mxu0 %v2760
  %2912 = vmatprep.subr.bf16.mxu0 0
  %2913 = vmatpush1.bf16.msra.mxu0 %v2761
  %2914 = vmatprep.subr.bf16.mxu0 0
  %2915 = vmatpush1.bf16.msra.mxu0 %v2762
  %2916 = vmatprep.subr.bf16.mxu0 0
  %2917 = vmatpush1.bf16.msra.mxu0 0
  %2918 = vmatprep.subr.bf16.mxu0 0
  %2919 = vmatpush1.bf16.msra.mxu0 0
  %2920 = vmatprep.subr.bf16.mxu0 0
  %2921 = vmatpush1.bf16.msra.mxu0 0
  %2922 = vmatprep.mubr.bf16.mxu0 %v2808
  %2923 = vmatmul.mubr.bf16.gmra.mrb[0].mxu0 %v2442
  %v2924 = vpop.f32.mrb[0].mxu0
  %v2925 = vadd.f32 %v2885, %v2924
  %v2926 = vpop.f32.mrb[0].mxu0
  %v2927 = vpop.f32.mrb[0].mxu0
  %v2928 = vpop.f32.mrb[0].mxu0
  %2929 = vdwg.mxu0
  %v2930 = vadd.f32 %v2384, %v2925
  %v2931 = vld [vmem:[#allocation2] sm:$0x18]
  %v2932 = vld [vmem:[#allocation2 + $0x8] sm:$0x18]
  %v2933 = vld [vmem:[#allocation2 + $0x10] sm:$0x18]
  %v2934 = vld [vmem:[#allocation2 + $0x18] sm:$0x18]
  %v2935 = vld [vmem:[#allocation2 + $0x20] sm:$0x18]
  %v2936 = vld [vmem:[#allocation2 + $0x28] sm:$0x18]
  %v2943 = vrot.slane %v2931, 3
  %v2944 = vrot.slane %v2932, 3
  %v2945 = vrot.slane %v2933, 3
  %v2946 = vrot.slane %v2934, 3
  %v2947 = vrot.slane %v2935, 3
  %v2948 = vrot.slane %v2936, 3
  %v2949 = vrot.slane %v2931, 1
  %v2950 = vrot.slane %v2932, 1
  %v2951 = vrot.slane %v2933, 1
  %v2952 = vrot.slane %v2934, 1
  %v2953 = vrot.slane %v2935, 1
  %v2954 = vrot.slane %v2936, 1
  %2955 = vrot.lane.b32.xlu0 %v2949, 80
  %v2956 = vpop.permute.xlu0 %2955
  %2957 = vrot.lane.b32.xlu0 %v2950, 80
  %v2958 = vpop.permute.xlu0 %2957
  %2959 = vrot.lane.b32.xlu0 %v2951, 80
  %v2960 = vpop.permute.xlu0 %2959
  %2961 = vrot.lane.b32.xlu0 %v2952, 80
  %v2962 = vpop.permute.xlu0 %2961
  %2963 = vrot.lane.b32.xlu0 %v2953, 80
  %v2964 = vpop.permute.xlu0 %2963
  %2965 = vrot.lane.b32.xlu0 %v2954, 80
  %v2966 = vpop.permute.xlu0 %2965
  %v2967 = vsel %vm1329, %v2956, %v2958
  %v2968 = vsel %vm1329, %v2958, %v2960
  %v2969 = vsel %vm1329, %v2960, %v2962
  %v2970 = vsel %vm1329, %v2962, %v2964
  %v2971 = vsel %vm1329, %v2964, %v2966
  %v2974 = vsel %vm1335, %v2943, %v2967
  %v2978 = vsel %vm1335, %v2944, %v2968
  %v2982 = vsel %vm1335, %v2945, %v2969
  %v2986 = vsel %vm1335, %v2946, %v2970
  %v2990 = vsel %vm1335, %v2947, %v2971
  %v2994 = vsel %vm1335, %v2948, %v2966
  %s2995 = scalar_lea.vmem %s3, 1080
  %v2996 = vld [vmem:[%s2995] sm:$0xf]
  %v2997 = vld [vmem:[%s2995 + $0x4] sm:$0xf]
  %v2998 = vld [vmem:[%s2995 + $0x8] sm:$0xf]
  %v2999 = vld [vmem:[%s2995 + $0xc] sm:$0xf]
  %v3000 = vld [vmem:[%s2995 + $0x10] sm:$0xf]
  %v3001 = vld [vmem:[%s2995 + $0x14] sm:$0xf]
  %v3002 = vld [vmem:[%s2995 + $0x18] sm:$0xf]
  %v3003 = vld [vmem:[%s2995 + $0x1c] sm:$0xf]
  %v3004 = vld [vmem:[%s2995 + $0x20] sm:$0xf]
  %v3005 = vld [vmem:[%s2995 + $0x24] sm:$0xf]
  %v3006 = vld [vmem:[%s2995 + $0x28] sm:$0xf]
  %v3007 = vld [vmem:[%s2995 + $0x2c] sm:$0xf]
  %v3008 = vld [vmem:[%s2995 + $0x30] sm:$0xf]
  %v3009 = vld [vmem:[%s2995 + $0x34] sm:$0xf]
  %v3010 = vld [vmem:[%s2995 + $0x38] sm:$0xf]
  %v3011 = vld [vmem:[%s2995 + $0x3c] sm:$0xf]
  %v3012 = vld [vmem:[%s2995 + $0x40] sm:$0xf]
  %v3013 = vld [vmem:[%s2995 + $0x44] sm:$0xf]
  %v3014 = vld [vmem:[%s2995 + $0x48] sm:$0xf]
  %v3015 = vld [vmem:[%s2995 + $0x4c] sm:$0xf]
  %v3016 = vld [vmem:[%s2995 + $0x50] sm:$0xf]
  %v3017 = vld [vmem:[%s2995 + $0x54] sm:$0xf]
  %v3018 = vld [vmem:[%s2995 + $0x58] sm:$0xf]
  %v3019 = vld [vmem:[%s2995 + $0x5c] sm:$0xf]
  %v3020 = vld [vmem:[%s2995 + $0x60] sm:$0xf]
  %v3021 = vld [vmem:[%s2995 + $0x64] sm:$0xf]
  %v3022 = vld [vmem:[%s2995 + $0x68] sm:$0xf]
  %v3023 = vld [vmem:[%s2995 + $0x6c] sm:$0xf]
  %v3024 = vld [vmem:[%s2995 + $0x70] sm:$0xf]
  %v3025 = vld [vmem:[%s2995 + $0x74] sm:$0xf]
  %v3026 = vld [vmem:[%s2995 + $0x78] sm:$0xf]
  %v3027 = vld [vmem:[%s2995 + $0x7c] sm:$0xf]
  %v3028 = vld [vmem:[%s2995 + $0x80] sm:$0xf]
  %v3029 = vld [vmem:[%s2995 + $0x84] sm:$0xf]
  %v3030 = vld [vmem:[%s2995 + $0x88] sm:$0xf]
  %v3031 = vld [vmem:[%s2995 + $0x8c] sm:$0xf]
  %v3032 = vld [vmem:[%s2995 + $0x90] sm:$0xf]
  %v3033 = vld [vmem:[%s2995 + $0x94] sm:$0xf]
  %v3034 = vld [vmem:[%s2995 + $0x98] sm:$0xf]
  %v3035 = vld [vmem:[%s2995 + $0x9c] sm:$0xf]
  %v3036 = vld [vmem:[%s2995 + $0xa0] sm:$0xf]
  %v3037 = vld [vmem:[%s2995 + $0xa4] sm:$0xf]
  %v3038 = vld [vmem:[%s2995 + $0xa8] sm:$0xf]
  %v3039 = vld [vmem:[%s2995 + $0xac] sm:$0xf]
  %v3040 = vld [vmem:[%s2995 + $0xb0] sm:$0xf]
  %v3041 = vld [vmem:[%s2995 + $0xb4] sm:$0xf]
  %v3042 = vld [vmem:[%s2995 + $0xb8] sm:$0xf]
  %v3043 = vld [vmem:[%s2995 + $0xbc] sm:$0xf]
  %v3044 = vld [vmem:[%s2995 + $0xc0] sm:$0xf]
  %v3045 = vld [vmem:[%s2995 + $0xc4] sm:$0xf]
  %v3046 = vld [vmem:[%s2995 + $0xc8] sm:$0xf]
  %v3047 = vld [vmem:[%s2995 + $0xcc] sm:$0xf]
  %v3048 = vld [vmem:[%s2995 + $0xd0] sm:$0xf]
  %v3049 = vld [vmem:[%s2995 + $0xd4] sm:$0xf]
  %v3050 = vld [vmem:[%s2995 + $0xd8] sm:$0xf]
  %v3051 = vld [vmem:[%s2995 + $0xdc] sm:$0xf]
  %v3052 = vld [vmem:[%s2995 + $0xe0] sm:$0xf]
  %v3053 = vld [vmem:[%s2995 + $0xe4] sm:$0xf]
  %v3054 = vld [vmem:[%s2995 + $0xe8] sm:$0xf]
  %v3055 = vld [vmem:[%s2995 + $0xec] sm:$0xf]
  %v3056 = vld [vmem:[%s2995 + $0xf0] sm:$0xf]
  %v3057 = vld [vmem:[%s2995 + $0xf4] sm:$0xf]
  %v3058 = vld [vmem:[%s2995 + $0xf8] sm:$0xf]
  %v3059 = vld [vmem:[%s2995 + $0xfc] sm:$0xf]
  %v3060 = vld [vmem:[%s2995 + $0x100] sm:$0xf]
  %v3061 = vld [vmem:[%s2995 + $0x104] sm:$0xf]
  %v3062 = vld [vmem:[%s2995 + $0x108] sm:$0xf]
  %v3063 = vld [vmem:[%s2995 + $0x10c] sm:$0xf]
  %v3064 = vld [vmem:[%s2995 + $0x110] sm:$0xf]
  %v3065 = vld [vmem:[%s2995 + $0x114] sm:$0xf]
  %v3066 = vld [vmem:[%s2995 + $0x118] sm:$0xf]
  %v3067 = vld [vmem:[%s2995 + $0x11c] sm:$0xf]
  %v3068 = vld [vmem:[%s2995 + $0x120] sm:$0xf]
  %v3069 = vld [vmem:[%s2995 + $0x124] sm:$0xf]
  %v3070 = vld [vmem:[%s2995 + $0x128] sm:$0xf]
  %v3071 = vld [vmem:[%s2995 + $0x12c] sm:$0xf]
  %v3072 = vld [vmem:[%s2995 + $0x130] sm:$0xf]
  %v3073 = vld [vmem:[%s2995 + $0x134] sm:$0xf]
  %v3074 = vld [vmem:[%s2995 + $0x138] sm:$0xf]
  %v3075 = vld [vmem:[%s2995 + $0x13c] sm:$0xf]
  %v3076 = vld [vmem:[%s2995 + $0x140] sm:$0xf]
  %v3077 = vld [vmem:[%s2995 + $0x144] sm:$0xf]
  %v3078 = vld [vmem:[%s2995 + $0x148] sm:$0xf]
  %v3079 = vld [vmem:[%s2995 + $0x14c] sm:$0xf]
  %v3080 = vld [vmem:[%s2995 + $0x150] sm:$0xf]
  %v3081 = vld [vmem:[%s2995 + $0x154] sm:$0xf]
  %v3082 = vld [vmem:[%s2995 + $0x158] sm:$0xf]
  %v3083 = vld [vmem:[%s2995 + $0x15c] sm:$0xf]
  %v3084 = vld [vmem:[%s2995 + $0x160] sm:$0xf]
  %v3085 = vld [vmem:[%s2995 + $0x164] sm:$0xf]
  %v3176 = vunpack.c.l.b16 %v2996
  %v3177 = vunpack.c.l.b16 %v2997
  %v3178 = vunpack.c.l.b16 %v2998
  %v3179 = vunpack.c.l.b16 %v2999
  %v3180 = vunpack.c.l.b16 %v3000
  %v3181 = vunpack.c.l.b16 %v3001
  %v3182 = vunpack.c.l.b16 %v3002
  %v3183 = vunpack.c.l.b16 %v3003
  %v3184 = vunpack.c.l.b16 %v3004
  %v3185 = vunpack.c.l.b16 %v3005
  %v3186 = vunpack.c.l.b16 %v3006
  %v3187 = vunpack.c.l.b16 %v3007
  %v3188 = vunpack.c.l.b16 %v3008
  %v3189 = vunpack.c.l.b16 %v3009
  %v3190 = vunpack.c.l.b16 %v3010
  %v3191 = vunpack.c.l.b16 %v3011
  %v3192 = vunpack.c.l.b16 %v3012
  %v3193 = vunpack.c.l.b16 %v3013
  %v3194 = vunpack.c.l.b16 %v3014
  %v3195 = vunpack.c.l.b16 %v3015
  %v3196 = vunpack.c.l.b16 %v3016
  %v3197 = vunpack.c.l.b16 %v3017
  %v3198 = vunpack.c.l.b16 %v3018
  %v3199 = vunpack.c.l.b16 %v3019
  %v3200 = vunpack.c.l.b16 %v3020
  %v3201 = vunpack.c.l.b16 %v3021
  %v3202 = vunpack.c.l.b16 %v3022
  %v3203 = vunpack.c.l.b16 %v3023
  %v3204 = vunpack.c.l.b16 %v3024
  %v3205 = vunpack.c.l.b16 %v3025
  %v3206 = vunpack.c.l.b16 %v3026
  %v3207 = vunpack.c.l.b16 %v3027
  %v3208 = vunpack.c.l.b16 %v3028
  %v3209 = vunpack.c.l.b16 %v3029
  %v3210 = vunpack.c.l.b16 %v3030
  %v3211 = vunpack.c.l.b16 %v3031
  %v3212 = vunpack.c.l.b16 %v3032
  %v3213 = vunpack.c.l.b16 %v3033
  %v3214 = vunpack.c.l.b16 %v3034
  %v3215 = vunpack.c.l.b16 %v3035
  %v3216 = vunpack.c.l.b16 %v3036
  %v3217 = vunpack.c.l.b16 %v3037
  %v3218 = vunpack.c.l.b16 %v3038
  %v3219 = vunpack.c.l.b16 %v3039
  %v3220 = vunpack.c.l.b16 %v3040
  %v3221 = vunpack.c.l.b16 %v3041
  %v3222 = vunpack.c.l.b16 %v3042
  %v3223 = vunpack.c.l.b16 %v3043
  %v3224 = vunpack.c.l.b16 %v3044
  %v3225 = vunpack.c.l.b16 %v3045
  %v3226 = vunpack.c.l.b16 %v3046
  %v3227 = vunpack.c.l.b16 %v3047
  %v3228 = vunpack.c.l.b16 %v3048
  %v3229 = vunpack.c.l.b16 %v3049
  %v3230 = vunpack.c.l.b16 %v3050
  %v3231 = vunpack.c.l.b16 %v3051
  %v3232 = vunpack.c.l.b16 %v3052
  %v3233 = vunpack.c.l.b16 %v3053
  %v3234 = vunpack.c.l.b16 %v3054
  %v3235 = vunpack.c.l.b16 %v3055
  %v3236 = vunpack.c.l.b16 %v3056
  %v3237 = vunpack.c.l.b16 %v3057
  %v3238 = vunpack.c.l.b16 %v3058
  %v3239 = vunpack.c.l.b16 %v3059
  %v3240 = vunpack.c.l.b16 %v3060
  %v3241 = vunpack.c.l.b16 %v3061
  %v3242 = vunpack.c.l.b16 %v3062
  %v3243 = vunpack.c.l.b16 %v3063
  %v3244 = vunpack.c.l.b16 %v3064
  %v3245 = vunpack.c.l.b16 %v3065
  %v3246 = vunpack.c.l.b16 %v3066
  %v3247 = vunpack.c.l.b16 %v3067
  %v3248 = vunpack.c.l.b16 %v3068
  %v3249 = vunpack.c.l.b16 %v3069
  %v3250 = vunpack.c.l.b16 %v3070
  %v3251 = vunpack.c.l.b16 %v3071
  %v3252 = vunpack.c.l.b16 %v3072
  %v3253 = vunpack.c.l.b16 %v3073
  %v3254 = vunpack.c.l.b16 %v3074
  %v3255 = vunpack.c.l.b16 %v3075
  %v3256 = vunpack.c.l.b16 %v3076
  %v3257 = vunpack.c.l.b16 %v3077
  %v3258 = vunpack.c.l.b16 %v3078
  %v3259 = vunpack.c.l.b16 %v3079
  %v3260 = vunpack.c.l.b16 %v3080
  %v3261 = vunpack.c.l.b16 %v3081
  %v3262 = vunpack.c.l.b16 %v3082
  %v3263 = vunpack.c.l.b16 %v3083
  %v3264 = vunpack.c.l.b16 %v3084
  %v3265 = vunpack.c.l.b16 %v3085
  %v3266 = vpack.c.b16 %v3177, %v3176
  %v3267 = vpack.c.b16 %v3179, %v3178
  %v3268 = vpack.c.b16 %v3181, %v3180
  %v3269 = vpack.c.b16 %v3183, %v3182
  %v3270 = vpack.c.b16 %v3185, %v3184
  %v3271 = vpack.c.b16 %v3187, %v3186
  %v3272 = vpack.c.b16 %v3189, %v3188
  %v3273 = vpack.c.b16 %v3191, %v3190
  %v3274 = vpack.c.b16 %v3193, %v3192
  %v3275 = vpack.c.b16 %v3195, %v3194
  %v3276 = vpack.c.b16 %v3197, %v3196
  %v3277 = vpack.c.b16 %v3199, %v3198
  %v3278 = vpack.c.b16 %v3201, %v3200
  %v3279 = vpack.c.b16 %v3203, %v3202
  %v3280 = vpack.c.b16 %v3205, %v3204
  %v3281 = vpack.c.b16 %v3207, %v3206
  %v3282 = vpack.c.b16 %v3209, %v3208
  %v3283 = vpack.c.b16 %v3211, %v3210
  %v3284 = vpack.c.b16 %v3213, %v3212
  %v3285 = vpack.c.b16 %v3215, %v3214
  %v3286 = vpack.c.b16 %v3217, %v3216
  %v3287 = vpack.c.b16 %v3219, %v3218
  %v3288 = vpack.c.b16 %v3221, %v3220
  %v3289 = vpack.c.b16 %v3223, %v3222
  %v3290 = vpack.c.b16 %v3225, %v3224
  %v3291 = vpack.c.b16 %v3227, %v3226
  %v3292 = vpack.c.b16 %v3229, %v3228
  %v3293 = vpack.c.b16 %v3231, %v3230
  %v3294 = vpack.c.b16 %v3233, %v3232
  %v3295 = vpack.c.b16 %v3235, %v3234
  %v3296 = vpack.c.b16 %v3237, %v3236
  %v3297 = vpack.c.b16 %v3239, %v3238
  %v3298 = vpack.c.b16 %v3241, %v3240
  %v3299 = vpack.c.b16 %v3243, %v3242
  %v3300 = vpack.c.b16 %v3245, %v3244
  %v3301 = vpack.c.b16 %v3247, %v3246
  %v3302 = vpack.c.b16 %v3249, %v3248
  %v3303 = vpack.c.b16 %v3251, %v3250
  %v3304 = vpack.c.b16 %v3253, %v3252
  %v3305 = vpack.c.b16 %v3255, %v3254
  %v3306 = vpack.c.b16 %v3257, %v3256
  %v3307 = vpack.c.b16 %v3259, %v3258
  %v3308 = vpack.c.b16 %v3261, %v3260
  %v3309 = vpack.c.b16 %v3263, %v3262
  %v3310 = vpack.c.b16 %v3265, %v3264
  %v3356 = vsel %vm1874, %v2994, 0
  %3358 = vmatprep.subr.bf16.mxu0 0
  %3359 = vmatpush1.bf16.msra.mxu0 %v3266
  %3360 = vmatprep.subr.bf16.mxu0 0
  %3361 = vmatpush1.bf16.msra.mxu0 %v3267
  %3362 = vmatprep.subr.bf16.mxu0 0
  %3363 = vmatpush1.bf16.msra.mxu0 %v3268
  %3364 = vmatprep.subr.bf16.mxu0 0
  %3365 = vmatpush1.bf16.msra.mxu0 %v3269
  %3366 = vmatprep.subr.bf16.mxu0 0
  %3367 = vmatpush1.bf16.msra.mxu0 %v3270
  %3368 = vmatprep.subr.bf16.mxu0 0
  %3369 = vmatpush1.bf16.msra.mxu0 %v3271
  %3370 = vmatprep.subr.bf16.mxu0 0
  %3371 = vmatpush1.bf16.msra.mxu0 %v3272
  %3372 = vmatprep.subr.bf16.mxu0 0
  %3373 = vmatpush1.bf16.msra.mxu0 %v3273
  %3374 = vmatprep.subr.bf16.mxu0 0
  %3375 = vmatpush1.bf16.msra.mxu0 %v3274
  %3376 = vmatprep.subr.bf16.mxu0 0
  %3377 = vmatpush1.bf16.msra.mxu0 %v3275
  %3378 = vmatprep.subr.bf16.mxu0 0
  %3379 = vmatpush1.bf16.msra.mxu0 %v3276
  %3380 = vmatprep.subr.bf16.mxu0 0
  %3381 = vmatpush1.bf16.msra.mxu0 %v3277
  %3382 = vmatprep.subr.bf16.mxu0 0
  %3383 = vmatpush1.bf16.msra.mxu0 %v3278
  %3384 = vmatprep.subr.bf16.mxu0 0
  %3385 = vmatpush1.bf16.msra.mxu0 %v3279
  %3386 = vmatprep.subr.bf16.mxu0 0
  %3387 = vmatpush1.bf16.msra.mxu0 %v3280
  %3388 = vmatprep.subr.bf16.mxu0 0
  %3389 = vmatpush1.bf16.msra.mxu0 %v3281
  %3390 = vmatprep.mubr.bf16.mxu0 %v2978
  %3391 = vmatmul.mubr.bf16.gmra.mrb[0].mxu0 %v2974
  %v3392 = vpop.f32.mrb[0].mxu0
  %v3393 = vadd.f32 0.0, %v3392
  %v3394 = vpop.f32.mrb[0].mxu0
  %v3395 = vpop.f32.mrb[0].mxu0
  %v3396 = vpop.f32.mrb[0].mxu0
  %3397 = vdwg.mxu0
  %3398 = vmatprep.subr.bf16.mxu0 0
  %3399 = vmatpush1.bf16.msra.mxu0 %v3282
  %3400 = vmatprep.subr.bf16.mxu0 0
  %3401 = vmatpush1.bf16.msra.mxu0 %v3283
  %3402 = vmatprep.subr.bf16.mxu0 0
  %3403 = vmatpush1.bf16.msra.mxu0 %v3284
  %3404 = vmatprep.subr.bf16.mxu0 0
  %3405 = vmatpush1.bf16.msra.mxu0 %v3285
  %3406 = vmatprep.subr.bf16.mxu0 0
  %3407 = vmatpush1.bf16.msra.mxu0 %v3286
  %3408 = vmatprep.subr.bf16.mxu0 0
  %3409 = vmatpush1.bf16.msra.mxu0 %v3287
  %3410 = vmatprep.subr.bf16.mxu0 0
  %3411 = vmatpush1.bf16.msra.mxu0 %v3288
  %3412 = vmatprep.subr.bf16.mxu0 0
  %3413 = vmatpush1.bf16.msra.mxu0 %v3289
  %3414 = vmatprep.subr.bf16.mxu0 0
  %3415 = vmatpush1.bf16.msra.mxu0 %v3290
  %3416 = vmatprep.subr.bf16.mxu0 0
  %3417 = vmatpush1.bf16.msra.mxu0 %v3291
  %3418 = vmatprep.subr.bf16.mxu0 0
  %3419 = vmatpush1.bf16.msra.mxu0 %v3292
  %3420 = vmatprep.subr.bf16.mxu0 0
  %3421 = vmatpush1.bf16.msra.mxu0 %v3293
  %3422 = vmatprep.subr.bf16.mxu0 0
  %3423 = vmatpush1.bf16.msra.mxu0 %v3294
  %3424 = vmatprep.subr.bf16.mxu0 0
  %3425 = vmatpush1.bf16.msra.mxu0 %v3295
  %3426 = vmatprep.subr.bf16.mxu0 0
  %3427 = vmatpush1.bf16.msra.mxu0 %v3296
  %3428 = vmatprep.subr.bf16.mxu0 0
  %3429 = vmatpush1.bf16.msra.mxu0 %v3297
  %3430 = vmatprep.mubr.bf16.mxu0 %v2986
  %3431 = vmatmul.mubr.bf16.gmra.mrb[0].mxu0 %v2982
  %v3432 = vpop.f32.mrb[0].mxu0
  %v3433 = vadd.f32 %v3393, %v3432
  %v3434 = vpop.f32.mrb[0].mxu0
  %v3435 = vpop.f32.mrb[0].mxu0
  %v3436 = vpop.f32.mrb[0].mxu0
  %3437 = vdwg.mxu0
  %3438 = vmatprep.subr.bf16.mxu0 0
  %3439 = vmatpush1.bf16.msra.mxu0 %v3298
  %3440 = vmatprep.subr.bf16.mxu0 0
  %3441 = vmatpush1.bf16.msra.mxu0 %v3299
  %3442 = vmatprep.subr.bf16.mxu0 0
  %3443 = vmatpush1.bf16.msra.mxu0 %v3300
  %3444 = vmatprep.subr.bf16.mxu0 0
  %3445 = vmatpush1.bf16.msra.mxu0 %v3301
  %3446 = vmatprep.subr.bf16.mxu0 0
  %3447 = vmatpush1.bf16.msra.mxu0 %v3302
  %3448 = vmatprep.subr.bf16.mxu0 0
  %3449 = vmatpush1.bf16.msra.mxu0 %v3303
  %3450 = vmatprep.subr.bf16.mxu0 0
  %3451 = vmatpush1.bf16.msra.mxu0 %v3304
  %3452 = vmatprep.subr.bf16.mxu0 0
  %3453 = vmatpush1.bf16.msra.mxu0 %v3305
  %3454 = vmatprep.subr.bf16.mxu0 0
  %3455 = vmatpush1.bf16.msra.mxu0 %v3306
  %3456 = vmatprep.subr.bf16.mxu0 0
  %3457 = vmatpush1.bf16.msra.mxu0 %v3307
  %3458 = vmatprep.subr.bf16.mxu0 0
  %3459 = vmatpush1.bf16.msra.mxu0 %v3308
  %3460 = vmatprep.subr.bf16.mxu0 0
  %3461 = vmatpush1.bf16.msra.mxu0 %v3309
  %3462 = vmatprep.subr.bf16.mxu0 0
  %3463 = vmatpush1.bf16.msra.mxu0 %v3310
  %3464 = vmatprep.subr.bf16.mxu0 0
  %3465 = vmatpush1.bf16.msra.mxu0 0
  %3466 = vmatprep.subr.bf16.mxu0 0
  %3467 = vmatpush1.bf16.msra.mxu0 0
  %3468 = vmatprep.subr.bf16.mxu0 0
  %3469 = vmatpush1.bf16.msra.mxu0 0
  %3470 = vmatprep.mubr.bf16.mxu0 %v3356
  %3471 = vmatmul.mubr.bf16.gmra.mrb[0].mxu0 %v2990
  %v3472 = vpop.f32.mrb[0].mxu0
  %v3473 = vadd.f32 %v3433, %v3472
  %v3474 = vpop.f32.mrb[0].mxu0
  %v3475 = vpop.f32.mrb[0].mxu0
  %v3476 = vpop.f32.mrb[0].mxu0
  %3477 = vdwg.mxu0
  %v3478 = vadd.f32 %v2930, %v3473
  %v3479 = vld [vmem:[#allocation2] sm:$0x30]
  %v3480 = vld [vmem:[#allocation2 + $0x8] sm:$0x30]
  %v3481 = vld [vmem:[#allocation2 + $0x10] sm:$0x30]
  %v3482 = vld [vmem:[#allocation2 + $0x18] sm:$0x30]
  %v3483 = vld [vmem:[#allocation2 + $0x20] sm:$0x30]
  %v3484 = vld [vmem:[#allocation2 + $0x28] sm:$0x30]
  %v3491 = vrot.slane %v3479, 4
  %v3492 = vrot.slane %v3480, 4
  %v3493 = vrot.slane %v3481, 4
  %v3494 = vrot.slane %v3482, 4
  %v3495 = vrot.slane %v3483, 4
  %v3496 = vrot.slane %v3484, 4
  %v3497 = vrot.slane %v3479, 2
  %v3498 = vrot.slane %v3480, 2
  %v3499 = vrot.slane %v3481, 2
  %v3500 = vrot.slane %v3482, 2
  %v3501 = vrot.slane %v3483, 2
  %v3502 = vrot.slane %v3484, 2
  %3503 = vrot.lane.b32.xlu0 %v3497, 80
  %v3504 = vpop.permute.xlu0 %3503
  %3505 = vrot.lane.b32.xlu0 %v3498, 80
  %v3506 = vpop.permute.xlu0 %3505
  %3507 = vrot.lane.b32.xlu0 %v3499, 80
  %v3508 = vpop.permute.xlu0 %3507
  %3509 = vrot.lane.b32.xlu0 %v3500, 80
  %v3510 = vpop.permute.xlu0 %3509
  %3511 = vrot.lane.b32.xlu0 %v3501, 80
  %v3512 = vpop.permute.xlu0 %3511
  %3513 = vrot.lane.b32.xlu0 %v3502, 80
  %v3514 = vpop.permute.xlu0 %3513
  %v3515 = vsel %vm1329, %v3504, %v3506
  %v3516 = vsel %vm1329, %v3506, %v3508
  %v3517 = vsel %vm1329, %v3508, %v3510
  %v3518 = vsel %vm1329, %v3510, %v3512
  %v3519 = vsel %vm1329, %v3512, %v3514
  %v3522 = vsel %vm1335, %v3491, %v3515
  %v3526 = vsel %vm1335, %v3492, %v3516
  %v3530 = vsel %vm1335, %v3493, %v3517
  %v3534 = vsel %vm1335, %v3494, %v3518
  %v3538 = vsel %vm1335, %v3495, %v3519
  %v3542 = vsel %vm1335, %v3496, %v3514
  %s3543 = scalar_lea.vmem %s3, 1440
  %v3544 = vld [vmem:[%s3543] sm:$0xf]
  %v3545 = vld [vmem:[%s3543 + $0x4] sm:$0xf]
  %v3546 = vld [vmem:[%s3543 + $0x8] sm:$0xf]
  %v3547 = vld [vmem:[%s3543 + $0xc] sm:$0xf]
  %v3548 = vld [vmem:[%s3543 + $0x10] sm:$0xf]
  %v3549 = vld [vmem:[%s3543 + $0x14] sm:$0xf]
  %v3550 = vld [vmem:[%s3543 + $0x18] sm:$0xf]
  %v3551 = vld [vmem:[%s3543 + $0x1c] sm:$0xf]
  %v3552 = vld [vmem:[%s3543 + $0x20] sm:$0xf]
  %v3553 = vld [vmem:[%s3543 + $0x24] sm:$0xf]
  %v3554 = vld [vmem:[%s3543 + $0x28] sm:$0xf]
  %v3555 = vld [vmem:[%s3543 + $0x2c] sm:$0xf]
  %v3556 = vld [vmem:[%s3543 + $0x30] sm:$0xf]
  %v3557 = vld [vmem:[%s3543 + $0x34] sm:$0xf]
  %v3558 = vld [vmem:[%s3543 + $0x38] sm:$0xf]
  %v3559 = vld [vmem:[%s3543 + $0x3c] sm:$0xf]
  %v3560 = vld [vmem:[%s3543 + $0x40] sm:$0xf]
  %v3561 = vld [vmem:[%s3543 + $0x44] sm:$0xf]
  %v3562 = vld [vmem:[%s3543 + $0x48] sm:$0xf]
  %v3563 = vld [vmem:[%s3543 + $0x4c] sm:$0xf]
  %v3564 = vld [vmem:[%s3543 + $0x50] sm:$0xf]
  %v3565 = vld [vmem:[%s3543 + $0x54] sm:$0xf]
  %v3566 = vld [vmem:[%s3543 + $0x58] sm:$0xf]
  %v3567 = vld [vmem:[%s3543 + $0x5c] sm:$0xf]
  %v3568 = vld [vmem:[%s3543 + $0x60] sm:$0xf]
  %v3569 = vld [vmem:[%s3543 + $0x64] sm:$0xf]
  %v3570 = vld [vmem:[%s3543 + $0x68] sm:$0xf]
  %v3571 = vld [vmem:[%s3543 + $0x6c] sm:$0xf]
  %v3572 = vld [vmem:[%s3543 + $0x70] sm:$0xf]
  %v3573 = vld [vmem:[%s3543 + $0x74] sm:$0xf]
  %v3574 = vld [vmem:[%s3543 + $0x78] sm:$0xf]
  %v3575 = vld [vmem:[%s3543 + $0x7c] sm:$0xf]
  %v3576 = vld [vmem:[%s3543 + $0x80] sm:$0xf]
  %v3577 = vld [vmem:[%s3543 + $0x84] sm:$0xf]
  %v3578 = vld [vmem:[%s3543 + $0x88] sm:$0xf]
  %v3579 = vld [vmem:[%s3543 + $0x8c] sm:$0xf]
  %v3580 = vld [vmem:[%s3543 + $0x90] sm:$0xf]
  %v3581 = vld [vmem:[%s3543 + $0x94] sm:$0xf]
  %v3582 = vld [vmem:[%s3543 + $0x98] sm:$0xf]
  %v3583 = vld [vmem:[%s3543 + $0x9c] sm:$0xf]
  %v3584 = vld [vmem:[%s3543 + $0xa0] sm:$0xf]
  %v3585 = vld [vmem:[%s3543 + $0xa4] sm:$0xf]
  %v3586 = vld [vmem:[%s3543 + $0xa8] sm:$0xf]
  %v3587 = vld [vmem:[%s3543 + $0xac] sm:$0xf]
  %v3588 = vld [vmem:[%s3543 + $0xb0] sm:$0xf]
  %v3589 = vld [vmem:[%s3543 + $0xb4] sm:$0xf]
  %v3590 = vld [vmem:[%s3543 + $0xb8] sm:$0xf]
  %v3591 = vld [vmem:[%s3543 + $0xbc] sm:$0xf]
  %v3592 = vld [vmem:[%s3543 + $0xc0] sm:$0xf]
  %v3593 = vld [vmem:[%s3543 + $0xc4] sm:$0xf]
  %v3594 = vld [vmem:[%s3543 + $0xc8] sm:$0xf]
  %v3595 = vld [vmem:[%s3543 + $0xcc] sm:$0xf]
  %v3596 = vld [vmem:[%s3543 + $0xd0] sm:$0xf]
  %v3597 = vld [vmem:[%s3543 + $0xd4] sm:$0xf]
  %v3598 = vld [vmem:[%s3543 + $0xd8] sm:$0xf]
  %v3599 = vld [vmem:[%s3543 + $0xdc] sm:$0xf]
  %v3600 = vld [vmem:[%s3543 + $0xe0] sm:$0xf]
  %v3601 = vld [vmem:[%s3543 + $0xe4] sm:$0xf]
  %v3602 = vld [vmem:[%s3543 + $0xe8] sm:$0xf]
  %v3603 = vld [vmem:[%s3543 + $0xec] sm:$0xf]
  %v3604 = vld [vmem:[%s3543 + $0xf0] sm:$0xf]
  %v3605 = vld [vmem:[%s3543 + $0xf4] sm:$0xf]
  %v3606 = vld [vmem:[%s3543 + $0xf8] sm:$0xf]
  %v3607 = vld [vmem:[%s3543 + $0xfc] sm:$0xf]
  %v3608 = vld [vmem:[%s3543 + $0x100] sm:$0xf]
  %v3609 = vld [vmem:[%s3543 + $0x104] sm:$0xf]
  %v3610 = vld [vmem:[%s3543 + $0x108] sm:$0xf]
  %v3611 = vld [vmem:[%s3543 + $0x10c] sm:$0xf]
  %v3612 = vld [vmem:[%s3543 + $0x110] sm:$0xf]
  %v3613 = vld [vmem:[%s3543 + $0x114] sm:$0xf]
  %v3614 = vld [vmem:[%s3543 + $0x118] sm:$0xf]
  %v3615 = vld [vmem:[%s3543 + $0x11c] sm:$0xf]
  %v3616 = vld [vmem:[%s3543 + $0x120] sm:$0xf]
  %v3617 = vld [vmem:[%s3543 + $0x124] sm:$0xf]
  %v3618 = vld [vmem:[%s3543 + $0x128] sm:$0xf]
  %v3619 = vld [vmem:[%s3543 + $0x12c] sm:$0xf]
  %v3620 = vld [vmem:[%s3543 + $0x130] sm:$0xf]
  %v3621 = vld [vmem:[%s3543 + $0x134] sm:$0xf]
  %v3622 = vld [vmem:[%s3543 + $0x138] sm:$0xf]
  %v3623 = vld [vmem:[%s3543 + $0x13c] sm:$0xf]
  %v3624 = vld [vmem:[%s3543 + $0x140] sm:$0xf]
  %v3625 = vld [vmem:[%s3543 + $0x144] sm:$0xf]
  %v3626 = vld [vmem:[%s3543 + $0x148] sm:$0xf]
  %v3627 = vld [vmem:[%s3543 + $0x14c] sm:$0xf]
  %v3628 = vld [vmem:[%s3543 + $0x150] sm:$0xf]
  %v3629 = vld [vmem:[%s3543 + $0x154] sm:$0xf]
  %v3630 = vld [vmem:[%s3543 + $0x158] sm:$0xf]
  %v3631 = vld [vmem:[%s3543 + $0x15c] sm:$0xf]
  %v3632 = vld [vmem:[%s3543 + $0x160] sm:$0xf]
  %v3633 = vld [vmem:[%s3543 + $0x164] sm:$0xf]
  %v3724 = vunpack.c.l.b16 %v3544
  %v3725 = vunpack.c.l.b16 %v3545
  %v3726 = vunpack.c.l.b16 %v3546
  %v3727 = vunpack.c.l.b16 %v3547
  %v3728 = vunpack.c.l.b16 %v3548
  %v3729 = vunpack.c.l.b16 %v3549
  %v3730 = vunpack.c.l.b16 %v3550
  %v3731 = vunpack.c.l.b16 %v3551
  %v3732 = vunpack.c.l.b16 %v3552
  %v3733 = vunpack.c.l.b16 %v3553
  %v3734 = vunpack.c.l.b16 %v3554
  %v3735 = vunpack.c.l.b16 %v3555
  %v3736 = vunpack.c.l.b16 %v3556
  %v3737 = vunpack.c.l.b16 %v3557
  %v3738 = vunpack.c.l.b16 %v3558
  %v3739 = vunpack.c.l.b16 %v3559
  %v3740 = vunpack.c.l.b16 %v3560
  %v3741 = vunpack.c.l.b16 %v3561
  %v3742 = vunpack.c.l.b16 %v3562
  %v3743 = vunpack.c.l.b16 %v3563
  %v3744 = vunpack.c.l.b16 %v3564
  %v3745 = vunpack.c.l.b16 %v3565
  %v3746 = vunpack.c.l.b16 %v3566
  %v3747 = vunpack.c.l.b16 %v3567
  %v3748 = vunpack.c.l.b16 %v3568
  %v3749 = vunpack.c.l.b16 %v3569
  %v3750 = vunpack.c.l.b16 %v3570
  %v3751 = vunpack.c.l.b16 %v3571
  %v3752 = vunpack.c.l.b16 %v3572
  %v3753 = vunpack.c.l.b16 %v3573
  %v3754 = vunpack.c.l.b16 %v3574
  %v3755 = vunpack.c.l.b16 %v3575
  %v3756 = vunpack.c.l.b16 %v3576
  %v3757 = vunpack.c.l.b16 %v3577
  %v3758 = vunpack.c.l.b16 %v3578
  %v3759 = vunpack.c.l.b16 %v3579
  %v3760 = vunpack.c.l.b16 %v3580
  %v3761 = vunpack.c.l.b16 %v3581
  %v3762 = vunpack.c.l.b16 %v3582
  %v3763 = vunpack.c.l.b16 %v3583
  %v3764 = vunpack.c.l.b16 %v3584
  %v3765 = vunpack.c.l.b16 %v3585
  %v3766 = vunpack.c.l.b16 %v3586
  %v3767 = vunpack.c.l.b16 %v3587
  %v3768 = vunpack.c.l.b16 %v3588
  %v3769 = vunpack.c.l.b16 %v3589
  %v3770 = vunpack.c.l.b16 %v3590
  %v3771 = vunpack.c.l.b16 %v3591
  %v3772 = vunpack.c.l.b16 %v3592
  %v3773 = vunpack.c.l.b16 %v3593
  %v3774 = vunpack.c.l.b16 %v3594
  %v3775 = vunpack.c.l.b16 %v3595
  %v3776 = vunpack.c.l.b16 %v3596
  %v3777 = vunpack.c.l.b16 %v3597
  %v3778 = vunpack.c.l.b16 %v3598
  %v3779 = vunpack.c.l.b16 %v3599
  %v3780 = vunpack.c.l.b16 %v3600
  %v3781 = vunpack.c.l.b16 %v3601
  %v3782 = vunpack.c.l.b16 %v3602
  %v3783 = vunpack.c.l.b16 %v3603
  %v3784 = vunpack.c.l.b16 %v3604
  %v3785 = vunpack.c.l.b16 %v3605
  %v3786 = vunpack.c.l.b16 %v3606
  %v3787 = vunpack.c.l.b16 %v3607
  %v3788 = vunpack.c.l.b16 %v3608
  %v3789 = vunpack.c.l.b16 %v3609
  %v3790 = vunpack.c.l.b16 %v3610
  %v3791 = vunpack.c.l.b16 %v3611
  %v3792 = vunpack.c.l.b16 %v3612
  %v3793 = vunpack.c.l.b16 %v3613
  %v3794 = vunpack.c.l.b16 %v3614
  %v3795 = vunpack.c.l.b16 %v3615
  %v3796 = vunpack.c.l.b16 %v3616
  %v3797 = vunpack.c.l.b16 %v3617
  %v3798 = vunpack.c.l.b16 %v3618
  %v3799 = vunpack.c.l.b16 %v3619
  %v3800 = vunpack.c.l.b16 %v3620
  %v3801 = vunpack.c.l.b16 %v3621
  %v3802 = vunpack.c.l.b16 %v3622
  %v3803 = vunpack.c.l.b16 %v3623
  %v3804 = vunpack.c.l.b16 %v3624
  %v3805 = vunpack.c.l.b16 %v3625
  %v3806 = vunpack.c.l.b16 %v3626
  %v3807 = vunpack.c.l.b16 %v3627
  %v3808 = vunpack.c.l.b16 %v3628
  %v3809 = vunpack.c.l.b16 %v3629
  %v3810 = vunpack.c.l.b16 %v3630
  %v3811 = vunpack.c.l.b16 %v3631
  %v3812 = vunpack.c.l.b16 %v3632
  %v3813 = vunpack.c.l.b16 %v3633
  %v3814 = vpack.c.b16 %v3725, %v3724
  %v3815 = vpack.c.b16 %v3727, %v3726
  %v3816 = vpack.c.b16 %v3729, %v3728
  %v3817 = vpack.c.b16 %v3731, %v3730
  %v3818 = vpack.c.b16 %v3733, %v3732
  %v3819 = vpack.c.b16 %v3735, %v3734
  %v3820 = vpack.c.b16 %v3737, %v3736
  %v3821 = vpack.c.b16 %v3739, %v3738
  %v3822 = vpack.c.b16 %v3741, %v3740
  %v3823 = vpack.c.b16 %v3743, %v3742
  %v3824 = vpack.c.b16 %v3745, %v3744
  %v3825 = vpack.c.b16 %v3747, %v3746
  %v3826 = vpack.c.b16 %v3749, %v3748
  %v3827 = vpack.c.b16 %v3751, %v3750
  %v3828 = vpack.c.b16 %v3753, %v3752
  %v3829 = vpack.c.b16 %v3755, %v3754
  %v3830 = vpack.c.b16 %v3757, %v3756
  %v3831 = vpack.c.b16 %v3759, %v3758
  %v3832 = vpack.c.b16 %v3761, %v3760
  %v3833 = vpack.c.b16 %v3763, %v3762
  %v3834 = vpack.c.b16 %v3765, %v3764
  %v3835 = vpack.c.b16 %v3767, %v3766
  %v3836 = vpack.c.b16 %v3769, %v3768
  %v3837 = vpack.c.b16 %v3771, %v3770
  %v3838 = vpack.c.b16 %v3773, %v3772
  %v3839 = vpack.c.b16 %v3775, %v3774
  %v3840 = vpack.c.b16 %v3777, %v3776
  %v3841 = vpack.c.b16 %v3779, %v3778
  %v3842 = vpack.c.b16 %v3781, %v3780
  %v3843 = vpack.c.b16 %v3783, %v3782
  %v3844 = vpack.c.b16 %v3785, %v3784
  %v3845 = vpack.c.b16 %v3787, %v3786
  %v3846 = vpack.c.b16 %v3789, %v3788
  %v3847 = vpack.c.b16 %v3791, %v3790
  %v3848 = vpack.c.b16 %v3793, %v3792
  %v3849 = vpack.c.b16 %v3795, %v3794
  %v3850 = vpack.c.b16 %v3797, %v3796
  %v3851 = vpack.c.b16 %v3799, %v3798
  %v3852 = vpack.c.b16 %v3801, %v3800
  %v3853 = vpack.c.b16 %v3803, %v3802
  %v3854 = vpack.c.b16 %v3805, %v3804
  %v3855 = vpack.c.b16 %v3807, %v3806
  %v3856 = vpack.c.b16 %v3809, %v3808
  %v3857 = vpack.c.b16 %v3811, %v3810
  %v3858 = vpack.c.b16 %v3813, %v3812
  %v3904 = vsel %vm1874, %v3542, 0
  %3906 = vmatprep.subr.bf16.mxu0 0
  %3907 = vmatpush1.bf16.msra.mxu0 %v3814
  %3908 = vmatprep.subr.bf16.mxu0 0
  %3909 = vmatpush1.bf16.msra.mxu0 %v3815
  %3910 = vmatprep.subr.bf16.mxu0 0
  %3911 = vmatpush1.bf16.msra.mxu0 %v3816
  %3912 = vmatprep.subr.bf16.mxu0 0
  %3913 = vmatpush1.bf16.msra.mxu0 %v3817
  %3914 = vmatprep.subr.bf16.mxu0 0
  %3915 = vmatpush1.bf16.msra.mxu0 %v3818
  %3916 = vmatprep.subr.bf16.mxu0 0
  %3917 = vmatpush1.bf16.msra.mxu0 %v3819
  %3918 = vmatprep.subr.bf16.mxu0 0
  %3919 = vmatpush1.bf16.msra.mxu0 %v3820
  %3920 = vmatprep.subr.bf16.mxu0 0
  %3921 = vmatpush1.bf16.msra.mxu0 %v3821
  %3922 = vmatprep.subr.bf16.mxu0 0
  %3923 = vmatpush1.bf16.msra.mxu0 %v3822
  %3924 = vmatprep.subr.bf16.mxu0 0
  %3925 = vmatpush1.bf16.msra.mxu0 %v3823
  %3926 = vmatprep.subr.bf16.mxu0 0
  %3927 = vmatpush1.bf16.msra.mxu0 %v3824
  %3928 = vmatprep.subr.bf16.mxu0 0
  %3929 = vmatpush1.bf16.msra.mxu0 %v3825
  %3930 = vmatprep.subr.bf16.mxu0 0
  %3931 = vmatpush1.bf16.msra.mxu0 %v3826
  %3932 = vmatprep.subr.bf16.mxu0 0
  %3933 = vmatpush1.bf16.msra.mxu0 %v3827
  %3934 = vmatprep.subr.bf16.mxu0 0
  %3935 = vmatpush1.bf16.msra.mxu0 %v3828
  %3936 = vmatprep.subr.bf16.mxu0 0
  %3937 = vmatpush1.bf16.msra.mxu0 %v3829
  %3938 = vmatprep.mubr.bf16.mxu0 %v3526
  %3939 = vmatmul.mubr.bf16.gmra.mrb[0].mxu0 %v3522
  %v3940 = vpop.f32.mrb[0].mxu0
  %v3941 = vadd.f32 0.0, %v3940
  %v3942 = vpop.f32.mrb[0].mxu0
  %v3943 = vpop.f32.mrb[0].mxu0
  %v3944 = vpop.f32.mrb[0].mxu0
  %3945 = vdwg.mxu0
  %3946 = vmatprep.subr.bf16.mxu0 0
  %3947 = vmatpush1.bf16.msra.mxu0 %v3830
  %3948 = vmatprep.subr.bf16.mxu0 0
  %3949 = vmatpush1.bf16.msra.mxu0 %v3831
  %3950 = vmatprep.subr.bf16.mxu0 0
  %3951 = vmatpush1.bf16.msra.mxu0 %v3832
  %3952 = vmatprep.subr.bf16.mxu0 0
  %3953 = vmatpush1.bf16.msra.mxu0 %v3833
  %3954 = vmatprep.subr.bf16.mxu0 0
  %3955 = vmatpush1.bf16.msra.mxu0 %v3834
  %3956 = vmatprep.subr.bf16.mxu0 0
  %3957 = vmatpush1.bf16.msra.mxu0 %v3835
  %3958 = vmatprep.subr.bf16.mxu0 0
  %3959 = vmatpush1.bf16.msra.mxu0 %v3836
  %3960 = vmatprep.subr.bf16.mxu0 0
  %3961 = vmatpush1.bf16.msra.mxu0 %v3837
  %3962 = vmatprep.subr.bf16.mxu0 0
  %3963 = vmatpush1.bf16.msra.mxu0 %v3838
  %3964 = vmatprep.subr.bf16.mxu0 0
  %3965 = vmatpush1.bf16.msra.mxu0 %v3839
  %3966 = vmatprep.subr.bf16.mxu0 0
  %3967 = vmatpush1.bf16.msra.mxu0 %v3840
  %3968 = vmatprep.subr.bf16.mxu0 0
  %3969 = vmatpush1.bf16.msra.mxu0 %v3841
  %3970 = vmatprep.subr.bf16.mxu0 0
  %3971 = vmatpush1.bf16.msra.mxu0 %v3842
  %3972 = vmatprep.subr.bf16.mxu0 0
  %3973 = vmatpush1.bf16.msra.mxu0 %v3843
  %3974 = vmatprep.subr.bf16.mxu0 0
  %3975 = vmatpush1.bf16.msra.mxu0 %v3844
  %3976 = vmatprep.subr.bf16.mxu0 0
  %3977 = vmatpush1.bf16.msra.mxu0 %v3845
  %3978 = vmatprep.mubr.bf16.mxu0 %v3534
  %3979 = vmatmul.mubr.bf16.gmra.mrb[0].mxu0 %v3530
  %v3980 = vpop.f32.mrb[0].mxu0
  %v3981 = vadd.f32 %v3941, %v3980
  %v3982 = vpop.f32.mrb[0].mxu0
  %v3983 = vpop.f32.mrb[0].mxu0
  %v3984 = vpop.f32.mrb[0].mxu0
  %3985 = vdwg.mxu0
  %3986 = vmatprep.subr.bf16.mxu0 0
  %3987 = vmatpush1.bf16.msra.mxu0 %v3846
  %3988 = vmatprep.subr.bf16.mxu0 0
  %3989 = vmatpush1.bf16.msra.mxu0 %v3847
  %3990 = vmatprep.subr.bf16.mxu0 0
  %3991 = vmatpush1.bf16.msra.mxu0 %v3848
  %3992 = vmatprep.subr.bf16.mxu0 0
  %3993 = vmatpush1.bf16.msra.mxu0 %v3849
  %3994 = vmatprep.subr.bf16.mxu0 0
  %3995 = vmatpush1.bf16.msra.mxu0 %v3850
  %3996 = vmatprep.subr.bf16.mxu0 0
  %3997 = vmatpush1.bf16.msra.mxu0 %v3851
  %3998 = vmatprep.subr.bf16.mxu0 0
  %3999 = vmatpush1.bf16.msra.mxu0 %v3852
  %4000 = vmatprep.subr.bf16.mxu0 0
  %4001 = vmatpush1.bf16.msra.mxu0 %v3853
  %4002 = vmatprep.subr.bf16.mxu0 0
  %4003 = vmatpush1.bf16.msra.mxu0 %v3854
  %4004 = vmatprep.subr.bf16.mxu0 0
  %4005 = vmatpush1.bf16.msra.mxu0 %v3855
  %4006 = vmatprep.subr.bf16.mxu0 0
  %4007 = vmatpush1.bf16.msra.mxu0 %v3856
  %4008 = vmatprep.subr.bf16.mxu0 0
  %4009 = vmatpush1.bf16.msra.mxu0 %v3857
  %4010 = vmatprep.subr.bf16.mxu0 0
  %4011 = vmatpush1.bf16.msra.mxu0 %v3858
  %4012 = vmatprep.subr.bf16.mxu0 0
  %4013 = vmatpush1.bf16.msra.mxu0 0
  %4014 = vmatprep.subr.bf16.mxu0 0
  %4015 = vmatpush1.bf16.msra.mxu0 0
  %4016 = vmatprep.subr.bf16.mxu0 0
  %4017 = vmatpush1.bf16.msra.mxu0 0
  %4018 = vmatprep.mubr.bf16.mxu0 %v3904
  %4019 = vmatmul.mubr.bf16.gmra.mrb[0].mxu0 %v3538
  %v4020 = vpop.f32.mrb[0].mxu0
  %v4021 = vadd.f32 %v3981, %v4020
  %v4022 = vpop.f32.mrb[0].mxu0
  %v4023 = vpop.f32.mrb[0].mxu0
  %v4024 = vpop.f32.mrb[0].mxu0
  %4025 = vdwg.mxu0
  %v4026 = vadd.f32 %v3478, %v4021
  %v4027 = vld [vmem:[#allocation2] sm:$0x60]
  %v4028 = vld [vmem:[#allocation2 + $0x8] sm:$0x60]
  %v4029 = vld [vmem:[#allocation2 + $0x10] sm:$0x60]
  %v4030 = vld [vmem:[#allocation2 + $0x18] sm:$0x60]
  %v4031 = vld [vmem:[#allocation2 + $0x20] sm:$0x60]
  %v4032 = vld [vmem:[#allocation2 + $0x28] sm:$0x60]
  %v4039 = vrot.slane %v4027, 5
  %v4040 = vrot.slane %v4028, 5
  %v4041 = vrot.slane %v4029, 5
  %v4042 = vrot.slane %v4030, 5
  %v4043 = vrot.slane %v4031, 5
  %v4044 = vrot.slane %v4032, 5
  %v4045 = vrot.slane %v4027, 3
  %v4046 = vrot.slane %v4028, 3
  %v4047 = vrot.slane %v4029, 3
  %v4048 = vrot.slane %v4030, 3
  %v4049 = vrot.slane %v4031, 3
  %v4050 = vrot.slane %v4032, 3
  %4051 = vrot.lane.b32.xlu0 %v4045, 80
  %v4052 = vpop.permute.xlu0 %4051
  %4053 = vrot.lane.b32.xlu0 %v4046, 80
  %v4054 = vpop.permute.xlu0 %4053
  %4055 = vrot.lane.b32.xlu0 %v4047, 80
  %v4056 = vpop.permute.xlu0 %4055
  %4057 = vrot.lane.b32.xlu0 %v4048, 80
  %v4058 = vpop.permute.xlu0 %4057
  %4059 = vrot.lane.b32.xlu0 %v4049, 80
  %v4060 = vpop.permute.xlu0 %4059
  %4061 = vrot.lane.b32.xlu0 %v4050, 80
  %v4062 = vpop.permute.xlu0 %4061
  %v4063 = vsel %vm1329, %v4052, %v4054
  %v4064 = vsel %vm1329, %v4054, %v4056
  %v4065 = vsel %vm1329, %v4056, %v4058
  %v4066 = vsel %vm1329, %v4058, %v4060
  %v4067 = vsel %vm1329, %v4060, %v4062
  %v4070 = vsel %vm1335, %v4039, %v4063
  %v4074 = vsel %vm1335, %v4040, %v4064
  %v4078 = vsel %vm1335, %v4041, %v4065
  %v4082 = vsel %vm1335, %v4042, %v4066
  %v4086 = vsel %vm1335, %v4043, %v4067
  %v4090 = vsel %vm1335, %v4044, %v4062
  %s4091 = scalar_lea.vmem %s3, 1800
  %v4092 = vld [vmem:[%s4091] sm:$0xf]
  %v4093 = vld [vmem:[%s4091 + $0x4] sm:$0xf]
  %v4094 = vld [vmem:[%s4091 + $0x8] sm:$0xf]
  %v4095 = vld [vmem:[%s4091 + $0xc] sm:$0xf]
  %v4096 = vld [vmem:[%s4091 + $0x10] sm:$0xf]
  %v4097 = vld [vmem:[%s4091 + $0x14] sm:$0xf]
  %v4098 = vld [vmem:[%s4091 + $0x18] sm:$0xf]
  %v4099 = vld [vmem:[%s4091 + $0x1c] sm:$0xf]
  %v4100 = vld [vmem:[%s4091 + $0x20] sm:$0xf]
  %v4101 = vld [vmem:[%s4091 + $0x24] sm:$0xf]
  %v4102 = vld [vmem:[%s4091 + $0x28] sm:$0xf]
  %v4103 = vld [vmem:[%s4091 + $0x2c] sm:$0xf]
  %v4104 = vld [vmem:[%s4091 + $0x30] sm:$0xf]
  %v4105 = vld [vmem:[%s4091 + $0x34] sm:$0xf]
  %v4106 = vld [vmem:[%s4091 + $0x38] sm:$0xf]
  %v4107 = vld [vmem:[%s4091 + $0x3c] sm:$0xf]
  %v4108 = vld [vmem:[%s4091 + $0x40] sm:$0xf]
  %v4109 = vld [vmem:[%s4091 + $0x44] sm:$0xf]
  %v4110 = vld [vmem:[%s4091 + $0x48] sm:$0xf]
  %v4111 = vld [vmem:[%s4091 + $0x4c] sm:$0xf]
  %v4112 = vld [vmem:[%s4091 + $0x50] sm:$0xf]
  %v4113 = vld [vmem:[%s4091 + $0x54] sm:$0xf]
  %v4114 = vld [vmem:[%s4091 + $0x58] sm:$0xf]
  %v4115 = vld [vmem:[%s4091 + $0x5c] sm:$0xf]
  %v4116 = vld [vmem:[%s4091 + $0x60] sm:$0xf]
  %v4117 = vld [vmem:[%s4091 + $0x64] sm:$0xf]
  %v4118 = vld [vmem:[%s4091 + $0x68] sm:$0xf]
  %v4119 = vld [vmem:[%s4091 + $0x6c] sm:$0xf]
  %v4120 = vld [vmem:[%s4091 + $0x70] sm:$0xf]
  %v4121 = vld [vmem:[%s4091 + $0x74] sm:$0xf]
  %v4122 = vld [vmem:[%s4091 + $0x78] sm:$0xf]
  %v4123 = vld [vmem:[%s4091 + $0x7c] sm:$0xf]
  %v4124 = vld [vmem:[%s4091 + $0x80] sm:$0xf]
  %v4125 = vld [vmem:[%s4091 + $0x84] sm:$0xf]
  %v4126 = vld [vmem:[%s4091 + $0x88] sm:$0xf]
  %v4127 = vld [vmem:[%s4091 + $0x8c] sm:$0xf]
  %v4128 = vld [vmem:[%s4091 + $0x90] sm:$0xf]
  %v4129 = vld [vmem:[%s4091 + $0x94] sm:$0xf]
  %v4130 = vld [vmem:[%s4091 + $0x98] sm:$0xf]
  %v4131 = vld [vmem:[%s4091 + $0x9c] sm:$0xf]
  %v4132 = vld [vmem:[%s4091 + $0xa0] sm:$0xf]
  %v4133 = vld [vmem:[%s4091 + $0xa4] sm:$0xf]
  %v4134 = vld [vmem:[%s4091 + $0xa8] sm:$0xf]
  %v4135 = vld [vmem:[%s4091 + $0xac] sm:$0xf]
  %v4136 = vld [vmem:[%s4091 + $0xb0] sm:$0xf]
  %v4137 = vld [vmem:[%s4091 + $0xb4] sm:$0xf]
  %v4138 = vld [vmem:[%s4091 + $0xb8] sm:$0xf]
  %v4139 = vld [vmem:[%s4091 + $0xbc] sm:$0xf]
  %v4140 = vld [vmem:[%s4091 + $0xc0] sm:$0xf]
  %v4141 = vld [vmem:[%s4091 + $0xc4] sm:$0xf]
  %v4142 = vld [vmem:[%s4091 + $0xc8] sm:$0xf]
  %v4143 = vld [vmem:[%s4091 + $0xcc] sm:$0xf]
  %v4144 = vld [vmem:[%s4091 + $0xd0] sm:$0xf]
  %v4145 = vld [vmem:[%s4091 + $0xd4] sm:$0xf]
  %v4146 = vld [vmem:[%s4091 + $0xd8] sm:$0xf]
  %v4147 = vld [vmem:[%s4091 + $0xdc] sm:$0xf]
  %v4148 = vld [vmem:[%s4091 + $0xe0] sm:$0xf]
  %v4149 = vld [vmem:[%s4091 + $0xe4] sm:$0xf]
  %v4150 = vld [vmem:[%s4091 + $0xe8] sm:$0xf]
  %v4151 = vld [vmem:[%s4091 + $0xec] sm:$0xf]
  %v4152 = vld [vmem:[%s4091 + $0xf0] sm:$0xf]
  %v4153 = vld [vmem:[%s4091 + $0xf4] sm:$0xf]
  %v4154 = vld [vmem:[%s4091 + $0xf8] sm:$0xf]
  %v4155 = vld [vmem:[%s4091 + $0xfc] sm:$0xf]
  %v4156 = vld [vmem:[%s4091 + $0x100] sm:$0xf]
  %v4157 = vld [vmem:[%s4091 + $0x104] sm:$0xf]
  %v4158 = vld [vmem:[%s4091 + $0x108] sm:$0xf]
  %v4159 = vld [vmem:[%s4091 + $0x10c] sm:$0xf]
  %v4160 = vld [vmem:[%s4091 + $0x110] sm:$0xf]
  %v4161 = vld [vmem:[%s4091 + $0x114] sm:$0xf]
  %v4162 = vld [vmem:[%s4091 + $0x118] sm:$0xf]
  %v4163 = vld [vmem:[%s4091 + $0x11c] sm:$0xf]
  %v4164 = vld [vmem:[%s4091 + $0x120] sm:$0xf]
  %v4165 = vld [vmem:[%s4091 + $0x124] sm:$0xf]
  %v4166 = vld [vmem:[%s4091 + $0x128] sm:$0xf]
  %v4167 = vld [vmem:[%s4091 + $0x12c] sm:$0xf]
  %v4168 = vld [vmem:[%s4091 + $0x130] sm:$0xf]
  %v4169 = vld [vmem:[%s4091 + $0x134] sm:$0xf]
  %v4170 = vld [vmem:[%s4091 + $0x138] sm:$0xf]
  %v4171 = vld [vmem:[%s4091 + $0x13c] sm:$0xf]
  %v4172 = vld [vmem:[%s4091 + $0x140] sm:$0xf]
  %v4173 = vld [vmem:[%s4091 + $0x144] sm:$0xf]
  %v4174 = vld [vmem:[%s4091 + $0x148] sm:$0xf]
  %v4175 = vld [vmem:[%s4091 + $0x14c] sm:$0xf]
  %v4176 = vld [vmem:[%s4091 + $0x150] sm:$0xf]
  %v4177 = vld [vmem:[%s4091 + $0x154] sm:$0xf]
  %v4178 = vld [vmem:[%s4091 + $0x158] sm:$0xf]
  %v4179 = vld [vmem:[%s4091 + $0x15c] sm:$0xf]
  %v4180 = vld [vmem:[%s4091 + $0x160] sm:$0xf]
  %v4181 = vld [vmem:[%s4091 + $0x164] sm:$0xf]
  %v4272 = vunpack.c.l.b16 %v4092
  %v4273 = vunpack.c.l.b16 %v4093
  %v4274 = vunpack.c.l.b16 %v4094
  %v4275 = vunpack.c.l.b16 %v4095
  %v4276 = vunpack.c.l.b16 %v4096
  %v4277 = vunpack.c.l.b16 %v4097
  %v4278 = vunpack.c.l.b16 %v4098
  %v4279 = vunpack.c.l.b16 %v4099
  %v4280 = vunpack.c.l.b16 %v4100
  %v4281 = vunpack.c.l.b16 %v4101
  %v4282 = vunpack.c.l.b16 %v4102
  %v4283 = vunpack.c.l.b16 %v4103
  %v4284 = vunpack.c.l.b16 %v4104
  %v4285 = vunpack.c.l.b16 %v4105
  %v4286 = vunpack.c.l.b16 %v4106
  %v4287 = vunpack.c.l.b16 %v4107
  %v4288 = vunpack.c.l.b16 %v4108
  %v4289 = vunpack.c.l.b16 %v4109
  %v4290 = vunpack.c.l.b16 %v4110
  %v4291 = vunpack.c.l.b16 %v4111
  %v4292 = vunpack.c.l.b16 %v4112
  %v4293 = vunpack.c.l.b16 %v4113
  %v4294 = vunpack.c.l.b16 %v4114
  %v4295 = vunpack.c.l.b16 %v4115
  %v4296 = vunpack.c.l.b16 %v4116
  %v4297 = vunpack.c.l.b16 %v4117
  %v4298 = vunpack.c.l.b16 %v4118
  %v4299 = vunpack.c.l.b16 %v4119
  %v4300 = vunpack.c.l.b16 %v4120
  %v4301 = vunpack.c.l.b16 %v4121
  %v4302 = vunpack.c.l.b16 %v4122
  %v4303 = vunpack.c.l.b16 %v4123
  %v4304 = vunpack.c.l.b16 %v4124
  %v4305 = vunpack.c.l.b16 %v4125
  %v4306 = vunpack.c.l.b16 %v4126
  %v4307 = vunpack.c.l.b16 %v4127
  %v4308 = vunpack.c.l.b16 %v4128
  %v4309 = vunpack.c.l.b16 %v4129
  %v4310 = vunpack.c.l.b16 %v4130
  %v4311 = vunpack.c.l.b16 %v4131
  %v4312 = vunpack.c.l.b16 %v4132
  %v4313 = vunpack.c.l.b16 %v4133
  %v4314 = vunpack.c.l.b16 %v4134
  %v4315 = vunpack.c.l.b16 %v4135
  %v4316 = vunpack.c.l.b16 %v4136
  %v4317 = vunpack.c.l.b16 %v4137
  %v4318 = vunpack.c.l.b16 %v4138
  %v4319 = vunpack.c.l.b16 %v4139
  %v4320 = vunpack.c.l.b16 %v4140
  %v4321 = vunpack.c.l.b16 %v4141
  %v4322 = vunpack.c.l.b16 %v4142
  %v4323 = vunpack.c.l.b16 %v4143
  %v4324 = vunpack.c.l.b16 %v4144
  %v4325 = vunpack.c.l.b16 %v4145
  %v4326 = vunpack.c.l.b16 %v4146
  %v4327 = vunpack.c.l.b16 %v4147
  %v4328 = vunpack.c.l.b16 %v4148
  %v4329 = vunpack.c.l.b16 %v4149
  %v4330 = vunpack.c.l.b16 %v4150
  %v4331 = vunpack.c.l.b16 %v4151
  %v4332 = vunpack.c.l.b16 %v4152
  %v4333 = vunpack.c.l.b16 %v4153
  %v4334 = vunpack.c.l.b16 %v4154
  %v4335 = vunpack.c.l.b16 %v4155
  %v4336 = vunpack.c.l.b16 %v4156
  %v4337 = vunpack.c.l.b16 %v4157
  %v4338 = vunpack.c.l.b16 %v4158
  %v4339 = vunpack.c.l.b16 %v4159
  %v4340 = vunpack.c.l.b16 %v4160
  %v4341 = vunpack.c.l.b16 %v4161
  %v4342 = vunpack.c.l.b16 %v4162
  %v4343 = vunpack.c.l.b16 %v4163
  %v4344 = vunpack.c.l.b16 %v4164
  %v4345 = vunpack.c.l.b16 %v4165
  %v4346 = vunpack.c.l.b16 %v4166
  %v4347 = vunpack.c.l.b16 %v4167
  %v4348 = vunpack.c.l.b16 %v4168
  %v4349 = vunpack.c.l.b16 %v4169
  %v4350 = vunpack.c.l.b16 %v4170
  %v4351 = vunpack.c.l.b16 %v4171
  %v4352 = vunpack.c.l.b16 %v4172
  %v4353 = vunpack.c.l.b16 %v4173
  %v4354 = vunpack.c.l.b16 %v4174
  %v4355 = vunpack.c.l.b16 %v4175
  %v4356 = vunpack.c.l.b16 %v4176
  %v4357 = vunpack.c.l.b16 %v4177
  %v4358 = vunpack.c.l.b16 %v4178
  %v4359 = vunpack.c.l.b16 %v4179
  %v4360 = vunpack.c.l.b16 %v4180
  %v4361 = vunpack.c.l.b16 %v4181
  %v4362 = vpack.c.b16 %v4273, %v4272
  %v4363 = vpack.c.b16 %v4275, %v4274
  %v4364 = vpack.c.b16 %v4277, %v4276
  %v4365 = vpack.c.b16 %v4279, %v4278
  %v4366 = vpack.c.b16 %v4281, %v4280
  %v4367 = vpack.c.b16 %v4283, %v4282
  %v4368 = vpack.c.b16 %v4285, %v4284
  %v4369 = vpack.c.b16 %v4287, %v4286
  %v4370 = vpack.c.b16 %v4289, %v4288
  %v4371 = vpack.c.b16 %v4291, %v4290
  %v4372 = vpack.c.b16 %v4293, %v4292
  %v4373 = vpack.c.b16 %v4295, %v4294
  %v4374 = vpack.c.b16 %v4297, %v4296
  %v4375 = vpack.c.b16 %v4299, %v4298
  %v4376 = vpack.c.b16 %v4301, %v4300
  %v4377 = vpack.c.b16 %v4303, %v4302
  %v4378 = vpack.c.b16 %v4305, %v4304
  %v4379 = vpack.c.b16 %v4307, %v4306
  %v4380 = vpack.c.b16 %v4309, %v4308
  %v4381 = vpack.c.b16 %v4311, %v4310
  %v4382 = vpack.c.b16 %v4313, %v4312
  %v4383 = vpack.c.b16 %v4315, %v4314
  %v4384 = vpack.c.b16 %v4317, %v4316
  %v4385 = vpack.c.b16 %v4319, %v4318
  %v4386 = vpack.c.b16 %v4321, %v4320
  %v4387 = vpack.c.b16 %v4323, %v4322
  %v4388 = vpack.c.b16 %v4325, %v4324
  %v4389 = vpack.c.b16 %v4327, %v4326
  %v4390 = vpack.c.b16 %v4329, %v4328
  %v4391 = vpack.c.b16 %v4331, %v4330
  %v4392 = vpack.c.b16 %v4333, %v4332
  %v4393 = vpack.c.b16 %v4335, %v4334
  %v4394 = vpack.c.b16 %v4337, %v4336
  %v4395 = vpack.c.b16 %v4339, %v4338
  %v4396 = vpack.c.b16 %v4341, %v4340
  %v4397 = vpack.c.b16 %v4343, %v4342
  %v4398 = vpack.c.b16 %v4345, %v4344
  %v4399 = vpack.c.b16 %v4347, %v4346
  %v4400 = vpack.c.b16 %v4349, %v4348
  %v4401 = vpack.c.b16 %v4351, %v4350
  %v4402 = vpack.c.b16 %v4353, %v4352
  %v4403 = vpack.c.b16 %v4355, %v4354
  %v4404 = vpack.c.b16 %v4357, %v4356
  %v4405 = vpack.c.b16 %v4359, %v4358
  %v4406 = vpack.c.b16 %v4361, %v4360
  %v4452 = vsel %vm1874, %v4090, 0
  %4454 = vmatprep.subr.bf16.mxu0 0
  %4455 = vmatpush1.bf16.msra.mxu0 %v4362
  %4456 = vmatprep.subr.bf16.mxu0 0
  %4457 = vmatpush1.bf16.msra.mxu0 %v4363
  %4458 = vmatprep.subr.bf16.mxu0 0
  %4459 = vmatpush1.bf16.msra.mxu0 %v4364
  %4460 = vmatprep.subr.bf16.mxu0 0
  %4461 = vmatpush1.bf16.msra.mxu0 %v4365
  %4462 = vmatprep.subr.bf16.mxu0 0
  %4463 = vmatpush1.bf16.msra.mxu0 %v4366
  %4464 = vmatprep.subr.bf16.mxu0 0
  %4465 = vmatpush1.bf16.msra.mxu0 %v4367
  %4466 = vmatprep.subr.bf16.mxu0 0
  %4467 = vmatpush1.bf16.msra.mxu0 %v4368
  %4468 = vmatprep.subr.bf16.mxu0 0
  %4469 = vmatpush1.bf16.msra.mxu0 %v4369
  %4470 = vmatprep.subr.bf16.mxu0 0
  %4471 = vmatpush1.bf16.msra.mxu0 %v4370
  %4472 = vmatprep.subr.bf16.mxu0 0
  %4473 = vmatpush1.bf16.msra.mxu0 %v4371
  %4474 = vmatprep.subr.bf16.mxu0 0
  %4475 = vmatpush1.bf16.msra.mxu0 %v4372
  %4476 = vmatprep.subr.bf16.mxu0 0
  %4477 = vmatpush1.bf16.msra.mxu0 %v4373
  %4478 = vmatprep.subr.bf16.mxu0 0
  %4479 = vmatpush1.bf16.msra.mxu0 %v4374
  %4480 = vmatprep.subr.bf16.mxu0 0
  %4481 = vmatpush1.bf16.msra.mxu0 %v4375
  %4482 = vmatprep.subr.bf16.mxu0 0
  %4483 = vmatpush1.bf16.msra.mxu0 %v4376
  %4484 = vmatprep.subr.bf16.mxu0 0
  %4485 = vmatpush1.bf16.msra.mxu0 %v4377
  %4486 = vmatprep.mubr.bf16.mxu0 %v4074
  %4487 = vmatmul.mubr.bf16.gmra.mrb[0].mxu0 %v4070
  %v4488 = vpop.f32.mrb[0].mxu0
  %v4489 = vadd.f32 0.0, %v4488
  %v4490 = vpop.f32.mrb[0].mxu0
  %v4491 = vpop.f32.mrb[0].mxu0
  %v4492 = vpop.f32.mrb[0].mxu0
  %4493 = vdwg.mxu0
  %4494 = vmatprep.subr.bf16.mxu0 0
  %4495 = vmatpush1.bf16.msra.mxu0 %v4378
  %4496 = vmatprep.subr.bf16.mxu0 0
  %4497 = vmatpush1.bf16.msra.mxu0 %v4379
  %4498 = vmatprep.subr.bf16.mxu0 0
  %4499 = vmatpush1.bf16.msra.mxu0 %v4380
  %4500 = vmatprep.subr.bf16.mxu0 0
  %4501 = vmatpush1.bf16.msra.mxu0 %v4381
  %4502 = vmatprep.subr.bf16.mxu0 0
  %4503 = vmatpush1.bf16.msra.mxu0 %v4382
  %4504 = vmatprep.subr.bf16.mxu0 0
  %4505 = vmatpush1.bf16.msra.mxu0 %v4383
  %4506 = vmatprep.subr.bf16.mxu0 0
  %4507 = vmatpush1.bf16.msra.mxu0 %v4384
  %4508 = vmatprep.subr.bf16.mxu0 0
  %4509 = vmatpush1.bf16.msra.mxu0 %v4385
  %4510 = vmatprep.subr.bf16.mxu0 0
  %4511 = vmatpush1.bf16.msra.mxu0 %v4386
  %4512 = vmatprep.subr.bf16.mxu0 0
  %4513 = vmatpush1.bf16.msra.mxu0 %v4387
  %4514 = vmatprep.subr.bf16.mxu0 0
  %4515 = vmatpush1.bf16.msra.mxu0 %v4388
  %4516 = vmatprep.subr.bf16.mxu0 0
  %4517 = vmatpush1.bf16.msra.mxu0 %v4389
  %4518 = vmatprep.subr.bf16.mxu0 0
  %4519 = vmatpush1.bf16.msra.mxu0 %v4390
  %4520 = vmatprep.subr.bf16.mxu0 0
  %4521 = vmatpush1.bf16.msra.mxu0 %v4391
  %4522 = vmatprep.subr.bf16.mxu0 0
  %4523 = vmatpush1.bf16.msra.mxu0 %v4392
  %4524 = vmatprep.subr.bf16.mxu0 0
  %4525 = vmatpush1.bf16.msra.mxu0 %v4393
  %4526 = vmatprep.mubr.bf16.mxu0 %v4082
  %4527 = vmatmul.mubr.bf16.gmra.mrb[0].mxu0 %v4078
  %v4528 = vpop.f32.mrb[0].mxu0
  %v4529 = vadd.f32 %v4489, %v4528
  %v4530 = vpop.f32.mrb[0].mxu0
  %v4531 = vpop.f32.mrb[0].mxu0
  %v4532 = vpop.f32.mrb[0].mxu0
  %4533 = vdwg.mxu0
  %4534 = vmatprep.subr.bf16.mxu0 0
  %4535 = vmatpush1.bf16.msra.mxu0 %v4394
  %4536 = vmatprep.subr.bf16.mxu0 0
  %4537 = vmatpush1.bf16.msra.mxu0 %v4395
  %4538 = vmatprep.subr.bf16.mxu0 0
  %4539 = vmatpush1.bf16.msra.mxu0 %v4396
  %4540 = vmatprep.subr.bf16.mxu0 0
  %4541 = vmatpush1.bf16.msra.mxu0 %v4397
  %4542 = vmatprep.subr.bf16.mxu0 0
  %4543 = vmatpush1.bf16.msra.mxu0 %v4398
  %4544 = vmatprep.subr.bf16.mxu0 0
  %4545 = vmatpush1.bf16.msra.mxu0 %v4399
  %4546 = vmatprep.subr.bf16.mxu0 0
  %4547 = vmatpush1.bf16.msra.mxu0 %v4400
  %4548 = vmatprep.subr.bf16.mxu0 0
  %4549 = vmatpush1.bf16.msra.mxu0 %v4401
  %4550 = vmatprep.subr.bf16.mxu0 0
  %4551 = vmatpush1.bf16.msra.mxu0 %v4402
  %4552 = vmatprep.subr.bf16.mxu0 0
  %4553 = vmatpush1.bf16.msra.mxu0 %v4403
  %4554 = vmatprep.subr.bf16.mxu0 0
  %4555 = vmatpush1.bf16.msra.mxu0 %v4404
  %4556 = vmatprep.subr.bf16.mxu0 0
  %4557 = vmatpush1.bf16.msra.mxu0 %v4405
  %4558 = vmatprep.subr.bf16.mxu0 0
  %4559 = vmatpush1.bf16.msra.mxu0 %v4406
  %4560 = vmatprep.subr.bf16.mxu0 0
  %4561 = vmatpush1.bf16.msra.mxu0 0
  %4562 = vmatprep.subr.bf16.mxu0 0
  %4563 = vmatpush1.bf16.msra.mxu0 0
  %4564 = vmatprep.subr.bf16.mxu0 0
  %4565 = vmatpush1.bf16.msra.mxu0 0
  %4566 = vmatprep.mubr.bf16.mxu0 %v4452
  %4567 = vmatmul.mubr.bf16.gmra.mrb[0].mxu0 %v4086
  %v4568 = vpop.f32.mrb[0].mxu0
  %v4569 = vadd.f32 %v4529, %v4568
  %v4570 = vpop.f32.mrb[0].mxu0
  %v4571 = vpop.f32.mrb[0].mxu0
  %v4572 = vpop.f32.mrb[0].mxu0
  %4573 = vdwg.mxu0
  %v4574 = vadd.f32 %v4026, %v4569
  %v4575 = vld [vmem:[#allocation2] sm:$0xc0]
  %v4576 = vld [vmem:[#allocation2 + $0x8] sm:$0xc0]
  %v4577 = vld [vmem:[#allocation2 + $0x10] sm:$0xc0]
  %v4578 = vld [vmem:[#allocation2 + $0x18] sm:$0xc0]
  %v4579 = vld [vmem:[#allocation2 + $0x20] sm:$0xc0]
  %v4580 = vld [vmem:[#allocation2 + $0x28] sm:$0xc0]
  %v4587 = vrot.slane %v4575, 6
  %v4588 = vrot.slane %v4576, 6
  %v4589 = vrot.slane %v4577, 6
  %v4590 = vrot.slane %v4578, 6
  %v4591 = vrot.slane %v4579, 6
  %v4592 = vrot.slane %v4580, 6
  %v4593 = vrot.slane %v4575, 4
  %v4594 = vrot.slane %v4576, 4
  %v4595 = vrot.slane %v4577, 4
  %v4596 = vrot.slane %v4578, 4
  %v4597 = vrot.slane %v4579, 4
  %v4598 = vrot.slane %v4580, 4
  %4599 = vrot.lane.b32.xlu0 %v4593, 80
  %v4600 = vpop.permute.xlu0 %4599
  %4601 = vrot.lane.b32.xlu0 %v4594, 80
  %v4602 = vpop.permute.xlu0 %4601
  %4603 = vrot.lane.b32.xlu0 %v4595, 80
  %v4604 = vpop.permute.xlu0 %4603
  %4605 = vrot.lane.b32.xlu0 %v4596, 80
  %v4606 = vpop.permute.xlu0 %4605
  %4607 = vrot.lane.b32.xlu0 %v4597, 80
  %v4608 = vpop.permute.xlu0 %4607
  %4609 = vrot.lane.b32.xlu0 %v4598, 80
  %v4610 = vpop.permute.xlu0 %4609
  %v4611 = vsel %vm1329, %v4600, %v4602
  %v4612 = vsel %vm1329, %v4602, %v4604
  %v4613 = vsel %vm1329, %v4604, %v4606
  %v4614 = vsel %vm1329, %v4606, %v4608
  %v4615 = vsel %vm1329, %v4608, %v4610
  %v4618 = vsel %vm1335, %v4587, %v4611
  %v4622 = vsel %vm1335, %v4588, %v4612
  %v4626 = vsel %vm1335, %v4589, %v4613
  %v4630 = vsel %vm1335, %v4590, %v4614
  %v4634 = vsel %vm1335, %v4591, %v4615
  %v4638 = vsel %vm1335, %v4592, %v4610
  %s4639 = scalar_lea.vmem %s3, 2160
  %v4640 = vld [vmem:[%s4639] sm:$0xf]
  %v4641 = vld [vmem:[%s4639 + $0x4] sm:$0xf]
  %v4642 = vld [vmem:[%s4639 + $0x8] sm:$0xf]
  %v4643 = vld [vmem:[%s4639 + $0xc] sm:$0xf]
  %v4644 = vld [vmem:[%s4639 + $0x10] sm:$0xf]
  %v4645 = vld [vmem:[%s4639 + $0x14] sm:$0xf]
  %v4646 = vld [vmem:[%s4639 + $0x18] sm:$0xf]
  %v4647 = vld [vmem:[%s4639 + $0x1c] sm:$0xf]
  %v4648 = vld [vmem:[%s4639 + $0x20] sm:$0xf]
  %v4649 = vld [vmem:[%s4639 + $0x24] sm:$0xf]
  %v4650 = vld [vmem:[%s4639 + $0x28] sm:$0xf]
  %v4651 = vld [vmem:[%s4639 + $0x2c] sm:$0xf]
  %v4652 = vld [vmem:[%s4639 + $0x30] sm:$0xf]
  %v4653 = vld [vmem:[%s4639 + $0x34] sm:$0xf]
  %v4654 = vld [vmem:[%s4639 + $0x38] sm:$0xf]
  %v4655 = vld [vmem:[%s4639 + $0x3c] sm:$0xf]
  %v4656 = vld [vmem:[%s4639 + $0x40] sm:$0xf]
  %v4657 = vld [vmem:[%s4639 + $0x44] sm:$0xf]
  %v4658 = vld [vmem:[%s4639 + $0x48] sm:$0xf]
  %v4659 = vld [vmem:[%s4639 + $0x4c] sm:$0xf]
  %v4660 = vld [vmem:[%s4639 + $0x50] sm:$0xf]
  %v4661 = vld [vmem:[%s4639 + $0x54] sm:$0xf]
  %v4662 = vld [vmem:[%s4639 + $0x58] sm:$0xf]
  %v4663 = vld [vmem:[%s4639 + $0x5c] sm:$0xf]
  %v4664 = vld [vmem:[%s4639 + $0x60] sm:$0xf]
  %v4665 = vld [vmem:[%s4639 + $0x64] sm:$0xf]
  %v4666 = vld [vmem:[%s4639 + $0x68] sm:$0xf]
  %v4667 = vld [vmem:[%s4639 + $0x6c] sm:$0xf]
  %v4668 = vld [vmem:[%s4639 + $0x70] sm:$0xf]
  %v4669 = vld [vmem:[%s4639 + $0x74] sm:$0xf]
  %v4670 = vld [vmem:[%s4639 + $0x78] sm:$0xf]
  %v4671 = vld [vmem:[%s4639 + $0x7c] sm:$0xf]
  %v4672 = vld [vmem:[%s4639 + $0x80] sm:$0xf]
  %v4673 = vld [vmem:[%s4639 + $0x84] sm:$0xf]
  %v4674 = vld [vmem:[%s4639 + $0x88] sm:$0xf]
  %v4675 = vld [vmem:[%s4639 + $0x8c] sm:$0xf]
  %v4676 = vld [vmem:[%s4639 + $0x90] sm:$0xf]
  %v4677 = vld [vmem:[%s4639 + $0x94] sm:$0xf]
  %v4678 = vld [vmem:[%s4639 + $0x98] sm:$0xf]
  %v4679 = vld [vmem:[%s4639 + $0x9c] sm:$0xf]
  %v4680 = vld [vmem:[%s4639 + $0xa0] sm:$0xf]
  %v4681 = vld [vmem:[%s4639 + $0xa4] sm:$0xf]
  %v4682 = vld [vmem:[%s4639 + $0xa8] sm:$0xf]
  %v4683 = vld [vmem:[%s4639 + $0xac] sm:$0xf]
  %v4684 = vld [vmem:[%s4639 + $0xb0] sm:$0xf]
  %v4685 = vld [vmem:[%s4639 + $0xb4] sm:$0xf]
  %v4686 = vld [vmem:[%s4639 + $0xb8] sm:$0xf]
  %v4687 = vld [vmem:[%s4639 + $0xbc] sm:$0xf]
  %v4688 = vld [vmem:[%s4639 + $0xc0] sm:$0xf]
  %v4689 = vld [vmem:[%s4639 + $0xc4] sm:$0xf]
  %v4690 = vld [vmem:[%s4639 + $0xc8] sm:$0xf]
  %v4691 = vld [vmem:[%s4639 + $0xcc] sm:$0xf]
  %v4692 = vld [vmem:[%s4639 + $0xd0] sm:$0xf]
  %v4693 = vld [vmem:[%s4639 + $0xd4] sm:$0xf]
  %v4694 = vld [vmem:[%s4639 + $0xd8] sm:$0xf]
  %v4695 = vld [vmem:[%s4639 + $0xdc] sm:$0xf]
  %v4696 = vld [vmem:[%s4639 + $0xe0] sm:$0xf]
  %v4697 = vld [vmem:[%s4639 + $0xe4] sm:$0xf]
  %v4698 = vld [vmem:[%s4639 + $0xe8] sm:$0xf]
  %v4699 = vld [vmem:[%s4639 + $0xec] sm:$0xf]
  %v4700 = vld [vmem:[%s4639 + $0xf0] sm:$0xf]
  %v4701 = vld [vmem:[%s4639 + $0xf4] sm:$0xf]
  %v4702 = vld [vmem:[%s4639 + $0xf8] sm:$0xf]
  %v4703 = vld [vmem:[%s4639 + $0xfc] sm:$0xf]
  %v4704 = vld [vmem:[%s4639 + $0x100] sm:$0xf]
  %v4705 = vld [vmem:[%s4639 + $0x104] sm:$0xf]
  %v4706 = vld [vmem:[%s4639 + $0x108] sm:$0xf]
  %v4707 = vld [vmem:[%s4639 + $0x10c] sm:$0xf]
  %v4708 = vld [vmem:[%s4639 + $0x110] sm:$0xf]
  %v4709 = vld [vmem:[%s4639 + $0x114] sm:$0xf]
  %v4710 = vld [vmem:[%s4639 + $0x118] sm:$0xf]
  %v4711 = vld [vmem:[%s4639 + $0x11c] sm:$0xf]
  %v4712 = vld [vmem:[%s4639 + $0x120] sm:$0xf]
  %v4713 = vld [vmem:[%s4639 + $0x124] sm:$0xf]
  %v4714 = vld [vmem:[%s4639 + $0x128] sm:$0xf]
  %v4715 = vld [vmem:[%s4639 + $0x12c] sm:$0xf]
  %v4716 = vld [vmem:[%s4639 + $0x130] sm:$0xf]
  %v4717 = vld [vmem:[%s4639 + $0x134] sm:$0xf]
  %v4718 = vld [vmem:[%s4639 + $0x138] sm:$0xf]
  %v4719 = vld [vmem:[%s4639 + $0x13c] sm:$0xf]
  %v4720 = vld [vmem:[%s4639 + $0x140] sm:$0xf]
  %v4721 = vld [vmem:[%s4639 + $0x144] sm:$0xf]
  %v4722 = vld [vmem:[%s4639 + $0x148] sm:$0xf]
  %v4723 = vld [vmem:[%s4639 + $0x14c] sm:$0xf]
  %v4724 = vld [vmem:[%s4639 + $0x150] sm:$0xf]
  %v4725 = vld [vmem:[%s4639 + $0x154] sm:$0xf]
  %v4726 = vld [vmem:[%s4639 + $0x158] sm:$0xf]
  %v4727 = vld [vmem:[%s4639 + $0x15c] sm:$0xf]
  %v4728 = vld [vmem:[%s4639 + $0x160] sm:$0xf]
  %v4729 = vld [vmem:[%s4639 + $0x164] sm:$0xf]
  %v4820 = vunpack.c.l.b16 %v4640
  %v4821 = vunpack.c.l.b16 %v4641
  %v4822 = vunpack.c.l.b16 %v4642
  %v4823 = vunpack.c.l.b16 %v4643
  %v4824 = vunpack.c.l.b16 %v4644
  %v4825 = vunpack.c.l.b16 %v4645
  %v4826 = vunpack.c.l.b16 %v4646
  %v4827 = vunpack.c.l.b16 %v4647
  %v4828 = vunpack.c.l.b16 %v4648
  %v4829 = vunpack.c.l.b16 %v4649
  %v4830 = vunpack.c.l.b16 %v4650
  %v4831 = vunpack.c.l.b16 %v4651
  %v4832 = vunpack.c.l.b16 %v4652
  %v4833 = vunpack.c.l.b16 %v4653
  %v4834 = vunpack.c.l.b16 %v4654
  %v4835 = vunpack.c.l.b16 %v4655
  %v4836 = vunpack.c.l.b16 %v4656
  %v4837 = vunpack.c.l.b16 %v4657
  %v4838 = vunpack.c.l.b16 %v4658
  %v4839 = vunpack.c.l.b16 %v4659
  %v4840 = vunpack.c.l.b16 %v4660
  %v4841 = vunpack.c.l.b16 %v4661
  %v4842 = vunpack.c.l.b16 %v4662
  %v4843 = vunpack.c.l.b16 %v4663
  %v4844 = vunpack.c.l.b16 %v4664
  %v4845 = vunpack.c.l.b16 %v4665
  %v4846 = vunpack.c.l.b16 %v4666
  %v4847 = vunpack.c.l.b16 %v4667
  %v4848 = vunpack.c.l.b16 %v4668
  %v4849 = vunpack.c.l.b16 %v4669
  %v4850 = vunpack.c.l.b16 %v4670
  %v4851 = vunpack.c.l.b16 %v4671
  %v4852 = vunpack.c.l.b16 %v4672
  %v4853 = vunpack.c.l.b16 %v4673
  %v4854 = vunpack.c.l.b16 %v4674
  %v4855 = vunpack.c.l.b16 %v4675
  %v4856 = vunpack.c.l.b16 %v4676
  %v4857 = vunpack.c.l.b16 %v4677
  %v4858 = vunpack.c.l.b16 %v4678
  %v4859 = vunpack.c.l.b16 %v4679
  %v4860 = vunpack.c.l.b16 %v4680
  %v4861 = vunpack.c.l.b16 %v4681
  %v4862 = vunpack.c.l.b16 %v4682
  %v4863 = vunpack.c.l.b16 %v4683
  %v4864 = vunpack.c.l.b16 %v4684
  %v4865 = vunpack.c.l.b16 %v4685
  %v4866 = vunpack.c.l.b16 %v4686
  %v4867 = vunpack.c.l.b16 %v4687
  %v4868 = vunpack.c.l.b16 %v4688
  %v4869 = vunpack.c.l.b16 %v4689
  %v4870 = vunpack.c.l.b16 %v4690
  %v4871 = vunpack.c.l.b16 %v4691
  %v4872 = vunpack.c.l.b16 %v4692
  %v4873 = vunpack.c.l.b16 %v4693
  %v4874 = vunpack.c.l.b16 %v4694
  %v4875 = vunpack.c.l.b16 %v4695
  %v4876 = vunpack.c.l.b16 %v4696
  %v4877 = vunpack.c.l.b16 %v4697
  %v4878 = vunpack.c.l.b16 %v4698
  %v4879 = vunpack.c.l.b16 %v4699
  %v4880 = vunpack.c.l.b16 %v4700
  %v4881 = vunpack.c.l.b16 %v4701
  %v4882 = vunpack.c.l.b16 %v4702
  %v4883 = vunpack.c.l.b16 %v4703
  %v4884 = vunpack.c.l.b16 %v4704
  %v4885 = vunpack.c.l.b16 %v4705
  %v4886 = vunpack.c.l.b16 %v4706
  %v4887 = vunpack.c.l.b16 %v4707
  %v4888 = vunpack.c.l.b16 %v4708
  %v4889 = vunpack.c.l.b16 %v4709
  %v4890 = vunpack.c.l.b16 %v4710
  %v4891 = vunpack.c.l.b16 %v4711
  %v4892 = vunpack.c.l.b16 %v4712
  %v4893 = vunpack.c.l.b16 %v4713
  %v4894 = vunpack.c.l.b16 %v4714
  %v4895 = vunpack.c.l.b16 %v4715
  %v4896 = vunpack.c.l.b16 %v4716
  %v4897 = vunpack.c.l.b16 %v4717
  %v4898 = vunpack.c.l.b16 %v4718
  %v4899 = vunpack.c.l.b16 %v4719
  %v4900 = vunpack.c.l.b16 %v4720
  %v4901 = vunpack.c.l.b16 %v4721
  %v4902 = vunpack.c.l.b16 %v4722
  %v4903 = vunpack.c.l.b16 %v4723
  %v4904 = vunpack.c.l.b16 %v4724
  %v4905 = vunpack.c.l.b16 %v4725
  %v4906 = vunpack.c.l.b16 %v4726
  %v4907 = vunpack.c.l.b16 %v4727
  %v4908 = vunpack.c.l.b16 %v4728
  %v4909 = vunpack.c.l.b16 %v4729
  %v4910 = vpack.c.b16 %v4821, %v4820
  %v4911 = vpack.c.b16 %v4823, %v4822
  %v4912 = vpack.c.b16 %v4825, %v4824
  %v4913 = vpack.c.b16 %v4827, %v4826
  %v4914 = vpack.c.b16 %v4829, %v4828
  %v4915 = vpack.c.b16 %v4831, %v4830
  %v4916 = vpack.c.b16 %v4833, %v4832
  %v4917 = vpack.c.b16 %v4835, %v4834
  %v4918 = vpack.c.b16 %v4837, %v4836
  %v4919 = vpack.c.b16 %v4839, %v4838
  %v4920 = vpack.c.b16 %v4841, %v4840
  %v4921 = vpack.c.b16 %v4843, %v4842
  %v4922 = vpack.c.b16 %v4845, %v4844
  %v4923 = vpack.c.b16 %v4847, %v4846
  %v4924 = vpack.c.b16 %v4849, %v4848
  %v4925 = vpack.c.b16 %v4851, %v4850
  %v4926 = vpack.c.b16 %v4853, %v4852
  %v4927 = vpack.c.b16 %v4855, %v4854
  %v4928 = vpack.c.b16 %v4857, %v4856
  %v4929 = vpack.c.b16 %v4859, %v4858
  %v4930 = vpack.c.b16 %v4861, %v4860
  %v4931 = vpack.c.b16 %v4863, %v4862
  %v4932 = vpack.c.b16 %v4865, %v4864
  %v4933 = vpack.c.b16 %v4867, %v4866
  %v4934 = vpack.c.b16 %v4869, %v4868
  %v4935 = vpack.c.b16 %v4871, %v4870
  %v4936 = vpack.c.b16 %v4873, %v4872
  %v4937 = vpack.c.b16 %v4875, %v4874
  %v4938 = vpack.c.b16 %v4877, %v4876
  %v4939 = vpack.c.b16 %v4879, %v4878
  %v4940 = vpack.c.b16 %v4881, %v4880
  %v4941 = vpack.c.b16 %v4883, %v4882
  %v4942 = vpack.c.b16 %v4885, %v4884
  %v4943 = vpack.c.b16 %v4887, %v4886
  %v4944 = vpack.c.b16 %v4889, %v4888
  %v4945 = vpack.c.b16 %v4891, %v4890
  %v4946 = vpack.c.b16 %v4893, %v4892
  %v4947 = vpack.c.b16 %v4895, %v4894
  %v4948 = vpack.c.b16 %v4897, %v4896
  %v4949 = vpack.c.b16 %v4899, %v4898
  %v4950 = vpack.c.b16 %v4901, %v4900
  %v4951 = vpack.c.b16 %v4903, %v4902
  %v4952 = vpack.c.b16 %v4905, %v4904
  %v4953 = vpack.c.b16 %v4907, %v4906
  %v4954 = vpack.c.b16 %v4909, %v4908
  %v5000 = vsel %vm1874, %v4638, 0
  %5002 = vmatprep.subr.bf16.mxu0 0
  %5003 = vmatpush1.bf16.msra.mxu0 %v4910
  %5004 = vmatprep.subr.bf16.mxu0 0
  %5005 = vmatpush1.bf16.msra.mxu0 %v4911
  %5006 = vmatprep.subr.bf16.mxu0 0
  %5007 = vmatpush1.bf16.msra.mxu0 %v4912
  %5008 = vmatprep.subr.bf16.mxu0 0
  %5009 = vmatpush1.bf16.msra.mxu0 %v4913
  %5010 = vmatprep.subr.bf16.mxu0 0
  %5011 = vmatpush1.bf16.msra.mxu0 %v4914
  %5012 = vmatprep.subr.bf16.mxu0 0
  %5013 = vmatpush1.bf16.msra.mxu0 %v4915
  %5014 = vmatprep.subr.bf16.mxu0 0
  %5015 = vmatpush1.bf16.msra.mxu0 %v4916
  %5016 = vmatprep.subr.bf16.mxu0 0
  %5017 = vmatpush1.bf16.msra.mxu0 %v4917
  %5018 = vmatprep.subr.bf16.mxu0 0
  %5019 = vmatpush1.bf16.msra.mxu0 %v4918
  %5020 = vmatprep.subr.bf16.mxu0 0
  %5021 = vmatpush1.bf16.msra.mxu0 %v4919
  %5022 = vmatprep.subr.bf16.mxu0 0
  %5023 = vmatpush1.bf16.msra.mxu0 %v4920
  %5024 = vmatprep.subr.bf16.mxu0 0
  %5025 = vmatpush1.bf16.msra.mxu0 %v4921
  %5026 = vmatprep.subr.bf16.mxu0 0
  %5027 = vmatpush1.bf16.msra.mxu0 %v4922
  %5028 = vmatprep.subr.bf16.mxu0 0
  %5029 = vmatpush1.bf16.msra.mxu0 %v4923
  %5030 = vmatprep.subr.bf16.mxu0 0
  %5031 = vmatpush1.bf16.msra.mxu0 %v4924
  %5032 = vmatprep.subr.bf16.mxu0 0
  %5033 = vmatpush1.bf16.msra.mxu0 %v4925
  %5034 = vmatprep.mubr.bf16.mxu0 %v4622
  %5035 = vmatmul.mubr.bf16.gmra.mrb[0].mxu0 %v4618
  %v5036 = vpop.f32.mrb[0].mxu0
  %v5037 = vadd.f32 0.0, %v5036
  %v5038 = vpop.f32.mrb[0].mxu0
  %v5039 = vpop.f32.mrb[0].mxu0
  %v5040 = vpop.f32.mrb[0].mxu0
  %5041 = vdwg.mxu0
  %5042 = vmatprep.subr.bf16.mxu0 0
  %5043 = vmatpush1.bf16.msra.mxu0 %v4926
  %5044 = vmatprep.subr.bf16.mxu0 0
  %5045 = vmatpush1.bf16.msra.mxu0 %v4927
  %5046 = vmatprep.subr.bf16.mxu0 0
  %5047 = vmatpush1.bf16.msra.mxu0 %v4928
  %5048 = vmatprep.subr.bf16.mxu0 0
  %5049 = vmatpush1.bf16.msra.mxu0 %v4929
  %5050 = vmatprep.subr.bf16.mxu0 0
  %5051 = vmatpush1.bf16.msra.mxu0 %v4930
  %5052 = vmatprep.subr.bf16.mxu0 0
  %5053 = vmatpush1.bf16.msra.mxu0 %v4931
  %5054 = vmatprep.subr.bf16.mxu0 0
  %5055 = vmatpush1.bf16.msra.mxu0 %v4932
  %5056 = vmatprep.subr.bf16.mxu0 0
  %5057 = vmatpush1.bf16.msra.mxu0 %v4933
  %5058 = vmatprep.subr.bf16.mxu0 0
  %5059 = vmatpush1.bf16.msra.mxu0 %v4934
  %5060 = vmatprep.subr.bf16.mxu0 0
  %5061 = vmatpush1.bf16.msra.mxu0 %v4935
  %5062 = vmatprep.subr.bf16.mxu0 0
  %5063 = vmatpush1.bf16.msra.mxu0 %v4936
  %5064 = vmatprep.subr.bf16.mxu0 0
  %5065 = vmatpush1.bf16.msra.mxu0 %v4937
  %5066 = vmatprep.subr.bf16.mxu0 0
  %5067 = vmatpush1.bf16.msra.mxu0 %v4938
  %5068 = vmatprep.subr.bf16.mxu0 0
  %5069 = vmatpush1.bf16.msra.mxu0 %v4939
  %5070 = vmatprep.subr.bf16.mxu0 0
  %5071 = vmatpush1.bf16.msra.mxu0 %v4940
  %5072 = vmatprep.subr.bf16.mxu0 0
  %5073 = vmatpush1.bf16.msra.mxu0 %v4941
  %5074 = vmatprep.mubr.bf16.mxu0 %v4630
  %5075 = vmatmul.mubr.bf16.gmra.mrb[0].mxu0 %v4626
  %v5076 = vpop.f32.mrb[0].mxu0
  %v5077 = vadd.f32 %v5037, %v5076
  %v5078 = vpop.f32.mrb[0].mxu0
  %v5079 = vpop.f32.mrb[0].mxu0
  %v5080 = vpop.f32.mrb[0].mxu0
  %5081 = vdwg.mxu0
  %5082 = vmatprep.subr.bf16.mxu0 0
  %5083 = vmatpush1.bf16.msra.mxu0 %v4942
  %5084 = vmatprep.subr.bf16.mxu0 0
  %5085 = vmatpush1.bf16.msra.mxu0 %v4943
  %5086 = vmatprep.subr.bf16.mxu0 0
  %5087 = vmatpush1.bf16.msra.mxu0 %v4944
  %5088 = vmatprep.subr.bf16.mxu0 0
  %5089 = vmatpush1.bf16.msra.mxu0 %v4945
  %5090 = vmatprep.subr.bf16.mxu0 0
  %5091 = vmatpush1.bf16.msra.mxu0 %v4946
  %5092 = vmatprep.subr.bf16.mxu0 0
  %5093 = vmatpush1.bf16.msra.mxu0 %v4947
  %5094 = vmatprep.subr.bf16.mxu0 0
  %5095 = vmatpush1.bf16.msra.mxu0 %v4948
  %5096 = vmatprep.subr.bf16.mxu0 0
  %5097 = vmatpush1.bf16.msra.mxu0 %v4949
  %5098 = vmatprep.subr.bf16.mxu0 0
  %5099 = vmatpush1.bf16.msra.mxu0 %v4950
  %5100 = vmatprep.subr.bf16.mxu0 0
  %5101 = vmatpush1.bf16.msra.mxu0 %v4951
  %5102 = vmatprep.subr.bf16.mxu0 0
  %5103 = vmatpush1.bf16.msra.mxu0 %v4952
  %5104 = vmatprep.subr.bf16.mxu0 0
  %5105 = vmatpush1.bf16.msra.mxu0 %v4953
  %5106 = vmatprep.subr.bf16.mxu0 0
  %5107 = vmatpush1.bf16.msra.mxu0 %v4954
  %5108 = vmatprep.subr.bf16.mxu0 0
  %5109 = vmatpush1.bf16.msra.mxu0 0
  %5110 = vmatprep.subr.bf16.mxu0 0
  %5111 = vmatpush1.bf16.msra.mxu0 0
  %5112 = vmatprep.subr.bf16.mxu0 0
  %5113 = vmatpush1.bf16.msra.mxu0 0
  %5114 = vmatprep.mubr.bf16.mxu0 %v5000
  %5115 = vmatmul.mubr.bf16.gmra.mrb[0].mxu0 %v4634
  %v5116 = vpop.f32.mrb[0].mxu0
  %v5117 = vadd.f32 %v5077, %v5116
  %v5118 = vpop.f32.mrb[0].mxu0
  %v5119 = vpop.f32.mrb[0].mxu0
  %v5120 = vpop.f32.mrb[0].mxu0
  %5121 = vdwg.mxu0
  %v5122 = vadd.f32 %v4574, %v5117
  %v5123 = vld [vmem:[#allocation2] sm:$0x80]
  %v5124 = vld [vmem:[#allocation2 + $0x8] sm:$0x80]
  %v5125 = vld [vmem:[#allocation2 + $0x10] sm:$0x80]
  %v5126 = vld [vmem:[#allocation2 + $0x18] sm:$0x80]
  %v5127 = vld [vmem:[#allocation2 + $0x20] sm:$0x80]
  %v5128 = vld [vmem:[#allocation2 + $0x28] sm:$0x80]
  %v5129 = vld [vmem:[#allocation2 + $0x30] sm:$0x1]
  %v5130 = vld [vmem:[#allocation2 + $0x38] sm:$0x1]
  %v5131 = vld [vmem:[#allocation2 + $0x40] sm:$0x1]
  %v5132 = vld [vmem:[#allocation2 + $0x48] sm:$0x1]
  %v5133 = vld [vmem:[#allocation2 + $0x50] sm:$0x1]
  %v5134 = vld [vmem:[#allocation2 + $0x58] sm:$0x1]
  %vm5147 = vcmask 1040384
  %v5148 = vrot.slane %v5123, 7
  %v5149 = vrot.slane %v5129, 7
  %v5150 = vsel %vm5147, %v5148, %v5149
  %v5151 = vrot.slane %v5124, 7
  %v5152 = vrot.slane %v5130, 7
  %v5153 = vsel %vm5147, %v5151, %v5152
  %v5154 = vrot.slane %v5125, 7
  %v5155 = vrot.slane %v5131, 7
  %v5156 = vsel %vm5147, %v5154, %v5155
  %v5157 = vrot.slane %v5126, 7
  %v5158 = vrot.slane %v5132, 7
  %v5159 = vsel %vm5147, %v5157, %v5158
  %v5160 = vrot.slane %v5127, 7
  %v5161 = vrot.slane %v5133, 7
  %v5162 = vsel %vm5147, %v5160, %v5161
  %v5163 = vrot.slane %v5128, 7
  %v5164 = vrot.slane %v5134, 7
  %v5165 = vsel %vm5147, %v5163, %v5164
  %vm5166 = vcmask 1042432
  %v5167 = vrot.slane %v5123, 5
  %v5168 = vrot.slane %v5129, 5
  %v5169 = vsel %vm5166, %v5167, %v5168
  %v5170 = vrot.slane %v5124, 5
  %v5171 = vrot.slane %v5130, 5
  %v5172 = vsel %vm5166, %v5170, %v5171
  %v5173 = vrot.slane %v5125, 5
  %v5174 = vrot.slane %v5131, 5
  %v5175 = vsel %vm5166, %v5173, %v5174
  %v5176 = vrot.slane %v5126, 5
  %v5177 = vrot.slane %v5132, 5
  %v5178 = vsel %vm5166, %v5176, %v5177
  %v5179 = vrot.slane %v5127, 5
  %v5180 = vrot.slane %v5133, 5
  %v5181 = vsel %vm5166, %v5179, %v5180
  %v5182 = vrot.slane %v5128, 5
  %v5183 = vrot.slane %v5134, 5
  %v5184 = vsel %vm5166, %v5182, %v5183
  %5185 = vrot.lane.b32.xlu0 %v5169, 80
  %v5186 = vpop.permute.xlu0 %5185
  %5187 = vrot.lane.b32.xlu0 %v5172, 80
  %v5188 = vpop.permute.xlu0 %5187
  %5189 = vrot.lane.b32.xlu0 %v5175, 80
  %v5190 = vpop.permute.xlu0 %5189
  %5191 = vrot.lane.b32.xlu0 %v5178, 80
  %v5192 = vpop.permute.xlu0 %5191
  %5193 = vrot.lane.b32.xlu0 %v5181, 80
  %v5194 = vpop.permute.xlu0 %5193
  %5195 = vrot.lane.b32.xlu0 %v5184, 80
  %v5196 = vpop.permute.xlu0 %5195
  %v5197 = vsel %vm1329, %v5186, %v5188
  %v5198 = vsel %vm1329, %v5188, %v5190
  %v5199 = vsel %vm1329, %v5190, %v5192
  %v5200 = vsel %vm1329, %v5192, %v5194
  %v5201 = vsel %vm1329, %v5194, %v5196
  %v5204 = vsel %vm1335, %v5150, %v5197
  %v5208 = vsel %vm1335, %v5153, %v5198
  %v5212 = vsel %vm1335, %v5156, %v5199
  %v5216 = vsel %vm1335, %v5159, %v5200
  %v5220 = vsel %vm1335, %v5162, %v5201
  %v5224 = vsel %vm1335, %v5165, %v5196
  %s5225 = scalar_lea.vmem %s3, 2520
  %v5226 = vld [vmem:[%s5225] sm:$0xf]
  %v5227 = vld [vmem:[%s5225 + $0x4] sm:$0xf]
  %v5228 = vld [vmem:[%s5225 + $0x8] sm:$0xf]
  %v5229 = vld [vmem:[%s5225 + $0xc] sm:$0xf]
  %v5230 = vld [vmem:[%s5225 + $0x10] sm:$0xf]
  %v5231 = vld [vmem:[%s5225 + $0x14] sm:$0xf]
  %v5232 = vld [vmem:[%s5225 + $0x18] sm:$0xf]
  %v5233 = vld [vmem:[%s5225 + $0x1c] sm:$0xf]
  %v5234 = vld [vmem:[%s5225 + $0x20] sm:$0xf]
  %v5235 = vld [vmem:[%s5225 + $0x24] sm:$0xf]
  %v5236 = vld [vmem:[%s5225 + $0x28] sm:$0xf]
  %v5237 = vld [vmem:[%s5225 + $0x2c] sm:$0xf]
  %v5238 = vld [vmem:[%s5225 + $0x30] sm:$0xf]
  %v5239 = vld [vmem:[%s5225 + $0x34] sm:$0xf]
  %v5240 = vld [vmem:[%s5225 + $0x38] sm:$0xf]
  %v5241 = vld [vmem:[%s5225 + $0x3c] sm:$0xf]
  %v5242 = vld [vmem:[%s5225 + $0x40] sm:$0xf]
  %v5243 = vld [vmem:[%s5225 + $0x44] sm:$0xf]
  %v5244 = vld [vmem:[%s5225 + $0x48] sm:$0xf]
  %v5245 = vld [vmem:[%s5225 + $0x4c] sm:$0xf]
  %v5246 = vld [vmem:[%s5225 + $0x50] sm:$0xf]
  %v5247 = vld [vmem:[%s5225 + $0x54] sm:$0xf]
  %v5248 = vld [vmem:[%s5225 + $0x58] sm:$0xf]
  %v5249 = vld [vmem:[%s5225 + $0x5c] sm:$0xf]
  %v5250 = vld [vmem:[%s5225 + $0x60] sm:$0xf]
  %v5251 = vld [vmem:[%s5225 + $0x64] sm:$0xf]
  %v5252 = vld [vmem:[%s5225 + $0x68] sm:$0xf]
  %v5253 = vld [vmem:[%s5225 + $0x6c] sm:$0xf]
  %v5254 = vld [vmem:[%s5225 + $0x70] sm:$0xf]
  %v5255 = vld [vmem:[%s5225 + $0x74] sm:$0xf]
  %v5256 = vld [vmem:[%s5225 + $0x78] sm:$0xf]
  %v5257 = vld [vmem:[%s5225 + $0x7c] sm:$0xf]
  %v5258 = vld [vmem:[%s5225 + $0x80] sm:$0xf]
  %v5259 = vld [vmem:[%s5225 + $0x84] sm:$0xf]
  %v5260 = vld [vmem:[%s5225 + $0x88] sm:$0xf]
  %v5261 = vld [vmem:[%s5225 + $0x8c] sm:$0xf]
  %v5262 = vld [vmem:[%s5225 + $0x90] sm:$0xf]
  %v5263 = vld [vmem:[%s5225 + $0x94] sm:$0xf]
  %v5264 = vld [vmem:[%s5225 + $0x98] sm:$0xf]
  %v5265 = vld [vmem:[%s5225 + $0x9c] sm:$0xf]
  %v5266 = vld [vmem:[%s5225 + $0xa0] sm:$0xf]
  %v5267 = vld [vmem:[%s5225 + $0xa4] sm:$0xf]
  %v5268 = vld [vmem:[%s5225 + $0xa8] sm:$0xf]
  %v5269 = vld [vmem:[%s5225 + $0xac] sm:$0xf]
  %v5270 = vld [vmem:[%s5225 + $0xb0] sm:$0xf]
  %v5271 = vld [vmem:[%s5225 + $0xb4] sm:$0xf]
  %v5272 = vld [vmem:[%s5225 + $0xb8] sm:$0xf]
  %v5273 = vld [vmem:[%s5225 + $0xbc] sm:$0xf]
  %v5274 = vld [vmem:[%s5225 + $0xc0] sm:$0xf]
  %v5275 = vld [vmem:[%s5225 + $0xc4] sm:$0xf]
  %v5276 = vld [vmem:[%s5225 + $0xc8] sm:$0xf]
  %v5277 = vld [vmem:[%s5225 + $0xcc] sm:$0xf]
  %v5278 = vld [vmem:[%s5225 + $0xd0] sm:$0xf]
  %v5279 = vld [vmem:[%s5225 + $0xd4] sm:$0xf]
  %v5280 = vld [vmem:[%s5225 + $0xd8] sm:$0xf]
  %v5281 = vld [vmem:[%s5225 + $0xdc] sm:$0xf]
  %v5282 = vld [vmem:[%s5225 + $0xe0] sm:$0xf]
  %v5283 = vld [vmem:[%s5225 + $0xe4] sm:$0xf]
  %v5284 = vld [vmem:[%s5225 + $0xe8] sm:$0xf]
  %v5285 = vld [vmem:[%s5225 + $0xec] sm:$0xf]
  %v5286 = vld [vmem:[%s5225 + $0xf0] sm:$0xf]
  %v5287 = vld [vmem:[%s5225 + $0xf4] sm:$0xf]
  %v5288 = vld [vmem:[%s5225 + $0xf8] sm:$0xf]
  %v5289 = vld [vmem:[%s5225 + $0xfc] sm:$0xf]
  %v5290 = vld [vmem:[%s5225 + $0x100] sm:$0xf]
  %v5291 = vld [vmem:[%s5225 + $0x104] sm:$0xf]
  %v5292 = vld [vmem:[%s5225 + $0x108] sm:$0xf]
  %v5293 = vld [vmem:[%s5225 + $0x10c] sm:$0xf]
  %v5294 = vld [vmem:[%s5225 + $0x110] sm:$0xf]
  %v5295 = vld [vmem:[%s5225 + $0x114] sm:$0xf]
  %v5296 = vld [vmem:[%s5225 + $0x118] sm:$0xf]
  %v5297 = vld [vmem:[%s5225 + $0x11c] sm:$0xf]
  %v5298 = vld [vmem:[%s5225 + $0x120] sm:$0xf]
  %v5299 = vld [vmem:[%s5225 + $0x124] sm:$0xf]
  %v5300 = vld [vmem:[%s5225 + $0x128] sm:$0xf]
  %v5301 = vld [vmem:[%s5225 + $0x12c] sm:$0xf]
  %v5302 = vld [vmem:[%s5225 + $0x130] sm:$0xf]
  %v5303 = vld [vmem:[%s5225 + $0x134] sm:$0xf]
  %v5304 = vld [vmem:[%s5225 + $0x138] sm:$0xf]
  %v5305 = vld [vmem:[%s5225 + $0x13c] sm:$0xf]
  %v5306 = vld [vmem:[%s5225 + $0x140] sm:$0xf]
  %v5307 = vld [vmem:[%s5225 + $0x144] sm:$0xf]
  %v5308 = vld [vmem:[%s5225 + $0x148] sm:$0xf]
  %v5309 = vld [vmem:[%s5225 + $0x14c] sm:$0xf]
  %v5310 = vld [vmem:[%s5225 + $0x150] sm:$0xf]
  %v5311 = vld [vmem:[%s5225 + $0x154] sm:$0xf]
  %v5312 = vld [vmem:[%s5225 + $0x158] sm:$0xf]
  %v5313 = vld [vmem:[%s5225 + $0x15c] sm:$0xf]
  %v5314 = vld [vmem:[%s5225 + $0x160] sm:$0xf]
  %v5315 = vld [vmem:[%s5225 + $0x164] sm:$0xf]
  %v5406 = vunpack.c.l.b16 %v5226
  %v5407 = vunpack.c.l.b16 %v5227
  %v5408 = vunpack.c.l.b16 %v5228
  %v5409 = vunpack.c.l.b16 %v5229
  %v5410 = vunpack.c.l.b16 %v5230
  %v5411 = vunpack.c.l.b16 %v5231
  %v5412 = vunpack.c.l.b16 %v5232
  %v5413 = vunpack.c.l.b16 %v5233
  %v5414 = vunpack.c.l.b16 %v5234
  %v5415 = vunpack.c.l.b16 %v5235
  %v5416 = vunpack.c.l.b16 %v5236
  %v5417 = vunpack.c.l.b16 %v5237
  %v5418 = vunpack.c.l.b16 %v5238
  %v5419 = vunpack.c.l.b16 %v5239
  %v5420 = vunpack.c.l.b16 %v5240
  %v5421 = vunpack.c.l.b16 %v5241
  %v5422 = vunpack.c.l.b16 %v5242
  %v5423 = vunpack.c.l.b16 %v5243
  %v5424 = vunpack.c.l.b16 %v5244
  %v5425 = vunpack.c.l.b16 %v5245
  %v5426 = vunpack.c.l.b16 %v5246
  %v5427 = vunpack.c.l.b16 %v5247
  %v5428 = vunpack.c.l.b16 %v5248
  %v5429 = vunpack.c.l.b16 %v5249
  %v5430 = vunpack.c.l.b16 %v5250
  %v5431 = vunpack.c.l.b16 %v5251
  %v5432 = vunpack.c.l.b16 %v5252
  %v5433 = vunpack.c.l.b16 %v5253
  %v5434 = vunpack.c.l.b16 %v5254
  %v5435 = vunpack.c.l.b16 %v5255
  %v5436 = vunpack.c.l.b16 %v5256
  %v5437 = vunpack.c.l.b16 %v5257
  %v5438 = vunpack.c.l.b16 %v5258
  %v5439 = vunpack.c.l.b16 %v5259
  %v5440 = vunpack.c.l.b16 %v5260
  %v5441 = vunpack.c.l.b16 %v5261
  %v5442 = vunpack.c.l.b16 %v5262
  %v5443 = vunpack.c.l.b16 %v5263
  %v5444 = vunpack.c.l.b16 %v5264
  %v5445 = vunpack.c.l.b16 %v5265
  %v5446 = vunpack.c.l.b16 %v5266
  %v5447 = vunpack.c.l.b16 %v5267
  %v5448 = vunpack.c.l.b16 %v5268
  %v5449 = vunpack.c.l.b16 %v5269
  %v5450 = vunpack.c.l.b16 %v5270
  %v5451 = vunpack.c.l.b16 %v5271
  %v5452 = vunpack.c.l.b16 %v5272
  %v5453 = vunpack.c.l.b16 %v5273
  %v5454 = vunpack.c.l.b16 %v5274
  %v5455 = vunpack.c.l.b16 %v5275
  %v5456 = vunpack.c.l.b16 %v5276
  %v5457 = vunpack.c.l.b16 %v5277
  %v5458 = vunpack.c.l.b16 %v5278
  %v5459 = vunpack.c.l.b16 %v5279
  %v5460 = vunpack.c.l.b16 %v5280
  %v5461 = vunpack.c.l.b16 %v5281
  %v5462 = vunpack.c.l.b16 %v5282
  %v5463 = vunpack.c.l.b16 %v5283
  %v5464 = vunpack.c.l.b16 %v5284
  %v5465 = vunpack.c.l.b16 %v5285
  %v5466 = vunpack.c.l.b16 %v5286
  %v5467 = vunpack.c.l.b16 %v5287
  %v5468 = vunpack.c.l.b16 %v5288
  %v5469 = vunpack.c.l.b16 %v5289
  %v5470 = vunpack.c.l.b16 %v5290
  %v5471 = vunpack.c.l.b16 %v5291
  %v5472 = vunpack.c.l.b16 %v5292
  %v5473 = vunpack.c.l.b16 %v5293
  %v5474 = vunpack.c.l.b16 %v5294
  %v5475 = vunpack.c.l.b16 %v5295
  %v5476 = vunpack.c.l.b16 %v5296
  %v5477 = vunpack.c.l.b16 %v5297
  %v5478 = vunpack.c.l.b16 %v5298
  %v5479 = vunpack.c.l.b16 %v5299
  %v5480 = vunpack.c.l.b16 %v5300
  %v5481 = vunpack.c.l.b16 %v5301
  %v5482 = vunpack.c.l.b16 %v5302
  %v5483 = vunpack.c.l.b16 %v5303
  %v5484 = vunpack.c.l.b16 %v5304
  %v5485 = vunpack.c.l.b16 %v5305
  %v5486 = vunpack.c.l.b16 %v5306
  %v5487 = vunpack.c.l.b16 %v5307
  %v5488 = vunpack.c.l.b16 %v5308
  %v5489 = vunpack.c.l.b16 %v5309
  %v5490 = vunpack.c.l.b16 %v5310
  %v5491 = vunpack.c.l.b16 %v5311
  %v5492 = vunpack.c.l.b16 %v5312
  %v5493 = vunpack.c.l.b16 %v5313
  %v5494 = vunpack.c.l.b16 %v5314
  %v5495 = vunpack.c.l.b16 %v5315
  %v5496 = vpack.c.b16 %v5407, %v5406
  %v5497 = vpack.c.b16 %v5409, %v5408
  %v5498 = vpack.c.b16 %v5411, %v5410
  %v5499 = vpack.c.b16 %v5413, %v5412
  %v5500 = vpack.c.b16 %v5415, %v5414
  %v5501 = vpack.c.b16 %v5417, %v5416
  %v5502 = vpack.c.b16 %v5419, %v5418
  %v5503 = vpack.c.b16 %v5421, %v5420
  %v5504 = vpack.c.b16 %v5423, %v5422
  %v5505 = vpack.c.b16 %v5425, %v5424
  %v5506 = vpack.c.b16 %v5427, %v5426
  %v5507 = vpack.c.b16 %v5429, %v5428
  %v5508 = vpack.c.b16 %v5431, %v5430
  %v5509 = vpack.c.b16 %v5433, %v5432
  %v5510 = vpack.c.b16 %v5435, %v5434
  %v5511 = vpack.c.b16 %v5437, %v5436
  %v5512 = vpack.c.b16 %v5439, %v5438
  %v5513 = vpack.c.b16 %v5441, %v5440
  %v5514 = vpack.c.b16 %v5443, %v5442
  %v5515 = vpack.c.b16 %v5445, %v5444
  %v5516 = vpack.c.b16 %v5447, %v5446
  %v5517 = vpack.c.b16 %v5449, %v5448
  %v5518 = vpack.c.b16 %v5451, %v5450
  %v5519 = vpack.c.b16 %v5453, %v5452
  %v5520 = vpack.c.b16 %v5455, %v5454
  %v5521 = vpack.c.b16 %v5457, %v5456
  %v5522 = vpack.c.b16 %v5459, %v5458
  %v5523 = vpack.c.b16 %v5461, %v5460
  %v5524 = vpack.c.b16 %v5463, %v5462
  %v5525 = vpack.c.b16 %v5465, %v5464
  %v5526 = vpack.c.b16 %v5467, %v5466
  %v5527 = vpack.c.b16 %v5469, %v5468
  %v5528 = vpack.c.b16 %v5471, %v5470
  %v5529 = vpack.c.b16 %v5473, %v5472
  %v5530 = vpack.c.b16 %v5475, %v5474
  %v5531 = vpack.c.b16 %v5477, %v5476
  %v5532 = vpack.c.b16 %v5479, %v5478
  %v5533 = vpack.c.b16 %v5481, %v5480
  %v5534 = vpack.c.b16 %v5483, %v5482
  %v5535 = vpack.c.b16 %v5485, %v5484
  %v5536 = vpack.c.b16 %v5487, %v5486
  %v5537 = vpack.c.b16 %v5489, %v5488
  %v5538 = vpack.c.b16 %v5491, %v5490
  %v5539 = vpack.c.b16 %v5493, %v5492
  %v5540 = vpack.c.b16 %v5495, %v5494
  %v5586 = vsel %vm1874, %v5224, 0
  %5588 = vmatprep.subr.bf16.mxu0 0
  %5589 = vmatpush1.bf16.msra.mxu0 %v5496
  %5590 = vmatprep.subr.bf16.mxu0 0
  %5591 = vmatpush1.bf16.msra.mxu0 %v5497
  %5592 = vmatprep.subr.bf16.mxu0 0
  %5593 = vmatpush1.bf16.msra.mxu0 %v5498
  %5594 = vmatprep.subr.bf16.mxu0 0
  %5595 = vmatpush1.bf16.msra.mxu0 %v5499
  %5596 = vmatprep.subr.bf16.mxu0 0
  %5597 = vmatpush1.bf16.msra.mxu0 %v5500
  %5598 = vmatprep.subr.bf16.mxu0 0
  %5599 = vmatpush1.bf16.msra.mxu0 %v5501
  %5600 = vmatprep.subr.bf16.mxu0 0
  %5601 = vmatpush1.bf16.msra.mxu0 %v5502
  %5602 = vmatprep.subr.bf16.mxu0 0
  %5603 = vmatpush1.bf16.msra.mxu0 %v5503
  %5604 = vmatprep.subr.bf16.mxu0 0
  %5605 = vmatpush1.bf16.msra.mxu0 %v5504
  %5606 = vmatprep.subr.bf16.mxu0 0
  %5607 = vmatpush1.bf16.msra.mxu0 %v5505
  %5608 = vmatprep.subr.bf16.mxu0 0
  %5609 = vmatpush1.bf16.msra.mxu0 %v5506
  %5610 = vmatprep.subr.bf16.mxu0 0
  %5611 = vmatpush1.bf16.msra.mxu0 %v5507
  %5612 = vmatprep.subr.bf16.mxu0 0
  %5613 = vmatpush1.bf16.msra.mxu0 %v5508
  %5614 = vmatprep.subr.bf16.mxu0 0
  %5615 = vmatpush1.bf16.msra.mxu0 %v5509
  %5616 = vmatprep.subr.bf16.mxu0 0
  %5617 = vmatpush1.bf16.msra.mxu0 %v5510
  %5618 = vmatprep.subr.bf16.mxu0 0
  %5619 = vmatpush1.bf16.msra.mxu0 %v5511
  %5620 = vmatprep.mubr.bf16.mxu0 %v5208
  %5621 = vmatmul.mubr.bf16.gmra.mrb[0].mxu0 %v5204
  %v5622 = vpop.f32.mrb[0].mxu0
  %v5623 = vadd.f32 0.0, %v5622
  %v5624 = vpop.f32.mrb[0].mxu0
  %v5625 = vpop.f32.mrb[0].mxu0
  %v5626 = vpop.f32.mrb[0].mxu0
  %5627 = vdwg.mxu0
  %5628 = vmatprep.subr.bf16.mxu0 0
  %5629 = vmatpush1.bf16.msra.mxu0 %v5512
  %5630 = vmatprep.subr.bf16.mxu0 0
  %5631 = vmatpush1.bf16.msra.mxu0 %v5513
  %5632 = vmatprep.subr.bf16.mxu0 0
  %5633 = vmatpush1.bf16.msra.mxu0 %v5514
  %5634 = vmatprep.subr.bf16.mxu0 0
  %5635 = vmatpush1.bf16.msra.mxu0 %v5515
  %5636 = vmatprep.subr.bf16.mxu0 0
  %5637 = vmatpush1.bf16.msra.mxu0 %v5516
  %5638 = vmatprep.subr.bf16.mxu0 0
  %5639 = vmatpush1.bf16.msra.mxu0 %v5517
  %5640 = vmatprep.subr.bf16.mxu0 0
  %5641 = vmatpush1.bf16.msra.mxu0 %v5518
  %5642 = vmatprep.subr.bf16.mxu0 0
  %5643 = vmatpush1.bf16.msra.mxu0 %v5519
  %5644 = vmatprep.subr.bf16.mxu0 0
  %5645 = vmatpush1.bf16.msra.mxu0 %v5520
  %5646 = vmatprep.subr.bf16.mxu0 0
  %5647 = vmatpush1.bf16.msra.mxu0 %v5521
  %5648 = vmatprep.subr.bf16.mxu0 0
  %5649 = vmatpush1.bf16.msra.mxu0 %v5522
  %5650 = vmatprep.subr.bf16.mxu0 0
  %5651 = vmatpush1.bf16.msra.mxu0 %v5523
  %5652 = vmatprep.subr.bf16.mxu0 0
  %5653 = vmatpush1.bf16.msra.mxu0 %v5524
  %5654 = vmatprep.subr.bf16.mxu0 0
  %5655 = vmatpush1.bf16.msra.mxu0 %v5525
  %5656 = vmatprep.subr.bf16.mxu0 0
  %5657 = vmatpush1.bf16.msra.mxu0 %v5526
  %5658 = vmatprep.subr.bf16.mxu0 0
  %5659 = vmatpush1.bf16.msra.mxu0 %v5527
  %5660 = vmatprep.mubr.bf16.mxu0 %v5216
  %5661 = vmatmul.mubr.bf16.gmra.mrb[0].mxu0 %v5212
  %v5662 = vpop.f32.mrb[0].mxu0
  %v5663 = vadd.f32 %v5623, %v5662
  %v5664 = vpop.f32.mrb[0].mxu0
  %v5665 = vpop.f32.mrb[0].mxu0
  %v5666 = vpop.f32.mrb[0].mxu0
  %5667 = vdwg.mxu0
  %5668 = vmatprep.subr.bf16.mxu0 0
  %5669 = vmatpush1.bf16.msra.mxu0 %v5528
  %5670 = vmatprep.subr.bf16.mxu0 0
  %5671 = vmatpush1.bf16.msra.mxu0 %v5529
  %5672 = vmatprep.subr.bf16.mxu0 0
  %5673 = vmatpush1.bf16.msra.mxu0 %v5530
  %5674 = vmatprep.subr.bf16.mxu0 0
  %5675 = vmatpush1.bf16.msra.mxu0 %v5531
  %5676 = vmatprep.subr.bf16.mxu0 0
  %5677 = vmatpush1.bf16.msra.mxu0 %v5532
  %5678 = vmatprep.subr.bf16.mxu0 0
  %5679 = vmatpush1.bf16.msra.mxu0 %v5533
  %5680 = vmatprep.subr.bf16.mxu0 0
  %5681 = vmatpush1.bf16.msra.mxu0 %v5534
  %5682 = vmatprep.subr.bf16.mxu0 0
  %5683 = vmatpush1.bf16.msra.mxu0 %v5535
  %5684 = vmatprep.subr.bf16.mxu0 0
  %5685 = vmatpush1.bf16.msra.mxu0 %v5536
  %5686 = vmatprep.subr.bf16.mxu0 0
  %5687 = vmatpush1.bf16.msra.mxu0 %v5537
  %5688 = vmatprep.subr.bf16.mxu0 0
  %5689 = vmatpush1.bf16.msra.mxu0 %v5538
  %5690 = vmatprep.subr.bf16.mxu0 0
  %5691 = vmatpush1.bf16.msra.mxu0 %v5539
  %5692 = vmatprep.subr.bf16.mxu0 0
  %5693 = vmatpush1.bf16.msra.mxu0 %v5540
  %5694 = vmatprep.subr.bf16.mxu0 0
  %5695 = vmatpush1.bf16.msra.mxu0 0
  %5696 = vmatprep.subr.bf16.mxu0 0
  %5697 = vmatpush1.bf16.msra.mxu0 0
  %5698 = vmatprep.subr.bf16.mxu0 0
  %5699 = vmatpush1.bf16.msra.mxu0 0
  %5700 = vmatprep.mubr.bf16.mxu0 %v5586
  %5701 = vmatmul.mubr.bf16.gmra.mrb[0].mxu0 %v5220
  %v5702 = vpop.f32.mrb[0].mxu0
  %v5703 = vadd.f32 %v5663, %v5702
  %v5704 = vpop.f32.mrb[0].mxu0
  %v5705 = vpop.f32.mrb[0].mxu0
  %v5706 = vpop.f32.mrb[0].mxu0
  %5707 = vdwg.mxu0
  %v5708 = vadd.f32 %v5122, %v5703
  %v5709 = vld [vmem:[#allocation2 + $0x30] sm:$0x3]
  %v5710 = vld [vmem:[#allocation2 + $0x38] sm:$0x3]
  %v5711 = vld [vmem:[#allocation2 + $0x40] sm:$0x3]
  %v5712 = vld [vmem:[#allocation2 + $0x48] sm:$0x3]
  %v5713 = vld [vmem:[#allocation2 + $0x50] sm:$0x3]
  %v5714 = vld [vmem:[#allocation2 + $0x58] sm:$0x3]
  %v5721 = vrot.slane %v5709, 6
  %v5722 = vrot.slane %v5710, 6
  %v5723 = vrot.slane %v5711, 6
  %v5724 = vrot.slane %v5712, 6
  %v5725 = vrot.slane %v5713, 6
  %v5726 = vrot.slane %v5714, 6
  %5727 = vrot.lane.b32.xlu0 %v5721, 80
  %v5728 = vpop.permute.xlu0 %5727
  %5729 = vrot.lane.b32.xlu0 %v5722, 80
  %v5730 = vpop.permute.xlu0 %5729
  %5731 = vrot.lane.b32.xlu0 %v5723, 80
  %v5732 = vpop.permute.xlu0 %5731
  %5733 = vrot.lane.b32.xlu0 %v5724, 80
  %v5734 = vpop.permute.xlu0 %5733
  %5735 = vrot.lane.b32.xlu0 %v5725, 80
  %v5736 = vpop.permute.xlu0 %5735
  %5737 = vrot.lane.b32.xlu0 %v5726, 80
  %v5738 = vpop.permute.xlu0 %5737
  %v5739 = vsel %vm1329, %v5728, %v5730
  %v5740 = vsel %vm1329, %v5730, %v5732
  %v5741 = vsel %vm1329, %v5732, %v5734
  %v5742 = vsel %vm1329, %v5734, %v5736
  %v5743 = vsel %vm1329, %v5736, %v5738
  %v5746 = vsel %vm1335, %v5709, %v5739
  %v5750 = vsel %vm1335, %v5710, %v5740
  %v5754 = vsel %vm1335, %v5711, %v5741
  %v5758 = vsel %vm1335, %v5712, %v5742
  %v5762 = vsel %vm1335, %v5713, %v5743
  %v5766 = vsel %vm1335, %v5714, %v5738
  %s5767 = scalar_lea.vmem %s3, 2880
  %v5768 = vld [vmem:[%s5767] sm:$0xf]
  %v5769 = vld [vmem:[%s5767 + $0x4] sm:$0xf]
  %v5770 = vld [vmem:[%s5767 + $0x8] sm:$0xf]
  %v5771 = vld [vmem:[%s5767 + $0xc] sm:$0xf]
  %v5772 = vld [vmem:[%s5767 + $0x10] sm:$0xf]
  %v5773 = vld [vmem:[%s5767 + $0x14] sm:$0xf]
  %v5774 = vld [vmem:[%s5767 + $0x18] sm:$0xf]
  %v5775 = vld [vmem:[%s5767 + $0x1c] sm:$0xf]
  %v5776 = vld [vmem:[%s5767 + $0x20] sm:$0xf]
  %v5777 = vld [vmem:[%s5767 + $0x24] sm:$0xf]
  %v5778 = vld [vmem:[%s5767 + $0x28] sm:$0xf]
  %v5779 = vld [vmem:[%s5767 + $0x2c] sm:$0xf]
  %v5780 = vld [vmem:[%s5767 + $0x30] sm:$0xf]
  %v5781 = vld [vmem:[%s5767 + $0x34] sm:$0xf]
  %v5782 = vld [vmem:[%s5767 + $0x38] sm:$0xf]
  %v5783 = vld [vmem:[%s5767 + $0x3c] sm:$0xf]
  %v5784 = vld [vmem:[%s5767 + $0x40] sm:$0xf]
  %v5785 = vld [vmem:[%s5767 + $0x44] sm:$0xf]
  %v5786 = vld [vmem:[%s5767 + $0x48] sm:$0xf]
  %v5787 = vld [vmem:[%s5767 + $0x4c] sm:$0xf]
  %v5788 = vld [vmem:[%s5767 + $0x50] sm:$0xf]
  %v5789 = vld [vmem:[%s5767 + $0x54] sm:$0xf]
  %v5790 = vld [vmem:[%s5767 + $0x58] sm:$0xf]
  %v5791 = vld [vmem:[%s5767 + $0x5c] sm:$0xf]
  %v5792 = vld [vmem:[%s5767 + $0x60] sm:$0xf]
  %v5793 = vld [vmem:[%s5767 + $0x64] sm:$0xf]
  %v5794 = vld [vmem:[%s5767 + $0x68] sm:$0xf]
  %v5795 = vld [vmem:[%s5767 + $0x6c] sm:$0xf]
  %v5796 = vld [vmem:[%s5767 + $0x70] sm:$0xf]
  %v5797 = vld [vmem:[%s5767 + $0x74] sm:$0xf]
  %v5798 = vld [vmem:[%s5767 + $0x78] sm:$0xf]
  %v5799 = vld [vmem:[%s5767 + $0x7c] sm:$0xf]
  %v5800 = vld [vmem:[%s5767 + $0x80] sm:$0xf]
  %v5801 = vld [vmem:[%s5767 + $0x84] sm:$0xf]
  %v5802 = vld [vmem:[%s5767 + $0x88] sm:$0xf]
  %v5803 = vld [vmem:[%s5767 + $0x8c] sm:$0xf]
  %v5804 = vld [vmem:[%s5767 + $0x90] sm:$0xf]
  %v5805 = vld [vmem:[%s5767 + $0x94] sm:$0xf]
  %v5806 = vld [vmem:[%s5767 + $0x98] sm:$0xf]
  %v5807 = vld [vmem:[%s5767 + $0x9c] sm:$0xf]
  %v5808 = vld [vmem:[%s5767 + $0xa0] sm:$0xf]
  %v5809 = vld [vmem:[%s5767 + $0xa4] sm:$0xf]
  %v5810 = vld [vmem:[%s5767 + $0xa8] sm:$0xf]
  %v5811 = vld [vmem:[%s5767 + $0xac] sm:$0xf]
  %v5812 = vld [vmem:[%s5767 + $0xb0] sm:$0xf]
  %v5813 = vld [vmem:[%s5767 + $0xb4] sm:$0xf]
  %v5814 = vld [vmem:[%s5767 + $0xb8] sm:$0xf]
  %v5815 = vld [vmem:[%s5767 + $0xbc] sm:$0xf]
  %v5816 = vld [vmem:[%s5767 + $0xc0] sm:$0xf]
  %v5817 = vld [vmem:[%s5767 + $0xc4] sm:$0xf]
  %v5818 = vld [vmem:[%s5767 + $0xc8] sm:$0xf]
  %v5819 = vld [vmem:[%s5767 + $0xcc] sm:$0xf]
  %v5820 = vld [vmem:[%s5767 + $0xd0] sm:$0xf]
  %v5821 = vld [vmem:[%s5767 + $0xd4] sm:$0xf]
  %v5822 = vld [vmem:[%s5767 + $0xd8] sm:$0xf]
  %v5823 = vld [vmem:[%s5767 + $0xdc] sm:$0xf]
  %v5824 = vld [vmem:[%s5767 + $0xe0] sm:$0xf]
  %v5825 = vld [vmem:[%s5767 + $0xe4] sm:$0xf]
  %v5826 = vld [vmem:[%s5767 + $0xe8] sm:$0xf]
  %v5827 = vld [vmem:[%s5767 + $0xec] sm:$0xf]
  %v5828 = vld [vmem:[%s5767 + $0xf0] sm:$0xf]
  %v5829 = vld [vmem:[%s5767 + $0xf4] sm:$0xf]
  %v5830 = vld [vmem:[%s5767 + $0xf8] sm:$0xf]
  %v5831 = vld [vmem:[%s5767 + $0xfc] sm:$0xf]
  %v5832 = vld [vmem:[%s5767 + $0x100] sm:$0xf]
  %v5833 = vld [vmem:[%s5767 + $0x104] sm:$0xf]
  %v5834 = vld [vmem:[%s5767 + $0x108] sm:$0xf]
  %v5835 = vld [vmem:[%s5767 + $0x10c] sm:$0xf]
  %v5836 = vld [vmem:[%s5767 + $0x110] sm:$0xf]
  %v5837 = vld [vmem:[%s5767 + $0x114] sm:$0xf]
  %v5838 = vld [vmem:[%s5767 + $0x118] sm:$0xf]
  %v5839 = vld [vmem:[%s5767 + $0x11c] sm:$0xf]
  %v5840 = vld [vmem:[%s5767 + $0x120] sm:$0xf]
  %v5841 = vld [vmem:[%s5767 + $0x124] sm:$0xf]
  %v5842 = vld [vmem:[%s5767 + $0x128] sm:$0xf]
  %v5843 = vld [vmem:[%s5767 + $0x12c] sm:$0xf]
  %v5844 = vld [vmem:[%s5767 + $0x130] sm:$0xf]
  %v5845 = vld [vmem:[%s5767 + $0x134] sm:$0xf]
  %v5846 = vld [vmem:[%s5767 + $0x138] sm:$0xf]
  %v5847 = vld [vmem:[%s5767 + $0x13c] sm:$0xf]
  %v5848 = vld [vmem:[%s5767 + $0x140] sm:$0xf]
  %v5849 = vld [vmem:[%s5767 + $0x144] sm:$0xf]
  %v5850 = vld [vmem:[%s5767 + $0x148] sm:$0xf]
  %v5851 = vld [vmem:[%s5767 + $0x14c] sm:$0xf]
  %v5852 = vld [vmem:[%s5767 + $0x150] sm:$0xf]
  %v5853 = vld [vmem:[%s5767 + $0x154] sm:$0xf]
  %v5854 = vld [vmem:[%s5767 + $0x158] sm:$0xf]
  %v5855 = vld [vmem:[%s5767 + $0x15c] sm:$0xf]
  %v5856 = vld [vmem:[%s5767 + $0x160] sm:$0xf]
  %v5857 = vld [vmem:[%s5767 + $0x164] sm:$0xf]
  %v5948 = vunpack.c.l.b16 %v5768
  %v5949 = vunpack.c.l.b16 %v5769
  %v5950 = vunpack.c.l.b16 %v5770
  %v5951 = vunpack.c.l.b16 %v5771
  %v5952 = vunpack.c.l.b16 %v5772
  %v5953 = vunpack.c.l.b16 %v5773
  %v5954 = vunpack.c.l.b16 %v5774
  %v5955 = vunpack.c.l.b16 %v5775
  %v5956 = vunpack.c.l.b16 %v5776
  %v5957 = vunpack.c.l.b16 %v5777
  %v5958 = vunpack.c.l.b16 %v5778
  %v5959 = vunpack.c.l.b16 %v5779
  %v5960 = vunpack.c.l.b16 %v5780
  %v5961 = vunpack.c.l.b16 %v5781
  %v5962 = vunpack.c.l.b16 %v5782
  %v5963 = vunpack.c.l.b16 %v5783
  %v5964 = vunpack.c.l.b16 %v5784
  %v5965 = vunpack.c.l.b16 %v5785
  %v5966 = vunpack.c.l.b16 %v5786
  %v5967 = vunpack.c.l.b16 %v5787
  %v5968 = vunpack.c.l.b16 %v5788
  %v5969 = vunpack.c.l.b16 %v5789
  %v5970 = vunpack.c.l.b16 %v5790
  %v5971 = vunpack.c.l.b16 %v5791
  %v5972 = vunpack.c.l.b16 %v5792
  %v5973 = vunpack.c.l.b16 %v5793
  %v5974 = vunpack.c.l.b16 %v5794
  %v5975 = vunpack.c.l.b16 %v5795
  %v5976 = vunpack.c.l.b16 %v5796
  %v5977 = vunpack.c.l.b16 %v5797
  %v5978 = vunpack.c.l.b16 %v5798
  %v5979 = vunpack.c.l.b16 %v5799
  %v5980 = vunpack.c.l.b16 %v5800
  %v5981 = vunpack.c.l.b16 %v5801
  %v5982 = vunpack.c.l.b16 %v5802
  %v5983 = vunpack.c.l.b16 %v5803
  %v5984 = vunpack.c.l.b16 %v5804
  %v5985 = vunpack.c.l.b16 %v5805
  %v5986 = vunpack.c.l.b16 %v5806
  %v5987 = vunpack.c.l.b16 %v5807
  %v5988 = vunpack.c.l.b16 %v5808
  %v5989 = vunpack.c.l.b16 %v5809
  %v5990 = vunpack.c.l.b16 %v5810
  %v5991 = vunpack.c.l.b16 %v5811
  %v5992 = vunpack.c.l.b16 %v5812
  %v5993 = vunpack.c.l.b16 %v5813
  %v5994 = vunpack.c.l.b16 %v5814
  %v5995 = vunpack.c.l.b16 %v5815
  %v5996 = vunpack.c.l.b16 %v5816
  %v5997 = vunpack.c.l.b16 %v5817
  %v5998 = vunpack.c.l.b16 %v5818
  %v5999 = vunpack.c.l.b16 %v5819
  %v6000 = vunpack.c.l.b16 %v5820
  %v6001 = vunpack.c.l.b16 %v5821
  %v6002 = vunpack.c.l.b16 %v5822
  %v6003 = vunpack.c.l.b16 %v5823
  %v6004 = vunpack.c.l.b16 %v5824
  %v6005 = vunpack.c.l.b16 %v5825
  %v6006 = vunpack.c.l.b16 %v5826
  %v6007 = vunpack.c.l.b16 %v5827
  %v6008 = vunpack.c.l.b16 %v5828
  %v6009 = vunpack.c.l.b16 %v5829
  %v6010 = vunpack.c.l.b16 %v5830
  %v6011 = vunpack.c.l.b16 %v5831
  %v6012 = vunpack.c.l.b16 %v5832
  %v6013 = vunpack.c.l.b16 %v5833
  %v6014 = vunpack.c.l.b16 %v5834
  %v6015 = vunpack.c.l.b16 %v5835
  %v6016 = vunpack.c.l.b16 %v5836
  %v6017 = vunpack.c.l.b16 %v5837
  %v6018 = vunpack.c.l.b16 %v5838
  %v6019 = vunpack.c.l.b16 %v5839
  %v6020 = vunpack.c.l.b16 %v5840
  %v6021 = vunpack.c.l.b16 %v5841
  %v6022 = vunpack.c.l.b16 %v5842
  %v6023 = vunpack.c.l.b16 %v5843
  %v6024 = vunpack.c.l.b16 %v5844
  %v6025 = vunpack.c.l.b16 %v5845
  %v6026 = vunpack.c.l.b16 %v5846
  %v6027 = vunpack.c.l.b16 %v5847
  %v6028 = vunpack.c.l.b16 %v5848
  %v6029 = vunpack.c.l.b16 %v5849
  %v6030 = vunpack.c.l.b16 %v5850
  %v6031 = vunpack.c.l.b16 %v5851
  %v6032 = vunpack.c.l.b16 %v5852
  %v6033 = vunpack.c.l.b16 %v5853
  %v6034 = vunpack.c.l.b16 %v5854
  %v6035 = vunpack.c.l.b16 %v5855
  %v6036 = vunpack.c.l.b16 %v5856
  %v6037 = vunpack.c.l.b16 %v5857
  %v6038 = vpack.c.b16 %v5949, %v5948
  %v6039 = vpack.c.b16 %v5951, %v5950
  %v6040 = vpack.c.b16 %v5953, %v5952
  %v6041 = vpack.c.b16 %v5955, %v5954
  %v6042 = vpack.c.b16 %v5957, %v5956
  %v6043 = vpack.c.b16 %v5959, %v5958
  %v6044 = vpack.c.b16 %v5961, %v5960
  %v6045 = vpack.c.b16 %v5963, %v5962
  %v6046 = vpack.c.b16 %v5965, %v5964
  %v6047 = vpack.c.b16 %v5967, %v5966
  %v6048 = vpack.c.b16 %v5969, %v5968
  %v6049 = vpack.c.b16 %v5971, %v5970
  %v6050 = vpack.c.b16 %v5973, %v5972
  %v6051 = vpack.c.b16 %v5975, %v5974
  %v6052 = vpack.c.b16 %v5977, %v5976
  %v6053 = vpack.c.b16 %v5979, %v5978
  %v6054 = vpack.c.b16 %v5981, %v5980
  %v6055 = vpack.c.b16 %v5983, %v5982
  %v6056 = vpack.c.b16 %v5985, %v5984
  %v6057 = vpack.c.b16 %v5987, %v5986
  %v6058 = vpack.c.b16 %v5989, %v5988
  %v6059 = vpack.c.b16 %v5991, %v5990
  %v6060 = vpack.c.b16 %v5993, %v5992
  %v6061 = vpack.c.b16 %v5995, %v5994
  %v6062 = vpack.c.b16 %v5997, %v5996
  %v6063 = vpack.c.b16 %v5999, %v5998
  %v6064 = vpack.c.b16 %v6001, %v6000
  %v6065 = vpack.c.b16 %v6003, %v6002
  %v6066 = vpack.c.b16 %v6005, %v6004
  %v6067 = vpack.c.b16 %v6007, %v6006
  %v6068 = vpack.c.b16 %v6009, %v6008
  %v6069 = vpack.c.b16 %v6011, %v6010
  %v6070 = vpack.c.b16 %v6013, %v6012
  %v6071 = vpack.c.b16 %v6015, %v6014
  %v6072 = vpack.c.b16 %v6017, %v6016
  %v6073 = vpack.c.b16 %v6019, %v6018
  %v6074 = vpack.c.b16 %v6021, %v6020
  %v6075 = vpack.c.b16 %v6023, %v6022
  %v6076 = vpack.c.b16 %v6025, %v6024
  %v6077 = vpack.c.b16 %v6027, %v6026
  %v6078 = vpack.c.b16 %v6029, %v6028
  %v6079 = vpack.c.b16 %v6031, %v6030
  %v6080 = vpack.c.b16 %v6033, %v6032
  %v6081 = vpack.c.b16 %v6035, %v6034
  %v6082 = vpack.c.b16 %v6037, %v6036
  %v6128 = vsel %vm1874, %v5766, 0
  %6130 = vmatprep.subr.bf16.mxu0 0
  %6131 = vmatpush1.bf16.msra.mxu0 %v6038
  %6132 = vmatprep.subr.bf16.mxu0 0
  %6133 = vmatpush1.bf16.msra.mxu0 %v6039
  %6134 = vmatprep.subr.bf16.mxu0 0
  %6135 = vmatpush1.bf16.msra.mxu0 %v6040
  %6136 = vmatprep.subr.bf16.mxu0 0
  %6137 = vmatpush1.bf16.msra.mxu0 %v6041
  %6138 = vmatprep.subr.bf16.mxu0 0
  %6139 = vmatpush1.bf16.msra.mxu0 %v6042
  %6140 = vmatprep.subr.bf16.mxu0 0
  %6141 = vmatpush1.bf16.msra.mxu0 %v6043
  %6142 = vmatprep.subr.bf16.mxu0 0
  %6143 = vmatpush1.bf16.msra.mxu0 %v6044
  %6144 = vmatprep.subr.bf16.mxu0 0
  %6145 = vmatpush1.bf16.msra.mxu0 %v6045
  %6146 = vmatprep.subr.bf16.mxu0 0
  %6147 = vmatpush1.bf16.msra.mxu0 %v6046
  %6148 = vmatprep.subr.bf16.mxu0 0
  %6149 = vmatpush1.bf16.msra.mxu0 %v6047
  %6150 = vmatprep.subr.bf16.mxu0 0
  %6151 = vmatpush1.bf16.msra.mxu0 %v6048
  %6152 = vmatprep.subr.bf16.mxu0 0
  %6153 = vmatpush1.bf16.msra.mxu0 %v6049
  %6154 = vmatprep.subr.bf16.mxu0 0
  %6155 = vmatpush1.bf16.msra.mxu0 %v6050
  %6156 = vmatprep.subr.bf16.mxu0 0
  %6157 = vmatpush1.bf16.msra.mxu0 %v6051
  %6158 = vmatprep.subr.bf16.mxu0 0
  %6159 = vmatpush1.bf16.msra.mxu0 %v6052
  %6160 = vmatprep.subr.bf16.mxu0 0
  %6161 = vmatpush1.bf16.msra.mxu0 %v6053
  %6162 = vmatprep.mubr.bf16.mxu0 %v5750
  %6163 = vmatmul.mubr.bf16.gmra.mrb[0].mxu0 %v5746
  %v6164 = vpop.f32.mrb[0].mxu0
  %v6165 = vadd.f32 0.0, %v6164
  %v6166 = vpop.f32.mrb[0].mxu0
  %v6167 = vpop.f32.mrb[0].mxu0
  %v6168 = vpop.f32.mrb[0].mxu0
  %6169 = vdwg.mxu0
  %6170 = vmatprep.subr.bf16.mxu0 0
  %6171 = vmatpush1.bf16.msra.mxu0 %v6054
  %6172 = vmatprep.subr.bf16.mxu0 0
  %6173 = vmatpush1.bf16.msra.mxu0 %v6055
  %6174 = vmatprep.subr.bf16.mxu0 0
  %6175 = vmatpush1.bf16.msra.mxu0 %v6056
  %6176 = vmatprep.subr.bf16.mxu0 0
  %6177 = vmatpush1.bf16.msra.mxu0 %v6057
  %6178 = vmatprep.subr.bf16.mxu0 0
  %6179 = vmatpush1.bf16.msra.mxu0 %v6058
  %6180 = vmatprep.subr.bf16.mxu0 0
  %6181 = vmatpush1.bf16.msra.mxu0 %v6059
  %6182 = vmatprep.subr.bf16.mxu0 0
  %6183 = vmatpush1.bf16.msra.mxu0 %v6060
  %6184 = vmatprep.subr.bf16.mxu0 0
  %6185 = vmatpush1.bf16.msra.mxu0 %v6061
  %6186 = vmatprep.subr.bf16.mxu0 0
  %6187 = vmatpush1.bf16.msra.mxu0 %v6062
  %6188 = vmatprep.subr.bf16.mxu0 0
  %6189 = vmatpush1.bf16.msra.mxu0 %v6063
  %6190 = vmatprep.subr.bf16.mxu0 0
  %6191 = vmatpush1.bf16.msra.mxu0 %v6064
  %6192 = vmatprep.subr.bf16.mxu0 0
  %6193 = vmatpush1.bf16.msra.mxu0 %v6065
  %6194 = vmatprep.subr.bf16.mxu0 0
  %6195 = vmatpush1.bf16.msra.mxu0 %v6066
  %6196 = vmatprep.subr.bf16.mxu0 0
  %6197 = vmatpush1.bf16.msra.mxu0 %v6067
  %6198 = vmatprep.subr.bf16.mxu0 0
  %6199 = vmatpush1.bf16.msra.mxu0 %v6068
  %6200 = vmatprep.subr.bf16.mxu0 0
  %6201 = vmatpush1.bf16.msra.mxu0 %v6069
  %6202 = vmatprep.mubr.bf16.mxu0 %v5758
  %6203 = vmatmul.mubr.bf16.gmra.mrb[0].mxu0 %v5754
  %v6204 = vpop.f32.mrb[0].mxu0
  %v6205 = vadd.f32 %v6165, %v6204
  %v6206 = vpop.f32.mrb[0].mxu0
  %v6207 = vpop.f32.mrb[0].mxu0
  %v6208 = vpop.f32.mrb[0].mxu0
  %6209 = vdwg.mxu0
  %6210 = vmatprep.subr.bf16.mxu0 0
  %6211 = vmatpush1.bf16.msra.mxu0 %v6070
  %6212 = vmatprep.subr.bf16.mxu0 0
  %6213 = vmatpush1.bf16.msra.mxu0 %v6071
  %6214 = vmatprep.subr.bf16.mxu0 0
  %6215 = vmatpush1.bf16.msra.mxu0 %v6072
  %6216 = vmatprep.subr.bf16.mxu0 0
  %6217 = vmatpush1.bf16.msra.mxu0 %v6073
  %6218 = vmatprep.subr.bf16.mxu0 0
  %6219 = vmatpush1.bf16.msra.mxu0 %v6074
  %6220 = vmatprep.subr.bf16.mxu0 0
  %6221 = vmatpush1.bf16.msra.mxu0 %v6075
  %6222 = vmatprep.subr.bf16.mxu0 0
  %6223 = vmatpush1.bf16.msra.mxu0 %v6076
  %6224 = vmatprep.subr.bf16.mxu0 0
  %6225 = vmatpush1.bf16.msra.mxu0 %v6077
  %6226 = vmatprep.subr.bf16.mxu0 0
  %6227 = vmatpush1.bf16.msra.mxu0 %v6078
  %6228 = vmatprep.subr.bf16.mxu0 0
  %6229 = vmatpush1.bf16.msra.mxu0 %v6079
  %6230 = vmatprep.subr.bf16.mxu0 0
  %6231 = vmatpush1.bf16.msra.mxu0 %v6080
  %6232 = vmatprep.subr.bf16.mxu0 0
  %6233 = vmatpush1.bf16.msra.mxu0 %v6081
  %6234 = vmatprep.subr.bf16.mxu0 0
  %6235 = vmatpush1.bf16.msra.mxu0 %v6082
  %6236 = vmatprep.subr.bf16.mxu0 0
  %6237 = vmatpush1.bf16.msra.mxu0 0
  %6238 = vmatprep.subr.bf16.mxu0 0
  %6239 = vmatpush1.bf16.msra.mxu0 0
  %6240 = vmatprep.subr.bf16.mxu0 0
  %6241 = vmatpush1.bf16.msra.mxu0 0
  %6242 = vmatprep.mubr.bf16.mxu0 %v6128
  %6243 = vmatmul.mubr.bf16.gmra.mrb[0].mxu0 %v5762
  %v6244 = vpop.f32.mrb[0].mxu0
  %v6245 = vadd.f32 %v6205, %v6244
  %v6246 = vpop.f32.mrb[0].mxu0
  %v6247 = vpop.f32.mrb[0].mxu0
  %v6248 = vpop.f32.mrb[0].mxu0
  %6249 = vdwg.mxu0
  %v6250 = vadd.f32 %v5708, %v6245
  %v6251 = vld [vmem:[#allocation2 + $0x30] sm:$0x6]
  %v6252 = vld [vmem:[#allocation2 + $0x38] sm:$0x6]
  %v6253 = vld [vmem:[#allocation2 + $0x40] sm:$0x6]
  %v6254 = vld [vmem:[#allocation2 + $0x48] sm:$0x6]
  %v6255 = vld [vmem:[#allocation2 + $0x50] sm:$0x6]
  %v6256 = vld [vmem:[#allocation2 + $0x58] sm:$0x6]
  %v6263 = vrot.slane %v6251, 1
  %v6264 = vrot.slane %v6252, 1
  %v6265 = vrot.slane %v6253, 1
  %v6266 = vrot.slane %v6254, 1
  %v6267 = vrot.slane %v6255, 1
  %v6268 = vrot.slane %v6256, 1
  %v6269 = vrot.slane %v6251, 7
  %v6270 = vrot.slane %v6252, 7
  %v6271 = vrot.slane %v6253, 7
  %v6272 = vrot.slane %v6254, 7
  %v6273 = vrot.slane %v6255, 7
  %v6274 = vrot.slane %v6256, 7
  %6275 = vrot.lane.b32.xlu0 %v6269, 80
  %v6276 = vpop.permute.xlu0 %6275
  %6277 = vrot.lane.b32.xlu0 %v6270, 80
  %v6278 = vpop.permute.xlu0 %6277
  %6279 = vrot.lane.b32.xlu0 %v6271, 80
  %v6280 = vpop.permute.xlu0 %6279
  %6281 = vrot.lane.b32.xlu0 %v6272, 80
  %v6282 = vpop.permute.xlu0 %6281
  %6283 = vrot.lane.b32.xlu0 %v6273, 80
  %v6284 = vpop.permute.xlu0 %6283
  %6285 = vrot.lane.b32.xlu0 %v6274, 80
  %v6286 = vpop.permute.xlu0 %6285
  %v6287 = vsel %vm1329, %v6276, %v6278
  %v6288 = vsel %vm1329, %v6278, %v6280
  %v6289 = vsel %vm1329, %v6280, %v6282
  %v6290 = vsel %vm1329, %v6282, %v6284
  %v6291 = vsel %vm1329, %v6284, %v6286
  %v6294 = vsel %vm1335, %v6263, %v6287
  %v6298 = vsel %vm1335, %v6264, %v6288
  %v6302 = vsel %vm1335, %v6265, %v6289
  %v6306 = vsel %vm1335, %v6266, %v6290
  %v6310 = vsel %vm1335, %v6267, %v6291
  %v6314 = vsel %vm1335, %v6268, %v6286
  %s6315 = scalar_lea.vmem %s3, 3240
  %v6316 = vld [vmem:[%s6315] sm:$0xf]
  %v6317 = vld [vmem:[%s6315 + $0x4] sm:$0xf]
  %v6318 = vld [vmem:[%s6315 + $0x8] sm:$0xf]
  %v6319 = vld [vmem:[%s6315 + $0xc] sm:$0xf]
  %v6320 = vld [vmem:[%s6315 + $0x10] sm:$0xf]
  %v6321 = vld [vmem:[%s6315 + $0x14] sm:$0xf]
  %v6322 = vld [vmem:[%s6315 + $0x18] sm:$0xf]
  %v6323 = vld [vmem:[%s6315 + $0x1c] sm:$0xf]
  %v6324 = vld [vmem:[%s6315 + $0x20] sm:$0xf]
  %v6325 = vld [vmem:[%s6315 + $0x24] sm:$0xf]
  %v6326 = vld [vmem:[%s6315 + $0x28] sm:$0xf]
  %v6327 = vld [vmem:[%s6315 + $0x2c] sm:$0xf]
  %v6328 = vld [vmem:[%s6315 + $0x30] sm:$0xf]
  %v6329 = vld [vmem:[%s6315 + $0x34] sm:$0xf]
  %v6330 = vld [vmem:[%s6315 + $0x38] sm:$0xf]
  %v6331 = vld [vmem:[%s6315 + $0x3c] sm:$0xf]
  %v6332 = vld [vmem:[%s6315 + $0x40] sm:$0xf]
  %v6333 = vld [vmem:[%s6315 + $0x44] sm:$0xf]
  %v6334 = vld [vmem:[%s6315 + $0x48] sm:$0xf]
  %v6335 = vld [vmem:[%s6315 + $0x4c] sm:$0xf]
  %v6336 = vld [vmem:[%s6315 + $0x50] sm:$0xf]
  %v6337 = vld [vmem:[%s6315 + $0x54] sm:$0xf]
  %v6338 = vld [vmem:[%s6315 + $0x58] sm:$0xf]
  %v6339 = vld [vmem:[%s6315 + $0x5c] sm:$0xf]
  %v6340 = vld [vmem:[%s6315 + $0x60] sm:$0xf]
  %v6341 = vld [vmem:[%s6315 + $0x64] sm:$0xf]
  %v6342 = vld [vmem:[%s6315 + $0x68] sm:$0xf]
  %v6343 = vld [vmem:[%s6315 + $0x6c] sm:$0xf]
  %v6344 = vld [vmem:[%s6315 + $0x70] sm:$0xf]
  %v6345 = vld [vmem:[%s6315 + $0x74] sm:$0xf]
  %v6346 = vld [vmem:[%s6315 + $0x78] sm:$0xf]
  %v6347 = vld [vmem:[%s6315 + $0x7c] sm:$0xf]
  %v6348 = vld [vmem:[%s6315 + $0x80] sm:$0xf]
  %v6349 = vld [vmem:[%s6315 + $0x84] sm:$0xf]
  %v6350 = vld [vmem:[%s6315 + $0x88] sm:$0xf]
  %v6351 = vld [vmem:[%s6315 + $0x8c] sm:$0xf]
  %v6352 = vld [vmem:[%s6315 + $0x90] sm:$0xf]
  %v6353 = vld [vmem:[%s6315 + $0x94] sm:$0xf]
  %v6354 = vld [vmem:[%s6315 + $0x98] sm:$0xf]
  %v6355 = vld [vmem:[%s6315 + $0x9c] sm:$0xf]
  %v6356 = vld [vmem:[%s6315 + $0xa0] sm:$0xf]
  %v6357 = vld [vmem:[%s6315 + $0xa4] sm:$0xf]
  %v6358 = vld [vmem:[%s6315 + $0xa8] sm:$0xf]
  %v6359 = vld [vmem:[%s6315 + $0xac] sm:$0xf]
  %v6360 = vld [vmem:[%s6315 + $0xb0] sm:$0xf]
  %v6361 = vld [vmem:[%s6315 + $0xb4] sm:$0xf]
  %v6362 = vld [vmem:[%s6315 + $0xb8] sm:$0xf]
  %v6363 = vld [vmem:[%s6315 + $0xbc] sm:$0xf]
  %v6364 = vld [vmem:[%s6315 + $0xc0] sm:$0xf]
  %v6365 = vld [vmem:[%s6315 + $0xc4] sm:$0xf]
  %v6366 = vld [vmem:[%s6315 + $0xc8] sm:$0xf]
  %v6367 = vld [vmem:[%s6315 + $0xcc] sm:$0xf]
  %v6368 = vld [vmem:[%s6315 + $0xd0] sm:$0xf]
  %v6369 = vld [vmem:[%s6315 + $0xd4] sm:$0xf]
  %v6370 = vld [vmem:[%s6315 + $0xd8] sm:$0xf]
  %v6371 = vld [vmem:[%s6315 + $0xdc] sm:$0xf]
  %v6372 = vld [vmem:[%s6315 + $0xe0] sm:$0xf]
  %v6373 = vld [vmem:[%s6315 + $0xe4] sm:$0xf]
  %v6374 = vld [vmem:[%s6315 + $0xe8] sm:$0xf]
  %v6375 = vld [vmem:[%s6315 + $0xec] sm:$0xf]
  %v6376 = vld [vmem:[%s6315 + $0xf0] sm:$0xf]
  %v6377 = vld [vmem:[%s6315 + $0xf4] sm:$0xf]
  %v6378 = vld [vmem:[%s6315 + $0xf8] sm:$0xf]
  %v6379 = vld [vmem:[%s6315 + $0xfc] sm:$0xf]
  %v6380 = vld [vmem:[%s6315 + $0x100] sm:$0xf]
  %v6381 = vld [vmem:[%s6315 + $0x104] sm:$0xf]
  %v6382 = vld [vmem:[%s6315 + $0x108] sm:$0xf]
  %v6383 = vld [vmem:[%s6315 + $0x10c] sm:$0xf]
  %v6384 = vld [vmem:[%s6315 + $0x110] sm:$0xf]
  %v6385 = vld [vmem:[%s6315 + $0x114] sm:$0xf]
  %v6386 = vld [vmem:[%s6315 + $0x118] sm:$0xf]
  %v6387 = vld [vmem:[%s6315 + $0x11c] sm:$0xf]
  %v6388 = vld [vmem:[%s6315 + $0x120] sm:$0xf]
  %v6389 = vld [vmem:[%s6315 + $0x124] sm:$0xf]
  %v6390 = vld [vmem:[%s6315 + $0x128] sm:$0xf]
  %v6391 = vld [vmem:[%s6315 + $0x12c] sm:$0xf]
  %v6392 = vld [vmem:[%s6315 + $0x130] sm:$0xf]
  %v6393 = vld [vmem:[%s6315 + $0x134] sm:$0xf]
  %v6394 = vld [vmem:[%s6315 + $0x138] sm:$0xf]
  %v6395 = vld [vmem:[%s6315 + $0x13c] sm:$0xf]
  %v6396 = vld [vmem:[%s6315 + $0x140] sm:$0xf]
  %v6397 = vld [vmem:[%s6315 + $0x144] sm:$0xf]
  %v6398 = vld [vmem:[%s6315 + $0x148] sm:$0xf]
  %v6399 = vld [vmem:[%s6315 + $0x14c] sm:$0xf]
  %v6400 = vld [vmem:[%s6315 + $0x150] sm:$0xf]
  %v6401 = vld [vmem:[%s6315 + $0x154] sm:$0xf]
  %v6402 = vld [vmem:[%s6315 + $0x158] sm:$0xf]
  %v6403 = vld [vmem:[%s6315 + $0x15c] sm:$0xf]
  %v6404 = vld [vmem:[%s6315 + $0x160] sm:$0xf]
  %v6405 = vld [vmem:[%s6315 + $0x164] sm:$0xf]
  %v6496 = vunpack.c.l.b16 %v6316
  %v6497 = vunpack.c.l.b16 %v6317
  %v6498 = vunpack.c.l.b16 %v6318
  %v6499 = vunpack.c.l.b16 %v6319
  %v6500 = vunpack.c.l.b16 %v6320
  %v6501 = vunpack.c.l.b16 %v6321
  %v6502 = vunpack.c.l.b16 %v6322
  %v6503 = vunpack.c.l.b16 %v6323
  %v6504 = vunpack.c.l.b16 %v6324
  %v6505 = vunpack.c.l.b16 %v6325
  %v6506 = vunpack.c.l.b16 %v6326
  %v6507 = vunpack.c.l.b16 %v6327
  %v6508 = vunpack.c.l.b16 %v6328
  %v6509 = vunpack.c.l.b16 %v6329
  %v6510 = vunpack.c.l.b16 %v6330
  %v6511 = vunpack.c.l.b16 %v6331
  %v6512 = vunpack.c.l.b16 %v6332
  %v6513 = vunpack.c.l.b16 %v6333
  %v6514 = vunpack.c.l.b16 %v6334
  %v6515 = vunpack.c.l.b16 %v6335
  %v6516 = vunpack.c.l.b16 %v6336
  %v6517 = vunpack.c.l.b16 %v6337
  %v6518 = vunpack.c.l.b16 %v6338
  %v6519 = vunpack.c.l.b16 %v6339
  %v6520 = vunpack.c.l.b16 %v6340
  %v6521 = vunpack.c.l.b16 %v6341
  %v6522 = vunpack.c.l.b16 %v6342
  %v6523 = vunpack.c.l.b16 %v6343
  %v6524 = vunpack.c.l.b16 %v6344
  %v6525 = vunpack.c.l.b16 %v6345
  %v6526 = vunpack.c.l.b16 %v6346
  %v6527 = vunpack.c.l.b16 %v6347
  %v6528 = vunpack.c.l.b16 %v6348
  %v6529 = vunpack.c.l.b16 %v6349
  %v6530 = vunpack.c.l.b16 %v6350
  %v6531 = vunpack.c.l.b16 %v6351
  %v6532 = vunpack.c.l.b16 %v6352
  %v6533 = vunpack.c.l.b16 %v6353
  %v6534 = vunpack.c.l.b16 %v6354
  %v6535 = vunpack.c.l.b16 %v6355
  %v6536 = vunpack.c.l.b16 %v6356
  %v6537 = vunpack.c.l.b16 %v6357
  %v6538 = vunpack.c.l.b16 %v6358
  %v6539 = vunpack.c.l.b16 %v6359
  %v6540 = vunpack.c.l.b16 %v6360
  %v6541 = vunpack.c.l.b16 %v6361
  %v6542 = vunpack.c.l.b16 %v6362
  %v6543 = vunpack.c.l.b16 %v6363
  %v6544 = vunpack.c.l.b16 %v6364
  %v6545 = vunpack.c.l.b16 %v6365
  %v6546 = vunpack.c.l.b16 %v6366
  %v6547 = vunpack.c.l.b16 %v6367
  %v6548 = vunpack.c.l.b16 %v6368
  %v6549 = vunpack.c.l.b16 %v6369
  %v6550 = vunpack.c.l.b16 %v6370
  %v6551 = vunpack.c.l.b16 %v6371
  %v6552 = vunpack.c.l.b16 %v6372
  %v6553 = vunpack.c.l.b16 %v6373
  %v6554 = vunpack.c.l.b16 %v6374
  %v6555 = vunpack.c.l.b16 %v6375
  %v6556 = vunpack.c.l.b16 %v6376
  %v6557 = vunpack.c.l.b16 %v6377
  %v6558 = vunpack.c.l.b16 %v6378
  %v6559 = vunpack.c.l.b16 %v6379
  %v6560 = vunpack.c.l.b16 %v6380
  %v6561 = vunpack.c.l.b16 %v6381
  %v6562 = vunpack.c.l.b16 %v6382
  %v6563 = vunpack.c.l.b16 %v6383
  %v6564 = vunpack.c.l.b16 %v6384
  %v6565 = vunpack.c.l.b16 %v6385
  %v6566 = vunpack.c.l.b16 %v6386
  %v6567 = vunpack.c.l.b16 %v6387
  %v6568 = vunpack.c.l.b16 %v6388
  %v6569 = vunpack.c.l.b16 %v6389
  %v6570 = vunpack.c.l.b16 %v6390
  %v6571 = vunpack.c.l.b16 %v6391
  %v6572 = vunpack.c.l.b16 %v6392
  %v6573 = vunpack.c.l.b16 %v6393
  %v6574 = vunpack.c.l.b16 %v6394
  %v6575 = vunpack.c.l.b16 %v6395
  %v6576 = vunpack.c.l.b16 %v6396
  %v6577 = vunpack.c.l.b16 %v6397
  %v6578 = vunpack.c.l.b16 %v6398
  %v6579 = vunpack.c.l.b16 %v6399
  %v6580 = vunpack.c.l.b16 %v6400
  %v6581 = vunpack.c.l.b16 %v6401
  %v6582 = vunpack.c.l.b16 %v6402
  %v6583 = vunpack.c.l.b16 %v6403
  %v6584 = vunpack.c.l.b16 %v6404
  %v6585 = vunpack.c.l.b16 %v6405
  %v6586 = vpack.c.b16 %v6497, %v6496
  %v6587 = vpack.c.b16 %v6499, %v6498
  %v6588 = vpack.c.b16 %v6501, %v6500
  %v6589 = vpack.c.b16 %v6503, %v6502
  %v6590 = vpack.c.b16 %v6505, %v6504
  %v6591 = vpack.c.b16 %v6507, %v6506
  %v6592 = vpack.c.b16 %v6509, %v6508
  %v6593 = vpack.c.b16 %v6511, %v6510
  %v6594 = vpack.c.b16 %v6513, %v6512
  %v6595 = vpack.c.b16 %v6515, %v6514
  %v6596 = vpack.c.b16 %v6517, %v6516
  %v6597 = vpack.c.b16 %v6519, %v6518
  %v6598 = vpack.c.b16 %v6521, %v6520
  %v6599 = vpack.c.b16 %v6523, %v6522
  %v6600 = vpack.c.b16 %v6525, %v6524
  %v6601 = vpack.c.b16 %v6527, %v6526
  %v6602 = vpack.c.b16 %v6529, %v6528
  %v6603 = vpack.c.b16 %v6531, %v6530
  %v6604 = vpack.c.b16 %v6533, %v6532
  %v6605 = vpack.c.b16 %v6535, %v6534
  %v6606 = vpack.c.b16 %v6537, %v6536
  %v6607 = vpack.c.b16 %v6539, %v6538
  %v6608 = vpack.c.b16 %v6541, %v6540
  %v6609 = vpack.c.b16 %v6543, %v6542
  %v6610 = vpack.c.b16 %v6545, %v6544
  %v6611 = vpack.c.b16 %v6547, %v6546
  %v6612 = vpack.c.b16 %v6549, %v6548
  %v6613 = vpack.c.b16 %v6551, %v6550
  %v6614 = vpack.c.b16 %v6553, %v6552
  %v6615 = vpack.c.b16 %v6555, %v6554
  %v6616 = vpack.c.b16 %v6557, %v6556
  %v6617 = vpack.c.b16 %v6559, %v6558
  %v6618 = vpack.c.b16 %v6561, %v6560
  %v6619 = vpack.c.b16 %v6563, %v6562
  %v6620 = vpack.c.b16 %v6565, %v6564
  %v6621 = vpack.c.b16 %v6567, %v6566
  %v6622 = vpack.c.b16 %v6569, %v6568
  %v6623 = vpack.c.b16 %v6571, %v6570
  %v6624 = vpack.c.b16 %v6573, %v6572
  %v6625 = vpack.c.b16 %v6575, %v6574
  %v6626 = vpack.c.b16 %v6577, %v6576
  %v6627 = vpack.c.b16 %v6579, %v6578
  %v6628 = vpack.c.b16 %v6581, %v6580
  %v6629 = vpack.c.b16 %v6583, %v6582
  %v6630 = vpack.c.b16 %v6585, %v6584
  %v6676 = vsel %vm1874, %v6314, 0
  %6678 = vmatprep.subr.bf16.mxu0 0
  %6679 = vmatpush1.bf16.msra.mxu0 %v6586
  %6680 = vmatprep.subr.bf16.mxu0 0
  %6681 = vmatpush1.bf16.msra.mxu0 %v6587
  %6682 = vmatprep.subr.bf16.mxu0 0
  %6683 = vmatpush1.bf16.msra.mxu0 %v6588
  %6684 = vmatprep.subr.bf16.mxu0 0
  %6685 = vmatpush1.bf16.msra.mxu0 %v6589
  %6686 = vmatprep.subr.bf16.mxu0 0
  %6687 = vmatpush1.bf16.msra.mxu0 %v6590
  %6688 = vmatprep.subr.bf16.mxu0 0
  %6689 = vmatpush1.bf16.msra.mxu0 %v6591
  %6690 = vmatprep.subr.bf16.mxu0 0
  %6691 = vmatpush1.bf16.msra.mxu0 %v6592
  %6692 = vmatprep.subr.bf16.mxu0 0
  %6693 = vmatpush1.bf16.msra.mxu0 %v6593
  %6694 = vmatprep.subr.bf16.mxu0 0
  %6695 = vmatpush1.bf16.msra.mxu0 %v6594
  %6696 = vmatprep.subr.bf16.mxu0 0
  %6697 = vmatpush1.bf16.msra.mxu0 %v6595
  %6698 = vmatprep.subr.bf16.mxu0 0
  %6699 = vmatpush1.bf16.msra.mxu0 %v6596
  %6700 = vmatprep.subr.bf16.mxu0 0
  %6701 = vmatpush1.bf16.msra.mxu0 %v6597
  %6702 = vmatprep.subr.bf16.mxu0 0
  %6703 = vmatpush1.bf16.msra.mxu0 %v6598
  %6704 = vmatprep.subr.bf16.mxu0 0
  %6705 = vmatpush1.bf16.msra.mxu0 %v6599
  %6706 = vmatprep.subr.bf16.mxu0 0
  %6707 = vmatpush1.bf16.msra.mxu0 %v6600
  %6708 = vmatprep.subr.bf16.mxu0 0
  %6709 = vmatpush1.bf16.msra.mxu0 %v6601
  %6710 = vmatprep.mubr.bf16.mxu0 %v6298
  %6711 = vmatmul.mubr.bf16.gmra.mrb[0].mxu0 %v6294
  %v6712 = vpop.f32.mrb[0].mxu0
  %v6713 = vadd.f32 0.0, %v6712
  %v6714 = vpop.f32.mrb[0].mxu0
  %v6715 = vpop.f32.mrb[0].mxu0
  %v6716 = vpop.f32.mrb[0].mxu0
  %6717 = vdwg.mxu0
  %6718 = vmatprep.subr.bf16.mxu0 0
  %6719 = vmatpush1.bf16.msra.mxu0 %v6602
  %6720 = vmatprep.subr.bf16.mxu0 0
  %6721 = vmatpush1.bf16.msra.mxu0 %v6603
  %6722 = vmatprep.subr.bf16.mxu0 0
  %6723 = vmatpush1.bf16.msra.mxu0 %v6604
  %6724 = vmatprep.subr.bf16.mxu0 0
  %6725 = vmatpush1.bf16.msra.mxu0 %v6605
  %6726 = vmatprep.subr.bf16.mxu0 0
  %6727 = vmatpush1.bf16.msra.mxu0 %v6606
  %6728 = vmatprep.subr.bf16.mxu0 0
  %6729 = vmatpush1.bf16.msra.mxu0 %v6607
  %6730 = vmatprep.subr.bf16.mxu0 0
  %6731 = vmatpush1.bf16.msra.mxu0 %v6608
  %6732 = vmatprep.subr.bf16.mxu0 0
  %6733 = vmatpush1.bf16.msra.mxu0 %v6609
  %6734 = vmatprep.subr.bf16.mxu0 0
  %6735 = vmatpush1.bf16.msra.mxu0 %v6610
  %6736 = vmatprep.subr.bf16.mxu0 0
  %6737 = vmatpush1.bf16.msra.mxu0 %v6611
  %6738 = vmatprep.subr.bf16.mxu0 0
  %6739 = vmatpush1.bf16.msra.mxu0 %v6612
  %6740 = vmatprep.subr.bf16.mxu0 0
  %6741 = vmatpush1.bf16.msra.mxu0 %v6613
  %6742 = vmatprep.subr.bf16.mxu0 0
  %6743 = vmatpush1.bf16.msra.mxu0 %v6614
  %6744 = vmatprep.subr.bf16.mxu0 0
  %6745 = vmatpush1.bf16.msra.mxu0 %v6615
  %6746 = vmatprep.subr.bf16.mxu0 0
  %6747 = vmatpush1.bf16.msra.mxu0 %v6616
  %6748 = vmatprep.subr.bf16.mxu0 0
  %6749 = vmatpush1.bf16.msra.mxu0 %v6617
  %6750 = vmatprep.mubr.bf16.mxu0 %v6306
  %6751 = vmatmul.mubr.bf16.gmra.mrb[0].mxu0 %v6302
  %v6752 = vpop.f32.mrb[0].mxu0
  %v6753 = vadd.f32 %v6713, %v6752
  %v6754 = vpop.f32.mrb[0].mxu0
  %v6755 = vpop.f32.mrb[0].mxu0
  %v6756 = vpop.f32.mrb[0].mxu0
  %6757 = vdwg.mxu0
  %6758 = vmatprep.subr.bf16.mxu0 0
  %6759 = vmatpush1.bf16.msra.mxu0 %v6618
  %6760 = vmatprep.subr.bf16.mxu0 0
  %6761 = vmatpush1.bf16.msra.mxu0 %v6619
  %6762 = vmatprep.subr.bf16.mxu0 0
  %6763 = vmatpush1.bf16.msra.mxu0 %v6620
  %6764 = vmatprep.subr.bf16.mxu0 0
  %6765 = vmatpush1.bf16.msra.mxu0 %v6621
  %6766 = vmatprep.subr.bf16.mxu0 0
  %6767 = vmatpush1.bf16.msra.mxu0 %v6622
  %6768 = vmatprep.subr.bf16.mxu0 0
  %6769 = vmatpush1.bf16.msra.mxu0 %v6623
  %6770 = vmatprep.subr.bf16.mxu0 0
  %6771 = vmatpush1.bf16.msra.mxu0 %v6624
  %6772 = vmatprep.subr.bf16.mxu0 0
  %6773 = vmatpush1.bf16.msra.mxu0 %v6625
  %6774 = vmatprep.subr.bf16.mxu0 0
  %6775 = vmatpush1.bf16.msra.mxu0 %v6626
  %6776 = vmatprep.subr.bf16.mxu0 0
  %6777 = vmatpush1.bf16.msra.mxu0 %v6627
  %6778 = vmatprep.subr.bf16.mxu0 0
  %6779 = vmatpush1.bf16.msra.mxu0 %v6628
  %6780 = vmatprep.subr.bf16.mxu0 0
  %6781 = vmatpush1.bf16.msra.mxu0 %v6629
  %6782 = vmatprep.subr.bf16.mxu0 0
  %6783 = vmatpush1.bf16.msra.mxu0 %v6630
  %6784 = vmatprep.subr.bf16.mxu0 0
  %6785 = vmatpush1.bf16.msra.mxu0 0
  %6786 = vmatprep.subr.bf16.mxu0 0
  %6787 = vmatpush1.bf16.msra.mxu0 0
  %6788 = vmatprep.subr.bf16.mxu0 0
  %6789 = vmatpush1.bf16.msra.mxu0 0
  %6790 = vmatprep.mubr.bf16.mxu0 %v6676
  %6791 = vmatmul.mubr.bf16.gmra.mrb[0].mxu0 %v6310
  %v6792 = vpop.f32.mrb[0].mxu0
  %v6793 = vadd.f32 %v6753, %v6792
  %v6794 = vpop.f32.mrb[0].mxu0
  %v6795 = vpop.f32.mrb[0].mxu0
  %v6796 = vpop.f32.mrb[0].mxu0
  %6797 = vdwg.mxu0
  %v6798 = vadd.f32 %v6250, %v6793
  %v6799 = vld [vmem:[#allocation2 + $0x30] sm:$0xc]
  %v6800 = vld [vmem:[#allocation2 + $0x38] sm:$0xc]
  %v6801 = vld [vmem:[#allocation2 + $0x40] sm:$0xc]
  %v6802 = vld [vmem:[#allocation2 + $0x48] sm:$0xc]
  %v6803 = vld [vmem:[#allocation2 + $0x50] sm:$0xc]
  %v6804 = vld [vmem:[#allocation2 + $0x58] sm:$0xc]
  %v6811 = vrot.slane %v6799, 2
  %v6812 = vrot.slane %v6800, 2
  %v6813 = vrot.slane %v6801, 2
  %v6814 = vrot.slane %v6802, 2
  %v6815 = vrot.slane %v6803, 2
  %v6816 = vrot.slane %v6804, 2
  %6817 = vrot.lane.b32.xlu0 %v6799, 80
  %v6818 = vpop.permute.xlu0 %6817
  %6819 = vrot.lane.b32.xlu0 %v6800, 80
  %v6820 = vpop.permute.xlu0 %6819
  %6821 = vrot.lane.b32.xlu0 %v6801, 80
  %v6822 = vpop.permute.xlu0 %6821
  %6823 = vrot.lane.b32.xlu0 %v6802, 80
  %v6824 = vpop.permute.xlu0 %6823
  %6825 = vrot.lane.b32.xlu0 %v6803, 80
  %v6826 = vpop.permute.xlu0 %6825
  %6827 = vrot.lane.b32.xlu0 %v6804, 80
  %v6828 = vpop.permute.xlu0 %6827
  %v6829 = vsel %vm1329, %v6818, %v6820
  %v6830 = vsel %vm1329, %v6820, %v6822
  %v6831 = vsel %vm1329, %v6822, %v6824
  %v6832 = vsel %vm1329, %v6824, %v6826
  %v6833 = vsel %vm1329, %v6826, %v6828
  %v6836 = vsel %vm1335, %v6811, %v6829
  %v6840 = vsel %vm1335, %v6812, %v6830
  %v6844 = vsel %vm1335, %v6813, %v6831
  %v6848 = vsel %vm1335, %v6814, %v6832
  %v6852 = vsel %vm1335, %v6815, %v6833
  %v6856 = vsel %vm1335, %v6816, %v6828
  %s6857 = scalar_lea.vmem %s3, 3600
  %v6858 = vld [vmem:[%s6857] sm:$0xf]
  %v6859 = vld [vmem:[%s6857 + $0x4] sm:$0xf]
  %v6860 = vld [vmem:[%s6857 + $0x8] sm:$0xf]
  %v6861 = vld [vmem:[%s6857 + $0xc] sm:$0xf]
  %v6862 = vld [vmem:[%s6857 + $0x10] sm:$0xf]
  %v6863 = vld [vmem:[%s6857 + $0x14] sm:$0xf]
  %v6864 = vld [vmem:[%s6857 + $0x18] sm:$0xf]
  %v6865 = vld [vmem:[%s6857 + $0x1c] sm:$0xf]
  %v6866 = vld [vmem:[%s6857 + $0x20] sm:$0xf]
  %v6867 = vld [vmem:[%s6857 + $0x24] sm:$0xf]
  %v6868 = vld [vmem:[%s6857 + $0x28] sm:$0xf]
  %v6869 = vld [vmem:[%s6857 + $0x2c] sm:$0xf]
  %v6870 = vld [vmem:[%s6857 + $0x30] sm:$0xf]
  %v6871 = vld [vmem:[%s6857 + $0x34] sm:$0xf]
  %v6872 = vld [vmem:[%s6857 + $0x38] sm:$0xf]
  %v6873 = vld [vmem:[%s6857 + $0x3c] sm:$0xf]
  %v6874 = vld [vmem:[%s6857 + $0x40] sm:$0xf]
  %v6875 = vld [vmem:[%s6857 + $0x44] sm:$0xf]
  %v6876 = vld [vmem:[%s6857 + $0x48] sm:$0xf]
  %v6877 = vld [vmem:[%s6857 + $0x4c] sm:$0xf]
  %v6878 = vld [vmem:[%s6857 + $0x50] sm:$0xf]
  %v6879 = vld [vmem:[%s6857 + $0x54] sm:$0xf]
  %v6880 = vld [vmem:[%s6857 + $0x58] sm:$0xf]
  %v6881 = vld [vmem:[%s6857 + $0x5c] sm:$0xf]
  %v6882 = vld [vmem:[%s6857 + $0x60] sm:$0xf]
  %v6883 = vld [vmem:[%s6857 + $0x64] sm:$0xf]
  %v6884 = vld [vmem:[%s6857 + $0x68] sm:$0xf]
  %v6885 = vld [vmem:[%s6857 + $0x6c] sm:$0xf]
  %v6886 = vld [vmem:[%s6857 + $0x70] sm:$0xf]
  %v6887 = vld [vmem:[%s6857 + $0x74] sm:$0xf]
  %v6888 = vld [vmem:[%s6857 + $0x78] sm:$0xf]
  %v6889 = vld [vmem:[%s6857 + $0x7c] sm:$0xf]
  %v6890 = vld [vmem:[%s6857 + $0x80] sm:$0xf]
  %v6891 = vld [vmem:[%s6857 + $0x84] sm:$0xf]
  %v6892 = vld [vmem:[%s6857 + $0x88] sm:$0xf]
  %v6893 = vld [vmem:[%s6857 + $0x8c] sm:$0xf]
  %v6894 = vld [vmem:[%s6857 + $0x90] sm:$0xf]
  %v6895 = vld [vmem:[%s6857 + $0x94] sm:$0xf]
  %v6896 = vld [vmem:[%s6857 + $0x98] sm:$0xf]
  %v6897 = vld [vmem:[%s6857 + $0x9c] sm:$0xf]
  %v6898 = vld [vmem:[%s6857 + $0xa0] sm:$0xf]
  %v6899 = vld [vmem:[%s6857 + $0xa4] sm:$0xf]
  %v6900 = vld [vmem:[%s6857 + $0xa8] sm:$0xf]
  %v6901 = vld [vmem:[%s6857 + $0xac] sm:$0xf]
  %v6902 = vld [vmem:[%s6857 + $0xb0] sm:$0xf]
  %v6903 = vld [vmem:[%s6857 + $0xb4] sm:$0xf]
  %v6904 = vld [vmem:[%s6857 + $0xb8] sm:$0xf]
  %v6905 = vld [vmem:[%s6857 + $0xbc] sm:$0xf]
  %v6906 = vld [vmem:[%s6857 + $0xc0] sm:$0xf]
  %v6907 = vld [vmem:[%s6857 + $0xc4] sm:$0xf]
  %v6908 = vld [vmem:[%s6857 + $0xc8] sm:$0xf]
  %v6909 = vld [vmem:[%s6857 + $0xcc] sm:$0xf]
  %v6910 = vld [vmem:[%s6857 + $0xd0] sm:$0xf]
  %v6911 = vld [vmem:[%s6857 + $0xd4] sm:$0xf]
  %v6912 = vld [vmem:[%s6857 + $0xd8] sm:$0xf]
  %v6913 = vld [vmem:[%s6857 + $0xdc] sm:$0xf]
  %v6914 = vld [vmem:[%s6857 + $0xe0] sm:$0xf]
  %v6915 = vld [vmem:[%s6857 + $0xe4] sm:$0xf]
  %v6916 = vld [vmem:[%s6857 + $0xe8] sm:$0xf]
  %v6917 = vld [vmem:[%s6857 + $0xec] sm:$0xf]
  %v6918 = vld [vmem:[%s6857 + $0xf0] sm:$0xf]
  %v6919 = vld [vmem:[%s6857 + $0xf4] sm:$0xf]
  %v6920 = vld [vmem:[%s6857 + $0xf8] sm:$0xf]
  %v6921 = vld [vmem:[%s6857 + $0xfc] sm:$0xf]
  %v6922 = vld [vmem:[%s6857 + $0x100] sm:$0xf]
  %v6923 = vld [vmem:[%s6857 + $0x104] sm:$0xf]
  %v6924 = vld [vmem:[%s6857 + $0x108] sm:$0xf]
  %v6925 = vld [vmem:[%s6857 + $0x10c] sm:$0xf]
  %v6926 = vld [vmem:[%s6857 + $0x110] sm:$0xf]
  %v6927 = vld [vmem:[%s6857 + $0x114] sm:$0xf]
  %v6928 = vld [vmem:[%s6857 + $0x118] sm:$0xf]
  %v6929 = vld [vmem:[%s6857 + $0x11c] sm:$0xf]
  %v6930 = vld [vmem:[%s6857 + $0x120] sm:$0xf]
  %v6931 = vld [vmem:[%s6857 + $0x124] sm:$0xf]
  %v6932 = vld [vmem:[%s6857 + $0x128] sm:$0xf]
  %v6933 = vld [vmem:[%s6857 + $0x12c] sm:$0xf]
  %v6934 = vld [vmem:[%s6857 + $0x130] sm:$0xf]
  %v6935 = vld [vmem:[%s6857 + $0x134] sm:$0xf]
  %v6936 = vld [vmem:[%s6857 + $0x138] sm:$0xf]
  %v6937 = vld [vmem:[%s6857 + $0x13c] sm:$0xf]
  %v6938 = vld [vmem:[%s6857 + $0x140] sm:$0xf]
  %v6939 = vld [vmem:[%s6857 + $0x144] sm:$0xf]
  %v6940 = vld [vmem:[%s6857 + $0x148] sm:$0xf]
  %v6941 = vld [vmem:[%s6857 + $0x14c] sm:$0xf]
  %v6942 = vld [vmem:[%s6857 + $0x150] sm:$0xf]
  %v6943 = vld [vmem:[%s6857 + $0x154] sm:$0xf]
  %v6944 = vld [vmem:[%s6857 + $0x158] sm:$0xf]
  %v6945 = vld [vmem:[%s6857 + $0x15c] sm:$0xf]
  %v6946 = vld [vmem:[%s6857 + $0x160] sm:$0xf]
  %v6947 = vld [vmem:[%s6857 + $0x164] sm:$0xf]
  %v7038 = vunpack.c.l.b16 %v6858
  %v7039 = vunpack.c.l.b16 %v6859
  %v7040 = vunpack.c.l.b16 %v6860
  %v7041 = vunpack.c.l.b16 %v6861
  %v7042 = vunpack.c.l.b16 %v6862
  %v7043 = vunpack.c.l.b16 %v6863
  %v7044 = vunpack.c.l.b16 %v6864
  %v7045 = vunpack.c.l.b16 %v6865
  %v7046 = vunpack.c.l.b16 %v6866
  %v7047 = vunpack.c.l.b16 %v6867
  %v7048 = vunpack.c.l.b16 %v6868
  %v7049 = vunpack.c.l.b16 %v6869
  %v7050 = vunpack.c.l.b16 %v6870
  %v7051 = vunpack.c.l.b16 %v6871
  %v7052 = vunpack.c.l.b16 %v6872
  %v7053 = vunpack.c.l.b16 %v6873
  %v7054 = vunpack.c.l.b16 %v6874
  %v7055 = vunpack.c.l.b16 %v6875
  %v7056 = vunpack.c.l.b16 %v6876
  %v7057 = vunpack.c.l.b16 %v6877
  %v7058 = vunpack.c.l.b16 %v6878
  %v7059 = vunpack.c.l.b16 %v6879
  %v7060 = vunpack.c.l.b16 %v6880
  %v7061 = vunpack.c.l.b16 %v6881
  %v7062 = vunpack.c.l.b16 %v6882
  %v7063 = vunpack.c.l.b16 %v6883
  %v7064 = vunpack.c.l.b16 %v6884
  %v7065 = vunpack.c.l.b16 %v6885
  %v7066 = vunpack.c.l.b16 %v6886
  %v7067 = vunpack.c.l.b16 %v6887
  %v7068 = vunpack.c.l.b16 %v6888
  %v7069 = vunpack.c.l.b16 %v6889
  %v7070 = vunpack.c.l.b16 %v6890
  %v7071 = vunpack.c.l.b16 %v6891
  %v7072 = vunpack.c.l.b16 %v6892
  %v7073 = vunpack.c.l.b16 %v6893
  %v7074 = vunpack.c.l.b16 %v6894
  %v7075 = vunpack.c.l.b16 %v6895
  %v7076 = vunpack.c.l.b16 %v6896
  %v7077 = vunpack.c.l.b16 %v6897
  %v7078 = vunpack.c.l.b16 %v6898
  %v7079 = vunpack.c.l.b16 %v6899
  %v7080 = vunpack.c.l.b16 %v6900
  %v7081 = vunpack.c.l.b16 %v6901
  %v7082 = vunpack.c.l.b16 %v6902
  %v7083 = vunpack.c.l.b16 %v6903
  %v7084 = vunpack.c.l.b16 %v6904
  %v7085 = vunpack.c.l.b16 %v6905
  %v7086 = vunpack.c.l.b16 %v6906
  %v7087 = vunpack.c.l.b16 %v6907
  %v7088 = vunpack.c.l.b16 %v6908
  %v7089 = vunpack.c.l.b16 %v6909
  %v7090 = vunpack.c.l.b16 %v6910
  %v7091 = vunpack.c.l.b16 %v6911
  %v7092 = vunpack.c.l.b16 %v6912
  %v7093 = vunpack.c.l.b16 %v6913
  %v7094 = vunpack.c.l.b16 %v6914
  %v7095 = vunpack.c.l.b16 %v6915
  %v7096 = vunpack.c.l.b16 %v6916
  %v7097 = vunpack.c.l.b16 %v6917
  %v7098 = vunpack.c.l.b16 %v6918
  %v7099 = vunpack.c.l.b16 %v6919
  %v7100 = vunpack.c.l.b16 %v6920
  %v7101 = vunpack.c.l.b16 %v6921
  %v7102 = vunpack.c.l.b16 %v6922
  %v7103 = vunpack.c.l.b16 %v6923
  %v7104 = vunpack.c.l.b16 %v6924
  %v7105 = vunpack.c.l.b16 %v6925
  %v7106 = vunpack.c.l.b16 %v6926
  %v7107 = vunpack.c.l.b16 %v6927
  %v7108 = vunpack.c.l.b16 %v6928
  %v7109 = vunpack.c.l.b16 %v6929
  %v7110 = vunpack.c.l.b16 %v6930
  %v7111 = vunpack.c.l.b16 %v6931
  %v7112 = vunpack.c.l.b16 %v6932
  %v7113 = vunpack.c.l.b16 %v6933
  %v7114 = vunpack.c.l.b16 %v6934
  %v7115 = vunpack.c.l.b16 %v6935
  %v7116 = vunpack.c.l.b16 %v6936
  %v7117 = vunpack.c.l.b16 %v6937
  %v7118 = vunpack.c.l.b16 %v6938
  %v7119 = vunpack.c.l.b16 %v6939
  %v7120 = vunpack.c.l.b16 %v6940
  %v7121 = vunpack.c.l.b16 %v6941
  %v7122 = vunpack.c.l.b16 %v6942
  %v7123 = vunpack.c.l.b16 %v6943
  %v7124 = vunpack.c.l.b16 %v6944
  %v7125 = vunpack.c.l.b16 %v6945
  %v7126 = vunpack.c.l.b16 %v6946
  %v7127 = vunpack.c.l.b16 %v6947
  %v7128 = vpack.c.b16 %v7039, %v7038
  %v7129 = vpack.c.b16 %v7041, %v7040
  %v7130 = vpack.c.b16 %v7043, %v7042
  %v7131 = vpack.c.b16 %v7045, %v7044
  %v7132 = vpack.c.b16 %v7047, %v7046
  %v7133 = vpack.c.b16 %v7049, %v7048
  %v7134 = vpack.c.b16 %v7051, %v7050
  %v7135 = vpack.c.b16 %v7053, %v7052
  %v7136 = vpack.c.b16 %v7055, %v7054
  %v7137 = vpack.c.b16 %v7057, %v7056
  %v7138 = vpack.c.b16 %v7059, %v7058
  %v7139 = vpack.c.b16 %v7061, %v7060
  %v7140 = vpack.c.b16 %v7063, %v7062
  %v7141 = vpack.c.b16 %v7065, %v7064
  %v7142 = vpack.c.b16 %v7067, %v7066
  %v7143 = vpack.c.b16 %v7069, %v7068
  %v7144 = vpack.c.b16 %v7071, %v7070
  %v7145 = vpack.c.b16 %v7073, %v7072
  %v7146 = vpack.c.b16 %v7075, %v7074
  %v7147 = vpack.c.b16 %v7077, %v7076
  %v7148 = vpack.c.b16 %v7079, %v7078
  %v7149 = vpack.c.b16 %v7081, %v7080
  %v7150 = vpack.c.b16 %v7083, %v7082
  %v7151 = vpack.c.b16 %v7085, %v7084
  %v7152 = vpack.c.b16 %v7087, %v7086
  %v7153 = vpack.c.b16 %v7089, %v7088
  %v7154 = vpack.c.b16 %v7091, %v7090
  %v7155 = vpack.c.b16 %v7093, %v7092
  %v7156 = vpack.c.b16 %v7095, %v7094
  %v7157 = vpack.c.b16 %v7097, %v7096
  %v7158 = vpack.c.b16 %v7099, %v7098
  %v7159 = vpack.c.b16 %v7101, %v7100
  %v7160 = vpack.c.b16 %v7103, %v7102
  %v7161 = vpack.c.b16 %v7105, %v7104
  %v7162 = vpack.c.b16 %v7107, %v7106
  %v7163 = vpack.c.b16 %v7109, %v7108
  %v7164 = vpack.c.b16 %v7111, %v7110
  %v7165 = vpack.c.b16 %v7113, %v7112
  %v7166 = vpack.c.b16 %v7115, %v7114
  %v7167 = vpack.c.b16 %v7117, %v7116
  %v7168 = vpack.c.b16 %v7119, %v7118
  %v7169 = vpack.c.b16 %v7121, %v7120
  %v7170 = vpack.c.b16 %v7123, %v7122
  %v7171 = vpack.c.b16 %v7125, %v7124
  %v7172 = vpack.c.b16 %v7127, %v7126
  %v7218 = vsel %vm1874, %v6856, 0
  %7220 = vmatprep.subr.bf16.mxu0 0
  %7221 = vmatpush1.bf16.msra.mxu0 %v7128
  %7222 = vmatprep.subr.bf16.mxu0 0
  %7223 = vmatpush1.bf16.msra.mxu0 %v7129
  %7224 = vmatprep.subr.bf16.mxu0 0
  %7225 = vmatpush1.bf16.msra.mxu0 %v7130
  %7226 = vmatprep.subr.bf16.mxu0 0
  %7227 = vmatpush1.bf16.msra.mxu0 %v7131
  %7228 = vmatprep.subr.bf16.mxu0 0
  %7229 = vmatpush1.bf16.msra.mxu0 %v7132
  %7230 = vmatprep.subr.bf16.mxu0 0
  %7231 = vmatpush1.bf16.msra.mxu0 %v7133
  %7232 = vmatprep.subr.bf16.mxu0 0
  %7233 = vmatpush1.bf16.msra.mxu0 %v7134
  %7234 = vmatprep.subr.bf16.mxu0 0
  %7235 = vmatpush1.bf16.msra.mxu0 %v7135
  %7236 = vmatprep.subr.bf16.mxu0 0
  %7237 = vmatpush1.bf16.msra.mxu0 %v7136
  %7238 = vmatprep.subr.bf16.mxu0 0
  %7239 = vmatpush1.bf16.msra.mxu0 %v7137
  %7240 = vmatprep.subr.bf16.mxu0 0
  %7241 = vmatpush1.bf16.msra.mxu0 %v7138
  %7242 = vmatprep.subr.bf16.mxu0 0
  %7243 = vmatpush1.bf16.msra.mxu0 %v7139
  %7244 = vmatprep.subr.bf16.mxu0 0
  %7245 = vmatpush1.bf16.msra.mxu0 %v7140
  %7246 = vmatprep.subr.bf16.mxu0 0
  %7247 = vmatpush1.bf16.msra.mxu0 %v7141
  %7248 = vmatprep.subr.bf16.mxu0 0
  %7249 = vmatpush1.bf16.msra.mxu0 %v7142
  %7250 = vmatprep.subr.bf16.mxu0 0
  %7251 = vmatpush1.bf16.msra.mxu0 %v7143
  %7252 = vmatprep.mubr.bf16.mxu0 %v6840
  %7253 = vmatmul.mubr.bf16.gmra.mrb[0].mxu0 %v6836
  %v7254 = vpop.f32.mrb[0].mxu0
  %v7255 = vadd.f32 0.0, %v7254
  %v7256 = vpop.f32.mrb[0].mxu0
  %v7257 = vpop.f32.mrb[0].mxu0
  %v7258 = vpop.f32.mrb[0].mxu0
  %7259 = vdwg.mxu0
  %7260 = vmatprep.subr.bf16.mxu0 0
  %7261 = vmatpush1.bf16.msra.mxu0 %v7144
  %7262 = vmatprep.subr.bf16.mxu0 0
  %7263 = vmatpush1.bf16.msra.mxu0 %v7145
  %7264 = vmatprep.subr.bf16.mxu0 0
  %7265 = vmatpush1.bf16.msra.mxu0 %v7146
  %7266 = vmatprep.subr.bf16.mxu0 0
  %7267 = vmatpush1.bf16.msra.mxu0 %v7147
  %7268 = vmatprep.subr.bf16.mxu0 0
  %7269 = vmatpush1.bf16.msra.mxu0 %v7148
  %7270 = vmatprep.subr.bf16.mxu0 0
  %7271 = vmatpush1.bf16.msra.mxu0 %v7149
  %7272 = vmatprep.subr.bf16.mxu0 0
  %7273 = vmatpush1.bf16.msra.mxu0 %v7150
  %7274 = vmatprep.subr.bf16.mxu0 0
  %7275 = vmatpush1.bf16.msra.mxu0 %v7151
  %7276 = vmatprep.subr.bf16.mxu0 0
  %7277 = vmatpush1.bf16.msra.mxu0 %v7152
  %7278 = vmatprep.subr.bf16.mxu0 0
  %7279 = vmatpush1.bf16.msra.mxu0 %v7153
  %7280 = vmatprep.subr.bf16.mxu0 0
  %7281 = vmatpush1.bf16.msra.mxu0 %v7154
  %7282 = vmatprep.subr.bf16.mxu0 0
  %7283 = vmatpush1.bf16.msra.mxu0 %v7155
  %7284 = vmatprep.subr.bf16.mxu0 0
  %7285 = vmatpush1.bf16.msra.mxu0 %v7156
  %7286 = vmatprep.subr.bf16.mxu0 0
  %7287 = vmatpush1.bf16.msra.mxu0 %v7157
  %7288 = vmatprep.subr.bf16.mxu0 0
  %7289 = vmatpush1.bf16.msra.mxu0 %v7158
  %7290 = vmatprep.subr.bf16.mxu0 0
  %7291 = vmatpush1.bf16.msra.mxu0 %v7159
  %7292 = vmatprep.mubr.bf16.mxu0 %v6848
  %7293 = vmatmul.mubr.bf16.gmra.mrb[0].mxu0 %v6844
  %v7294 = vpop.f32.mrb[0].mxu0
  %v7295 = vadd.f32 %v7255, %v7294
  %v7296 = vpop.f32.mrb[0].mxu0
  %v7297 = vpop.f32.mrb[0].mxu0
  %v7298 = vpop.f32.mrb[0].mxu0
  %7299 = vdwg.mxu0
  %7300 = vmatprep.subr.bf16.mxu0 0
  %7301 = vmatpush1.bf16.msra.mxu0 %v7160
  %7302 = vmatprep.subr.bf16.mxu0 0
  %7303 = vmatpush1.bf16.msra.mxu0 %v7161
  %7304 = vmatprep.subr.bf16.mxu0 0
  %7305 = vmatpush1.bf16.msra.mxu0 %v7162
  %7306 = vmatprep.subr.bf16.mxu0 0
  %7307 = vmatpush1.bf16.msra.mxu0 %v7163
  %7308 = vmatprep.subr.bf16.mxu0 0
  %7309 = vmatpush1.bf16.msra.mxu0 %v7164
  %7310 = vmatprep.subr.bf16.mxu0 0
  %7311 = vmatpush1.bf16.msra.mxu0 %v7165
  %7312 = vmatprep.subr.bf16.mxu0 0
  %7313 = vmatpush1.bf16.msra.mxu0 %v7166
  %7314 = vmatprep.subr.bf16.mxu0 0
  %7315 = vmatpush1.bf16.msra.mxu0 %v7167
  %7316 = vmatprep.subr.bf16.mxu0 0
  %7317 = vmatpush1.bf16.msra.mxu0 %v7168
  %7318 = vmatprep.subr.bf16.mxu0 0
  %7319 = vmatpush1.bf16.msra.mxu0 %v7169
  %7320 = vmatprep.subr.bf16.mxu0 0
  %7321 = vmatpush1.bf16.msra.mxu0 %v7170
  %7322 = vmatprep.subr.bf16.mxu0 0
  %7323 = vmatpush1.bf16.msra.mxu0 %v7171
  %7324 = vmatprep.subr.bf16.mxu0 0
  %7325 = vmatpush1.bf16.msra.mxu0 %v7172
  %7326 = vmatprep.subr.bf16.mxu0 0
  %7327 = vmatpush1.bf16.msra.mxu0 0
  %7328 = vmatprep.subr.bf16.mxu0 0
  %7329 = vmatpush1.bf16.msra.mxu0 0
  %7330 = vmatprep.subr.bf16.mxu0 0
  %7331 = vmatpush1.bf16.msra.mxu0 0
  %7332 = vmatprep.mubr.bf16.mxu0 %v7218
  %7333 = vmatmul.mubr.bf16.gmra.mrb[0].mxu0 %v6852
  %v7334 = vpop.f32.mrb[0].mxu0
  %v7335 = vadd.f32 %v7295, %v7334
  %v7336 = vpop.f32.mrb[0].mxu0
  %v7337 = vpop.f32.mrb[0].mxu0
  %v7338 = vpop.f32.mrb[0].mxu0
  %7339 = vdwg.mxu0
  %v7340 = vadd.f32 %v6798, %v7335
  %v7341 = vld [vmem:[#allocation2 + $0x30] sm:$0x18]
  %v7342 = vld [vmem:[#allocation2 + $0x38] sm:$0x18]
  %v7343 = vld [vmem:[#allocation2 + $0x40] sm:$0x18]
  %v7344 = vld [vmem:[#allocation2 + $0x48] sm:$0x18]
  %v7345 = vld [vmem:[#allocation2 + $0x50] sm:$0x18]
  %v7346 = vld [vmem:[#allocation2 + $0x58] sm:$0x18]
  %v7353 = vrot.slane %v7341, 3
  %v7354 = vrot.slane %v7342, 3
  %v7355 = vrot.slane %v7343, 3
  %v7356 = vrot.slane %v7344, 3
  %v7357 = vrot.slane %v7345, 3
  %v7358 = vrot.slane %v7346, 3
  %v7359 = vrot.slane %v7341, 1
  %v7360 = vrot.slane %v7342, 1
  %v7361 = vrot.slane %v7343, 1
  %v7362 = vrot.slane %v7344, 1
  %v7363 = vrot.slane %v7345, 1
  %v7364 = vrot.slane %v7346, 1
  %7365 = vrot.lane.b32.xlu0 %v7359, 80
  %v7366 = vpop.permute.xlu0 %7365
  %7367 = vrot.lane.b32.xlu0 %v7360, 80
  %v7368 = vpop.permute.xlu0 %7367
  %7369 = vrot.lane.b32.xlu0 %v7361, 80
  %v7370 = vpop.permute.xlu0 %7369
  %7371 = vrot.lane.b32.xlu0 %v7362, 80
  %v7372 = vpop.permute.xlu0 %7371
  %7373 = vrot.lane.b32.xlu0 %v7363, 80
  %v7374 = vpop.permute.xlu0 %7373
  %7375 = vrot.lane.b32.xlu0 %v7364, 80
  %v7376 = vpop.permute.xlu0 %7375
  %v7377 = vsel %vm1329, %v7366, %v7368
  %v7378 = vsel %vm1329, %v7368, %v7370
  %v7379 = vsel %vm1329, %v7370, %v7372
  %v7380 = vsel %vm1329, %v7372, %v7374
  %v7381 = vsel %vm1329, %v7374, %v7376
  %v7384 = vsel %vm1335, %v7353, %v7377
  %v7388 = vsel %vm1335, %v7354, %v7378
  %v7392 = vsel %vm1335, %v7355, %v7379
  %v7396 = vsel %vm1335, %v7356, %v7380
  %v7400 = vsel %vm1335, %v7357, %v7381
  %v7404 = vsel %vm1335, %v7358, %v7376
  %s7405 = scalar_lea.vmem %s3, 3960
  %v7406 = vld [vmem:[%s7405] sm:$0xf]
  %v7407 = vld [vmem:[%s7405 + $0x4] sm:$0xf]
  %v7408 = vld [vmem:[%s7405 + $0x8] sm:$0xf]
  %v7409 = vld [vmem:[%s7405 + $0xc] sm:$0xf]
  %v7410 = vld [vmem:[%s7405 + $0x10] sm:$0xf]
  %v7411 = vld [vmem:[%s7405 + $0x14] sm:$0xf]
  %v7412 = vld [vmem:[%s7405 + $0x18] sm:$0xf]
  %v7413 = vld [vmem:[%s7405 + $0x1c] sm:$0xf]
  %v7414 = vld [vmem:[%s7405 + $0x20] sm:$0xf]
  %v7415 = vld [vmem:[%s7405 + $0x24] sm:$0xf]
  %v7416 = vld [vmem:[%s7405 + $0x28] sm:$0xf]
  %v7417 = vld [vmem:[%s7405 + $0x2c] sm:$0xf]
  %v7418 = vld [vmem:[%s7405 + $0x30] sm:$0xf]
  %v7419 = vld [vmem:[%s7405 + $0x34] sm:$0xf]
  %v7420 = vld [vmem:[%s7405 + $0x38] sm:$0xf]
  %v7421 = vld [vmem:[%s7405 + $0x3c] sm:$0xf]
  %v7422 = vld [vmem:[%s7405 + $0x40] sm:$0xf]
  %v7423 = vld [vmem:[%s7405 + $0x44] sm:$0xf]
  %v7424 = vld [vmem:[%s7405 + $0x48] sm:$0xf]
  %v7425 = vld [vmem:[%s7405 + $0x4c] sm:$0xf]
  %v7426 = vld [vmem:[%s7405 + $0x50] sm:$0xf]
  %v7427 = vld [vmem:[%s7405 + $0x54] sm:$0xf]
  %v7428 = vld [vmem:[%s7405 + $0x58] sm:$0xf]
  %v7429 = vld [vmem:[%s7405 + $0x5c] sm:$0xf]
  %v7430 = vld [vmem:[%s7405 + $0x60] sm:$0xf]
  %v7431 = vld [vmem:[%s7405 + $0x64] sm:$0xf]
  %v7432 = vld [vmem:[%s7405 + $0x68] sm:$0xf]
  %v7433 = vld [vmem:[%s7405 + $0x6c] sm:$0xf]
  %v7434 = vld [vmem:[%s7405 + $0x70] sm:$0xf]
  %v7435 = vld [vmem:[%s7405 + $0x74] sm:$0xf]
  %v7436 = vld [vmem:[%s7405 + $0x78] sm:$0xf]
  %v7437 = vld [vmem:[%s7405 + $0x7c] sm:$0xf]
  %v7438 = vld [vmem:[%s7405 + $0x80] sm:$0xf]
  %v7439 = vld [vmem:[%s7405 + $0x84] sm:$0xf]
  %v7440 = vld [vmem:[%s7405 + $0x88] sm:$0xf]
  %v7441 = vld [vmem:[%s7405 + $0x8c] sm:$0xf]
  %v7442 = vld [vmem:[%s7405 + $0x90] sm:$0xf]
  %v7443 = vld [vmem:[%s7405 + $0x94] sm:$0xf]
  %v7444 = vld [vmem:[%s7405 + $0x98] sm:$0xf]
  %v7445 = vld [vmem:[%s7405 + $0x9c] sm:$0xf]
  %v7446 = vld [vmem:[%s7405 + $0xa0] sm:$0xf]
  %v7447 = vld [vmem:[%s7405 + $0xa4] sm:$0xf]
  %v7448 = vld [vmem:[%s7405 + $0xa8] sm:$0xf]
  %v7449 = vld [vmem:[%s7405 + $0xac] sm:$0xf]
  %v7450 = vld [vmem:[%s7405 + $0xb0] sm:$0xf]
  %v7451 = vld [vmem:[%s7405 + $0xb4] sm:$0xf]
  %v7452 = vld [vmem:[%s7405 + $0xb8] sm:$0xf]
  %v7453 = vld [vmem:[%s7405 + $0xbc] sm:$0xf]
  %v7454 = vld [vmem:[%s7405 + $0xc0] sm:$0xf]
  %v7455 = vld [vmem:[%s7405 + $0xc4] sm:$0xf]
  %v7456 = vld [vmem:[%s7405 + $0xc8] sm:$0xf]
  %v7457 = vld [vmem:[%s7405 + $0xcc] sm:$0xf]
  %v7458 = vld [vmem:[%s7405 + $0xd0] sm:$0xf]
  %v7459 = vld [vmem:[%s7405 + $0xd4] sm:$0xf]
  %v7460 = vld [vmem:[%s7405 + $0xd8] sm:$0xf]
  %v7461 = vld [vmem:[%s7405 + $0xdc] sm:$0xf]
  %v7462 = vld [vmem:[%s7405 + $0xe0] sm:$0xf]
  %v7463 = vld [vmem:[%s7405 + $0xe4] sm:$0xf]
  %v7464 = vld [vmem:[%s7405 + $0xe8] sm:$0xf]
  %v7465 = vld [vmem:[%s7405 + $0xec] sm:$0xf]
  %v7466 = vld [vmem:[%s7405 + $0xf0] sm:$0xf]
  %v7467 = vld [vmem:[%s7405 + $0xf4] sm:$0xf]
  %v7468 = vld [vmem:[%s7405 + $0xf8] sm:$0xf]
  %v7469 = vld [vmem:[%s7405 + $0xfc] sm:$0xf]
  %v7470 = vld [vmem:[%s7405 + $0x100] sm:$0xf]
  %v7471 = vld [vmem:[%s7405 + $0x104] sm:$0xf]
  %v7472 = vld [vmem:[%s7405 + $0x108] sm:$0xf]
  %v7473 = vld [vmem:[%s7405 + $0x10c] sm:$0xf]
  %v7474 = vld [vmem:[%s7405 + $0x110] sm:$0xf]
  %v7475 = vld [vmem:[%s7405 + $0x114] sm:$0xf]
  %v7476 = vld [vmem:[%s7405 + $0x118] sm:$0xf]
  %v7477 = vld [vmem:[%s7405 + $0x11c] sm:$0xf]
  %v7478 = vld [vmem:[%s7405 + $0x120] sm:$0xf]
  %v7479 = vld [vmem:[%s7405 + $0x124] sm:$0xf]
  %v7480 = vld [vmem:[%s7405 + $0x128] sm:$0xf]
  %v7481 = vld [vmem:[%s7405 + $0x12c] sm:$0xf]
  %v7482 = vld [vmem:[%s7405 + $0x130] sm:$0xf]
  %v7483 = vld [vmem:[%s7405 + $0x134] sm:$0xf]
  %v7484 = vld [vmem:[%s7405 + $0x138] sm:$0xf]
  %v7485 = vld [vmem:[%s7405 + $0x13c] sm:$0xf]
  %v7486 = vld [vmem:[%s7405 + $0x140] sm:$0xf]
  %v7487 = vld [vmem:[%s7405 + $0x144] sm:$0xf]
  %v7488 = vld [vmem:[%s7405 + $0x148] sm:$0xf]
  %v7489 = vld [vmem:[%s7405 + $0x14c] sm:$0xf]
  %v7490 = vld [vmem:[%s7405 + $0x150] sm:$0xf]
  %v7491 = vld [vmem:[%s7405 + $0x154] sm:$0xf]
  %v7492 = vld [vmem:[%s7405 + $0x158] sm:$0xf]
  %v7493 = vld [vmem:[%s7405 + $0x15c] sm:$0xf]
  %v7494 = vld [vmem:[%s7405 + $0x160] sm:$0xf]
  %v7495 = vld [vmem:[%s7405 + $0x164] sm:$0xf]
  %v7586 = vunpack.c.l.b16 %v7406
  %v7587 = vunpack.c.l.b16 %v7407
  %v7588 = vunpack.c.l.b16 %v7408
  %v7589 = vunpack.c.l.b16 %v7409
  %v7590 = vunpack.c.l.b16 %v7410
  %v7591 = vunpack.c.l.b16 %v7411
  %v7592 = vunpack.c.l.b16 %v7412
  %v7593 = vunpack.c.l.b16 %v7413
  %v7594 = vunpack.c.l.b16 %v7414
  %v7595 = vunpack.c.l.b16 %v7415
  %v7596 = vunpack.c.l.b16 %v7416
  %v7597 = vunpack.c.l.b16 %v7417
  %v7598 = vunpack.c.l.b16 %v7418
  %v7599 = vunpack.c.l.b16 %v7419
  %v7600 = vunpack.c.l.b16 %v7420
  %v7601 = vunpack.c.l.b16 %v7421
  %v7602 = vunpack.c.l.b16 %v7422
  %v7603 = vunpack.c.l.b16 %v7423
  %v7604 = vunpack.c.l.b16 %v7424
  %v7605 = vunpack.c.l.b16 %v7425
  %v7606 = vunpack.c.l.b16 %v7426
  %v7607 = vunpack.c.l.b16 %v7427
  %v7608 = vunpack.c.l.b16 %v7428
  %v7609 = vunpack.c.l.b16 %v7429
  %v7610 = vunpack.c.l.b16 %v7430
  %v7611 = vunpack.c.l.b16 %v7431
  %v7612 = vunpack.c.l.b16 %v7432
  %v7613 = vunpack.c.l.b16 %v7433
  %v7614 = vunpack.c.l.b16 %v7434
  %v7615 = vunpack.c.l.b16 %v7435
  %v7616 = vunpack.c.l.b16 %v7436
  %v7617 = vunpack.c.l.b16 %v7437
  %v7618 = vunpack.c.l.b16 %v7438
  %v7619 = vunpack.c.l.b16 %v7439
  %v7620 = vunpack.c.l.b16 %v7440
  %v7621 = vunpack.c.l.b16 %v7441
  %v7622 = vunpack.c.l.b16 %v7442
  %v7623 = vunpack.c.l.b16 %v7443
  %v7624 = vunpack.c.l.b16 %v7444
  %v7625 = vunpack.c.l.b16 %v7445
  %v7626 = vunpack.c.l.b16 %v7446
  %v7627 = vunpack.c.l.b16 %v7447
  %v7628 = vunpack.c.l.b16 %v7448
  %v7629 = vunpack.c.l.b16 %v7449
  %v7630 = vunpack.c.l.b16 %v7450
  %v7631 = vunpack.c.l.b16 %v7451
  %v7632 = vunpack.c.l.b16 %v7452
  %v7633 = vunpack.c.l.b16 %v7453
  %v7634 = vunpack.c.l.b16 %v7454
  %v7635 = vunpack.c.l.b16 %v7455
  %v7636 = vunpack.c.l.b16 %v7456
  %v7637 = vunpack.c.l.b16 %v7457
  %v7638 = vunpack.c.l.b16 %v7458
  %v7639 = vunpack.c.l.b16 %v7459
  %v7640 = vunpack.c.l.b16 %v7460
  %v7641 = vunpack.c.l.b16 %v7461
  %v7642 = vunpack.c.l.b16 %v7462
  %v7643 = vunpack.c.l.b16 %v7463
  %v7644 = vunpack.c.l.b16 %v7464
  %v7645 = vunpack.c.l.b16 %v7465
  %v7646 = vunpack.c.l.b16 %v7466
  %v7647 = vunpack.c.l.b16 %v7467
  %v7648 = vunpack.c.l.b16 %v7468
  %v7649 = vunpack.c.l.b16 %v7469
  %v7650 = vunpack.c.l.b16 %v7470
  %v7651 = vunpack.c.l.b16 %v7471
  %v7652 = vunpack.c.l.b16 %v7472
  %v7653 = vunpack.c.l.b16 %v7473
  %v7654 = vunpack.c.l.b16 %v7474
  %v7655 = vunpack.c.l.b16 %v7475
  %v7656 = vunpack.c.l.b16 %v7476
  %v7657 = vunpack.c.l.b16 %v7477
  %v7658 = vunpack.c.l.b16 %v7478
  %v7659 = vunpack.c.l.b16 %v7479
  %v7660 = vunpack.c.l.b16 %v7480
  %v7661 = vunpack.c.l.b16 %v7481
  %v7662 = vunpack.c.l.b16 %v7482
  %v7663 = vunpack.c.l.b16 %v7483
  %v7664 = vunpack.c.l.b16 %v7484
  %v7665 = vunpack.c.l.b16 %v7485
  %v7666 = vunpack.c.l.b16 %v7486
  %v7667 = vunpack.c.l.b16 %v7487
  %v7668 = vunpack.c.l.b16 %v7488
  %v7669 = vunpack.c.l.b16 %v7489
  %v7670 = vunpack.c.l.b16 %v7490
  %v7671 = vunpack.c.l.b16 %v7491
  %v7672 = vunpack.c.l.b16 %v7492
  %v7673 = vunpack.c.l.b16 %v7493
  %v7674 = vunpack.c.l.b16 %v7494
  %v7675 = vunpack.c.l.b16 %v7495
  %v7676 = vpack.c.b16 %v7587, %v7586
  %v7677 = vpack.c.b16 %v7589, %v7588
  %v7678 = vpack.c.b16 %v7591, %v7590
  %v7679 = vpack.c.b16 %v7593, %v7592
  %v7680 = vpack.c.b16 %v7595, %v7594
  %v7681 = vpack.c.b16 %v7597, %v7596
  %v7682 = vpack.c.b16 %v7599, %v7598
  %v7683 = vpack.c.b16 %v7601, %v7600
  %v7684 = vpack.c.b16 %v7603, %v7602
  %v7685 = vpack.c.b16 %v7605, %v7604
  %v7686 = vpack.c.b16 %v7607, %v7606
  %v7687 = vpack.c.b16 %v7609, %v7608
  %v7688 = vpack.c.b16 %v7611, %v7610
  %v7689 = vpack.c.b16 %v7613, %v7612
  %v7690 = vpack.c.b16 %v7615, %v7614
  %v7691 = vpack.c.b16 %v7617, %v7616
  %v7692 = vpack.c.b16 %v7619, %v7618
  %v7693 = vpack.c.b16 %v7621, %v7620
  %v7694 = vpack.c.b16 %v7623, %v7622
  %v7695 = vpack.c.b16 %v7625, %v7624
  %v7696 = vpack.c.b16 %v7627, %v7626
  %v7697 = vpack.c.b16 %v7629, %v7628
  %v7698 = vpack.c.b16 %v7631, %v7630
  %v7699 = vpack.c.b16 %v7633, %v7632
  %v7700 = vpack.c.b16 %v7635, %v7634
  %v7701 = vpack.c.b16 %v7637, %v7636
  %v7702 = vpack.c.b16 %v7639, %v7638
  %v7703 = vpack.c.b16 %v7641, %v7640
  %v7704 = vpack.c.b16 %v7643, %v7642
  %v7705 = vpack.c.b16 %v7645, %v7644
  %v7706 = vpack.c.b16 %v7647, %v7646
  %v7707 = vpack.c.b16 %v7649, %v7648
  %v7708 = vpack.c.b16 %v7651, %v7650
  %v7709 = vpack.c.b16 %v7653, %v7652
  %v7710 = vpack.c.b16 %v7655, %v7654
  %v7711 = vpack.c.b16 %v7657, %v7656
  %v7712 = vpack.c.b16 %v7659, %v7658
  %v7713 = vpack.c.b16 %v7661, %v7660
  %v7714 = vpack.c.b16 %v7663, %v7662
  %v7715 = vpack.c.b16 %v7665, %v7664
  %v7716 = vpack.c.b16 %v7667, %v7666
  %v7717 = vpack.c.b16 %v7669, %v7668
  %v7718 = vpack.c.b16 %v7671, %v7670
  %v7719 = vpack.c.b16 %v7673, %v7672
  %v7720 = vpack.c.b16 %v7675, %v7674
  %v7766 = vsel %vm1874, %v7404, 0
  %7768 = vmatprep.subr.bf16.mxu0 0
  %7769 = vmatpush1.bf16.msra.mxu0 %v7676
  %7770 = vmatprep.subr.bf16.mxu0 0
  %7771 = vmatpush1.bf16.msra.mxu0 %v7677
  %7772 = vmatprep.subr.bf16.mxu0 0
  %7773 = vmatpush1.bf16.msra.mxu0 %v7678
  %7774 = vmatprep.subr.bf16.mxu0 0
  %7775 = vmatpush1.bf16.msra.mxu0 %v7679
  %7776 = vmatprep.subr.bf16.mxu0 0
  %7777 = vmatpush1.bf16.msra.mxu0 %v7680
  %7778 = vmatprep.subr.bf16.mxu0 0
  %7779 = vmatpush1.bf16.msra.mxu0 %v7681
  %7780 = vmatprep.subr.bf16.mxu0 0
  %7781 = vmatpush1.bf16.msra.mxu0 %v7682
  %7782 = vmatprep.subr.bf16.mxu0 0
  %7783 = vmatpush1.bf16.msra.mxu0 %v7683
  %7784 = vmatprep.subr.bf16.mxu0 0
  %7785 = vmatpush1.bf16.msra.mxu0 %v7684
  %7786 = vmatprep.subr.bf16.mxu0 0
  %7787 = vmatpush1.bf16.msra.mxu0 %v7685
  %7788 = vmatprep.subr.bf16.mxu0 0
  %7789 = vmatpush1.bf16.msra.mxu0 %v7686
  %7790 = vmatprep.subr.bf16.mxu0 0
  %7791 = vmatpush1.bf16.msra.mxu0 %v7687
  %7792 = vmatprep.subr.bf16.mxu0 0
  %7793 = vmatpush1.bf16.msra.mxu0 %v7688
  %7794 = vmatprep.subr.bf16.mxu0 0
  %7795 = vmatpush1.bf16.msra.mxu0 %v7689
  %7796 = vmatprep.subr.bf16.mxu0 0
  %7797 = vmatpush1.bf16.msra.mxu0 %v7690
  %7798 = vmatprep.subr.bf16.mxu0 0
  %7799 = vmatpush1.bf16.msra.mxu0 %v7691
  %7800 = vmatprep.mubr.bf16.mxu0 %v7388
  %7801 = vmatmul.mubr.bf16.gmra.mrb[0].mxu0 %v7384
  %v7802 = vpop.f32.mrb[0].mxu0
  %v7803 = vadd.f32 0.0, %v7802
  %v7804 = vpop.f32.mrb[0].mxu0
  %v7805 = vpop.f32.mrb[0].mxu0
  %v7806 = vpop.f32.mrb[0].mxu0
  %7807 = vdwg.mxu0
  %7808 = vmatprep.subr.bf16.mxu0 0
  %7809 = vmatpush1.bf16.msra.mxu0 %v7692
  %7810 = vmatprep.subr.bf16.mxu0 0
  %7811 = vmatpush1.bf16.msra.mxu0 %v7693
  %7812 = vmatprep.subr.bf16.mxu0 0
  %7813 = vmatpush1.bf16.msra.mxu0 %v7694
  %7814 = vmatprep.subr.bf16.mxu0 0
  %7815 = vmatpush1.bf16.msra.mxu0 %v7695
  %7816 = vmatprep.subr.bf16.mxu0 0
  %7817 = vmatpush1.bf16.msra.mxu0 %v7696
  %7818 = vmatprep.subr.bf16.mxu0 0
  %7819 = vmatpush1.bf16.msra.mxu0 %v7697
  %7820 = vmatprep.subr.bf16.mxu0 0
  %7821 = vmatpush1.bf16.msra.mxu0 %v7698
  %7822 = vmatprep.subr.bf16.mxu0 0
  %7823 = vmatpush1.bf16.msra.mxu0 %v7699
  %7824 = vmatprep.subr.bf16.mxu0 0
  %7825 = vmatpush1.bf16.msra.mxu0 %v7700
  %7826 = vmatprep.subr.bf16.mxu0 0
  %7827 = vmatpush1.bf16.msra.mxu0 %v7701
  %7828 = vmatprep.subr.bf16.mxu0 0
  %7829 = vmatpush1.bf16.msra.mxu0 %v7702
  %7830 = vmatprep.subr.bf16.mxu0 0
  %7831 = vmatpush1.bf16.msra.mxu0 %v7703
  %7832 = vmatprep.subr.bf16.mxu0 0
  %7833 = vmatpush1.bf16.msra.mxu0 %v7704
  %7834 = vmatprep.subr.bf16.mxu0 0
  %7835 = vmatpush1.bf16.msra.mxu0 %v7705
  %7836 = vmatprep.subr.bf16.mxu0 0
  %7837 = vmatpush1.bf16.msra.mxu0 %v7706
  %7838 = vmatprep.subr.bf16.mxu0 0
  %7839 = vmatpush1.bf16.msra.mxu0 %v7707
  %7840 = vmatprep.mubr.bf16.mxu0 %v7396
  %7841 = vmatmul.mubr.bf16.gmra.mrb[0].mxu0 %v7392
  %v7842 = vpop.f32.mrb[0].mxu0
  %v7843 = vadd.f32 %v7803, %v7842
  %v7844 = vpop.f32.mrb[0].mxu0
  %v7845 = vpop.f32.mrb[0].mxu0
  %v7846 = vpop.f32.mrb[0].mxu0
  %7847 = vdwg.mxu0
  %7848 = vmatprep.subr.bf16.mxu0 0
  %7849 = vmatpush1.bf16.msra.mxu0 %v7708
  %7850 = vmatprep.subr.bf16.mxu0 0
  %7851 = vmatpush1.bf16.msra.mxu0 %v7709
  %7852 = vmatprep.subr.bf16.mxu0 0
  %7853 = vmatpush1.bf16.msra.mxu0 %v7710
  %7854 = vmatprep.subr.bf16.mxu0 0
  %7855 = vmatpush1.bf16.msra.mxu0 %v7711
  %7856 = vmatprep.subr.bf16.mxu0 0
  %7857 = vmatpush1.bf16.msra.mxu0 %v7712
  %7858 = vmatprep.subr.bf16.mxu0 0
  %7859 = vmatpush1.bf16.msra.mxu0 %v7713
  %7860 = vmatprep.subr.bf16.mxu0 0
  %7861 = vmatpush1.bf16.msra.mxu0 %v7714
  %7862 = vmatprep.subr.bf16.mxu0 0
  %7863 = vmatpush1.bf16.msra.mxu0 %v7715
  %7864 = vmatprep.subr.bf16.mxu0 0
  %7865 = vmatpush1.bf16.msra.mxu0 %v7716
  %7866 = vmatprep.subr.bf16.mxu0 0
  %7867 = vmatpush1.bf16.msra.mxu0 %v7717
  %7868 = vmatprep.subr.bf16.mxu0 0
  %7869 = vmatpush1.bf16.msra.mxu0 %v7718
  %7870 = vmatprep.subr.bf16.mxu0 0
  %7871 = vmatpush1.bf16.msra.mxu0 %v7719
  %7872 = vmatprep.subr.bf16.mxu0 0
  %7873 = vmatpush1.bf16.msra.mxu0 %v7720
  %7874 = vmatprep.subr.bf16.mxu0 0
  %7875 = vmatpush1.bf16.msra.mxu0 0
  %7876 = vmatprep.subr.bf16.mxu0 0
  %7877 = vmatpush1.bf16.msra.mxu0 0
  %7878 = vmatprep.subr.bf16.mxu0 0
  %7879 = vmatpush1.bf16.msra.mxu0 0
  %7880 = vmatprep.mubr.bf16.mxu0 %v7766
  %7881 = vmatmul.mubr.bf16.gmra.mrb[0].mxu0 %v7400
  %v7882 = vpop.f32.mrb[0].mxu0
  %v7883 = vadd.f32 %v7843, %v7882
  %v7884 = vpop.f32.mrb[0].mxu0
  %v7885 = vpop.f32.mrb[0].mxu0
  %v7886 = vpop.f32.mrb[0].mxu0
  %7887 = vdwg.mxu0
  %v7888 = vadd.f32 %v7340, %v7883
  %v7889 = vld [vmem:[#allocation2 + $0x30] sm:$0x30]
  %v7890 = vld [vmem:[#allocation2 + $0x38] sm:$0x30]
  %v7891 = vld [vmem:[#allocation2 + $0x40] sm:$0x30]
  %v7892 = vld [vmem:[#allocation2 + $0x48] sm:$0x30]
  %v7893 = vld [vmem:[#allocation2 + $0x50] sm:$0x30]
  %v7894 = vld [vmem:[#allocation2 + $0x58] sm:$0x30]
  %v7901 = vrot.slane %v7889, 4
  %v7902 = vrot.slane %v7890, 4
  %v7903 = vrot.slane %v7891, 4
  %v7904 = vrot.slane %v7892, 4
  %v7905 = vrot.slane %v7893, 4
  %v7906 = vrot.slane %v7894, 4
  %v7907 = vrot.slane %v7889, 2
  %v7908 = vrot.slane %v7890, 2
  %v7909 = vrot.slane %v7891, 2
  %v7910 = vrot.slane %v7892, 2
  %v7911 = vrot.slane %v7893, 2
  %v7912 = vrot.slane %v7894, 2
  %7913 = vrot.lane.b32.xlu0 %v7907, 80
  %v7914 = vpop.permute.xlu0 %7913
  %7915 = vrot.lane.b32.xlu0 %v7908, 80
  %v7916 = vpop.permute.xlu0 %7915
  %7917 = vrot.lane.b32.xlu0 %v7909, 80
  %v7918 = vpop.permute.xlu0 %7917
  %7919 = vrot.lane.b32.xlu0 %v7910, 80
  %v7920 = vpop.permute.xlu0 %7919
  %7921 = vrot.lane.b32.xlu0 %v7911, 80
  %v7922 = vpop.permute.xlu0 %7921
  %7923 = vrot.lane.b32.xlu0 %v7912, 80
  %v7924 = vpop.permute.xlu0 %7923
  %v7925 = vsel %vm1329, %v7914, %v7916
  %v7926 = vsel %vm1329, %v7916, %v7918
  %v7927 = vsel %vm1329, %v7918, %v7920
  %v7928 = vsel %vm1329, %v7920, %v7922
  %v7929 = vsel %vm1329, %v7922, %v7924
  %v7932 = vsel %vm1335, %v7901, %v7925
  %v7936 = vsel %vm1335, %v7902, %v7926
  %v7940 = vsel %vm1335, %v7903, %v7927
  %v7944 = vsel %vm1335, %v7904, %v7928
  %v7948 = vsel %vm1335, %v7905, %v7929
  %v7952 = vsel %vm1335, %v7906, %v7924
  %s7953 = scalar_lea.vmem %s3, 4320
  %v7954 = vld [vmem:[%s7953] sm:$0xf]
  %v7955 = vld [vmem:[%s7953 + $0x4] sm:$0xf]
  %v7956 = vld [vmem:[%s7953 + $0x8] sm:$0xf]
  %v7957 = vld [vmem:[%s7953 + $0xc] sm:$0xf]
  %v7958 = vld [vmem:[%s7953 + $0x10] sm:$0xf]
  %v7959 = vld [vmem:[%s7953 + $0x14] sm:$0xf]
  %v7960 = vld [vmem:[%s7953 + $0x18] sm:$0xf]
  %v7961 = vld [vmem:[%s7953 + $0x1c] sm:$0xf]
  %v7962 = vld [vmem:[%s7953 + $0x20] sm:$0xf]
  %v7963 = vld [vmem:[%s7953 + $0x24] sm:$0xf]
  %v7964 = vld [vmem:[%s7953 + $0x28] sm:$0xf]
  %v7965 = vld [vmem:[%s7953 + $0x2c] sm:$0xf]
  %v7966 = vld [vmem:[%s7953 + $0x30] sm:$0xf]
  %v7967 = vld [vmem:[%s7953 + $0x34] sm:$0xf]
  %v7968 = vld [vmem:[%s7953 + $0x38] sm:$0xf]
  %v7969 = vld [vmem:[%s7953 + $0x3c] sm:$0xf]
  %v7970 = vld [vmem:[%s7953 + $0x40] sm:$0xf]
  %v7971 = vld [vmem:[%s7953 + $0x44] sm:$0xf]
  %v7972 = vld [vmem:[%s7953 + $0x48] sm:$0xf]
  %v7973 = vld [vmem:[%s7953 + $0x4c] sm:$0xf]
  %v7974 = vld [vmem:[%s7953 + $0x50] sm:$0xf]
  %v7975 = vld [vmem:[%s7953 + $0x54] sm:$0xf]
  %v7976 = vld [vmem:[%s7953 + $0x58] sm:$0xf]
  %v7977 = vld [vmem:[%s7953 + $0x5c] sm:$0xf]
  %v7978 = vld [vmem:[%s7953 + $0x60] sm:$0xf]
  %v7979 = vld [vmem:[%s7953 + $0x64] sm:$0xf]
  %v7980 = vld [vmem:[%s7953 + $0x68] sm:$0xf]
  %v7981 = vld [vmem:[%s7953 + $0x6c] sm:$0xf]
  %v7982 = vld [vmem:[%s7953 + $0x70] sm:$0xf]
  %v7983 = vld [vmem:[%s7953 + $0x74] sm:$0xf]
  %v7984 = vld [vmem:[%s7953 + $0x78] sm:$0xf]
  %v7985 = vld [vmem:[%s7953 + $0x7c] sm:$0xf]
  %v7986 = vld [vmem:[%s7953 + $0x80] sm:$0xf]
  %v7987 = vld [vmem:[%s7953 + $0x84] sm:$0xf]
  %v7988 = vld [vmem:[%s7953 + $0x88] sm:$0xf]
  %v7989 = vld [vmem:[%s7953 + $0x8c] sm:$0xf]
  %v7990 = vld [vmem:[%s7953 + $0x90] sm:$0xf]
  %v7991 = vld [vmem:[%s7953 + $0x94] sm:$0xf]
  %v7992 = vld [vmem:[%s7953 + $0x98] sm:$0xf]
  %v7993 = vld [vmem:[%s7953 + $0x9c] sm:$0xf]
  %v7994 = vld [vmem:[%s7953 + $0xa0] sm:$0xf]
  %v7995 = vld [vmem:[%s7953 + $0xa4] sm:$0xf]
  %v7996 = vld [vmem:[%s7953 + $0xa8] sm:$0xf]
  %v7997 = vld [vmem:[%s7953 + $0xac] sm:$0xf]
  %v7998 = vld [vmem:[%s7953 + $0xb0] sm:$0xf]
  %v7999 = vld [vmem:[%s7953 + $0xb4] sm:$0xf]
  %v8000 = vld [vmem:[%s7953 + $0xb8] sm:$0xf]
  %v8001 = vld [vmem:[%s7953 + $0xbc] sm:$0xf]
  %v8002 = vld [vmem:[%s7953 + $0xc0] sm:$0xf]
  %v8003 = vld [vmem:[%s7953 + $0xc4] sm:$0xf]
  %v8004 = vld [vmem:[%s7953 + $0xc8] sm:$0xf]
  %v8005 = vld [vmem:[%s7953 + $0xcc] sm:$0xf]
  %v8006 = vld [vmem:[%s7953 + $0xd0] sm:$0xf]
  %v8007 = vld [vmem:[%s7953 + $0xd4] sm:$0xf]
  %v8008 = vld [vmem:[%s7953 + $0xd8] sm:$0xf]
  %v8009 = vld [vmem:[%s7953 + $0xdc] sm:$0xf]
  %v8010 = vld [vmem:[%s7953 + $0xe0] sm:$0xf]
  %v8011 = vld [vmem:[%s7953 + $0xe4] sm:$0xf]
  %v8012 = vld [vmem:[%s7953 + $0xe8] sm:$0xf]
  %v8013 = vld [vmem:[%s7953 + $0xec] sm:$0xf]
  %v8014 = vld [vmem:[%s7953 + $0xf0] sm:$0xf]
  %v8015 = vld [vmem:[%s7953 + $0xf4] sm:$0xf]
  %v8016 = vld [vmem:[%s7953 + $0xf8] sm:$0xf]
  %v8017 = vld [vmem:[%s7953 + $0xfc] sm:$0xf]
  %v8018 = vld [vmem:[%s7953 + $0x100] sm:$0xf]
  %v8019 = vld [vmem:[%s7953 + $0x104] sm:$0xf]
  %v8020 = vld [vmem:[%s7953 + $0x108] sm:$0xf]
  %v8021 = vld [vmem:[%s7953 + $0x10c] sm:$0xf]
  %v8022 = vld [vmem:[%s7953 + $0x110] sm:$0xf]
  %v8023 = vld [vmem:[%s7953 + $0x114] sm:$0xf]
  %v8024 = vld [vmem:[%s7953 + $0x118] sm:$0xf]
  %v8025 = vld [vmem:[%s7953 + $0x11c] sm:$0xf]
  %v8026 = vld [vmem:[%s7953 + $0x120] sm:$0xf]
  %v8027 = vld [vmem:[%s7953 + $0x124] sm:$0xf]
  %v8028 = vld [vmem:[%s7953 + $0x128] sm:$0xf]
  %v8029 = vld [vmem:[%s7953 + $0x12c] sm:$0xf]
  %v8030 = vld [vmem:[%s7953 + $0x130] sm:$0xf]
  %v8031 = vld [vmem:[%s7953 + $0x134] sm:$0xf]
  %v8032 = vld [vmem:[%s7953 + $0x138] sm:$0xf]
  %v8033 = vld [vmem:[%s7953 + $0x13c] sm:$0xf]
  %v8034 = vld [vmem:[%s7953 + $0x140] sm:$0xf]
  %v8035 = vld [vmem:[%s7953 + $0x144] sm:$0xf]
  %v8036 = vld [vmem:[%s7953 + $0x148] sm:$0xf]
  %v8037 = vld [vmem:[%s7953 + $0x14c] sm:$0xf]
  %v8038 = vld [vmem:[%s7953 + $0x150] sm:$0xf]
  %v8039 = vld [vmem:[%s7953 + $0x154] sm:$0xf]
  %v8040 = vld [vmem:[%s7953 + $0x158] sm:$0xf]
  %v8041 = vld [vmem:[%s7953 + $0x15c] sm:$0xf]
  %v8042 = vld [vmem:[%s7953 + $0x160] sm:$0xf]
  %v8043 = vld [vmem:[%s7953 + $0x164] sm:$0xf]
  %v8134 = vunpack.c.l.b16 %v7954
  %v8135 = vunpack.c.l.b16 %v7955
  %v8136 = vunpack.c.l.b16 %v7956
  %v8137 = vunpack.c.l.b16 %v7957
  %v8138 = vunpack.c.l.b16 %v7958
  %v8139 = vunpack.c.l.b16 %v7959
  %v8140 = vunpack.c.l.b16 %v7960
  %v8141 = vunpack.c.l.b16 %v7961
  %v8142 = vunpack.c.l.b16 %v7962
  %v8143 = vunpack.c.l.b16 %v7963
  %v8144 = vunpack.c.l.b16 %v7964
  %v8145 = vunpack.c.l.b16 %v7965
  %v8146 = vunpack.c.l.b16 %v7966
  %v8147 = vunpack.c.l.b16 %v7967
  %v8148 = vunpack.c.l.b16 %v7968
  %v8149 = vunpack.c.l.b16 %v7969
  %v8150 = vunpack.c.l.b16 %v7970
  %v8151 = vunpack.c.l.b16 %v7971
  %v8152 = vunpack.c.l.b16 %v7972
  %v8153 = vunpack.c.l.b16 %v7973
  %v8154 = vunpack.c.l.b16 %v7974
  %v8155 = vunpack.c.l.b16 %v7975
  %v8156 = vunpack.c.l.b16 %v7976
  %v8157 = vunpack.c.l.b16 %v7977
  %v8158 = vunpack.c.l.b16 %v7978
  %v8159 = vunpack.c.l.b16 %v7979
  %v8160 = vunpack.c.l.b16 %v7980
  %v8161 = vunpack.c.l.b16 %v7981
  %v8162 = vunpack.c.l.b16 %v7982
  %v8163 = vunpack.c.l.b16 %v7983
  %v8164 = vunpack.c.l.b16 %v7984
  %v8165 = vunpack.c.l.b16 %v7985
  %v8166 = vunpack.c.l.b16 %v7986
  %v8167 = vunpack.c.l.b16 %v7987
  %v8168 = vunpack.c.l.b16 %v7988
  %v8169 = vunpack.c.l.b16 %v7989
  %v8170 = vunpack.c.l.b16 %v7990
  %v8171 = vunpack.c.l.b16 %v7991
  %v8172 = vunpack.c.l.b16 %v7992
  %v8173 = vunpack.c.l.b16 %v7993
  %v8174 = vunpack.c.l.b16 %v7994
  %v8175 = vunpack.c.l.b16 %v7995
  %v8176 = vunpack.c.l.b16 %v7996
  %v8177 = vunpack.c.l.b16 %v7997
  %v8178 = vunpack.c.l.b16 %v7998
  %v8179 = vunpack.c.l.b16 %v7999
  %v8180 = vunpack.c.l.b16 %v8000
  %v8181 = vunpack.c.l.b16 %v8001
  %v8182 = vunpack.c.l.b16 %v8002
  %v8183 = vunpack.c.l.b16 %v8003
  %v8184 = vunpack.c.l.b16 %v8004
  %v8185 = vunpack.c.l.b16 %v8005
  %v8186 = vunpack.c.l.b16 %v8006
  %v8187 = vunpack.c.l.b16 %v8007
  %v8188 = vunpack.c.l.b16 %v8008
  %v8189 = vunpack.c.l.b16 %v8009
  %v8190 = vunpack.c.l.b16 %v8010
  %v8191 = vunpack.c.l.b16 %v8011
  %v8192 = vunpack.c.l.b16 %v8012
  %v8193 = vunpack.c.l.b16 %v8013
  %v8194 = vunpack.c.l.b16 %v8014
  %v8195 = vunpack.c.l.b16 %v8015
  %v8196 = vunpack.c.l.b16 %v8016
  %v8197 = vunpack.c.l.b16 %v8017
  %v8198 = vunpack.c.l.b16 %v8018
  %v8199 = vunpack.c.l.b16 %v8019
  %v8200 = vunpack.c.l.b16 %v8020
  %v8201 = vunpack.c.l.b16 %v8021
  %v8202 = vunpack.c.l.b16 %v8022
  %v8203 = vunpack.c.l.b16 %v8023
  %v8204 = vunpack.c.l.b16 %v8024
  %v8205 = vunpack.c.l.b16 %v8025
  %v8206 = vunpack.c.l.b16 %v8026
  %v8207 = vunpack.c.l.b16 %v8027
  %v8208 = vunpack.c.l.b16 %v8028
  %v8209 = vunpack.c.l.b16 %v8029
  %v8210 = vunpack.c.l.b16 %v8030
  %v8211 = vunpack.c.l.b16 %v8031
  %v8212 = vunpack.c.l.b16 %v8032
  %v8213 = vunpack.c.l.b16 %v8033
  %v8214 = vunpack.c.l.b16 %v8034
  %v8215 = vunpack.c.l.b16 %v8035
  %v8216 = vunpack.c.l.b16 %v8036
  %v8217 = vunpack.c.l.b16 %v8037
  %v8218 = vunpack.c.l.b16 %v8038
  %v8219 = vunpack.c.l.b16 %v8039
  %v8220 = vunpack.c.l.b16 %v8040
  %v8221 = vunpack.c.l.b16 %v8041
  %v8222 = vunpack.c.l.b16 %v8042
  %v8223 = vunpack.c.l.b16 %v8043
  %v8224 = vpack.c.b16 %v8135, %v8134
  %v8225 = vpack.c.b16 %v8137, %v8136
  %v8226 = vpack.c.b16 %v8139, %v8138
  %v8227 = vpack.c.b16 %v8141, %v8140
  %v8228 = vpack.c.b16 %v8143, %v8142
  %v8229 = vpack.c.b16 %v8145, %v8144
  %v8230 = vpack.c.b16 %v8147, %v8146
  %v8231 = vpack.c.b16 %v8149, %v8148
  %v8232 = vpack.c.b16 %v8151, %v8150
  %v8233 = vpack.c.b16 %v8153, %v8152
  %v8234 = vpack.c.b16 %v8155, %v8154
  %v8235 = vpack.c.b16 %v8157, %v8156
  %v8236 = vpack.c.b16 %v8159, %v8158
  %v8237 = vpack.c.b16 %v8161, %v8160
  %v8238 = vpack.c.b16 %v8163, %v8162
  %v8239 = vpack.c.b16 %v8165, %v8164
  %v8240 = vpack.c.b16 %v8167, %v8166
  %v8241 = vpack.c.b16 %v8169, %v8168
  %v8242 = vpack.c.b16 %v8171, %v8170
  %v8243 = vpack.c.b16 %v8173, %v8172
  %v8244 = vpack.c.b16 %v8175, %v8174
  %v8245 = vpack.c.b16 %v8177, %v8176
  %v8246 = vpack.c.b16 %v8179, %v8178
  %v8247 = vpack.c.b16 %v8181, %v8180
  %v8248 = vpack.c.b16 %v8183, %v8182
  %v8249 = vpack.c.b16 %v8185, %v8184
  %v8250 = vpack.c.b16 %v8187, %v8186
  %v8251 = vpack.c.b16 %v8189, %v8188
  %v8252 = vpack.c.b16 %v8191, %v8190
  %v8253 = vpack.c.b16 %v8193, %v8192
  %v8254 = vpack.c.b16 %v8195, %v8194
  %v8255 = vpack.c.b16 %v8197, %v8196
  %v8256 = vpack.c.b16 %v8199, %v8198
  %v8257 = vpack.c.b16 %v8201, %v8200
  %v8258 = vpack.c.b16 %v8203, %v8202
  %v8259 = vpack.c.b16 %v8205, %v8204
  %v8260 = vpack.c.b16 %v8207, %v8206
  %v8261 = vpack.c.b16 %v8209, %v8208
  %v8262 = vpack.c.b16 %v8211, %v8210
  %v8263 = vpack.c.b16 %v8213, %v8212
  %v8264 = vpack.c.b16 %v8215, %v8214
  %v8265 = vpack.c.b16 %v8217, %v8216
  %v8266 = vpack.c.b16 %v8219, %v8218
  %v8267 = vpack.c.b16 %v8221, %v8220
  %v8268 = vpack.c.b16 %v8223, %v8222
  %v8314 = vsel %vm1874, %v7952, 0
  %8316 = vmatprep.subr.bf16.mxu0 0
  %8317 = vmatpush1.bf16.msra.mxu0 %v8224
  %8318 = vmatprep.subr.bf16.mxu0 0
  %8319 = vmatpush1.bf16.msra.mxu0 %v8225
  %8320 = vmatprep.subr.bf16.mxu0 0
  %8321 = vmatpush1.bf16.msra.mxu0 %v8226
  %8322 = vmatprep.subr.bf16.mxu0 0
  %8323 = vmatpush1.bf16.msra.mxu0 %v8227
  %8324 = vmatprep.subr.bf16.mxu0 0
  %8325 = vmatpush1.bf16.msra.mxu0 %v8228
  %8326 = vmatprep.subr.bf16.mxu0 0
  %8327 = vmatpush1.bf16.msra.mxu0 %v8229
  %8328 = vmatprep.subr.bf16.mxu0 0
  %8329 = vmatpush1.bf16.msra.mxu0 %v8230
  %8330 = vmatprep.subr.bf16.mxu0 0
  %8331 = vmatpush1.bf16.msra.mxu0 %v8231
  %8332 = vmatprep.subr.bf16.mxu0 0
  %8333 = vmatpush1.bf16.msra.mxu0 %v8232
  %8334 = vmatprep.subr.bf16.mxu0 0
  %8335 = vmatpush1.bf16.msra.mxu0 %v8233
  %8336 = vmatprep.subr.bf16.mxu0 0
  %8337 = vmatpush1.bf16.msra.mxu0 %v8234
  %8338 = vmatprep.subr.bf16.mxu0 0
  %8339 = vmatpush1.bf16.msra.mxu0 %v8235
  %8340 = vmatprep.subr.bf16.mxu0 0
  %8341 = vmatpush1.bf16.msra.mxu0 %v8236
  %8342 = vmatprep.subr.bf16.mxu0 0
  %8343 = vmatpush1.bf16.msra.mxu0 %v8237
  %8344 = vmatprep.subr.bf16.mxu0 0
  %8345 = vmatpush1.bf16.msra.mxu0 %v8238
  %8346 = vmatprep.subr.bf16.mxu0 0
  %8347 = vmatpush1.bf16.msra.mxu0 %v8239
  %8348 = vmatprep.mubr.bf16.mxu0 %v7936
  %8349 = vmatmul.mubr.bf16.gmra.mrb[0].mxu0 %v7932
  %v8350 = vpop.f32.mrb[0].mxu0
  %v8351 = vadd.f32 0.0, %v8350
  %v8352 = vpop.f32.mrb[0].mxu0
  %v8353 = vpop.f32.mrb[0].mxu0
  %v8354 = vpop.f32.mrb[0].mxu0
  %8355 = vdwg.mxu0
  %8356 = vmatprep.subr.bf16.mxu0 0
  %8357 = vmatpush1.bf16.msra.mxu0 %v8240
  %8358 = vmatprep.subr.bf16.mxu0 0
  %8359 = vmatpush1.bf16.msra.mxu0 %v8241
  %8360 = vmatprep.subr.bf16.mxu0 0
  %8361 = vmatpush1.bf16.msra.mxu0 %v8242
  %8362 = vmatprep.subr.bf16.mxu0 0
  %8363 = vmatpush1.bf16.msra.mxu0 %v8243
  %8364 = vmatprep.subr.bf16.mxu0 0
  %8365 = vmatpush1.bf16.msra.mxu0 %v8244
  %8366 = vmatprep.subr.bf16.mxu0 0
  %8367 = vmatpush1.bf16.msra.mxu0 %v8245
  %8368 = vmatprep.subr.bf16.mxu0 0
  %8369 = vmatpush1.bf16.msra.mxu0 %v8246
  %8370 = vmatprep.subr.bf16.mxu0 0
  %8371 = vmatpush1.bf16.msra.mxu0 %v8247
  %8372 = vmatprep.subr.bf16.mxu0 0
  %8373 = vmatpush1.bf16.msra.mxu0 %v8248
  %8374 = vmatprep.subr.bf16.mxu0 0
  %8375 = vmatpush1.bf16.msra.mxu0 %v8249
  %8376 = vmatprep.subr.bf16.mxu0 0
  %8377 = vmatpush1.bf16.msra.mxu0 %v8250
  %8378 = vmatprep.subr.bf16.mxu0 0
  %8379 = vmatpush1.bf16.msra.mxu0 %v8251
  %8380 = vmatprep.subr.bf16.mxu0 0
  %8381 = vmatpush1.bf16.msra.mxu0 %v8252
  %8382 = vmatprep.subr.bf16.mxu0 0
  %8383 = vmatpush1.bf16.msra.mxu0 %v8253
  %8384 = vmatprep.subr.bf16.mxu0 0
  %8385 = vmatpush1.bf16.msra.mxu0 %v8254
  %8386 = vmatprep.subr.bf16.mxu0 0
  %8387 = vmatpush1.bf16.msra.mxu0 %v8255
  %8388 = vmatprep.mubr.bf16.mxu0 %v7944
  %8389 = vmatmul.mubr.bf16.gmra.mrb[0].mxu0 %v7940
  %v8390 = vpop.f32.mrb[0].mxu0
  %v8391 = vadd.f32 %v8351, %v8390
  %v8392 = vpop.f32.mrb[0].mxu0
  %v8393 = vpop.f32.mrb[0].mxu0
  %v8394 = vpop.f32.mrb[0].mxu0
  %8395 = vdwg.mxu0
  %8396 = vmatprep.subr.bf16.mxu0 0
  %8397 = vmatpush1.bf16.msra.mxu0 %v8256
  %8398 = vmatprep.subr.bf16.mxu0 0
  %8399 = vmatpush1.bf16.msra.mxu0 %v8257
  %8400 = vmatprep.subr.bf16.mxu0 0
  %8401 = vmatpush1.bf16.msra.mxu0 %v8258
  %8402 = vmatprep.subr.bf16.mxu0 0
  %8403 = vmatpush1.bf16.msra.mxu0 %v8259
  %8404 = vmatprep.subr.bf16.mxu0 0
  %8405 = vmatpush1.bf16.msra.mxu0 %v8260
  %8406 = vmatprep.subr.bf16.mxu0 0
  %8407 = vmatpush1.bf16.msra.mxu0 %v8261
  %8408 = vmatprep.subr.bf16.mxu0 0
  %8409 = vmatpush1.bf16.msra.mxu0 %v8262
  %8410 = vmatprep.subr.bf16.mxu0 0
  %8411 = vmatpush1.bf16.msra.mxu0 %v8263
  %8412 = vmatprep.subr.bf16.mxu0 0
  %8413 = vmatpush1.bf16.msra.mxu0 %v8264
  %8414 = vmatprep.subr.bf16.mxu0 0
  %8415 = vmatpush1.bf16.msra.mxu0 %v8265
  %8416 = vmatprep.subr.bf16.mxu0 0
  %8417 = vmatpush1.bf16.msra.mxu0 %v8266
  %8418 = vmatprep.subr.bf16.mxu0 0
  %8419 = vmatpush1.bf16.msra.mxu0 %v8267
  %8420 = vmatprep.subr.bf16.mxu0 0
  %8421 = vmatpush1.bf16.msra.mxu0 %v8268
  %8422 = vmatprep.subr.bf16.mxu0 0
  %8423 = vmatpush1.bf16.msra.mxu0 0
  %8424 = vmatprep.subr.bf16.mxu0 0
  %8425 = vmatpush1.bf16.msra.mxu0 0
  %8426 = vmatprep.subr.bf16.mxu0 0
  %8427 = vmatpush1.bf16.msra.mxu0 0
  %8428 = vmatprep.mubr.bf16.mxu0 %v8314
  %8429 = vmatmul.mubr.bf16.gmra.mrb[0].mxu0 %v7948
  %v8430 = vpop.f32.mrb[0].mxu0
  %v8431 = vadd.f32 %v8391, %v8430
  %v8432 = vpop.f32.mrb[0].mxu0
  %v8433 = vpop.f32.mrb[0].mxu0
  %v8434 = vpop.f32.mrb[0].mxu0
  %8435 = vdwg.mxu0
  %v8436 = vadd.f32 %v7888, %v8431
  %v8437 = vld [vmem:[#allocation2 + $0x30] sm:$0x60]
  %v8438 = vld [vmem:[#allocation2 + $0x38] sm:$0x60]
  %v8439 = vld [vmem:[#allocation2 + $0x40] sm:$0x60]
  %v8440 = vld [vmem:[#allocation2 + $0x48] sm:$0x60]
  %v8441 = vld [vmem:[#allocation2 + $0x50] sm:$0x60]
  %v8442 = vld [vmem:[#allocation2 + $0x58] sm:$0x60]
  %v8449 = vrot.slane %v8437, 5
  %v8450 = vrot.slane %v8438, 5
  %v8451 = vrot.slane %v8439, 5
  %v8452 = vrot.slane %v8440, 5
  %v8453 = vrot.slane %v8441, 5
  %v8454 = vrot.slane %v8442, 5
  %v8455 = vrot.slane %v8437, 3
  %v8456 = vrot.slane %v8438, 3
  %v8457 = vrot.slane %v8439, 3
  %v8458 = vrot.slane %v8440, 3
  %v8459 = vrot.slane %v8441, 3
  %v8460 = vrot.slane %v8442, 3
  %8461 = vrot.lane.b32.xlu0 %v8455, 80
  %v8462 = vpop.permute.xlu0 %8461
  %8463 = vrot.lane.b32.xlu0 %v8456, 80
  %v8464 = vpop.permute.xlu0 %8463
  %8465 = vrot.lane.b32.xlu0 %v8457, 80
  %v8466 = vpop.permute.xlu0 %8465
  %8467 = vrot.lane.b32.xlu0 %v8458, 80
  %v8468 = vpop.permute.xlu0 %8467
  %8469 = vrot.lane.b32.xlu0 %v8459, 80
  %v8470 = vpop.permute.xlu0 %8469
  %8471 = vrot.lane.b32.xlu0 %v8460, 80
  %v8472 = vpop.permute.xlu0 %8471
  %v8473 = vsel %vm1329, %v8462, %v8464
  %v8474 = vsel %vm1329, %v8464, %v8466
  %v8475 = vsel %vm1329, %v8466, %v8468
  %v8476 = vsel %vm1329, %v8468, %v8470
  %v8477 = vsel %vm1329, %v8470, %v8472
  %v8480 = vsel %vm1335, %v8449, %v8473
  %v8484 = vsel %vm1335, %v8450, %v8474
  %v8488 = vsel %vm1335, %v8451, %v8475
  %v8492 = vsel %vm1335, %v8452, %v8476
  %v8496 = vsel %vm1335, %v8453, %v8477
  %v8500 = vsel %vm1335, %v8454, %v8472
  %s8501 = scalar_lea.vmem %s3, 4680
  %v8502 = vld [vmem:[%s8501] sm:$0xf]
  %v8503 = vld [vmem:[%s8501 + $0x4] sm:$0xf]
  %v8504 = vld [vmem:[%s8501 + $0x8] sm:$0xf]
  %v8505 = vld [vmem:[%s8501 + $0xc] sm:$0xf]
  %v8506 = vld [vmem:[%s8501 + $0x10] sm:$0xf]
  %v8507 = vld [vmem:[%s8501 + $0x14] sm:$0xf]
  %v8508 = vld [vmem:[%s8501 + $0x18] sm:$0xf]
  %v8509 = vld [vmem:[%s8501 + $0x1c] sm:$0xf]
  %v8510 = vld [vmem:[%s8501 + $0x20] sm:$0xf]
  %v8511 = vld [vmem:[%s8501 + $0x24] sm:$0xf]
  %v8512 = vld [vmem:[%s8501 + $0x28] sm:$0xf]
  %v8513 = vld [vmem:[%s8501 + $0x2c] sm:$0xf]
  %v8514 = vld [vmem:[%s8501 + $0x30] sm:$0xf]
  %v8515 = vld [vmem:[%s8501 + $0x34] sm:$0xf]
  %v8516 = vld [vmem:[%s8501 + $0x38] sm:$0xf]
  %v8517 = vld [vmem:[%s8501 + $0x3c] sm:$0xf]
  %v8518 = vld [vmem:[%s8501 + $0x40] sm:$0xf]
  %v8519 = vld [vmem:[%s8501 + $0x44] sm:$0xf]
  %v8520 = vld [vmem:[%s8501 + $0x48] sm:$0xf]
  %v8521 = vld [vmem:[%s8501 + $0x4c] sm:$0xf]
  %v8522 = vld [vmem:[%s8501 + $0x50] sm:$0xf]
  %v8523 = vld [vmem:[%s8501 + $0x54] sm:$0xf]
  %v8524 = vld [vmem:[%s8501 + $0x58] sm:$0xf]
  %v8525 = vld [vmem:[%s8501 + $0x5c] sm:$0xf]
  %v8526 = vld [vmem:[%s8501 + $0x60] sm:$0xf]
  %v8527 = vld [vmem:[%s8501 + $0x64] sm:$0xf]
  %v8528 = vld [vmem:[%s8501 + $0x68] sm:$0xf]
  %v8529 = vld [vmem:[%s8501 + $0x6c] sm:$0xf]
  %v8530 = vld [vmem:[%s8501 + $0x70] sm:$0xf]
  %v8531 = vld [vmem:[%s8501 + $0x74] sm:$0xf]
  %v8532 = vld [vmem:[%s8501 + $0x78] sm:$0xf]
  %v8533 = vld [vmem:[%s8501 + $0x7c] sm:$0xf]
  %v8534 = vld [vmem:[%s8501 + $0x80] sm:$0xf]
  %v8535 = vld [vmem:[%s8501 + $0x84] sm:$0xf]
  %v8536 = vld [vmem:[%s8501 + $0x88] sm:$0xf]
  %v8537 = vld [vmem:[%s8501 + $0x8c] sm:$0xf]
  %v8538 = vld [vmem:[%s8501 + $0x90] sm:$0xf]
  %v8539 = vld [vmem:[%s8501 + $0x94] sm:$0xf]
  %v8540 = vld [vmem:[%s8501 + $0x98] sm:$0xf]
  %v8541 = vld [vmem:[%s8501 + $0x9c] sm:$0xf]
  %v8542 = vld [vmem:[%s8501 + $0xa0] sm:$0xf]
  %v8543 = vld [vmem:[%s8501 + $0xa4] sm:$0xf]
  %v8544 = vld [vmem:[%s8501 + $0xa8] sm:$0xf]
  %v8545 = vld [vmem:[%s8501 + $0xac] sm:$0xf]
  %v8546 = vld [vmem:[%s8501 + $0xb0] sm:$0xf]
  %v8547 = vld [vmem:[%s8501 + $0xb4] sm:$0xf]
  %v8548 = vld [vmem:[%s8501 + $0xb8] sm:$0xf]
  %v8549 = vld [vmem:[%s8501 + $0xbc] sm:$0xf]
  %v8550 = vld [vmem:[%s8501 + $0xc0] sm:$0xf]
  %v8551 = vld [vmem:[%s8501 + $0xc4] sm:$0xf]
  %v8552 = vld [vmem:[%s8501 + $0xc8] sm:$0xf]
  %v8553 = vld [vmem:[%s8501 + $0xcc] sm:$0xf]
  %v8554 = vld [vmem:[%s8501 + $0xd0] sm:$0xf]
  %v8555 = vld [vmem:[%s8501 + $0xd4] sm:$0xf]
  %v8556 = vld [vmem:[%s8501 + $0xd8] sm:$0xf]
  %v8557 = vld [vmem:[%s8501 + $0xdc] sm:$0xf]
  %v8558 = vld [vmem:[%s8501 + $0xe0] sm:$0xf]
  %v8559 = vld [vmem:[%s8501 + $0xe4] sm:$0xf]
  %v8560 = vld [vmem:[%s8501 + $0xe8] sm:$0xf]
  %v8561 = vld [vmem:[%s8501 + $0xec] sm:$0xf]
  %v8562 = vld [vmem:[%s8501 + $0xf0] sm:$0xf]
  %v8563 = vld [vmem:[%s8501 + $0xf4] sm:$0xf]
  %v8564 = vld [vmem:[%s8501 + $0xf8] sm:$0xf]
  %v8565 = vld [vmem:[%s8501 + $0xfc] sm:$0xf]
  %v8566 = vld [vmem:[%s8501 + $0x100] sm:$0xf]
  %v8567 = vld [vmem:[%s8501 + $0x104] sm:$0xf]
  %v8568 = vld [vmem:[%s8501 + $0x108] sm:$0xf]
  %v8569 = vld [vmem:[%s8501 + $0x10c] sm:$0xf]
  %v8570 = vld [vmem:[%s8501 + $0x110] sm:$0xf]
  %v8571 = vld [vmem:[%s8501 + $0x114] sm:$0xf]
  %v8572 = vld [vmem:[%s8501 + $0x118] sm:$0xf]
  %v8573 = vld [vmem:[%s8501 + $0x11c] sm:$0xf]
  %v8574 = vld [vmem:[%s8501 + $0x120] sm:$0xf]
  %v8575 = vld [vmem:[%s8501 + $0x124] sm:$0xf]
  %v8576 = vld [vmem:[%s8501 + $0x128] sm:$0xf]
  %v8577 = vld [vmem:[%s8501 + $0x12c] sm:$0xf]
  %v8578 = vld [vmem:[%s8501 + $0x130] sm:$0xf]
  %v8579 = vld [vmem:[%s8501 + $0x134] sm:$0xf]
  %v8580 = vld [vmem:[%s8501 + $0x138] sm:$0xf]
  %v8581 = vld [vmem:[%s8501 + $0x13c] sm:$0xf]
  %v8582 = vld [vmem:[%s8501 + $0x140] sm:$0xf]
  %v8583 = vld [vmem:[%s8501 + $0x144] sm:$0xf]
  %v8584 = vld [vmem:[%s8501 + $0x148] sm:$0xf]
  %v8585 = vld [vmem:[%s8501 + $0x14c] sm:$0xf]
  %v8586 = vld [vmem:[%s8501 + $0x150] sm:$0xf]
  %v8587 = vld [vmem:[%s8501 + $0x154] sm:$0xf]
  %v8588 = vld [vmem:[%s8501 + $0x158] sm:$0xf]
  %v8589 = vld [vmem:[%s8501 + $0x15c] sm:$0xf]
  %v8590 = vld [vmem:[%s8501 + $0x160] sm:$0xf]
  %v8591 = vld [vmem:[%s8501 + $0x164] sm:$0xf]
  %v8682 = vunpack.c.l.b16 %v8502
  %v8683 = vunpack.c.l.b16 %v8503
  %v8684 = vunpack.c.l.b16 %v8504
  %v8685 = vunpack.c.l.b16 %v8505
  %v8686 = vunpack.c.l.b16 %v8506
  %v8687 = vunpack.c.l.b16 %v8507
  %v8688 = vunpack.c.l.b16 %v8508
  %v8689 = vunpack.c.l.b16 %v8509
  %v8690 = vunpack.c.l.b16 %v8510
  %v8691 = vunpack.c.l.b16 %v8511
  %v8692 = vunpack.c.l.b16 %v8512
  %v8693 = vunpack.c.l.b16 %v8513
  %v8694 = vunpack.c.l.b16 %v8514
  %v8695 = vunpack.c.l.b16 %v8515
  %v8696 = vunpack.c.l.b16 %v8516
  %v8697 = vunpack.c.l.b16 %v8517
  %v8698 = vunpack.c.l.b16 %v8518
  %v8699 = vunpack.c.l.b16 %v8519
  %v8700 = vunpack.c.l.b16 %v8520
  %v8701 = vunpack.c.l.b16 %v8521
  %v8702 = vunpack.c.l.b16 %v8522
  %v8703 = vunpack.c.l.b16 %v8523
  %v8704 = vunpack.c.l.b16 %v8524
  %v8705 = vunpack.c.l.b16 %v8525
  %v8706 = vunpack.c.l.b16 %v8526
  %v8707 = vunpack.c.l.b16 %v8527
  %v8708 = vunpack.c.l.b16 %v8528
  %v8709 = vunpack.c.l.b16 %v8529
  %v8710 = vunpack.c.l.b16 %v8530
  %v8711 = vunpack.c.l.b16 %v8531
  %v8712 = vunpack.c.l.b16 %v8532
  %v8713 = vunpack.c.l.b16 %v8533
  %v8714 = vunpack.c.l.b16 %v8534
  %v8715 = vunpack.c.l.b16 %v8535
  %v8716 = vunpack.c.l.b16 %v8536
  %v8717 = vunpack.c.l.b16 %v8537
  %v8718 = vunpack.c.l.b16 %v8538
  %v8719 = vunpack.c.l.b16 %v8539
  %v8720 = vunpack.c.l.b16 %v8540
  %v8721 = vunpack.c.l.b16 %v8541
  %v8722 = vunpack.c.l.b16 %v8542
  %v8723 = vunpack.c.l.b16 %v8543
  %v8724 = vunpack.c.l.b16 %v8544
  %v8725 = vunpack.c.l.b16 %v8545
  %v8726 = vunpack.c.l.b16 %v8546
  %v8727 = vunpack.c.l.b16 %v8547
  %v8728 = vunpack.c.l.b16 %v8548
  %v8729 = vunpack.c.l.b16 %v8549
  %v8730 = vunpack.c.l.b16 %v8550
  %v8731 = vunpack.c.l.b16 %v8551
  %v8732 = vunpack.c.l.b16 %v8552
  %v8733 = vunpack.c.l.b16 %v8553
  %v8734 = vunpack.c.l.b16 %v8554
  %v8735 = vunpack.c.l.b16 %v8555
  %v8736 = vunpack.c.l.b16 %v8556
  %v8737 = vunpack.c.l.b16 %v8557
  %v8738 = vunpack.c.l.b16 %v8558
  %v8739 = vunpack.c.l.b16 %v8559
  %v8740 = vunpack.c.l.b16 %v8560
  %v8741 = vunpack.c.l.b16 %v8561
  %v8742 = vunpack.c.l.b16 %v8562
  %v8743 = vunpack.c.l.b16 %v8563
  %v8744 = vunpack.c.l.b16 %v8564
  %v8745 = vunpack.c.l.b16 %v8565
  %v8746 = vunpack.c.l.b16 %v8566
  %v8747 = vunpack.c.l.b16 %v8567
  %v8748 = vunpack.c.l.b16 %v8568
  %v8749 = vunpack.c.l.b16 %v8569
  %v8750 = vunpack.c.l.b16 %v8570
  %v8751 = vunpack.c.l.b16 %v8571
  %v8752 = vunpack.c.l.b16 %v8572
  %v8753 = vunpack.c.l.b16 %v8573
  %v8754 = vunpack.c.l.b16 %v8574
  %v8755 = vunpack.c.l.b16 %v8575
  %v8756 = vunpack.c.l.b16 %v8576
  %v8757 = vunpack.c.l.b16 %v8577
  %v8758 = vunpack.c.l.b16 %v8578
  %v8759 = vunpack.c.l.b16 %v8579
  %v8760 = vunpack.c.l.b16 %v8580
  %v8761 = vunpack.c.l.b16 %v8581
  %v8762 = vunpack.c.l.b16 %v8582
  %v8763 = vunpack.c.l.b16 %v8583
  %v8764 = vunpack.c.l.b16 %v8584
  %v8765 = vunpack.c.l.b16 %v8585
  %v8766 = vunpack.c.l.b16 %v8586
  %v8767 = vunpack.c.l.b16 %v8587
  %v8768 = vunpack.c.l.b16 %v8588
  %v8769 = vunpack.c.l.b16 %v8589
  %v8770 = vunpack.c.l.b16 %v8590
  %v8771 = vunpack.c.l.b16 %v8591
  %v8772 = vpack.c.b16 %v8683, %v8682
  %v8773 = vpack.c.b16 %v8685, %v8684
  %v8774 = vpack.c.b16 %v8687, %v8686
  %v8775 = vpack.c.b16 %v8689, %v8688
  %v8776 = vpack.c.b16 %v8691, %v8690
  %v8777 = vpack.c.b16 %v8693, %v8692
  %v8778 = vpack.c.b16 %v8695, %v8694
  %v8779 = vpack.c.b16 %v8697, %v8696
  %v8780 = vpack.c.b16 %v8699, %v8698
  %v8781 = vpack.c.b16 %v8701, %v8700
  %v8782 = vpack.c.b16 %v8703, %v8702
  %v8783 = vpack.c.b16 %v8705, %v8704
  %v8784 = vpack.c.b16 %v8707, %v8706
  %v8785 = vpack.c.b16 %v8709, %v8708
  %v8786 = vpack.c.b16 %v8711, %v8710
  %v8787 = vpack.c.b16 %v8713, %v8712
  %v8788 = vpack.c.b16 %v8715, %v8714
  %v8789 = vpack.c.b16 %v8717, %v8716
  %v8790 = vpack.c.b16 %v8719, %v8718
  %v8791 = vpack.c.b16 %v8721, %v8720
  %v8792 = vpack.c.b16 %v8723, %v8722
  %v8793 = vpack.c.b16 %v8725, %v8724
  %v8794 = vpack.c.b16 %v8727, %v8726
  %v8795 = vpack.c.b16 %v8729, %v8728
  %v8796 = vpack.c.b16 %v8731, %v8730
  %v8797 = vpack.c.b16 %v8733, %v8732
  %v8798 = vpack.c.b16 %v8735, %v8734
  %v8799 = vpack.c.b16 %v8737, %v8736
  %v8800 = vpack.c.b16 %v8739, %v8738
  %v8801 = vpack.c.b16 %v8741, %v8740
  %v8802 = vpack.c.b16 %v8743, %v8742
  %v8803 = vpack.c.b16 %v8745, %v8744
  %v8804 = vpack.c.b16 %v8747, %v8746
  %v8805 = vpack.c.b16 %v8749, %v8748
  %v8806 = vpack.c.b16 %v8751, %v8750
  %v8807 = vpack.c.b16 %v8753, %v8752
  %v8808 = vpack.c.b16 %v8755, %v8754
  %v8809 = vpack.c.b16 %v8757, %v8756
  %v8810 = vpack.c.b16 %v8759, %v8758
  %v8811 = vpack.c.b16 %v8761, %v8760
  %v8812 = vpack.c.b16 %v8763, %v8762
  %v8813 = vpack.c.b16 %v8765, %v8764
  %v8814 = vpack.c.b16 %v8767, %v8766
  %v8815 = vpack.c.b16 %v8769, %v8768
  %v8816 = vpack.c.b16 %v8771, %v8770
  %v8862 = vsel %vm1874, %v8500, 0
  %8864 = vmatprep.subr.bf16.mxu0 0
  %8865 = vmatpush1.bf16.msra.mxu0 %v8772
  %8866 = vmatprep.subr.bf16.mxu0 0
  %8867 = vmatpush1.bf16.msra.mxu0 %v8773
  %8868 = vmatprep.subr.bf16.mxu0 0
  %8869 = vmatpush1.bf16.msra.mxu0 %v8774
  %8870 = vmatprep.subr.bf16.mxu0 0
  %8871 = vmatpush1.bf16.msra.mxu0 %v8775
  %8872 = vmatprep.subr.bf16.mxu0 0
  %8873 = vmatpush1.bf16.msra.mxu0 %v8776
  %8874 = vmatprep.subr.bf16.mxu0 0
  %8875 = vmatpush1.bf16.msra.mxu0 %v8777
  %8876 = vmatprep.subr.bf16.mxu0 0
  %8877 = vmatpush1.bf16.msra.mxu0 %v8778
  %8878 = vmatprep.subr.bf16.mxu0 0
  %8879 = vmatpush1.bf16.msra.mxu0 %v8779
  %8880 = vmatprep.subr.bf16.mxu0 0
  %8881 = vmatpush1.bf16.msra.mxu0 %v8780
  %8882 = vmatprep.subr.bf16.mxu0 0
  %8883 = vmatpush1.bf16.msra.mxu0 %v8781
  %8884 = vmatprep.subr.bf16.mxu0 0
  %8885 = vmatpush1.bf16.msra.mxu0 %v8782
  %8886 = vmatprep.subr.bf16.mxu0 0
  %8887 = vmatpush1.bf16.msra.mxu0 %v8783
  %8888 = vmatprep.subr.bf16.mxu0 0
  %8889 = vmatpush1.bf16.msra.mxu0 %v8784
  %8890 = vmatprep.subr.bf16.mxu0 0
  %8891 = vmatpush1.bf16.msra.mxu0 %v8785
  %8892 = vmatprep.subr.bf16.mxu0 0
  %8893 = vmatpush1.bf16.msra.mxu0 %v8786
  %8894 = vmatprep.subr.bf16.mxu0 0
  %8895 = vmatpush1.bf16.msra.mxu0 %v8787
  %8896 = vmatprep.mubr.bf16.mxu0 %v8484
  %8897 = vmatmul.mubr.bf16.gmra.mrb[0].mxu0 %v8480
  %v8898 = vpop.f32.mrb[0].mxu0
  %v8899 = vadd.f32 0.0, %v8898
  %v8900 = vpop.f32.mrb[0].mxu0
  %v8901 = vpop.f32.mrb[0].mxu0
  %v8902 = vpop.f32.mrb[0].mxu0
  %8903 = vdwg.mxu0
  %8904 = vmatprep.subr.bf16.mxu0 0
  %8905 = vmatpush1.bf16.msra.mxu0 %v8788
  %8906 = vmatprep.subr.bf16.mxu0 0
  %8907 = vmatpush1.bf16.msra.mxu0 %v8789
  %8908 = vmatprep.subr.bf16.mxu0 0
  %8909 = vmatpush1.bf16.msra.mxu0 %v8790
  %8910 = vmatprep.subr.bf16.mxu0 0
  %8911 = vmatpush1.bf16.msra.mxu0 %v8791
  %8912 = vmatprep.subr.bf16.mxu0 0
  %8913 = vmatpush1.bf16.msra.mxu0 %v8792
  %8914 = vmatprep.subr.bf16.mxu0 0
  %8915 = vmatpush1.bf16.msra.mxu0 %v8793
  %8916 = vmatprep.subr.bf16.mxu0 0
  %8917 = vmatpush1.bf16.msra.mxu0 %v8794
  %8918 = vmatprep.subr.bf16.mxu0 0
  %8919 = vmatpush1.bf16.msra.mxu0 %v8795
  %8920 = vmatprep.subr.bf16.mxu0 0
  %8921 = vmatpush1.bf16.msra.mxu0 %v8796
  %8922 = vmatprep.subr.bf16.mxu0 0
  %8923 = vmatpush1.bf16.msra.mxu0 %v8797
  %8924 = vmatprep.subr.bf16.mxu0 0
  %8925 = vmatpush1.bf16.msra.mxu0 %v8798
  %8926 = vmatprep.subr.bf16.mxu0 0
  %8927 = vmatpush1.bf16.msra.mxu0 %v8799
  %8928 = vmatprep.subr.bf16.mxu0 0
  %8929 = vmatpush1.bf16.msra.mxu0 %v8800
  %8930 = vmatprep.subr.bf16.mxu0 0
  %8931 = vmatpush1.bf16.msra.mxu0 %v8801
  %8932 = vmatprep.subr.bf16.mxu0 0
  %8933 = vmatpush1.bf16.msra.mxu0 %v8802
  %8934 = vmatprep.subr.bf16.mxu0 0
  %8935 = vmatpush1.bf16.msra.mxu0 %v8803
  %8936 = vmatprep.mubr.bf16.mxu0 %v8492
  %8937 = vmatmul.mubr.bf16.gmra.mrb[0].mxu0 %v8488
  %v8938 = vpop.f32.mrb[0].mxu0
  %v8939 = vadd.f32 %v8899, %v8938
  %v8940 = vpop.f32.mrb[0].mxu0
  %v8941 = vpop.f32.mrb[0].mxu0
  %v8942 = vpop.f32.mrb[0].mxu0
  %8943 = vdwg.mxu0
  %8944 = vmatprep.subr.bf16.mxu0 0
  %8945 = vmatpush1.bf16.msra.mxu0 %v8804
  %8946 = vmatprep.subr.bf16.mxu0 0
  %8947 = vmatpush1.bf16.msra.mxu0 %v8805
  %8948 = vmatprep.subr.bf16.mxu0 0
  %8949 = vmatpush1.bf16.msra.mxu0 %v8806
  %8950 = vmatprep.subr.bf16.mxu0 0
  %8951 = vmatpush1.bf16.msra.mxu0 %v8807
  %8952 = vmatprep.subr.bf16.mxu0 0
  %8953 = vmatpush1.bf16.msra.mxu0 %v8808
  %8954 = vmatprep.subr.bf16.mxu0 0
  %8955 = vmatpush1.bf16.msra.mxu0 %v8809
  %8956 = vmatprep.subr.bf16.mxu0 0
  %8957 = vmatpush1.bf16.msra.mxu0 %v8810
  %8958 = vmatprep.subr.bf16.mxu0 0
  %8959 = vmatpush1.bf16.msra.mxu0 %v8811
  %8960 = vmatprep.subr.bf16.mxu0 0
  %8961 = vmatpush1.bf16.msra.mxu0 %v8812
  %8962 = vmatprep.subr.bf16.mxu0 0
  %8963 = vmatpush1.bf16.msra.mxu0 %v8813
  %8964 = vmatprep.subr.bf16.mxu0 0
  %8965 = vmatpush1.bf16.msra.mxu0 %v8814
  %8966 = vmatprep.subr.bf16.mxu0 0
  %8967 = vmatpush1.bf16.msra.mxu0 %v8815
  %8968 = vmatprep.subr.bf16.mxu0 0
  %8969 = vmatpush1.bf16.msra.mxu0 %v8816
  %8970 = vmatprep.subr.bf16.mxu0 0
  %8971 = vmatpush1.bf16.msra.mxu0 0
  %8972 = vmatprep.subr.bf16.mxu0 0
  %8973 = vmatpush1.bf16.msra.mxu0 0
  %8974 = vmatprep.subr.bf16.mxu0 0
  %8975 = vmatpush1.bf16.msra.mxu0 0
  %8976 = vmatprep.mubr.bf16.mxu0 %v8862
  %8977 = vmatmul.mubr.bf16.gmra.mrb[0].mxu0 %v8496
  %v8978 = vpop.f32.mrb[0].mxu0
  %v8979 = vadd.f32 %v8939, %v8978
  %v8980 = vpop.f32.mrb[0].mxu0
  %v8981 = vpop.f32.mrb[0].mxu0
  %v8982 = vpop.f32.mrb[0].mxu0
  %8983 = vdwg.mxu0
  %v8984 = vadd.f32 %v8436, %v8979
  %v8985 = vld [vmem:[#allocation2 + $0x30] sm:$0xc0]
  %v8986 = vld [vmem:[#allocation2 + $0x38] sm:$0xc0]
  %v8987 = vld [vmem:[#allocation2 + $0x40] sm:$0xc0]
  %v8988 = vld [vmem:[#allocation2 + $0x48] sm:$0xc0]
  %v8989 = vld [vmem:[#allocation2 + $0x50] sm:$0xc0]
  %v8990 = vld [vmem:[#allocation2 + $0x58] sm:$0xc0]
  %v8997 = vrot.slane %v8985, 6
  %v8998 = vrot.slane %v8986, 6
  %v8999 = vrot.slane %v8987, 6
  %v9000 = vrot.slane %v8988, 6
  %v9001 = vrot.slane %v8989, 6
  %v9002 = vrot.slane %v8990, 6
  %v9003 = vrot.slane %v8985, 4
  %v9004 = vrot.slane %v8986, 4
  %v9005 = vrot.slane %v8987, 4
  %v9006 = vrot.slane %v8988, 4
  %v9007 = vrot.slane %v8989, 4
  %v9008 = vrot.slane %v8990, 4
  %9009 = vrot.lane.b32.xlu0 %v9003, 80
  %v9010 = vpop.permute.xlu0 %9009
  %9011 = vrot.lane.b32.xlu0 %v9004, 80
  %v9012 = vpop.permute.xlu0 %9011
  %9013 = vrot.lane.b32.xlu0 %v9005, 80
  %v9014 = vpop.permute.xlu0 %9013
  %9015 = vrot.lane.b32.xlu0 %v9006, 80
  %v9016 = vpop.permute.xlu0 %9015
  %9017 = vrot.lane.b32.xlu0 %v9007, 80
  %v9018 = vpop.permute.xlu0 %9017
  %9019 = vrot.lane.b32.xlu0 %v9008, 80
  %v9020 = vpop.permute.xlu0 %9019
  %v9021 = vsel %vm1329, %v9010, %v9012
  %v9022 = vsel %vm1329, %v9012, %v9014
  %v9023 = vsel %vm1329, %v9014, %v9016
  %v9024 = vsel %vm1329, %v9016, %v9018
  %v9025 = vsel %vm1329, %v9018, %v9020
  %v9028 = vsel %vm1335, %v8997, %v9021
  %v9032 = vsel %vm1335, %v8998, %v9022
  %v9036 = vsel %vm1335, %v8999, %v9023
  %v9040 = vsel %vm1335, %v9000, %v9024
  %v9044 = vsel %vm1335, %v9001, %v9025
  %v9048 = vsel %vm1335, %v9002, %v9020
  %s9049 = scalar_lea.vmem %s3, 5040
  %v9050 = vld [vmem:[%s9049] sm:$0xf]
  %v9051 = vld [vmem:[%s9049 + $0x4] sm:$0xf]
  %v9052 = vld [vmem:[%s9049 + $0x8] sm:$0xf]
  %v9053 = vld [vmem:[%s9049 + $0xc] sm:$0xf]
  %v9054 = vld [vmem:[%s9049 + $0x10] sm:$0xf]
  %v9055 = vld [vmem:[%s9049 + $0x14] sm:$0xf]
  %v9056 = vld [vmem:[%s9049 + $0x18] sm:$0xf]
  %v9057 = vld [vmem:[%s9049 + $0x1c] sm:$0xf]
  %v9058 = vld [vmem:[%s9049 + $0x20] sm:$0xf]
  %v9059 = vld [vmem:[%s9049 + $0x24] sm:$0xf]
  %v9060 = vld [vmem:[%s9049 + $0x28] sm:$0xf]
  %v9061 = vld [vmem:[%s9049 + $0x2c] sm:$0xf]
  %v9062 = vld [vmem:[%s9049 + $0x30] sm:$0xf]
  %v9063 = vld [vmem:[%s9049 + $0x34] sm:$0xf]
  %v9064 = vld [vmem:[%s9049 + $0x38] sm:$0xf]
  %v9065 = vld [vmem:[%s9049 + $0x3c] sm:$0xf]
  %v9066 = vld [vmem:[%s9049 + $0x40] sm:$0xf]
  %v9067 = vld [vmem:[%s9049 + $0x44] sm:$0xf]
  %v9068 = vld [vmem:[%s9049 + $0x48] sm:$0xf]
  %v9069 = vld [vmem:[%s9049 + $0x4c] sm:$0xf]
  %v9070 = vld [vmem:[%s9049 + $0x50] sm:$0xf]
  %v9071 = vld [vmem:[%s9049 + $0x54] sm:$0xf]
  %v9072 = vld [vmem:[%s9049 + $0x58] sm:$0xf]
  %v9073 = vld [vmem:[%s9049 + $0x5c] sm:$0xf]
  %v9074 = vld [vmem:[%s9049 + $0x60] sm:$0xf]
  %v9075 = vld [vmem:[%s9049 + $0x64] sm:$0xf]
  %v9076 = vld [vmem:[%s9049 + $0x68] sm:$0xf]
  %v9077 = vld [vmem:[%s9049 + $0x6c] sm:$0xf]
  %v9078 = vld [vmem:[%s9049 + $0x70] sm:$0xf]
  %v9079 = vld [vmem:[%s9049 + $0x74] sm:$0xf]
  %v9080 = vld [vmem:[%s9049 + $0x78] sm:$0xf]
  %v9081 = vld [vmem:[%s9049 + $0x7c] sm:$0xf]
  %v9082 = vld [vmem:[%s9049 + $0x80] sm:$0xf]
  %v9083 = vld [vmem:[%s9049 + $0x84] sm:$0xf]
  %v9084 = vld [vmem:[%s9049 + $0x88] sm:$0xf]
  %v9085 = vld [vmem:[%s9049 + $0x8c] sm:$0xf]
  %v9086 = vld [vmem:[%s9049 + $0x90] sm:$0xf]
  %v9087 = vld [vmem:[%s9049 + $0x94] sm:$0xf]
  %v9088 = vld [vmem:[%s9049 + $0x98] sm:$0xf]
  %v9089 = vld [vmem:[%s9049 + $0x9c] sm:$0xf]
  %v9090 = vld [vmem:[%s9049 + $0xa0] sm:$0xf]
  %v9091 = vld [vmem:[%s9049 + $0xa4] sm:$0xf]
  %v9092 = vld [vmem:[%s9049 + $0xa8] sm:$0xf]
  %v9093 = vld [vmem:[%s9049 + $0xac] sm:$0xf]
  %v9094 = vld [vmem:[%s9049 + $0xb0] sm:$0xf]
  %v9095 = vld [vmem:[%s9049 + $0xb4] sm:$0xf]
  %v9096 = vld [vmem:[%s9049 + $0xb8] sm:$0xf]
  %v9097 = vld [vmem:[%s9049 + $0xbc] sm:$0xf]
  %v9098 = vld [vmem:[%s9049 + $0xc0] sm:$0xf]
  %v9099 = vld [vmem:[%s9049 + $0xc4] sm:$0xf]
  %v9100 = vld [vmem:[%s9049 + $0xc8] sm:$0xf]
  %v9101 = vld [vmem:[%s9049 + $0xcc] sm:$0xf]
  %v9102 = vld [vmem:[%s9049 + $0xd0] sm:$0xf]
  %v9103 = vld [vmem:[%s9049 + $0xd4] sm:$0xf]
  %v9104 = vld [vmem:[%s9049 + $0xd8] sm:$0xf]
  %v9105 = vld [vmem:[%s9049 + $0xdc] sm:$0xf]
  %v9106 = vld [vmem:[%s9049 + $0xe0] sm:$0xf]
  %v9107 = vld [vmem:[%s9049 + $0xe4] sm:$0xf]
  %v9108 = vld [vmem:[%s9049 + $0xe8] sm:$0xf]
  %v9109 = vld [vmem:[%s9049 + $0xec] sm:$0xf]
  %v9110 = vld [vmem:[%s9049 + $0xf0] sm:$0xf]
  %v9111 = vld [vmem:[%s9049 + $0xf4] sm:$0xf]
  %v9112 = vld [vmem:[%s9049 + $0xf8] sm:$0xf]
  %v9113 = vld [vmem:[%s9049 + $0xfc] sm:$0xf]
  %v9114 = vld [vmem:[%s9049 + $0x100] sm:$0xf]
  %v9115 = vld [vmem:[%s9049 + $0x104] sm:$0xf]
  %v9116 = vld [vmem:[%s9049 + $0x108] sm:$0xf]
  %v9117 = vld [vmem:[%s9049 + $0x10c] sm:$0xf]
  %v9118 = vld [vmem:[%s9049 + $0x110] sm:$0xf]
  %v9119 = vld [vmem:[%s9049 + $0x114] sm:$0xf]
  %v9120 = vld [vmem:[%s9049 + $0x118] sm:$0xf]
  %v9121 = vld [vmem:[%s9049 + $0x11c] sm:$0xf]
  %v9122 = vld [vmem:[%s9049 + $0x120] sm:$0xf]
  %v9123 = vld [vmem:[%s9049 + $0x124] sm:$0xf]
  %v9124 = vld [vmem:[%s9049 + $0x128] sm:$0xf]
  %v9125 = vld [vmem:[%s9049 + $0x12c] sm:$0xf]
  %v9126 = vld [vmem:[%s9049 + $0x130] sm:$0xf]
  %v9127 = vld [vmem:[%s9049 + $0x134] sm:$0xf]
  %v9128 = vld [vmem:[%s9049 + $0x138] sm:$0xf]
  %v9129 = vld [vmem:[%s9049 + $0x13c] sm:$0xf]
  %v9130 = vld [vmem:[%s9049 + $0x140] sm:$0xf]
  %v9131 = vld [vmem:[%s9049 + $0x144] sm:$0xf]
  %v9132 = vld [vmem:[%s9049 + $0x148] sm:$0xf]
  %v9133 = vld [vmem:[%s9049 + $0x14c] sm:$0xf]
  %v9134 = vld [vmem:[%s9049 + $0x150] sm:$0xf]
  %v9135 = vld [vmem:[%s9049 + $0x154] sm:$0xf]
  %v9136 = vld [vmem:[%s9049 + $0x158] sm:$0xf]
  %v9137 = vld [vmem:[%s9049 + $0x15c] sm:$0xf]
  %v9138 = vld [vmem:[%s9049 + $0x160] sm:$0xf]
  %v9139 = vld [vmem:[%s9049 + $0x164] sm:$0xf]
  %v9230 = vunpack.c.l.b16 %v9050
  %v9231 = vunpack.c.l.b16 %v9051
  %v9232 = vunpack.c.l.b16 %v9052
  %v9233 = vunpack.c.l.b16 %v9053
  %v9234 = vunpack.c.l.b16 %v9054
  %v9235 = vunpack.c.l.b16 %v9055
  %v9236 = vunpack.c.l.b16 %v9056
  %v9237 = vunpack.c.l.b16 %v9057
  %v9238 = vunpack.c.l.b16 %v9058
  %v9239 = vunpack.c.l.b16 %v9059
  %v9240 = vunpack.c.l.b16 %v9060
  %v9241 = vunpack.c.l.b16 %v9061
  %v9242 = vunpack.c.l.b16 %v9062
  %v9243 = vunpack.c.l.b16 %v9063
  %v9244 = vunpack.c.l.b16 %v9064
  %v9245 = vunpack.c.l.b16 %v9065
  %v9246 = vunpack.c.l.b16 %v9066
  %v9247 = vunpack.c.l.b16 %v9067
  %v9248 = vunpack.c.l.b16 %v9068
  %v9249 = vunpack.c.l.b16 %v9069
  %v9250 = vunpack.c.l.b16 %v9070
  %v9251 = vunpack.c.l.b16 %v9071
  %v9252 = vunpack.c.l.b16 %v9072
  %v9253 = vunpack.c.l.b16 %v9073
  %v9254 = vunpack.c.l.b16 %v9074
  %v9255 = vunpack.c.l.b16 %v9075
  %v9256 = vunpack.c.l.b16 %v9076
  %v9257 = vunpack.c.l.b16 %v9077
  %v9258 = vunpack.c.l.b16 %v9078
  %v9259 = vunpack.c.l.b16 %v9079
  %v9260 = vunpack.c.l.b16 %v9080
  %v9261 = vunpack.c.l.b16 %v9081
  %v9262 = vunpack.c.l.b16 %v9082
  %v9263 = vunpack.c.l.b16 %v9083
  %v9264 = vunpack.c.l.b16 %v9084
  %v9265 = vunpack.c.l.b16 %v9085
  %v9266 = vunpack.c.l.b16 %v9086
  %v9267 = vunpack.c.l.b16 %v9087
  %v9268 = vunpack.c.l.b16 %v9088
  %v9269 = vunpack.c.l.b16 %v9089
  %v9270 = vunpack.c.l.b16 %v9090
  %v9271 = vunpack.c.l.b16 %v9091
  %v9272 = vunpack.c.l.b16 %v9092
  %v9273 = vunpack.c.l.b16 %v9093
  %v9274 = vunpack.c.l.b16 %v9094
  %v9275 = vunpack.c.l.b16 %v9095
  %v9276 = vunpack.c.l.b16 %v9096
  %v9277 = vunpack.c.l.b16 %v9097
  %v9278 = vunpack.c.l.b16 %v9098
  %v9279 = vunpack.c.l.b16 %v9099
  %v9280 = vunpack.c.l.b16 %v9100
  %v9281 = vunpack.c.l.b16 %v9101
  %v9282 = vunpack.c.l.b16 %v9102
  %v9283 = vunpack.c.l.b16 %v9103
  %v9284 = vunpack.c.l.b16 %v9104
  %v9285 = vunpack.c.l.b16 %v9105
  %v9286 = vunpack.c.l.b16 %v9106
  %v9287 = vunpack.c.l.b16 %v9107
  %v9288 = vunpack.c.l.b16 %v9108
  %v9289 = vunpack.c.l.b16 %v9109
  %v9290 = vunpack.c.l.b16 %v9110
  %v9291 = vunpack.c.l.b16 %v9111
  %v9292 = vunpack.c.l.b16 %v9112
  %v9293 = vunpack.c.l.b16 %v9113
  %v9294 = vunpack.c.l.b16 %v9114
  %v9295 = vunpack.c.l.b16 %v9115
  %v9296 = vunpack.c.l.b16 %v9116
  %v9297 = vunpack.c.l.b16 %v9117
  %v9298 = vunpack.c.l.b16 %v9118
  %v9299 = vunpack.c.l.b16 %v9119
  %v9300 = vunpack.c.l.b16 %v9120
  %v9301 = vunpack.c.l.b16 %v9121
  %v9302 = vunpack.c.l.b16 %v9122
  %v9303 = vunpack.c.l.b16 %v9123
  %v9304 = vunpack.c.l.b16 %v9124
  %v9305 = vunpack.c.l.b16 %v9125
  %v9306 = vunpack.c.l.b16 %v9126
  %v9307 = vunpack.c.l.b16 %v9127
  %v9308 = vunpack.c.l.b16 %v9128
  %v9309 = vunpack.c.l.b16 %v9129
  %v9310 = vunpack.c.l.b16 %v9130
  %v9311 = vunpack.c.l.b16 %v9131
  %v9312 = vunpack.c.l.b16 %v9132
  %v9313 = vunpack.c.l.b16 %v9133
  %v9314 = vunpack.c.l.b16 %v9134
  %v9315 = vunpack.c.l.b16 %v9135
  %v9316 = vunpack.c.l.b16 %v9136
  %v9317 = vunpack.c.l.b16 %v9137
  %v9318 = vunpack.c.l.b16 %v9138
  %v9319 = vunpack.c.l.b16 %v9139
  %v9320 = vpack.c.b16 %v9231, %v9230
  %v9321 = vpack.c.b16 %v9233, %v9232
  %v9322 = vpack.c.b16 %v9235, %v9234
  %v9323 = vpack.c.b16 %v9237, %v9236
  %v9324 = vpack.c.b16 %v9239, %v9238
  %v9325 = vpack.c.b16 %v9241, %v9240
  %v9326 = vpack.c.b16 %v9243, %v9242
  %v9327 = vpack.c.b16 %v9245, %v9244
  %v9328 = vpack.c.b16 %v9247, %v9246
  %v9329 = vpack.c.b16 %v9249, %v9248
  %v9330 = vpack.c.b16 %v9251, %v9250
  %v9331 = vpack.c.b16 %v9253, %v9252
  %v9332 = vpack.c.b16 %v9255, %v9254
  %v9333 = vpack.c.b16 %v9257, %v9256
  %v9334 = vpack.c.b16 %v9259, %v9258
  %v9335 = vpack.c.b16 %v9261, %v9260
  %v9336 = vpack.c.b16 %v9263, %v9262
  %v9337 = vpack.c.b16 %v9265, %v9264
  %v9338 = vpack.c.b16 %v9267, %v9266
  %v9339 = vpack.c.b16 %v9269, %v9268
  %v9340 = vpack.c.b16 %v9271, %v9270
  %v9341 = vpack.c.b16 %v9273, %v9272
  %v9342 = vpack.c.b16 %v9275, %v9274
  %v9343 = vpack.c.b16 %v9277, %v9276
  %v9344 = vpack.c.b16 %v9279, %v9278
  %v9345 = vpack.c.b16 %v9281, %v9280
  %v9346 = vpack.c.b16 %v9283, %v9282
  %v9347 = vpack.c.b16 %v9285, %v9284
  %v9348 = vpack.c.b16 %v9287, %v9286
  %v9349 = vpack.c.b16 %v9289, %v9288
  %v9350 = vpack.c.b16 %v9291, %v9290
  %v9351 = vpack.c.b16 %v9293, %v9292
  %v9352 = vpack.c.b16 %v9295, %v9294
  %v9353 = vpack.c.b16 %v9297, %v9296
  %v9354 = vpack.c.b16 %v9299, %v9298
  %v9355 = vpack.c.b16 %v9301, %v9300
  %v9356 = vpack.c.b16 %v9303, %v9302
  %v9357 = vpack.c.b16 %v9305, %v9304
  %v9358 = vpack.c.b16 %v9307, %v9306
  %v9359 = vpack.c.b16 %v9309, %v9308
  %v9360 = vpack.c.b16 %v9311, %v9310
  %v9361 = vpack.c.b16 %v9313, %v9312
  %v9362 = vpack.c.b16 %v9315, %v9314
  %v9363 = vpack.c.b16 %v9317, %v9316
  %v9364 = vpack.c.b16 %v9319, %v9318
  %v9410 = vsel %vm1874, %v9048, 0
  %9412 = vmatprep.subr.bf16.mxu0 0
  %9413 = vmatpush1.bf16.msra.mxu0 %v9320
  %9414 = vmatprep.subr.bf16.mxu0 0
  %9415 = vmatpush1.bf16.msra.mxu0 %v9321
  %9416 = vmatprep.subr.bf16.mxu0 0
  %9417 = vmatpush1.bf16.msra.mxu0 %v9322
  %9418 = vmatprep.subr.bf16.mxu0 0
  %9419 = vmatpush1.bf16.msra.mxu0 %v9323
  %9420 = vmatprep.subr.bf16.mxu0 0
  %9421 = vmatpush1.bf16.msra.mxu0 %v9324
  %9422 = vmatprep.subr.bf16.mxu0 0
  %9423 = vmatpush1.bf16.msra.mxu0 %v9325
  %9424 = vmatprep.subr.bf16.mxu0 0
  %9425 = vmatpush1.bf16.msra.mxu0 %v9326
  %9426 = vmatprep.subr.bf16.mxu0 0
  %9427 = vmatpush1.bf16.msra.mxu0 %v9327
  %9428 = vmatprep.subr.bf16.mxu0 0
  %9429 = vmatpush1.bf16.msra.mxu0 %v9328
  %9430 = vmatprep.subr.bf16.mxu0 0
  %9431 = vmatpush1.bf16.msra.mxu0 %v9329
  %9432 = vmatprep.subr.bf16.mxu0 0
  %9433 = vmatpush1.bf16.msra.mxu0 %v9330
  %9434 = vmatprep.subr.bf16.mxu0 0
  %9435 = vmatpush1.bf16.msra.mxu0 %v9331
  %9436 = vmatprep.subr.bf16.mxu0 0
  %9437 = vmatpush1.bf16.msra.mxu0 %v9332
  %9438 = vmatprep.subr.bf16.mxu0 0
  %9439 = vmatpush1.bf16.msra.mxu0 %v9333
  %9440 = vmatprep.subr.bf16.mxu0 0
  %9441 = vmatpush1.bf16.msra.mxu0 %v9334
  %9442 = vmatprep.subr.bf16.mxu0 0
  %9443 = vmatpush1.bf16.msra.mxu0 %v9335
  %9444 = vmatprep.mubr.bf16.mxu0 %v9032
  %9445 = vmatmul.mubr.bf16.gmra.mrb[0].mxu0 %v9028
  %v9446 = vpop.f32.mrb[0].mxu0
  %v9447 = vadd.f32 0.0, %v9446
  %v9448 = vpop.f32.mrb[0].mxu0
  %v9449 = vpop.f32.mrb[0].mxu0
  %v9450 = vpop.f32.mrb[0].mxu0
  %9451 = vdwg.mxu0
  %9452 = vmatprep.subr.bf16.mxu0 0
  %9453 = vmatpush1.bf16.msra.mxu0 %v9336
  %9454 = vmatprep.subr.bf16.mxu0 0
  %9455 = vmatpush1.bf16.msra.mxu0 %v9337
  %9456 = vmatprep.subr.bf16.mxu0 0
  %9457 = vmatpush1.bf16.msra.mxu0 %v9338
  %9458 = vmatprep.subr.bf16.mxu0 0
  %9459 = vmatpush1.bf16.msra.mxu0 %v9339
  %9460 = vmatprep.subr.bf16.mxu0 0
  %9461 = vmatpush1.bf16.msra.mxu0 %v9340
  %9462 = vmatprep.subr.bf16.mxu0 0
  %9463 = vmatpush1.bf16.msra.mxu0 %v9341
  %9464 = vmatprep.subr.bf16.mxu0 0
  %9465 = vmatpush1.bf16.msra.mxu0 %v9342
  %9466 = vmatprep.subr.bf16.mxu0 0
  %9467 = vmatpush1.bf16.msra.mxu0 %v9343
  %9468 = vmatprep.subr.bf16.mxu0 0
  %9469 = vmatpush1.bf16.msra.mxu0 %v9344
  %9470 = vmatprep.subr.bf16.mxu0 0
  %9471 = vmatpush1.bf16.msra.mxu0 %v9345
  %9472 = vmatprep.subr.bf16.mxu0 0
  %9473 = vmatpush1.bf16.msra.mxu0 %v9346
  %9474 = vmatprep.subr.bf16.mxu0 0
  %9475 = vmatpush1.bf16.msra.mxu0 %v9347
  %9476 = vmatprep.subr.bf16.mxu0 0
  %9477 = vmatpush1.bf16.msra.mxu0 %v9348
  %9478 = vmatprep.subr.bf16.mxu0 0
  %9479 = vmatpush1.bf16.msra.mxu0 %v9349
  %9480 = vmatprep.subr.bf16.mxu0 0
  %9481 = vmatpush1.bf16.msra.mxu0 %v9350
  %9482 = vmatprep.subr.bf16.mxu0 0
  %9483 = vmatpush1.bf16.msra.mxu0 %v9351
  %9484 = vmatprep.mubr.bf16.mxu0 %v9040
  %9485 = vmatmul.mubr.bf16.gmra.mrb[0].mxu0 %v9036
  %v9486 = vpop.f32.mrb[0].mxu0
  %v9487 = vadd.f32 %v9447, %v9486
  %v9488 = vpop.f32.mrb[0].mxu0
  %v9489 = vpop.f32.mrb[0].mxu0
  %v9490 = vpop.f32.mrb[0].mxu0
  %9491 = vdwg.mxu0
  %9492 = vmatprep.subr.bf16.mxu0 0
  %9493 = vmatpush1.bf16.msra.mxu0 %v9352
  %9494 = vmatprep.subr.bf16.mxu0 0
  %9495 = vmatpush1.bf16.msra.mxu0 %v9353
  %9496 = vmatprep.subr.bf16.mxu0 0
  %9497 = vmatpush1.bf16.msra.mxu0 %v9354
  %9498 = vmatprep.subr.bf16.mxu0 0
  %9499 = vmatpush1.bf16.msra.mxu0 %v9355
  %9500 = vmatprep.subr.bf16.mxu0 0
  %9501 = vmatpush1.bf16.msra.mxu0 %v9356
  %9502 = vmatprep.subr.bf16.mxu0 0
  %9503 = vmatpush1.bf16.msra.mxu0 %v9357
  %9504 = vmatprep.subr.bf16.mxu0 0
  %9505 = vmatpush1.bf16.msra.mxu0 %v9358
  %9506 = vmatprep.subr.bf16.mxu0 0
  %9507 = vmatpush1.bf16.msra.mxu0 %v9359
  %9508 = vmatprep.subr.bf16.mxu0 0
  %9509 = vmatpush1.bf16.msra.mxu0 %v9360
  %9510 = vmatprep.subr.bf16.mxu0 0
  %9511 = vmatpush1.bf16.msra.mxu0 %v9361
  %9512 = vmatprep.subr.bf16.mxu0 0
  %9513 = vmatpush1.bf16.msra.mxu0 %v9362
  %9514 = vmatprep.subr.bf16.mxu0 0
  %9515 = vmatpush1.bf16.msra.mxu0 %v9363
  %9516 = vmatprep.subr.bf16.mxu0 0
  %9517 = vmatpush1.bf16.msra.mxu0 %v9364
  %9518 = vmatprep.subr.bf16.mxu0 0
  %9519 = vmatpush1.bf16.msra.mxu0 0
  %9520 = vmatprep.subr.bf16.mxu0 0
  %9521 = vmatpush1.bf16.msra.mxu0 0
  %9522 = vmatprep.subr.bf16.mxu0 0
  %9523 = vmatpush1.bf16.msra.mxu0 0
  %9524 = vmatprep.mubr.bf16.mxu0 %v9410
  %9525 = vmatmul.mubr.bf16.gmra.mrb[0].mxu0 %v9044
  %v9526 = vpop.f32.mrb[0].mxu0
  %v9527 = vadd.f32 %v9487, %v9526
  %v9528 = vpop.f32.mrb[0].mxu0
  %v9529 = vpop.f32.mrb[0].mxu0
  %v9530 = vpop.f32.mrb[0].mxu0
  %9531 = vdwg.mxu0
  %v9532 = vadd.f32 %v8984, %v9527
  %v9533 = vrot.slane %v9532, 4
  %v9534 = vadd.f32 %v9532, %v9533
  %v9535 = vrot.slane %v9534, 2
  %v9536 = vadd.f32 %v9534, %v9535
  %v9537 = vrot.slane %v9536, 1
  %v9538 = vadd.f32 %v9536, %v9537
  %v9539 = vrcp.pop 8.0
  %v9540 = vmul.f32 %v9538, %v9539
  %v9541 = vmul.f32 %v9532, %v9532
  %v9542 = vrot.slane %v9541, 4
  %v9543 = vadd.f32 %v9541, %v9542
  %v9544 = vrot.slane %v9543, 2
  %v9545 = vadd.f32 %v9543, %v9544
  %v9546 = vrot.slane %v9545, 1
  %v9547 = vadd.f32 %v9545, %v9546
  %v9548 = vmul.f32 %v9547, %v9539
  %v9549 = vmul.f32 %v9540, %v9540
  %v9550 = vsub.f32 %v9548, %v9549
  %v9551 = vsub.f32 %v9532, %v9540
  %v9552 = vadd.f32 %v9550, 1e-05
  %v9553 = vrsqrt.pop %v9552
  %v9554 = vmul.f32 %v9551, %v9553
  %v9555 = vld [vmem:[%s4] sm:$0x1]
  %v9556 = vlaneseq
  %v9557 = vshrl.u32 %v9556, 7
  %v9558 = vsub.s32 0, %v9557
  %v9559 = vrot.slane %v9555, %v9558
  %v9560 = vmul.f32 %v9554, %v9559
  %v9561 = vld [vmem:[%s4 + $0x1] sm:$0x1]
  %v9562 = vlaneseq
  %v9563 = vshrl.u32 %v9562, 7
  %v9564 = vsub.s32 0, %v9563
  %v9565 = vrot.slane %v9561, %v9564
  %v9566 = vadd.f32 %v9560, %v9565
  %v9567 = vmul.f32 %v9566, %v9566
  %v9568 = vmul.f32 %v9567, %v9566
  %v9569 = vmul.f32 %v9568, 0.044715
  %v9570 = vadd.f32 %v9566, %v9569
  %v9571 = vmul.f32 %v9570, 0.7978846
  %v9572 = vtanh.pop %v9571
  %v9573 = vmul.f32 %v9566, 0.5
  %v9574 = vadd.f32 %v9572, 1.0
  %v9575 = vmul.f32 %v9573, %v9574
  %9576 = vst [vmem:[%s5] sm:$0xff] %v9575
  // Predicated region
  $region22: #{_model_forward.1} parent=0 // pred_check
    _
  $region23: #{_model_forward.1} parent=0 // pred_check_branch
    %9578 = sbr.rel (0) target = $region25
  $region24: #{_model_forward.1} parent=0 // pred_region
    _
  $region25: #{_model_forward.1} parent=0 // pred_fallthru
    _
  // Predicated region
  $region26: #{_model_forward.1} parent=0 // pred_check
    _
  $region27: #{_model_forward.1} parent=0 // pred_check_branch
    %9580 = sbr.rel (0) target = $region29
  $region28: #{_model_forward.1} parent=0 // pred_region
    _
  $region29: #{_model_forward.1} parent=0 // pred_fallthru
    _

</llo_original>
